<compile_context>
chip_gen: v7x
topology: tpu7x:2x2x1
jax: 0.10.0
libtpu: 0.0.40
codegen_flags: <defaults>
</compile_context>

<pallas_src>
import functools

import numpy as np
import jax
import jax.numpy as jnp
from jax import lax
from jax.experimental import pallas as pl
from jax.experimental.pallas import tpu as pltpu


IMG_CHANNELS = 3


# -----------------------------------------------------------------------------
# One-time pltpu.roll probe (run eagerly at import, outside any jit trace).
# -----------------------------------------------------------------------------
def _probe_roll_mode():
    """Return 'roll' if pltpu.roll matches np.roll semantics on representative
    shapes, 'roll_rev' if it matches np.roll with negated shift, else 'concat'
    (safe wrap-shift fallback)."""
    try:
        def run(shape, s):
            def k(x_ref, o_ref):
                o_ref[...] = pltpu.roll(x_ref[...], shift=s, axis=0)
            x = np.arange(shape[0] * shape[1], dtype=np.float32).reshape(shape)
            out = pl.pallas_call(
                k, out_shape=jax.ShapeDtypeStruct(shape, jnp.float32))(jnp.asarray(x))
            return x, np.asarray(jax.device_get(out))

        fwd = rev = True
        for shape, s in (((512, 4), 17), ((256, 32), 15)):
            x, out = run(shape, s)
            fwd &= np.array_equal(out, np.roll(x, s, axis=0))
            rev &= np.array_equal(out, np.roll(x, -s, axis=0))
        if fwd:
            return "roll"
        if rev:
            return "roll_rev"
        return "concat"
    except Exception:
        return "concat"


_ROLL_MODE = _probe_roll_mode()


# -----------------------------------------------------------------------------
# In-kernel helpers
# -----------------------------------------------------------------------------
def _shift_rows(x2d, off):
    """out[i] = x2d[(i + off) % rows].  Wrapped rows are zeroed by the tap
    masks (every row whose tap crosses an image boundary is an edge row)."""
    rows = x2d.shape[0]
    off = off % rows
    if off == 0:
        return x2d
    if _ROLL_MODE == "roll":          # pltpu.roll == np.roll semantics
        return pltpu.roll(x2d, shift=rows - off, axis=0)
    if _ROLL_MODE == "roll_rev":      # opposite direction
        return pltpu.roll(x2d, shift=off, axis=0)
    # Fallback: wrap shift via two sublane slices + concat (always lowers).
    return jnp.concatenate([x2d[off:, :], x2d[:off, :]], axis=0)


def _conv3x3_im2col(x2d, wide_mask, w_ref, b_ref, W, act):
    """3x3 stride-1 'same' conv on a flattened (rows, Cin) f32 activation.

    One MXU matmul: the 9 row-rolled copies of x are lane-concatenated into an
    (rows, 9*Cin) LHS, masked by ONE pre-expanded boundary mask (also zeroes
    rows that wrapped across image boundaries), cast to bf16 and contracted
    against the (9*Cin, Cout) packed weight with f32 accumulation.
    """
    taps = [_shift_rows(x2d, (dy - 1) * W + (dx - 1))
            for dy in range(3) for dx in range(3)]
    lhs = jnp.concatenate(taps, axis=1) * wide_mask          # (rows, 9*Cin) f32
    acc = jnp.dot(lhs.astype(jnp.bfloat16), w_ref[...],
                  preferred_element_type=jnp.float32)
    acc = acc + b_ref[...]                                    # (1, Cout) bcast
    if act == "relu":
        acc = jnp.maximum(acc, 0.0)
    return acc


def _fused_kernel(*refs, W, with_feats, with_gt):
    """Entire SynthesisModel forward for one stacked batch block (grid step)."""
    it = iter(refs)
    x_ref = next(it)
    gt_ref = next(it) if with_gt else None
    m_in_ref = next(it)
    m_hid_ref = next(it)
    m_img_ref = next(it) if with_feats else None
    m_v1_ref = next(it) if with_feats else None
    e1w, e1b = next(it), next(it)
    e2w, e2b = next(it), next(it)
    dw, db = next(it), next(it)
    if with_feats:
        v1w, v1b = next(it), next(it)
        v2w, v2b = next(it), next(it)
    o_ref = next(it)

    x = x_ref[0]                                  # (rows, Cin) f32, rows=bb*H*W
    rows = x.shape[0]

    # TODO(synk): SynthesisEncoder internals are not given in the reference
    # file; a 2-layer conv3x3+ReLU stack stands in structurally.
    y = _conv3x3_im2col(x, m_in_ref[...], e1w, e1b, W, "relu")
    y = _conv3x3_im2col(y, m_hid_ref[...], e2w, e2b, W, "relu")

    # TODO(synk): SynthesisDecoder internals are not given; a single fused conv
    # head (3 tanh image channels + num_classes logit channels) stands in.
    dec = _conv3x3_im2col(y, m_hid_ref[...], dw, db, W, "none")
    lane = lax.broadcasted_iota(jnp.int32, dec.shape, 1)
    head = jnp.where(lane < IMG_CHANNELS, jnp.tanh(dec), dec)  # tanh image chans

    pieces = [head]
    if with_feats:
        # VGG input padded to 4 channels (weight row 3 is zero), so the image
        # and GT paths share a lane-aligned layout and can be row-stacked.
        if head.shape[1] >= 4:
            img4 = head[:, :4]
        else:
            img4 = jnp.concatenate(
                [head, jnp.zeros((rows, 4 - head.shape[1]), head.dtype)], axis=1)
        vin = jnp.concatenate([img4, gt_ref[0]], axis=0) if with_gt else img4
        # TODO(synk): VGG19LossNetwork replaced by a 2-layer VGG-style
        # conv3x3+ReLU feature extractor (no pretrained weights, no pooling).
        f1 = _conv3x3_im2col(vin, m_img_ref[...], v1w, v1b, W, "relu")
        f2 = _conv3x3_im2col(f1, m_v1_ref[...], v2w, v2b, W, "relu")
        pieces += [f1[:rows], f2[:rows]]
        if with_gt:
            pieces += [f1[rows:], f2[rows:]]      # GT features (fused VGG pass)

    o_ref[0] = jnp.concatenate(pieces, axis=1).astype(o_ref.dtype)


# -----------------------------------------------------------------------------
# Host-side helpers
# -----------------------------------------------------------------------------
def _build_tap_masks(H, W):
    """(H*W, 9) f32 validity masks for the 9 conv taps ('same' padding)."""
    hh, ww = np.meshgrid(np.arange(H), np.arange(W), indexing="ij")
    hh, ww = hh.reshape(-1), ww.reshape(-1)
    cols = []
    for dy in range(3):
        for dx in range(3):
            valid = ((hh + dy - 1 >= 0) & (hh + dy - 1 < H) &
                     (ww + dx - 1 >= 0) & (ww + dx - 1 < W))
            cols.append(valid.astype(np.float32))
    return np.stack(cols, axis=1)


def _wide_mask(base, cin, reps):
    """(N,9) -> (reps*N, 9*cin): one full-width multiply masks the whole LHS."""
    wide = np.repeat(base, cin, axis=1)
    return jnp.asarray(np.tile(wide, (reps, 1)), dtype=jnp.float32)


def _pack_conv(w_hwio, b, pad_cin_to=None):
    """(3,3,Cin,Cout) HWIO weight -> (9*Cin, Cout) bf16; bias -> (1,Cout) f32."""
    kh, kw, cin, cout = w_hwio.shape
    if pad_cin_to is not None and pad_cin_to > cin:
        w_hwio = jnp.pad(w_hwio, ((0, 0), (0, 0), (0, pad_cin_to - cin), (0, 0)))
    cin2 = w_hwio.shape[2]
    w2 = w_hwio.reshape(kh * kw * cin2, cout).astype(jnp.bfloat16)
    b2 = b.reshape(1, cout).astype(jnp.float32)
    return w2, b2


def _pick_bb(B, n, max_rows=4096):
    """Largest batch block that keeps >=2 grid steps (megacore) and bounded
    stacked row count (VMEM / LHS size)."""
    best = 1
    for bb in range(1, B + 1):
        if B % bb:
            continue
        if B >= 2 and B // bb < 2:
            continue
        if bb * n > max_rows:
            continue
        best = bb
    return best


# -----------------------------------------------------------------------------
# Parameters (deterministic stand-in init)
# -----------------------------------------------------------------------------
def _init_conv(key, cin, cout, scale=0.1):
    kw, kb = jax.random.split(key)
    w = scale * jax.random.normal(kw, (3, 3, cin, cout), dtype=jnp.float32)
    b = scale * jax.random.normal(kb, (cout,), dtype=jnp.float32)
    return w, b


def init_params(key, in_ch=4, hidden=32, num_classes=5, vgg_c1=8, vgg_c2=16):
    keys = jax.random.split(key, 5)
    p = {}
    p["enc1_w"], p["enc1_b"] = _init_conv(keys[0], in_ch, hidden)
    p["enc2_w"], p["enc2_b"] = _init_conv(keys[1], hidden, hidden)
    # Fused decoder head: channels [0:3] = image (tanh), [3:] = label logits.
    p["dec_w"], p["dec_b"] = _init_conv(keys[2], hidden, IMG_CHANNELS + num_classes)
    p["vgg1_w"], p["vgg1_b"] = _init_conv(keys[3], IMG_CHANNELS, vgg_c1)
    p["vgg2_w"], p["vgg2_b"] = _init_conv(keys[4], vgg_c1, vgg_c2)
    return p


# -----------------------------------------------------------------------------
# Model forward (mirrors SynthesisModel.forward)
# -----------------------------------------------------------------------------
def synthesis_model_forward(params, proposal_inputs,
                            compute_perceptual_features=False, gt_images=None):
    B, Cin, H, W = proposal_inputs.shape
    n = H * W
    with_feats = bool(compute_perceptual_features)
    with_gt = with_feats and (gt_images is not None)

    num_classes = params["dec_b"].shape[0] - IMG_CHANNELS
    hidden = params["enc1_b"].shape[0]
    c1 = params["vgg1_b"].shape[0]
    c2 = params["vgg2_b"].shape[0]

    bb = _pick_bb(B, n)
    grid_b = B // bb
    rows = bb * n
    vrep = (2 if with_gt else 1) * bb

    # Single NCHW -> flattened-NHWC transpose; bb images row-stacked per step.
    x_flat = (jnp.transpose(proposal_inputs, (0, 2, 3, 1))
              .reshape(grid_b, rows, Cin).astype(jnp.float32))
    gt_flat = None
    if with_gt:
        gt_nhwc = jnp.transpose(gt_images, (0, 2, 3, 1)).astype(jnp.float32)
        gtc = gt_nhwc.shape[-1]
        if gtc < 4:   # lane-align 3-channel GT images to 4 channels
            gt_nhwc = jnp.pad(gt_nhwc, ((0, 0), (0, 0), (0, 0), (0, 4 - gtc)))
        gt_flat = gt_nhwc.reshape(grid_b, rows, 4)

    base = _build_tap_masks(H, W)
    m_in = _wide_mask(base, Cin, bb)
    m_hid = _wide_mask(base, hidden, bb)

    packed = {
        "enc1": _pack_conv(params["enc1_w"], params["enc1_b"]),
        "enc2": _pack_conv(params["enc2_w"], params["enc2_b"]),
        "dec": _pack_conv(params["dec_w"], params["dec_b"]),
    }

    inputs = [x_flat]
    in_specs = [pl.BlockSpec((1, rows, Cin), lambda g: (g, 0, 0))]
    if with_gt:
        inputs.append(gt_flat)
        in_specs.append(pl.BlockSpec((1, rows, 4), lambda g: (g, 0, 0)))
    inputs += [m_in, m_hid]
    in_specs += [pl.BlockSpec(m_in.shape, lambda g: (0, 0)),
                 pl.BlockSpec(m_hid.shape, lambda g: (0, 0))]
    if with_feats:
        m_img = _wide_mask(base, 4, vrep)
        m_v1 = _wide_mask(base, c1, vrep)
        inputs += [m_img, m_v1]
        in_specs += [pl.BlockSpec(m_img.shape, lambda g: (0, 0)),
                     pl.BlockSpec(m_v1.shape, lambda g: (0, 0))]
        packed["vgg1"] = _pack_conv(params["vgg1_w"], params["vgg1_b"], pad_cin_to=4)
        packed["vgg2"] = _pack_conv(params["vgg2_w"], params["vgg2_b"])

    names = ["enc1", "enc2", "dec"] + (["vgg1", "vgg2"] if with_feats else [])
    for name in names:
        w2, b2 = packed[name]
        inputs += [w2, b2]
        in_specs += [pl.BlockSpec(w2.shape, lambda g: (0, 0)),
                     pl.BlockSpec(b2.shape, lambda g: (0, 0))]

    used = IMG_CHANNELS + num_classes
    if with_feats:
        used += (2 if with_gt else 1) * (c1 + c2)

    kernel = functools.partial(_fused_kernel, W=W,
                               with_feats=with_feats, with_gt=with_gt)
    out = pl.pallas_call(
        kernel,
        out_shape=jax.ShapeDtypeStruct((grid_b, rows, used), jnp.bfloat16),
        grid_spec=pltpu.PrefetchScalarGridSpec(
            num_scalar_prefetch=0,
            grid=(grid_b,),
            in_specs=in_specs,
            out_specs=pl.BlockSpec((1, rows, used), lambda g: (g, 0, 0)),
        ),
        compiler_params=pltpu.CompilerParams(
            dimension_semantics=("parallel",),
            vmem_limit_bytes=32 * 1024 * 1024),
    )(*inputs)

    out = out.reshape(B, n, used)

    def unpack(lo, c):
        return jnp.transpose(
            out[:, :, lo:lo + c].astype(jnp.float32).reshape(B, H, W, c),
            (0, 3, 1, 2))

    off = 0
    synthesized_images = unpack(off, IMG_CHANNELS); off += IMG_CHANNELS
    synthesized_labels = unpack(off, num_classes); off += num_classes

    synthesized_features, gt_features = None, None
    if with_feats:
        f1 = unpack(off, c1); off += c1
        f2 = unpack(off, c2); off += c2
        synthesized_features = (f1, f2)
        if with_gt:
            # torch.no_grad() / .clone() analogue (JAX arrays are immutable).
            g1 = jax.lax.stop_gradient(unpack(off, c1)); off += c1
            g2 = jax.lax.stop_gradient(unpack(off, c2)); off += c2
            gt_features = (g1, g2)

    return synthesized_images, synthesized_labels, synthesized_features, gt_features


# -----------------------------------------------------------------------------
# Pure-JAX reference (f32) for a numerical sanity check
# -----------------------------------------------------------------------------
def _conv_ref(x_nhwc, w, b, act):
    y = jax.lax.conv_general_dilated(
        x_nhwc, w, window_strides=(1, 1), padding="SAME",
        dimension_numbers=("NHWC", "HWIO", "NHWC"))
    y = y + b
    if act == "relu":
        y = jnp.maximum(y, 0.0)
    return y


def reference_forward(params, proposal_inputs, gt_images):
    x = jnp.transpose(proposal_inputs, (0, 2, 3, 1))
    y = _conv_ref(x, params["enc1_w"], params["enc1_b"], "relu")
    y = _conv_ref(y, params["enc2_w"], params["enc2_b"], "relu")
    dec = _conv_ref(y, params["dec_w"], params["dec_b"], "none")
    img = jnp.tanh(dec[..., :IMG_CHANNELS])
    lbl = dec[..., IMG_CHANNELS:]
    f1 = _conv_ref(img, params["vgg1_w"], params["vgg1_b"], "relu")
    f2 = _conv_ref(f1, params["vgg2_w"], params["vgg2_b"], "relu")
    g = jnp.transpose(gt_images, (0, 2, 3, 1))
    g1 = _conv_ref(g, params["vgg1_w"], params["vgg1_b"], "relu")
    g2 = _conv_ref(g1, params["vgg2_w"], params["vgg2_b"], "relu")
    to_nchw = lambda t: jnp.transpose(t, (0, 3, 1, 2))
    return tuple(to_nchw(t) for t in (img, lbl, f1, f2, g1, g2))


# -----------------------------------------------------------------------------
if __name__ == "__main__":
    key = jax.random.PRNGKey(0)
    k_param, k_x, k_gt = jax.random.split(key, 3)

    B, C, H, W = 2, 4, 16, 16
    params = init_params(k_param, in_ch=C, hidden=32, num_classes=5)

    proposal_inputs = jax.random.normal(k_x, (B, C, H, W), dtype=jnp.float32)
    gt_images = jax.random.normal(k_gt, (B, IMG_CHANNELS, H, W), dtype=jnp.float32)

    fwd = jax.jit(functools.partial(synthesis_model_forward,
                                    compute_perceptual_features=True))
    imgs, labels, feats, gt_feats = fwd(params, proposal_inputs,
                                        gt_images=gt_images)

    jax.block_until_ready(imgs)
    jax.block_until_ready(labels)
    jax.block_until_ready(feats)
    jax.block_until_ready(gt_feats)

    assert imgs.shape == (B, IMG_CHANNELS, H, W)
    assert labels.shape == (B, 5, H, W)
    assert feats[0].shape == (B, 8, H, W) and feats[1].shape == (B, 16, H, W)
    assert gt_feats[0].shape == (B, 8, H, W) and gt_feats[1].shape == (B, 16, H, W)

    # Numerical check vs. pure-JAX f32 reference (tolerance covers bf16 MXU ops
    # and the bf16 packed-output store).
    ref = reference_forward(params, proposal_inputs, gt_images)
    got = (imgs, labels, feats[0], feats[1], gt_feats[0], gt_feats[1])
    for a, b in zip(got, ref):
        assert bool(jnp.allclose(a, b, rtol=5e-2, atol=5e-2)), \
            f"mismatch: max abs diff {float(jnp.max(jnp.abs(a - b)))}"

    print("KERNEL_OK")
</pallas_src>

<mosaic_0001>
module attributes {stable_mosaic.version = 11 : i64} {
  func.func @k(%arg0: memref<512x4xf32, #tpu.memory_space<vmem>>, %arg1: memref<512x4xf32, #tpu.memory_space<vmem>>) attributes {dimension_semantics = [], scalar_prefetch = 0 : i64, scratch_operands = 0 : i64, tpu.core_type = #tpu.core_type<tc>} {
    %c0 = arith.constant 0 : index
    %c0_0 = arith.constant 0 : index
    %0 = vector.load %arg0[%c0, %c0_0] : memref<512x4xf32, #tpu.memory_space<vmem>>, vector<512x4xf32>
    %c17_i32 = arith.constant 17 : i32
    %1 = tpu.dynamic_rotate %0 by %c17_i32 dim 0 : vector<512x4xf32>, i32 -> vector<512x4xf32>
    %c0_1 = arith.constant 0 : index
    %c0_2 = arith.constant 0 : index
    %2 = vector.load %arg1[%c0_1, %c0_2] : memref<512x4xf32, #tpu.memory_space<vmem>>, vector<512x4xf32>
    tpu.vector_store %arg1[%c0_1, %c0_2], %1 {strides = array<i32>} : memref<512x4xf32, #tpu.memory_space<vmem>>, vector<512x4xf32>,
    return
  }
}

module attributes {stable_mosaic.version = 11 : i64} {
  func.func @_fused_kernel(%arg0: i32, %arg1: memref<1x256x4xf32, #tpu.memory_space<vmem>>, %arg2: memref<1x256x4xf32, #tpu.memory_space<vmem>>, %arg3: memref<256x36xf32, #tpu.memory_space<vmem>>, %arg4: memref<256x288xf32, #tpu.memory_space<vmem>>, %arg5: memref<512x36xf32, #tpu.memory_space<vmem>>, %arg6: memref<512x72xf32, #tpu.memory_space<vmem>>, %arg7: memref<36x32xbf16, #tpu.memory_space<vmem>>, %arg8: memref<1x32xf32, #tpu.memory_space<vmem>>, %arg9: memref<288x32xbf16, #tpu.memory_space<vmem>>, %arg10: memref<1x32xf32, #tpu.memory_space<vmem>>, %arg11: memref<288x8xbf16, #tpu.memory_space<vmem>>, %arg12: memref<1x8xf32, #tpu.memory_space<vmem>>, %arg13: memref<36x8xbf16, #tpu.memory_space<vmem>>, %arg14: memref<1x8xf32, #tpu.memory_space<vmem>>, %arg15: memref<72x16xbf16, #tpu.memory_space<vmem>>, %arg16: memref<1x16xf32, #tpu.memory_space<vmem>>, %arg17: memref<1x256x56xbf16, #tpu.memory_space<vmem>>) attributes {dimension_semantics = [#tpu.dimension_semantics<parallel>], iteration_bounds = array<i64: 2>, scalar_prefetch = 0 : i64, scratch_operands = 0 : i64, tpu.core_type = #tpu.core_type<tc>, window_params = [{transform_indices = @transform_0, window_bounds = array<i64: 1, 256, 4>}, {transform_indices = @transform_1, window_bounds = array<i64: 1, 256, 4>}, {pipeline_mode = #tpu.pipeline_mode<synchronous>, transform_indices = @transform_2, window_bounds = array<i64: 256, 36>}, {pipeline_mode = #tpu.pipeline_mode<synchronous>, transform_indices = @transform_3, window_bounds = array<i64: 256, 288>}, {pipeline_mode = #tpu.pipeline_mode<synchronous>, transform_indices = @transform_4, window_bounds = array<i64: 512, 36>}, {pipeline_mode = #tpu.pipeline_mode<synchronous>, transform_indices = @transform_5, window_bounds = array<i64: 512, 72>}, {pipeline_mode = #tpu.pipeline_mode<synchronous>, transform_indices = @transform_6, window_bounds = array<i64: 36, 32>}, {pipeline_mode = #tpu.pipeline_mode<synchronous>, transform_indices = @transform_7, window_bounds = array<i64: 1, 32>}, {pipeline_mode = #tpu.pipeline_mode<synchronous>, transform_indices = @transform_8, window_bounds = array<i64: 288, 32>}, {pipeline_mode = #tpu.pipeline_mode<synchronous>, transform_indices = @transform_9, window_bounds = array<i64: 1, 32>}, {pipeline_mode = #tpu.pipeline_mode<synchronous>, transform_indices = @transform_10, window_bounds = array<i64: 288, 8>}, {pipeline_mode = #tpu.pipeline_mode<synchronous>, transform_indices = @transform_11, window_bounds = array<i64: 1, 8>}, {pipeline_mode = #tpu.pipeline_mode<synchronous>, transform_indices = @transform_12, window_bounds = array<i64: 36, 8>}, {pipeline_mode = #tpu.pipeline_mode<synchronous>, transform_indices = @transform_13, window_bounds = array<i64: 1, 8>}, {pipeline_mode = #tpu.pipeline_mode<synchronous>, transform_indices = @transform_14, window_bounds = array<i64: 72, 16>}, {pipeline_mode = #tpu.pipeline_mode<synchronous>, transform_indices = @transform_15, window_bounds = array<i64: 1, 16>}, {transform_indices = @transform_16, window_bounds = array<i64: 1, 256, 56>}]} {
    %c0 = arith.constant 0 : index
    %c0_0 = arith.constant 0 : index
    %c0_1 = arith.constant 0 : index
    %0 = vector.load %arg1[%c0, %c0_0, %c0_1] : memref<1x256x4xf32, #tpu.memory_space<vmem>>, vector<1x256x4xf32>
    %1 = vector.shape_cast %0 : vector<1x256x4xf32> to vector<256x4xf32>
    %c0_2 = arith.constant 0 : index
    %c0_3 = arith.constant 0 : index
    %2 = vector.load %arg3[%c0_2, %c0_3] : memref<256x36xf32, #tpu.memory_space<vmem>>, vector<256x36xf32>
    %3 = vector.extract_strided_slice %1 {offsets = [239, 0], sizes = [17, 4], strides = [1, 1]} : vector<256x4xf32> to vector<17x4xf32>
    %4 = vector.extract_strided_slice %1 {offsets = [0, 0], sizes = [239, 4], strides = [1, 1]} : vector<256x4xf32> to vector<239x4xf32>
    %5 = tpu.concatenate %3, %4 in 0 : vector<17x4xf32>, vector<239x4xf32> -> vector<256x4xf32>
    %6 = vector.extract_strided_slice %1 {offsets = [240, 0], sizes = [16, 4], strides = [1, 1]} : vector<256x4xf32> to vector<16x4xf32>
    %7 = vector.extract_strided_slice %1 {offsets = [0, 0], sizes = [240, 4], strides = [1, 1]} : vector<256x4xf32> to vector<240x4xf32>
    %8 = tpu.concatenate %6, %7 in 0 : vector<16x4xf32>, vector<240x4xf32> -> vector<256x4xf32>
    %9 = vector.extract_strided_slice %1 {offsets = [241, 0], sizes = [15, 4], strides = [1, 1]} : vector<256x4xf32> to vector<15x4xf32>
    %10 = vector.extract_strided_slice %1 {offsets = [0, 0], sizes = [241, 4], strides = [1, 1]} : vector<256x4xf32> to vector<241x4xf32>
    %11 = tpu.concatenate %9, %10 in 0 : vector<15x4xf32>, vector<241x4xf32> -> vector<256x4xf32>
    %12 = vector.extract_strided_slice %1 {offsets = [255, 0], sizes = [1, 4], strides = [1, 1]} : vector<256x4xf32> to vector<1x4xf32>
    %13 = vector.extract_strided_slice %1 {offsets = [0, 0], sizes = [255, 4], strides = [1, 1]} : vector<256x4xf32> to vector<255x4xf32>
    %14 = tpu.concatenate %12, %13 in 0 : vector<1x4xf32>, vector<255x4xf32> -> vector<256x4xf32>
    %15 = vector.extract_strided_slice %1 {offsets = [1, 0], sizes = [255, 4], strides = [1, 1]} : vector<256x4xf32> to vector<255x4xf32>
    %16 = vector.extract_strided_slice %1 {offsets = [0, 0], sizes = [1, 4], strides = [1, 1]} : vector<256x4xf32> to vector<1x4xf32>
    %17 = tpu.concatenate %15, %16 in 0 : vector<255x4xf32>, vector<1x4xf32> -> vector<256x4xf32>
    %18 = vector.extract_strided_slice %1 {offsets = [15, 0], sizes = [241, 4], strides = [1, 1]} : vector<256x4xf32> to vector<241x4xf32>
    %19 = vector.extract_strided_slice %1 {offsets = [0, 0], sizes = [15, 4], strides = [1, 1]} : vector<256x4xf32> to vector<15x4xf32>
    %20 = tpu.concatenate %18, %19 in 0 : vector<241x4xf32>, vector<15x4xf32> -> vector<256x4xf32>
    %21 = vector.extract_strided_slice %1 {offsets = [16, 0], sizes = [240, 4], strides = [1, 1]} : vector<256x4xf32> to vector<240x4xf32>
    %22 = vector.extract_strided_slice %1 {offsets = [0, 0], sizes = [16, 4], strides = [1, 1]} : vector<256x4xf32> to vector<16x4xf32>
    %23 = tpu.concatenate %21, %22 in 0 : vector<240x4xf32>, vector<16x4xf32> -> vector<256x4xf32>
    %24 = vector.extract_strided_slice %1 {offsets = [17, 0], sizes = [239, 4], strides = [1, 1]} : vector<256x4xf32> to vector<239x4xf32>
    %25 = vector.extract_strided_slice %1 {offsets = [0, 0], sizes = [17, 4], strides = [1, 1]} : vector<256x4xf32> to vector<17x4xf32>
    %26 = tpu.concatenate %24, %25 in 0 : vector<239x4xf32>, vector<17x4xf32> -> vector<256x4xf32>
    %27 = tpu.concatenate %5, %8, %11, %14, %1, %17, %20, %23, %26 in 1 : vector<256x4xf32>, vector<256x4xf32>, vector<256x4xf32>, vector<256x4xf32>, vector<256x4xf32>, vector<256x4xf32>, vector<256x4xf32>, vector<256x4xf32>, vector<256x4xf32> -> vector<256x36xf32>
    %28 = arith.mulf %27, %2 : vector<256x36xf32>
    %29 = arith.truncf %28 : vector<256x36xf32> to vector<256x36xbf16>
    %c0_4 = arith.constant 0 : index
    %c0_5 = arith.constant 0 : index
    %30 = vector.load %arg7[%c0_4, %c0_5] : memref<36x32xbf16, #tpu.memory_space<vmem>>, vector<36x32xbf16>
    %cst = arith.constant dense<0.000000e+00> : vector<256x32xf32>
    %31 = tpu.matmul %29, %30, %cst {dimension_numbers = #tpu.dot_dimension_numbers<[1], [0], [0], [1], [0, 0, 1, 1], [], []>} : vector<256x36xbf16>, vector<36x32xbf16>, vector<256x32xf32> -> vector<256x32xf32>
    %c0_6 = arith.constant 0 : index
    %c0_7 = arith.constant 0 : index
    %32 = vector.load %arg8[%c0_6, %c0_7] : memref<1x32xf32, #tpu.memory_space<vmem>>, vector<1x32xf32>
    %33 = vector.broadcast %32 : vector<1x32xf32> to vector<256x32xf32>
    %34 = arith.addf %31, %33 : vector<256x32xf32>
    %cst_8 = arith.constant 0.000000e+00 : f32
    %35 = vector.broadcast %cst_8 : f32 to vector<256x32xf32>
    %36 = arith.maximumf %34, %35 : vector<256x32xf32>
    %c0_9 = arith.constant 0 : index
    %c0_10 = arith.constant 0 : index
    %37 = vector.load %arg4[%c0_9, %c0_10] : memref<256x288xf32, #tpu.memory_space<vmem>>, vector<256x288xf32>
    %38 = vector.extract_strided_slice %36 {offsets = [239, 0], sizes = [17, 32], strides = [1, 1]} : vector<256x32xf32> to vector<17x32xf32>
    %39 = vector.extract_strided_slice %36 {offsets = [0, 0], sizes = [239, 32], strides = [1, 1]} : vector<256x32xf32> to vector<239x32xf32>
    %40 = tpu.concatenate %38, %39 in 0 : vector<17x32xf32>, vector<239x32xf32> -> vector<256x32xf32>
    %41 = vector.extract_strided_slice %36 {offsets = [240, 0], sizes = [16, 32], strides = [1, 1]} : vector<256x32xf32> to vector<16x32xf32>
    %42 = vector.extract_strided_slice %36 {offsets = [0, 0], sizes = [240, 32], strides = [1, 1]} : vector<256x32xf32> to vector<240x32xf32>
    %43 = tpu.concatenate %41, %42 in 0 : vector<16x32xf32>, vector<240x32xf32> -> vector<256x32xf32>
    %44 = vector.extract_strided_slice %36 {offsets = [241, 0], sizes = [15, 32], strides = [1, 1]} : vector<256x32xf32> to vector<15x32xf32>
    %45 = vector.extract_strided_slice %36 {offsets = [0, 0], sizes = [241, 32], strides = [1, 1]} : vector<256x32xf32> to vector<241x32xf32>
    %46 = tpu.concatenate %44, %45 in 0 : vector<15x32xf32>, vector<241x32xf32> -> vector<256x32xf32>
    %47 = vector.extract_strided_slice %36 {offsets = [255, 0], sizes = [1, 32], strides = [1, 1]} : vector<256x32xf32> to vector<1x32xf32>
    %48 = vector.extract_strided_slice %36 {offsets = [0, 0], sizes = [255, 32], strides = [1, 1]} : vector<256x32xf32> to vector<255x32xf32>
    %49 = tpu.concatenate %47, %48 in 0 : vector<1x32xf32>, vector<255x32xf32> -> vector<256x32xf32>
    %50 = vector.extract_strided_slice %36 {offsets = [1, 0], sizes = [255, 32], strides = [1, 1]} : vector<256x32xf32> to vector<255x32xf32>
    %51 = vector.extract_strided_slice %36 {offsets = [0, 0], sizes = [1, 32], strides = [1, 1]} : vector<256x32xf32> to vector<1x32xf32>
    %52 = tpu.concatenate %50, %51 in 0 : vector<255x32xf32>, vector<1x32xf32> -> vector<256x32xf32>
    %53 = vector.extract_strided_slice %36 {offsets = [15, 0], sizes = [241, 32], strides = [1, 1]} : vector<256x32xf32> to vector<241x32xf32>
    %54 = vector.extract_strided_slice %36 {offsets = [0, 0], sizes = [15, 32], strides = [1, 1]} : vector<256x32xf32> to vector<15x32xf32>
    %55 = tpu.concatenate %53, %54 in 0 : vector<241x32xf32>, vector<15x32xf32> -> vector<256x32xf32>
    %56 = vector.extract_strided_slice %36 {offsets = [16, 0], sizes = [240, 32], strides = [1, 1]} : vector<256x32xf32> to vector<240x32xf32>
    %57 = vector.extract_strided_slice %36 {offsets = [0, 0], sizes = [16, 32], strides = [1, 1]} : vector<256x32xf32> to vector<16x32xf32>
    %58 = tpu.concatenate %56, %57 in 0 : vector<240x32xf32>, vector<16x32xf32> -> vector<256x32xf32>
    %59 = vector.extract_strided_slice %36 {offsets = [17, 0], sizes = [239, 32], strides = [1, 1]} : vector<256x32xf32> to vector<239x32xf32>
    %60 = vector.extract_strided_slice %36 {offsets = [0, 0], sizes = [17, 32], strides = [1, 1]} : vector<256x32xf32> to vector<17x32xf32>
    %61 = tpu.concatenate %59, %60 in 0 : vector<239x32xf32>, vector<17x32xf32> -> vector<256x32xf32>
    %62 = tpu.concatenate %40, %43, %46, %49, %36, %52, %55, %58, %61 in 1 : vector<256x32xf32>, vector<256x32xf32>, vector<256x32xf32>, vector<256x32xf32>, vector<256x32xf32>, vector<256x32xf32>, vector<256x32xf32>, vector<256x32xf32>, vector<256x32xf32> -> vector<256x288xf32>
    %63 = arith.mulf %62, %37 : vector<256x288xf32>
    %64 = arith.truncf %63 : vector<256x288xf32> to vector<256x288xbf16>
    %c0_11 = arith.constant 0 : index
    %c0_12 = arith.constant 0 : index
    %65 = vector.load %arg9[%c0_11, %c0_12] : memref<288x32xbf16, #tpu.memory_space<vmem>>, vector<288x32xbf16>
    %cst_13 = arith.constant dense<0.000000e+00> : vector<256x32xf32>
    %66 = tpu.matmul %64, %65, %cst_13 {dimension_numbers = #tpu.dot_dimension_numbers<[1], [0], [0], [1], [0, 0, 1, 1], [], []>} : vector<256x288xbf16>, vector<288x32xbf16>, vector<256x32xf32> -> vector<256x32xf32>
    %c0_14 = arith.constant 0 : index
    %c0_15 = arith.constant 0 : index
    %67 = vector.load %arg10[%c0_14, %c0_15] : memref<1x32xf32, #tpu.memory_space<vmem>>, vector<1x32xf32>
    %68 = vector.broadcast %67 : vector<1x32xf32> to vector<256x32xf32>
    %69 = arith.addf %66, %68 : vector<256x32xf32>
    %cst_16 = arith.constant 0.000000e+00 : f32
    %70 = vector.broadcast %cst_16 : f32 to vector<256x32xf32>
    %71 = arith.maximumf %69, %70 : vector<256x32xf32>
    %c0_17 = arith.constant 0 : index
    %c0_18 = arith.constant 0 : index
    %72 = vector.load %arg4[%c0_17, %c0_18] : memref<256x288xf32, #tpu.memory_space<vmem>>, vector<256x288xf32>
    %73 = vector.extract_strided_slice %71 {offsets = [239, 0], sizes = [17, 32], strides = [1, 1]} : vector<256x32xf32> to vector<17x32xf32>
    %74 = vector.extract_strided_slice %71 {offsets = [0, 0], sizes = [239, 32], strides = [1, 1]} : vector<256x32xf32> to vector<239x32xf32>
    %75 = tpu.concatenate %73, %74 in 0 : vector<17x32xf32>, vector<239x32xf32> -> vector<256x32xf32>
    %76 = vector.extract_strided_slice %71 {offsets = [240, 0], sizes = [16, 32], strides = [1, 1]} : vector<256x32xf32> to vector<16x32xf32>
    %77 = vector.extract_strided_slice %71 {offsets = [0, 0], sizes = [240, 32], strides = [1, 1]} : vector<256x32xf32> to vector<240x32xf32>
    %78 = tpu.concatenate %76, %77 in 0 : vector<16x32xf32>, vector<240x32xf32> -> vector<256x32xf32>
    %79 = vector.extract_strided_slice %71 {offsets = [241, 0], sizes = [15, 32], strides = [1, 1]} : vector<256x32xf32> to vector<15x32xf32>
    %80 = vector.extract_strided_slice %71 {offsets = [0, 0], sizes = [241, 32], strides = [1, 1]} : vector<256x32xf32> to vector<241x32xf32>
    %81 = tpu.concatenate %79, %80 in 0 : vector<15x32xf32>, vector<241x32xf32> -> vector<256x32xf32>
    %82 = vector.extract_strided_slice %71 {offsets = [255, 0], sizes = [1, 32], strides = [1, 1]} : vector<256x32xf32> to vector<1x32xf32>
    %83 = vector.extract_strided_slice %71 {offsets = [0, 0], sizes = [255, 32], strides = [1, 1]} : vector<256x32xf32> to vector<255x32xf32>
    %84 = tpu.concatenate %82, %83 in 0 : vector<1x32xf32>, vector<255x32xf32> -> vector<256x32xf32>
    %85 = vector.extract_strided_slice %71 {offsets = [1, 0], sizes = [255, 32], strides = [1, 1]} : vector<256x32xf32> to vector<255x32xf32>
    %86 = vector.extract_strided_slice %71 {offsets = [0, 0], sizes = [1, 32], strides = [1, 1]} : vector<256x32xf32> to vector<1x32xf32>
    %87 = tpu.concatenate %85, %86 in 0 : vector<255x32xf32>, vector<1x32xf32> -> vector<256x32xf32>
    %88 = vector.extract_strided_slice %71 {offsets = [15, 0], sizes = [241, 32], strides = [1, 1]} : vector<256x32xf32> to vector<241x32xf32>
    %89 = vector.extract_strided_slice %71 {offsets = [0, 0], sizes = [15, 32], strides = [1, 1]} : vector<256x32xf32> to vector<15x32xf32>
    %90 = tpu.concatenate %88, %89 in 0 : vector<241x32xf32>, vector<15x32xf32> -> vector<256x32xf32>
    %91 = vector.extract_strided_slice %71 {offsets = [16, 0], sizes = [240, 32], strides = [1, 1]} : vector<256x32xf32> to vector<240x32xf32>
    %92 = vector.extract_strided_slice %71 {offsets = [0, 0], sizes = [16, 32], strides = [1, 1]} : vector<256x32xf32> to vector<16x32xf32>
    %93 = tpu.concatenate %91, %92 in 0 : vector<240x32xf32>, vector<16x32xf32> -> vector<256x32xf32>
    %94 = vector.extract_strided_slice %71 {offsets = [17, 0], sizes = [239, 32], strides = [1, 1]} : vector<256x32xf32> to vector<239x32xf32>
    %95 = vector.extract_strided_slice %71 {offsets = [0, 0], sizes = [17, 32], strides = [1, 1]} : vector<256x32xf32> to vector<17x32xf32>
    %96 = tpu.concatenate %94, %95 in 0 : vector<239x32xf32>, vector<17x32xf32> -> vector<256x32xf32>
    %97 = tpu.concatenate %75, %78, %81, %84, %71, %87, %90, %93, %96 in 1 : vector<256x32xf32>, vector<256x32xf32>, vector<256x32xf32>, vector<256x32xf32>, vector<256x32xf32>, vector<256x32xf32>, vector<256x32xf32>, vector<256x32xf32>, vector<256x32xf32> -> vector<256x288xf32>
    %98 = arith.mulf %97, %72 : vector<256x288xf32>
    %99 = arith.truncf %98 : vector<256x288xf32> to vector<256x288xbf16>
    %c0_19 = arith.constant 0 : index
    %c0_20 = arith.constant 0 : index
    %100 = vector.load %arg11[%c0_19, %c0_20] : memref<288x8xbf16, #tpu.memory_space<vmem>>, vector<288x8xbf16>
    %cst_21 = arith.constant dense<0.000000e+00> : vector<256x8xf32>
    %101 = tpu.matmul %99, %100, %cst_21 {dimension_numbers = #tpu.dot_dimension_numbers<[1], [0], [0], [1], [0, 0, 1, 1], [], []>} : vector<256x288xbf16>, vector<288x8xbf16>, vector<256x8xf32> -> vector<256x8xf32>
    %c0_22 = arith.constant 0 : index
    %c0_23 = arith.constant 0 : index
    %102 = vector.load %arg12[%c0_22, %c0_23] : memref<1x8xf32, #tpu.memory_space<vmem>>, vector<1x8xf32>
    %103 = vector.broadcast %102 : vector<1x8xf32> to vector<256x8xf32>
    %104 = arith.addf %101, %103 : vector<256x8xf32>
    %105 = tpu.iota {dimensions = array<i32: 1>} : vector<256x8xi32>
    %c3_i32 = arith.constant 3 : i32
    %106 = vector.broadcast %c3_i32 : i32 to vector<256x8xi32>
    %107 = arith.cmpi slt, %105, %106 : vector<256x8xi32>
    %108 = math.tanh %104 : vector<256x8xf32>
    %109 = arith.select %107, %108, %104 : vector<256x8xi1>, vector<256x8xf32>
    %110 = vector.extract_strided_slice %109 {offsets = [0, 0], sizes = [256, 4], strides = [1, 1]} : vector<256x8xf32> to vector<256x4xf32>
    %c0_24 = arith.constant 0 : index
    %c0_25 = arith.constant 0 : index
    %c0_26 = arith.constant 0 : index
    %111 = vector.load %arg2[%c0_24, %c0_25, %c0_26] : memref<1x256x4xf32, #tpu.memory_space<vmem>>, vector<1x256x4xf32>
    %112 = vector.shape_cast %111 : vector<1x256x4xf32> to vector<256x4xf32>
    %113 = tpu.concatenate %110, %112 in 0 : vector<256x4xf32>, vector<256x4xf32> -> vector<512x4xf32>
    %c0_27 = arith.constant 0 : index
    %c0_28 = arith.constant 0 : index
    %114 = vector.load %arg5[%c0_27, %c0_28] : memref<512x36xf32, #tpu.memory_space<vmem>>, vector<512x36xf32>
    %115 = vector.extract_strided_slice %113 {offsets = [495, 0], sizes = [17, 4], strides = [1, 1]} : vector<512x4xf32> to vector<17x4xf32>
    %116 = vector.extract_strided_slice %113 {offsets = [0, 0], sizes = [495, 4], strides = [1, 1]} : vector<512x4xf32> to vector<495x4xf32>
    %117 = tpu.concatenate %115, %116 in 0 : vector<17x4xf32>, vector<495x4xf32> -> vector<512x4xf32>
    %118 = vector.extract_strided_slice %113 {offsets = [496, 0], sizes = [16, 4], strides = [1, 1]} : vector<512x4xf32> to vector<16x4xf32>
    %119 = vector.extract_strided_slice %113 {offsets = [0, 0], sizes = [496, 4], strides = [1, 1]} : vector<512x4xf32> to vector<496x4xf32>
    %120 = tpu.concatenate %118, %119 in 0 : vector<16x4xf32>, vector<496x4xf32> -> vector<512x4xf32>
    %121 = vector.extract_strided_slice %113 {offsets = [497, 0], sizes = [15, 4], strides = [1, 1]} : vector<512x4xf32> to vector<15x4xf32>
    %122 = vector.extract_strided_slice %113 {offsets = [0, 0], sizes = [497, 4], strides = [1, 1]} : vector<512x4xf32> to vector<497x4xf32>
    %123 = tpu.concatenate %121, %122 in 0 : vector<15x4xf32>, vector<497x4xf32> -> vector<512x4xf32>
    %124 = vector.extract_strided_slice %113 {offsets = [511, 0], sizes = [1, 4], strides = [1, 1]} : vector<512x4xf32> to vector<1x4xf32>
    %125 = vector.extract_strided_slice %113 {offsets = [0, 0], sizes = [511, 4], strides = [1, 1]} : vector<512x4xf32> to vector<511x4xf32>
    %126 = tpu.concatenate %124, %125 in 0 : vector<1x4xf32>, vector<511x4xf32> -> vector<512x4xf32>
    %127 = vector.extract_strided_slice %113 {offsets = [1, 0], sizes = [511, 4], strides = [1, 1]} : vector<512x4xf32> to vector<511x4xf32>
    %128 = vector.extract_strided_slice %113 {offsets = [0, 0], sizes = [1, 4], strides = [1, 1]} : vector<512x4xf32> to vector<1x4xf32>
    %129 = tpu.concatenate %127, %128 in 0 : vector<511x4xf32>, vector<1x4xf32> -> vector<512x4xf32>
    %130 = vector.extract_strided_slice %113 {offsets = [15, 0], sizes = [497, 4], strides = [1, 1]} : vector<512x4xf32> to vector<497x4xf32>
    %131 = vector.extract_strided_slice %113 {offsets = [0, 0], sizes = [15, 4], strides = [1, 1]} : vector<512x4xf32> to vector<15x4xf32>
    %132 = tpu.concatenate %130, %131 in 0 : vector<497x4xf32>, vector<15x4xf32> -> vector<512x4xf32>
    %133 = vector.extract_strided_slice %113 {offsets = [16, 0], sizes = [496, 4], strides = [1, 1]} : vector<512x4xf32> to vector<496x4xf32>
    %134 = vector.extract_strided_slice %113 {offsets = [0, 0], sizes = [16, 4], strides = [1, 1]} : vector<512x4xf32> to vector<16x4xf32>
    %135 = tpu.concatenate %133, %134 in 0 : vector<496x4xf32>, vector<16x4xf32> -> vector<512x4xf32>
    %136 = vector.extract_strided_slice %113 {offsets = [17, 0], sizes = [495, 4], strides = [1, 1]} : vector<512x4xf32> to vector<495x4xf32>
    %137 = vector.extract_strided_slice %113 {offsets = [0, 0], sizes = [17, 4], strides = [1, 1]} : vector<512x4xf32> to vector<17x4xf32>
    %138 = tpu.concatenate %136, %137 in 0 : vector<495x4xf32>, vector<17x4xf32> -> vector<512x4xf32>
    %139 = tpu.concatenate %117, %120, %123, %126, %113, %129, %132, %135, %138 in 1 : vector<512x4xf32>, vector<512x4xf32>, vector<512x4xf32>, vector<512x4xf32>, vector<512x4xf32>, vector<512x4xf32>, vector<512x4xf32>, vector<512x4xf32>, vector<512x4xf32> -> vector<512x36xf32>
    %140 = arith.mulf %139, %114 : vector<512x36xf32>
    %141 = arith.truncf %140 : vector<512x36xf32> to vector<512x36xbf16>
    %c0_29 = arith.constant 0 : index
    %c0_30 = arith.constant 0 : index
    %142 = vector.load %arg13[%c0_29, %c0_30] : memref<36x8xbf16, #tpu.memory_space<vmem>>, vector<36x8xbf16>
    %cst_31 = arith.constant dense<0.000000e+00> : vector<512x8xf32>
    %143 = tpu.matmul %141, %142, %cst_31 {dimension_numbers = #tpu.dot_dimension_numbers<[1], [0], [0], [1], [0, 0, 1, 1], [], []>} : vector<512x36xbf16>, vector<36x8xbf16>, vector<512x8xf32> -> vector<512x8xf32>
    %c0_32 = arith.constant 0 : index
    %c0_33 = arith.constant 0 : index
    %144 = vector.load %arg14[%c0_32, %c0_33] : memref<1x8xf32, #tpu.memory_space<vmem>>, vector<1x8xf32>
    %145 = vector.broadcast %144 : vector<1x8xf32> to vector<512x8xf32>
    %146 = arith.addf %143, %145 : vector<512x8xf32>
    %cst_34 = arith.constant 0.000000e+00 : f32
    %147 = vector.broadcast %cst_34 : f32 to vector<512x8xf32>
    %148 = arith.maximumf %146, %147 : vector<512x8xf32>
    %c0_35 = arith.constant 0 : index
    %c0_36 = arith.constant 0 : index
    %149 = vector.load %arg6[%c0_35, %c0_36] : memref<512x72xf32, #tpu.memory_space<vmem>>, vector<512x72xf32>
    %150 = vector.extract_strided_slice %148 {offsets = [495, 0], sizes = [17, 8], strides = [1, 1]} : vector<512x8xf32> to vector<17x8xf32>
    %151 = vector.extract_strided_slice %148 {offsets = [0, 0], sizes = [495, 8], strides = [1, 1]} : vector<512x8xf32> to vector<495x8xf32>
    %152 = tpu.concatenate %150, %151 in 0 : vector<17x8xf32>, vector<495x8xf32> -> vector<512x8xf32>
    %153 = vector.extract_strided_slice %148 {offsets = [496, 0], sizes = [16, 8], strides = [1, 1]} : vector<512x8xf32> to vector<16x8xf32>
    %154 = vector.extract_strided_slice %148 {offsets = [0, 0], sizes = [496, 8], strides = [1, 1]} : vector<512x8xf32> to vector<496x8xf32>
    %155 = tpu.concatenate %153, %154 in 0 : vector<16x8xf32>, vector<496x8xf32> -> vector<512x8xf32>
    %156 = vector.extract_strided_slice %148 {offsets = [497, 0], sizes = [15, 8], strides = [1, 1]} : vector<512x8xf32> to vector<15x8xf32>
    %157 = vector.extract_strided_slice %148 {offsets = [0, 0], sizes = [497, 8], strides = [1, 1]} : vector<512x8xf32> to vector<497x8xf32>
    %158 = tpu.concatenate %156, %157 in 0 : vector<15x8xf32>, vector<497x8xf32> -> vector<512x8xf32>
    %159 = vector.extract_strided_slice %148 {offsets = [511, 0], sizes = [1, 8], strides = [1, 1]} : vector<512x8xf32> to vector<1x8xf32>
    %160 = vector.extract_strided_slice %148 {offsets = [0, 0], sizes = [511, 8], strides = [1, 1]} : vector<512x8xf32> to vector<511x8xf32>
    %161 = tpu.concatenate %159, %160 in 0 : vector<1x8xf32>, vector<511x8xf32> -> vector<512x8xf32>
    %162 = vector.extract_strided_slice %148 {offsets = [1, 0], sizes = [511, 8], strides = [1, 1]} : vector<512x8xf32> to vector<511x8xf32>
    %163 = vector.extract_strided_slice %148 {offsets = [0, 0], sizes = [1, 8], strides = [1, 1]} : vector<512x8xf32> to vector<1x8xf32>
    %164 = tpu.concatenate %162, %163 in 0 : vector<511x8xf32>, vector<1x8xf32> -> vector<512x8xf32>
    %165 = vector.extract_strided_slice %148 {offsets = [15, 0], sizes = [497, 8], strides = [1, 1]} : vector<512x8xf32> to vector<497x8xf32>
    %166 = vector.extract_strided_slice %148 {offsets = [0, 0], sizes = [15, 8], strides = [1, 1]} : vector<512x8xf32> to vector<15x8xf32>
    %167 = tpu.concatenate %165, %166 in 0 : vector<497x8xf32>, vector<15x8xf32> -> vector<512x8xf32>
    %168 = vector.extract_strided_slice %148 {offsets = [16, 0], sizes = [496, 8], strides = [1, 1]} : vector<512x8xf32> to vector<496x8xf32>
    %169 = vector.extract_strided_slice %148 {offsets = [0, 0], sizes = [16, 8], strides = [1, 1]} : vector<512x8xf32> to vector<16x8xf32>
    %170 = tpu.concatenate %168, %169 in 0 : vector<496x8xf32>, vector<16x8xf32> -> vector<512x8xf32>
    %171 = vector.extract_strided_slice %148 {offsets = [17, 0], sizes = [495, 8], strides = [1, 1]} : vector<512x8xf32> to vector<495x8xf32>
    %172 = vector.extract_strided_slice %148 {offsets = [0, 0], sizes = [17, 8], strides = [1, 1]} : vector<512x8xf32> to vector<17x8xf32>
    %173 = tpu.concatenate %171, %172 in 0 : vector<495x8xf32>, vector<17x8xf32> -> vector<512x8xf32>
    %174 = tpu.concatenate %152, %155, %158, %161, %148, %164, %167, %170, %173 in 1 : vector<512x8xf32>, vector<512x8xf32>, vector<512x8xf32>, vector<512x8xf32>, vector<512x8xf32>, vector<512x8xf32>, vector<512x8xf32>, vector<512x8xf32>, vector<512x8xf32> -> vector<512x72xf32>
    %175 = arith.mulf %174, %149 : vector<512x72xf32>
    %176 = arith.truncf %175 : vector<512x72xf32> to vector<512x72xbf16>
    %c0_37 = arith.constant 0 : index
    %c0_38 = arith.constant 0 : index
    %177 = vector.load %arg15[%c0_37, %c0_38] : memref<72x16xbf16, #tpu.memory_space<vmem>>, vector<72x16xbf16>
    %cst_39 = arith.constant dense<0.000000e+00> : vector<512x16xf32>
    %178 = tpu.matmul %176, %177, %cst_39 {dimension_numbers = #tpu.dot_dimension_numbers<[1], [0], [0], [1], [0, 0, 1, 1], [], []>} : vector<512x72xbf16>, vector<72x16xbf16>, vector<512x16xf32> -> vector<512x16xf32>
    %c0_40 = arith.constant 0 : index
    %c0_41 = arith.constant 0 : index
    %179 = vector.load %arg16[%c0_40, %c0_41] : memref<1x16xf32, #tpu.memory_space<vmem>>, vector<1x16xf32>
    %180 = vector.broadcast %179 : vector<1x16xf32> to vector<512x16xf32>
    %181 = arith.addf %178, %180 : vector<512x16xf32>
    %cst_42 = arith.constant 0.000000e+00 : f32
    %182 = vector.broadcast %cst_42 : f32 to vector<512x16xf32>
    %183 = arith.maximumf %181, %182 : vector<512x16xf32>
    %184 = vector.extract_strided_slice %148 {offsets = [0, 0], sizes = [256, 8], strides = [1, 1]} : vector<512x8xf32> to vector<256x8xf32>
    %185 = vector.extract_strided_slice %183 {offsets = [0, 0], sizes = [256, 16], strides = [1, 1]} : vector<512x16xf32> to vector<256x16xf32>
    %186 = vector.extract_strided_slice %148 {offsets = [256, 0], sizes = [256, 8], strides = [1, 1]} : vector<512x8xf32> to vector<256x8xf32>
    %187 = vector.extract_strided_slice %183 {offsets = [256, 0], sizes = [256, 16], strides = [1, 1]} : vector<512x16xf32> to vector<256x16xf32>
    %188 = tpu.concatenate %109, %184, %185, %186, %187 in 1 : vector<256x8xf32>, vector<256x8xf32>, vector<256x16xf32>, vector<256x8xf32>, vector<256x16xf32> -> vector<256x56xf32>
    %189 = arith.truncf %188 : vector<256x56xf32> to vector<256x56xbf16>
    %c0_43 = arith.constant 0 : index
    %c0_44 = arith.constant 0 : index
    %c0_45 = arith.constant 0 : index
    %190 = vector.load %arg17[%c0_43, %c0_44, %c0_45] : memref<1x256x56xbf16, #tpu.memory_space<vmem>>, vector<1x256x56xbf16>
    %191 = vector.shape_cast %190 : vector<1x256x56xbf16> to vector<256x56xbf16>
    %192 = vector.shape_cast %189 : vector<256x56xbf16> to vector<1x256x56xbf16>
    tpu.vector_store %arg17[%c0_43, %c0_44, %c0_45], %192 {strides = array<i32>} : memref<1x256x56xbf16, #tpu.memory_space<vmem>>, vector<1x256x56xbf16>,
    return
  }
  func.func @transform_0(%arg0: i32) -> (i32, i32, i32) {
    %c0_i32 = arith.constant 0 : i32
    %c0_i32_0 = arith.constant 0 : i32
    %c0_i32_1 = arith.constant 0 : i32
    return %arg0, %c0_i32, %c0_i32_0 : i32, i32, i32
  }
  func.func @transform_1(%arg0: i32) -> (i32, i32, i32) {
    %c0_i32 = arith.constant 0 : i32
    %c0_i32_0 = arith.constant 0 : i32
    %c0_i32_1 = arith.constant 0 : i32
    return %arg0, %c0_i32, %c0_i32_0 : i32, i32, i32
  }
  func.func @transform_2(%arg0: i32) -> (i32, i32) {
    %c0_i32 = arith.constant 0 : i32
    %c0_i32_0 = arith.constant 0 : i32
    %c0_i32_1 = arith.constant 0 : i32
    return %c0_i32, %c0_i32_0 : i32, i32
  }
  func.func @transform_3(%arg0: i32) -> (i32, i32) {
    %c0_i32 = arith.constant 0 : i32
    %c0_i32_0 = arith.constant 0 : i32
    %c0_i32_1 = arith.constant 0 : i32
    return %c0_i32, %c0_i32_0 : i32, i32
  }
  func.func @transform_4(%arg0: i32) -> (i32, i32) {
    %c0_i32 = arith.constant 0 : i32
    %c0_i32_0 = arith.constant 0 : i32
    %c0_i32_1 = arith.constant 0 : i32
    return %c0_i32, %c0_i32_0 : i32, i32
  }
  func.func @transform_5(%arg0: i32) -> (i32, i32) {
    %c0_i32 = arith.constant 0 : i32
    %c0_i32_0 = arith.constant 0 : i32
    %c0_i32_1 = arith.constant 0 : i32
    return %c0_i32, %c0_i32_0 : i32, i32
  }
  func.func @transform_6(%arg0: i32) -> (i32, i32) {
    %c0_i32 = arith.constant 0 : i32
    %c0_i32_0 = arith.constant 0 : i32
    %c0_i32_1 = arith.constant 0 : i32
    return %c0_i32, %c0_i32_0 : i32, i32
  }
  func.func @transform_7(%arg0: i32) -> (i32, i32) {
    %c0_i32 = arith.constant 0 : i32
    %c0_i32_0 = arith.constant 0 : i32
    %c0_i32_1 = arith.constant 0 : i32
    return %c0_i32, %c0_i32_0 : i32, i32
  }
  func.func @transform_8(%arg0: i32) -> (i32, i32) {
    %c0_i32 = arith.constant 0 : i32
    %c0_i32_0 = arith.constant 0 : i32
    %c0_i32_1 = arith.constant 0 : i32
    return %c0_i32, %c0_i32_0 : i32, i32
  }
  func.func @transform_9(%arg0: i32) -> (i32, i32) {
    %c0_i32 = arith.constant 0 : i32
    %c0_i32_0 = arith.constant 0 : i32
    %c0_i32_1 = arith.constant 0 : i32
    return %c0_i32, %c0_i32_0 : i32, i32
  }
  func.func @transform_10(%arg0: i32) -> (i32, i32) {
    %c0_i32 = arith.constant 0 : i32
    %c0_i32_0 = arith.constant 0 : i32
    %c0_i32_1 = arith.constant 0 : i32
    return %c0_i32, %c0_i32_0 : i32, i32
  }
  func.func @transform_11(%arg0: i32) -> (i32, i32) {
    %c0_i32 = arith.constant 0 : i32
    %c0_i32_0 = arith.constant 0 : i32
    %c0_i32_1 = arith.constant 0 : i32
    return %c0_i32, %c0_i32_0 : i32, i32
  }
  func.func @transform_12(%arg0: i32) -> (i32, i32) {
    %c0_i32 = arith.constant 0 : i32
    %c0_i32_0 = arith.constant 0 : i32
    %c0_i32_1 = arith.constant 0 : i32
    return %c0_i32, %c0_i32_0 : i32, i32
  }
  func.func @transform_13(%arg0: i32) -> (i32, i32) {
    %c0_i32 = arith.constant 0 : i32
    %c0_i32_0 = arith.constant 0 : i32
    %c0_i32_1 = arith.constant 0 : i32
    return %c0_i32, %c0_i32_0 : i32, i32
  }
  func.func @transform_14(%arg0: i32) -> (i32, i32) {
    %c0_i32 = arith.constant 0 : i32
    %c0_i32_0 = arith.constant 0 : i32
    %c0_i32_1 = arith.constant 0 : i32
    return %c0_i32, %c0_i32_0 : i32, i32
  }
  func.func @transform_15(%arg0: i32) -> (i32, i32) {
    %c0_i32 = arith.constant 0 : i32
    %c0_i32_0 = arith.constant 0 : i32
    %c0_i32_1 = arith.constant 0 : i32
    return %c0_i32, %c0_i32_0 : i32, i32
  }
  func.func @transform_16(%arg0: i32) -> (i32, i32, i32) {
    %c0_i32 = arith.constant 0 : i32
    %c0_i32_0 = arith.constant 0 : i32
    %c0_i32_1 = arith.constant 0 : i32
    return %arg0, %c0_i32, %c0_i32_0 : i32, i32, i32
  }
}

</mosaic_0001>

<llo_original>
// kernel: tpu_custom_call.1
$region0: #{tpu_custom_call.1}
  #allocation0 [shape = 'u32[]', space=smem, size = 0x4, offset = 0x4, fixed_abs, tag = 'smem constant byte address 0x4 - core index']
  #allocation1 [shape = 'u32[144,128]{1,0:T(1,128)}', space=vmem, size = 0x12000, scoped, tag = 'internal scratch']
  %s0 = inlined_call_operand.vmem [shape: f32[512,4], index: 0, kind: input, shape index: {}]
  %s1 = inlined_call_operand.vmem [shape: f32[512,4], index: 1, kind: output, shape index: {}]
  %s2 = sld [smem:[#allocation0]]
  $region14: #{tpu_custom_call.1} parent=0
    _
  %s4 = ssub.s32 1, %s2
  %s5 = scalar_select 0, %s4, %s2
  // Predicated region
  $region2: #{tpu_custom_call.1} parent=0 // pred_check
    _
  $region3: #{tpu_custom_call.1} parent=0 // pred_check_branch
    %7 = sbr.rel (0) target = $region5
  $region4: #{tpu_custom_call.1} parent=0 // pred_region
    _
  $region5: #{tpu_custom_call.1} parent=0 // pred_fallthru
    _
  %v8 = vld [vmem:[%s0] sm:$0xff]
  %v9 = vld [vmem:[%s0 + $0x8] sm:$0xff]
  %v10 = vld [vmem:[%s0 + $0x10] sm:$0xff]
  %v11 = vld [vmem:[%s0 + $0x18] sm:$0xff]
  %v12 = vld [vmem:[%s0 + $0x20] sm:$0xff]
  %v13 = vld [vmem:[%s0 + $0x28] sm:$0xff]
  %v14 = vld [vmem:[%s0 + $0x30] sm:$0xff]
  %v15 = vld [vmem:[%s0 + $0x38] sm:$0xff]
  %v16 = vld [vmem:[%s0 + $0x40] sm:$0xff]
  %v17 = vld [vmem:[%s0 + $0x48] sm:$0xff]
  %v18 = vld [vmem:[%s0 + $0x50] sm:$0xff]
  %v19 = vld [vmem:[%s0 + $0x58] sm:$0xff]
  %v20 = vld [vmem:[%s0 + $0x60] sm:$0xff]
  %v21 = vld [vmem:[%s0 + $0x68] sm:$0xff]
  %v22 = vld [vmem:[%s0 + $0x70] sm:$0xff]
  %v23 = vld [vmem:[%s0 + $0x78] sm:$0xff]
  %v24 = vld [vmem:[%s0 + $0x80] sm:$0xff]
  %v25 = vld [vmem:[%s0 + $0x88] sm:$0xff]
  %v26 = vld [vmem:[%s0 + $0x90] sm:$0xff]
  %v27 = vld [vmem:[%s0 + $0x98] sm:$0xff]
  %v28 = vld [vmem:[%s0 + $0xa0] sm:$0xff]
  %v29 = vld [vmem:[%s0 + $0xa8] sm:$0xff]
  %v30 = vld [vmem:[%s0 + $0xb0] sm:$0xff]
  %v31 = vld [vmem:[%s0 + $0xb8] sm:$0xff]
  %v32 = vld [vmem:[%s0 + $0xc0] sm:$0xff]
  %v33 = vld [vmem:[%s0 + $0xc8] sm:$0xff]
  %v34 = vld [vmem:[%s0 + $0xd0] sm:$0xff]
  %v35 = vld [vmem:[%s0 + $0xd8] sm:$0xff]
  %v36 = vld [vmem:[%s0 + $0xe0] sm:$0xff]
  %v37 = vld [vmem:[%s0 + $0xe8] sm:$0xff]
  %v38 = vld [vmem:[%s0 + $0xf0] sm:$0xff]
  %v39 = vld [vmem:[%s0 + $0xf8] sm:$0xff]
  %v40 = vld [vmem:[%s0 + $0x100] sm:$0xff]
  %v41 = vld [vmem:[%s0 + $0x108] sm:$0xff]
  %v42 = vld [vmem:[%s0 + $0x110] sm:$0xff]
  %v43 = vld [vmem:[%s0 + $0x118] sm:$0xff]
  %v44 = vld [vmem:[%s0 + $0x120] sm:$0xff]
  %v45 = vld [vmem:[%s0 + $0x128] sm:$0xff]
  %v46 = vld [vmem:[%s0 + $0x130] sm:$0xff]
  %v47 = vld [vmem:[%s0 + $0x138] sm:$0xff]
  %v48 = vld [vmem:[%s0 + $0x140] sm:$0xff]
  %v49 = vld [vmem:[%s0 + $0x148] sm:$0xff]
  %v50 = vld [vmem:[%s0 + $0x150] sm:$0xff]
  %v51 = vld [vmem:[%s0 + $0x158] sm:$0xff]
  %v52 = vld [vmem:[%s0 + $0x160] sm:$0xff]
  %v53 = vld [vmem:[%s0 + $0x168] sm:$0xff]
  %v54 = vld [vmem:[%s0 + $0x170] sm:$0xff]
  %v55 = vld [vmem:[%s0 + $0x178] sm:$0xff]
  %v56 = vld [vmem:[%s0 + $0x180] sm:$0xff]
  %v57 = vld [vmem:[%s0 + $0x188] sm:$0xff]
  %v58 = vld [vmem:[%s0 + $0x190] sm:$0xff]
  %v59 = vld [vmem:[%s0 + $0x198] sm:$0xff]
  %v60 = vld [vmem:[%s0 + $0x1a0] sm:$0xff]
  %v61 = vld [vmem:[%s0 + $0x1a8] sm:$0xff]
  %v62 = vld [vmem:[%s0 + $0x1b0] sm:$0xff]
  %v63 = vld [vmem:[%s0 + $0x1b8] sm:$0xff]
  %v64 = vld [vmem:[%s0 + $0x1c0] sm:$0xff]
  %v65 = vld [vmem:[%s0 + $0x1c8] sm:$0xff]
  %v66 = vld [vmem:[%s0 + $0x1d0] sm:$0xff]
  %v67 = vld [vmem:[%s0 + $0x1d8] sm:$0xff]
  %v68 = vld [vmem:[%s0 + $0x1e0] sm:$0xff]
  %v69 = vld [vmem:[%s0 + $0x1e8] sm:$0xff]
  %v70 = vld [vmem:[%s0 + $0x1f0] sm:$0xff]
  %v71 = vld [vmem:[%s0 + $0x1f8] sm:$0xff]
  %v72 = vrot.slane %v8, 7
  %v73 = vrot.slane %v9, 7
  %v74 = vrot.slane %v10, 7
  %v75 = vrot.slane %v11, 7
  %v76 = vrot.slane %v12, 7
  %v77 = vrot.slane %v13, 7
  %v78 = vrot.slane %v14, 7
  %v79 = vrot.slane %v15, 7
  %v80 = vrot.slane %v16, 7
  %v81 = vrot.slane %v17, 7
  %v82 = vrot.slane %v18, 7
  %v83 = vrot.slane %v19, 7
  %v84 = vrot.slane %v20, 7
  %v85 = vrot.slane %v21, 7
  %v86 = vrot.slane %v22, 7
  %v87 = vrot.slane %v23, 7
  %v88 = vrot.slane %v24, 7
  %v89 = vrot.slane %v25, 7
  %v90 = vrot.slane %v26, 7
  %v91 = vrot.slane %v27, 7
  %v92 = vrot.slane %v28, 7
  %v93 = vrot.slane %v29, 7
  %v94 = vrot.slane %v30, 7
  %v95 = vrot.slane %v31, 7
  %v96 = vrot.slane %v32, 7
  %v97 = vrot.slane %v33, 7
  %v98 = vrot.slane %v34, 7
  %v99 = vrot.slane %v35, 7
  %v100 = vrot.slane %v36, 7
  %v101 = vrot.slane %v37, 7
  %v102 = vrot.slane %v38, 7
  %v103 = vrot.slane %v39, 7
  %v104 = vrot.slane %v40, 7
  %v105 = vrot.slane %v41, 7
  %v106 = vrot.slane %v42, 7
  %v107 = vrot.slane %v43, 7
  %v108 = vrot.slane %v44, 7
  %v109 = vrot.slane %v45, 7
  %v110 = vrot.slane %v46, 7
  %v111 = vrot.slane %v47, 7
  %v112 = vrot.slane %v48, 7
  %v113 = vrot.slane %v49, 7
  %v114 = vrot.slane %v50, 7
  %v115 = vrot.slane %v51, 7
  %v116 = vrot.slane %v52, 7
  %v117 = vrot.slane %v53, 7
  %v118 = vrot.slane %v54, 7
  %v119 = vrot.slane %v55, 7
  %v120 = vrot.slane %v56, 7
  %v121 = vrot.slane %v57, 7
  %v122 = vrot.slane %v58, 7
  %v123 = vrot.slane %v59, 7
  %v124 = vrot.slane %v60, 7
  %v125 = vrot.slane %v61, 7
  %v126 = vrot.slane %v62, 7
  %v127 = vrot.slane %v63, 7
  %v128 = vrot.slane %v64, 7
  %v129 = vrot.slane %v65, 7
  %v130 = vrot.slane %v66, 7
  %v131 = vrot.slane %v67, 7
  %v132 = vrot.slane %v68, 7
  %v133 = vrot.slane %v69, 7
  %v134 = vrot.slane %v70, 7
  %v135 = vrot.slane %v71, 7
  %v136 = vlaneseq
  %v137 = vshrl.u32 %v136, 7
  %vm138 = vcmp.lt.s32.totalorder %v137, 1
  %v139 = vsel %vm138, %v134, %v135
  %v140 = vsel %vm138, %v133, %v134
  %v141 = vsel %vm138, %v132, %v133
  %v142 = vsel %vm138, %v131, %v132
  %v143 = vsel %vm138, %v130, %v131
  %v144 = vsel %vm138, %v129, %v130
  %v145 = vsel %vm138, %v128, %v129
  %v146 = vsel %vm138, %v127, %v128
  %v147 = vsel %vm138, %v126, %v127
  %v148 = vsel %vm138, %v125, %v126
  %v149 = vsel %vm138, %v124, %v125
  %v150 = vsel %vm138, %v123, %v124
  %v151 = vsel %vm138, %v122, %v123
  %v152 = vsel %vm138, %v121, %v122
  %v153 = vsel %vm138, %v120, %v121
  %v154 = vsel %vm138, %v119, %v120
  %v155 = vsel %vm138, %v118, %v119
  %v156 = vsel %vm138, %v117, %v118
  %v157 = vsel %vm138, %v116, %v117
  %v158 = vsel %vm138, %v115, %v116
  %v159 = vsel %vm138, %v114, %v115
  %v160 = vsel %vm138, %v113, %v114
  %v161 = vsel %vm138, %v112, %v113
  %v162 = vsel %vm138, %v111, %v112
  %v163 = vsel %vm138, %v110, %v111
  %v164 = vsel %vm138, %v109, %v110
  %v165 = vsel %vm138, %v108, %v109
  %v166 = vsel %vm138, %v107, %v108
  %v167 = vsel %vm138, %v106, %v107
  %v168 = vsel %vm138, %v105, %v106
  %v169 = vsel %vm138, %v104, %v105
  %v170 = vsel %vm138, %v103, %v104
  %v171 = vsel %vm138, %v102, %v103
  %v172 = vsel %vm138, %v101, %v102
  %v173 = vsel %vm138, %v100, %v101
  %v174 = vsel %vm138, %v99, %v100
  %v175 = vsel %vm138, %v98, %v99
  %v176 = vsel %vm138, %v97, %v98
  %v177 = vsel %vm138, %v96, %v97
  %v178 = vsel %vm138, %v95, %v96
  %v179 = vsel %vm138, %v94, %v95
  %v180 = vsel %vm138, %v93, %v94
  %v181 = vsel %vm138, %v92, %v93
  %v182 = vsel %vm138, %v91, %v92
  %v183 = vsel %vm138, %v90, %v91
  %v184 = vsel %vm138, %v89, %v90
  %v185 = vsel %vm138, %v88, %v89
  %v186 = vsel %vm138, %v87, %v88
  %v187 = vsel %vm138, %v86, %v87
  %v188 = vsel %vm138, %v85, %v86
  %v189 = vsel %vm138, %v84, %v85
  %v190 = vsel %vm138, %v83, %v84
  %v191 = vsel %vm138, %v82, %v83
  %v192 = vsel %vm138, %v81, %v82
  %v193 = vsel %vm138, %v80, %v81
  %v194 = vsel %vm138, %v79, %v80
  %v195 = vsel %vm138, %v78, %v79
  %v196 = vsel %vm138, %v77, %v78
  %v197 = vsel %vm138, %v76, %v77
  %v198 = vsel %vm138, %v75, %v76
  %v199 = vsel %vm138, %v74, %v75
  %v200 = vsel %vm138, %v73, %v74
  %v201 = vsel %vm138, %v72, %v73
  %v202 = vsel %vm138, %v135, %v72
  %vm203 = vcmask 31744
  %204 = vst.msk [vmem:[%s1] sm:$0xff] %vm203, %v140
  %205 = vst.msk [vmem:[%s1 + $0x8] sm:$0xff] %vm203, %v139
  %206 = vst.msk [vmem:[%s1 + $0x10] sm:$0xff] %vm203, %v202
  %207 = vst.msk [vmem:[%s1 + $0x18] sm:$0xff] %vm203, %v201
  %208 = vst.msk [vmem:[%s1 + $0x20] sm:$0xff] %vm203, %v200
  %209 = vst.msk [vmem:[%s1 + $0x28] sm:$0xff] %vm203, %v199
  %210 = vst.msk [vmem:[%s1 + $0x30] sm:$0xff] %vm203, %v198
  %211 = vst.msk [vmem:[%s1 + $0x38] sm:$0xff] %vm203, %v197
  %212 = vst.msk [vmem:[%s1 + $0x40] sm:$0xff] %vm203, %v196
  %213 = vst.msk [vmem:[%s1 + $0x48] sm:$0xff] %vm203, %v195
  %214 = vst.msk [vmem:[%s1 + $0x50] sm:$0xff] %vm203, %v194
  %215 = vst.msk [vmem:[%s1 + $0x58] sm:$0xff] %vm203, %v193
  %216 = vst.msk [vmem:[%s1 + $0x60] sm:$0xff] %vm203, %v192
  %217 = vst.msk [vmem:[%s1 + $0x68] sm:$0xff] %vm203, %v191
  %218 = vst.msk [vmem:[%s1 + $0x70] sm:$0xff] %vm203, %v190
  %219 = vst.msk [vmem:[%s1 + $0x78] sm:$0xff] %vm203, %v189
  %220 = vst.msk [vmem:[%s1 + $0x80] sm:$0xff] %vm203, %v188
  %221 = vst.msk [vmem:[%s1 + $0x88] sm:$0xff] %vm203, %v187
  %222 = vst.msk [vmem:[%s1 + $0x90] sm:$0xff] %vm203, %v186
  %223 = vst.msk [vmem:[%s1 + $0x98] sm:$0xff] %vm203, %v185
  %224 = vst.msk [vmem:[%s1 + $0xa0] sm:$0xff] %vm203, %v184
  %225 = vst.msk [vmem:[%s1 + $0xa8] sm:$0xff] %vm203, %v183
  %226 = vst.msk [vmem:[%s1 + $0xb0] sm:$0xff] %vm203, %v182
  %227 = vst.msk [vmem:[%s1 + $0xb8] sm:$0xff] %vm203, %v181
  %228 = vst.msk [vmem:[%s1 + $0xc0] sm:$0xff] %vm203, %v180
  %229 = vst.msk [vmem:[%s1 + $0xc8] sm:$0xff] %vm203, %v179
  %230 = vst.msk [vmem:[%s1 + $0xd0] sm:$0xff] %vm203, %v178
  %231 = vst.msk [vmem:[%s1 + $0xd8] sm:$0xff] %vm203, %v177
  %232 = vst.msk [vmem:[%s1 + $0xe0] sm:$0xff] %vm203, %v176
  %233 = vst.msk [vmem:[%s1 + $0xe8] sm:$0xff] %vm203, %v175
  %234 = vst.msk [vmem:[%s1 + $0xf0] sm:$0xff] %vm203, %v174
  %235 = vst.msk [vmem:[%s1 + $0xf8] sm:$0xff] %vm203, %v173
  %236 = vst.msk [vmem:[%s1 + $0x100] sm:$0xff] %vm203, %v172
  %237 = vst.msk [vmem:[%s1 + $0x108] sm:$0xff] %vm203, %v171
  %238 = vst.msk [vmem:[%s1 + $0x110] sm:$0xff] %vm203, %v170
  %239 = vst.msk [vmem:[%s1 + $0x118] sm:$0xff] %vm203, %v169
  %240 = vst.msk [vmem:[%s1 + $0x120] sm:$0xff] %vm203, %v168
  %241 = vst.msk [vmem:[%s1 + $0x128] sm:$0xff] %vm203, %v167
  %242 = vst.msk [vmem:[%s1 + $0x130] sm:$0xff] %vm203, %v166
  %243 = vst.msk [vmem:[%s1 + $0x138] sm:$0xff] %vm203, %v165
  %244 = vst.msk [vmem:[%s1 + $0x140] sm:$0xff] %vm203, %v164
  %245 = vst.msk [vmem:[%s1 + $0x148] sm:$0xff] %vm203, %v163
  %246 = vst.msk [vmem:[%s1 + $0x150] sm:$0xff] %vm203, %v162
  %247 = vst.msk [vmem:[%s1 + $0x158] sm:$0xff] %vm203, %v161
  %248 = vst.msk [vmem:[%s1 + $0x160] sm:$0xff] %vm203, %v160
  %249 = vst.msk [vmem:[%s1 + $0x168] sm:$0xff] %vm203, %v159
  %250 = vst.msk [vmem:[%s1 + $0x170] sm:$0xff] %vm203, %v158
  %251 = vst.msk [vmem:[%s1 + $0x178] sm:$0xff] %vm203, %v157
  %252 = vst.msk [vmem:[%s1 + $0x180] sm:$0xff] %vm203, %v156
  %253 = vst.msk [vmem:[%s1 + $0x188] sm:$0xff] %vm203, %v155
  %254 = vst.msk [vmem:[%s1 + $0x190] sm:$0xff] %vm203, %v154
  %255 = vst.msk [vmem:[%s1 + $0x198] sm:$0xff] %vm203, %v153
  %256 = vst.msk [vmem:[%s1 + $0x1a0] sm:$0xff] %vm203, %v152
  %257 = vst.msk [vmem:[%s1 + $0x1a8] sm:$0xff] %vm203, %v151
  %258 = vst.msk [vmem:[%s1 + $0x1b0] sm:$0xff] %vm203, %v150
  %259 = vst.msk [vmem:[%s1 + $0x1b8] sm:$0xff] %vm203, %v149
  %260 = vst.msk [vmem:[%s1 + $0x1c0] sm:$0xff] %vm203, %v148
  %261 = vst.msk [vmem:[%s1 + $0x1c8] sm:$0xff] %vm203, %v147
  %262 = vst.msk [vmem:[%s1 + $0x1d0] sm:$0xff] %vm203, %v146
  %263 = vst.msk [vmem:[%s1 + $0x1d8] sm:$0xff] %vm203, %v145
  %264 = vst.msk [vmem:[%s1 + $0x1e0] sm:$0xff] %vm203, %v144
  %265 = vst.msk [vmem:[%s1 + $0x1e8] sm:$0xff] %vm203, %v143
  %266 = vst.msk [vmem:[%s1 + $0x1f0] sm:$0xff] %vm203, %v142
  %267 = vst.msk [vmem:[%s1 + $0x1f8] sm:$0xff] %vm203, %v141
  // Predicated region
  $region6: #{tpu_custom_call.1} parent=0 // pred_check
    _
  $region7: #{tpu_custom_call.1} parent=0 // pred_check_branch
    %269 = sbr.rel (0) target = $region9
  $region8: #{tpu_custom_call.1} parent=0 // pred_region
    _
  $region9: #{tpu_custom_call.1} parent=0 // pred_fallthru
    _
  // Predicated region
  $region10: #{tpu_custom_call.1} parent=0 // pred_check
    _
  $region11: #{tpu_custom_call.1} parent=0 // pred_check_branch
    %271 = sbr.rel (0) target = $region13
  $region12: #{tpu_custom_call.1} parent=0 // pred_region
    _
  $region13: #{tpu_custom_call.1} parent=0 // pred_fallthru
    _

// kernel: synthesis_model_forward.1
$region0: #{synthesis_model_forward.1}
  #allocation0 [shape = 'u32[]', space=smem, size = 0x4, offset = 0x4, fixed_abs, tag = 'smem constant byte address 0x4 - core index']
  #allocation1 [shape = 'u32[144,128]{1,0:T(1,128)}', space=vmem, size = 0x12000, scoped, tag = 'internal scratch']
  %s0 = inlined_call_operand.vmem [shape: f32[2,256,4], index: 0, kind: input, shape index: {}]
  %s1 = inlined_call_operand.vmem [shape: f32[2,256,4], index: 1, kind: input, shape index: {}]
  %s2 = inlined_call_operand.vmem [shape: f32[256,36], index: 2, kind: input, shape index: {}]
  %s3 = inlined_call_operand.vmem [shape: f32[256,288], index: 3, kind: input, shape index: {}]
  %s4 = inlined_call_operand.vmem [shape: f32[512,36], index: 4, kind: input, shape index: {}]
  %s5 = inlined_call_operand.vmem [shape: f32[512,72], index: 5, kind: input, shape index: {}]
  %s6 = inlined_call_operand.vmem [shape: bf16[36,32], index: 6, kind: input, shape index: {}]
  %s7 = inlined_call_operand.vmem [shape: f32[1,32], index: 7, kind: input, shape index: {}]
  %s8 = inlined_call_operand.vmem [shape: bf16[288,32], index: 8, kind: input, shape index: {}]
  %s9 = inlined_call_operand.vmem [shape: f32[1,32], index: 9, kind: input, shape index: {}]
  %s10 = inlined_call_operand.vmem [shape: bf16[288,8], index: 10, kind: input, shape index: {}]
  %s11 = inlined_call_operand.vmem [shape: f32[1,8], index: 11, kind: input, shape index: {}]
  %s12 = inlined_call_operand.vmem [shape: bf16[36,8], index: 12, kind: input, shape index: {}]
  %s13 = inlined_call_operand.vmem [shape: f32[1,8], index: 13, kind: input, shape index: {}]
  %s14 = inlined_call_operand.vmem [shape: bf16[72,16], index: 14, kind: input, shape index: {}]
  %s15 = inlined_call_operand.vmem [shape: f32[1,16], index: 15, kind: input, shape index: {}]
  %s16 = inlined_call_operand.vmem [shape: bf16[2,256,56], index: 16, kind: output, shape index: {}]
  %s17 = sld [smem:[#allocation0]]
  $region97: #{synthesis_model_forward.1} parent=0
    _
  %s19 = ssub.s32 1, %s17
  %s20 = scalar_select 0, %s19, %s17
  loop: start=0, step=1, limit=4
  $region2: #{synthesis_model_forward.1} parent=0 // loop_pre_header
    _
  $region3: #{synthesis_model_forward.1} parent=0 // loop_header
    %s22 = sphi 0, %s26
    %p23 = scmp.ge.s32.totalorder %s22, 4
    %s32 = sphi 0, %s34
    %s35 = sphi 0, %s32
    %s36 = sphi 0, %s35
    %s52 = sphi 0, %s36
    %s58 = sphi 0, %s60
    %s61 = sphi 0, %s58
    %s62 = sphi 0, %s61
    %s78 = sphi 0, %s62
    %s82 = sphi 0, %s82
    %s84 = sphi 0, %s82
    %s85 = sphi 0, %s84
    %s99 = sphi 0, %s85
    %s103 = sphi 0, %s103
    %s105 = sphi 0, %s103
    %s106 = sphi 0, %s105
    %s120 = sphi 0, %s106
    %s124 = sphi 0, %s124
    %s126 = sphi 0, %s124
    %s127 = sphi 0, %s126
    %s141 = sphi 0, %s127
    %s145 = sphi 0, %s145
    %s147 = sphi 0, %s145
    %s148 = sphi 0, %s147
    %s162 = sphi 0, %s148
    %s166 = sphi 0, %s166
    %s168 = sphi 0, %s166
    %s169 = sphi 0, %s168
    %s183 = sphi 0, %s169
    %s187 = sphi 0, %s187
    %s189 = sphi 0, %s187
    %s190 = sphi 0, %s189
    %s204 = sphi 0, %s190
    %s208 = sphi 0, %s208
    %s210 = sphi 0, %s208
    %s211 = sphi 0, %s210
    %s225 = sphi 0, %s211
    %s229 = sphi 0, %s229
    %s231 = sphi 0, %s229
    %s232 = sphi 0, %s231
    %s246 = sphi 0, %s232
    %s250 = sphi 0, %s250
    %s252 = sphi 0, %s250
    %s253 = sphi 0, %s252
    %s267 = sphi 0, %s253
    %s271 = sphi 0, %s271
    %s273 = sphi 0, %s271
    %s274 = sphi 0, %s273
    %s288 = sphi 0, %s274
    %s292 = sphi 0, %s292
    %s294 = sphi 0, %s292
    %s295 = sphi 0, %s294
    %s309 = sphi 0, %s295
    %s313 = sphi 0, %s313
    %s315 = sphi 0, %s313
    %s316 = sphi 0, %s315
    %s330 = sphi 0, %s316
    %s334 = sphi 0, %s334
    %s336 = sphi 0, %s334
    %s337 = sphi 0, %s336
    %s351 = sphi 0, %s337
    %s355 = sphi 0, %s355
    %s357 = sphi 0, %s355
    %s358 = sphi 0, %s357
    %s372 = sphi 0, %s358
    %s378 = sphi 0, %s380
    %s381 = sphi 0, %s378
    %s382 = sphi 0, %s381
    %s398 = sphi 0, %s382
  $region4: #{synthesis_model_forward.1} parent=0 // loop_header_branch
    %25 = sbr.rel (%p23) target = $region8
  $region5: #{synthesis_model_forward.1} parent=0 // loop_body
    %s27 = ssub.s32 %s22, 1
    %s28 = ssub.s32 %s22, 2
    %s29 = sadd.s32 %s22, 1
    %s30 = ssub.s32 %s22, %s29
    %p31 = scmp.eq.s32.totalorder %s30, 0
    %s33 = sadd.s32 %s32, 1
    %s34 = scalar_select %p31, %s32, %s33
    %p37 = pneg %p31
    %p38 = scmp.eq.s32.totalorder %s22, 1
    %p39 = por %p37, %p38
    %p40 = scmp.ne.s32.totalorder %s32, %s35
    %p41 = scmp.eq.s32.totalorder %s22, 0
    %p42 = por %p40, %p41
    %p43 = scmp.ne.s32.totalorder %s32, %s35
    %p44 = scmp.eq.s32.totalorder %s27, 1
    %p45 = por %p43, %p44
    %p46 = scmp.ne.s32.totalorder %s35, %s36
    %p47 = scmp.eq.s32.totalorder %s27, 0
    %p48 = por %p46, %p47
    %p49 = scmp.ne.s32.totalorder %s35, %s36
    %p50 = scmp.eq.s32.totalorder %s28, 1
    %p51 = por %p49, %p50
    %p53 = scmp.ne.s32.totalorder %s36, %s52
    %p54 = scmp.eq.s32.totalorder %s28, 0
    %p55 = por %p53, %p54
    %s56 = ssub.s32 %s22, %s29
    %p57 = scmp.eq.s32.totalorder %s56, 0
    %s59 = sadd.s32 %s58, 1
    %s60 = scalar_select %p57, %s58, %s59
    %p63 = pneg %p57
    %p64 = scmp.eq.s32.totalorder %s22, 1
    %p65 = por %p63, %p64
    %p66 = scmp.ne.s32.totalorder %s58, %s61
    %p67 = scmp.eq.s32.totalorder %s22, 0
    %p68 = por %p66, %p67
    %p69 = scmp.ne.s32.totalorder %s58, %s61
    %p70 = scmp.eq.s32.totalorder %s27, 1
    %p71 = por %p69, %p70
    %p72 = scmp.ne.s32.totalorder %s61, %s62
    %p73 = scmp.eq.s32.totalorder %s27, 0
    %p74 = por %p72, %p73
    %p75 = scmp.ne.s32.totalorder %s61, %s62
    %p76 = scmp.eq.s32.totalorder %s28, 1
    %p77 = por %p75, %p76
    %p79 = scmp.ne.s32.totalorder %s62, %s78
    %p80 = scmp.eq.s32.totalorder %s28, 0
    %p81 = por %p79, %p80
    %s83 = sadd.s32 %s82, 1
    %p86 = scmp.eq.s32.totalorder %s22, 1
    %p87 = scmp.ne.s32.totalorder %s82, %s84
    %p88 = scmp.eq.s32.totalorder %s22, 0
    %p89 = por %p87, %p88
    %p90 = scmp.ne.s32.totalorder %s82, %s84
    %p91 = scmp.eq.s32.totalorder %s27, 1
    %p92 = por %p90, %p91
    %p93 = scmp.ne.s32.totalorder %s84, %s85
    %p94 = scmp.eq.s32.totalorder %s27, 0
    %p95 = por %p93, %p94
    %p96 = scmp.ne.s32.totalorder %s84, %s85
    %p97 = scmp.eq.s32.totalorder %s28, 1
    %p98 = por %p96, %p97
    %p100 = scmp.ne.s32.totalorder %s85, %s99
    %p101 = scmp.eq.s32.totalorder %s28, 0
    %p102 = por %p100, %p101
    %s104 = sadd.s32 %s103, 1
    %p107 = scmp.eq.s32.totalorder %s22, 1
    %p108 = scmp.ne.s32.totalorder %s103, %s105
    %p109 = scmp.eq.s32.totalorder %s22, 0
    %p110 = por %p108, %p109
    %p111 = scmp.ne.s32.totalorder %s103, %s105
    %p112 = scmp.eq.s32.totalorder %s27, 1
    %p113 = por %p111, %p112
    %p114 = scmp.ne.s32.totalorder %s105, %s106
    %p115 = scmp.eq.s32.totalorder %s27, 0
    %p116 = por %p114, %p115
    %p117 = scmp.ne.s32.totalorder %s105, %s106
    %p118 = scmp.eq.s32.totalorder %s28, 1
    %p119 = por %p117, %p118
    %p121 = scmp.ne.s32.totalorder %s106, %s120
    %p122 = scmp.eq.s32.totalorder %s28, 0
    %p123 = por %p121, %p122
    %s125 = sadd.s32 %s124, 1
    %p128 = scmp.eq.s32.totalorder %s22, 1
    %p129 = scmp.ne.s32.totalorder %s124, %s126
    %p130 = scmp.eq.s32.totalorder %s22, 0
    %p131 = por %p129, %p130
    %p132 = scmp.ne.s32.totalorder %s124, %s126
    %p133 = scmp.eq.s32.totalorder %s27, 1
    %p134 = por %p132, %p133
    %p135 = scmp.ne.s32.totalorder %s126, %s127
    %p136 = scmp.eq.s32.totalorder %s27, 0
    %p137 = por %p135, %p136
    %p138 = scmp.ne.s32.totalorder %s126, %s127
    %p139 = scmp.eq.s32.totalorder %s28, 1
    %p140 = por %p138, %p139
    %p142 = scmp.ne.s32.totalorder %s127, %s141
    %p143 = scmp.eq.s32.totalorder %s28, 0
    %p144 = por %p142, %p143
    %s146 = sadd.s32 %s145, 1
    %p149 = scmp.eq.s32.totalorder %s22, 1
    %p150 = scmp.ne.s32.totalorder %s145, %s147
    %p151 = scmp.eq.s32.totalorder %s22, 0
    %p152 = por %p150, %p151
    %p153 = scmp.ne.s32.totalorder %s145, %s147
    %p154 = scmp.eq.s32.totalorder %s27, 1
    %p155 = por %p153, %p154
    %p156 = scmp.ne.s32.totalorder %s147, %s148
    %p157 = scmp.eq.s32.totalorder %s27, 0
    %p158 = por %p156, %p157
    %p159 = scmp.ne.s32.totalorder %s147, %s148
    %p160 = scmp.eq.s32.totalorder %s28, 1
    %p161 = por %p159, %p160
    %p163 = scmp.ne.s32.totalorder %s148, %s162
    %p164 = scmp.eq.s32.totalorder %s28, 0
    %p165 = por %p163, %p164
    %s167 = sadd.s32 %s166, 1
    %p170 = scmp.eq.s32.totalorder %s22, 1
    %p171 = scmp.ne.s32.totalorder %s166, %s168
    %p172 = scmp.eq.s32.totalorder %s22, 0
    %p173 = por %p171, %p172
    %p174 = scmp.ne.s32.totalorder %s166, %s168
    %p175 = scmp.eq.s32.totalorder %s27, 1
    %p176 = por %p174, %p175
    %p177 = scmp.ne.s32.totalorder %s168, %s169
    %p178 = scmp.eq.s32.totalorder %s27, 0
    %p179 = por %p177, %p178
    %p180 = scmp.ne.s32.totalorder %s168, %s169
    %p181 = scmp.eq.s32.totalorder %s28, 1
    %p182 = por %p180, %p181
    %p184 = scmp.ne.s32.totalorder %s169, %s183
    %p185 = scmp.eq.s32.totalorder %s28, 0
    %p186 = por %p184, %p185
    %s188 = sadd.s32 %s187, 1
    %p191 = scmp.eq.s32.totalorder %s22, 1
    %p192 = scmp.ne.s32.totalorder %s187, %s189
    %p193 = scmp.eq.s32.totalorder %s22, 0
    %p194 = por %p192, %p193
    %p195 = scmp.ne.s32.totalorder %s187, %s189
    %p196 = scmp.eq.s32.totalorder %s27, 1
    %p197 = por %p195, %p196
    %p198 = scmp.ne.s32.totalorder %s189, %s190
    %p199 = scmp.eq.s32.totalorder %s27, 0
    %p200 = por %p198, %p199
    %p201 = scmp.ne.s32.totalorder %s189, %s190
    %p202 = scmp.eq.s32.totalorder %s28, 1
    %p203 = por %p201, %p202
    %p205 = scmp.ne.s32.totalorder %s190, %s204
    %p206 = scmp.eq.s32.totalorder %s28, 0
    %p207 = por %p205, %p206
    %s209 = sadd.s32 %s208, 1
    %p212 = scmp.eq.s32.totalorder %s22, 1
    %p213 = scmp.ne.s32.totalorder %s208, %s210
    %p214 = scmp.eq.s32.totalorder %s22, 0
    %p215 = por %p213, %p214
    %p216 = scmp.ne.s32.totalorder %s208, %s210
    %p217 = scmp.eq.s32.totalorder %s27, 1
    %p218 = por %p216, %p217
    %p219 = scmp.ne.s32.totalorder %s210, %s211
    %p220 = scmp.eq.s32.totalorder %s27, 0
    %p221 = por %p219, %p220
    %p222 = scmp.ne.s32.totalorder %s210, %s211
    %p223 = scmp.eq.s32.totalorder %s28, 1
    %p224 = por %p222, %p223
    %p226 = scmp.ne.s32.totalorder %s211, %s225
    %p227 = scmp.eq.s32.totalorder %s28, 0
    %p228 = por %p226, %p227
    %s230 = sadd.s32 %s229, 1
    %p233 = scmp.eq.s32.totalorder %s22, 1
    %p234 = scmp.ne.s32.totalorder %s229, %s231
    %p235 = scmp.eq.s32.totalorder %s22, 0
    %p236 = por %p234, %p235
    %p237 = scmp.ne.s32.totalorder %s229, %s231
    %p238 = scmp.eq.s32.totalorder %s27, 1
    %p239 = por %p237, %p238
    %p240 = scmp.ne.s32.totalorder %s231, %s232
    %p241 = scmp.eq.s32.totalorder %s27, 0
    %p242 = por %p240, %p241
    %p243 = scmp.ne.s32.totalorder %s231, %s232
    %p244 = scmp.eq.s32.totalorder %s28, 1
    %p245 = por %p243, %p244
    %p247 = scmp.ne.s32.totalorder %s232, %s246
    %p248 = scmp.eq.s32.totalorder %s28, 0
    %p249 = por %p247, %p248
    %s251 = sadd.s32 %s250, 1
    %p254 = scmp.eq.s32.totalorder %s22, 1
    %p255 = scmp.ne.s32.totalorder %s250, %s252
    %p256 = scmp.eq.s32.totalorder %s22, 0
    %p257 = por %p255, %p256
    %p258 = scmp.ne.s32.totalorder %s250, %s252
    %p259 = scmp.eq.s32.totalorder %s27, 1
    %p260 = por %p258, %p259
    %p261 = scmp.ne.s32.totalorder %s252, %s253
    %p262 = scmp.eq.s32.totalorder %s27, 0
    %p263 = por %p261, %p262
    %p264 = scmp.ne.s32.totalorder %s252, %s253
    %p265 = scmp.eq.s32.totalorder %s28, 1
    %p266 = por %p264, %p265
    %p268 = scmp.ne.s32.totalorder %s253, %s267
    %p269 = scmp.eq.s32.totalorder %s28, 0
    %p270 = por %p268, %p269
    %s272 = sadd.s32 %s271, 1
    %p275 = scmp.eq.s32.totalorder %s22, 1
    %p276 = scmp.ne.s32.totalorder %s271, %s273
    %p277 = scmp.eq.s32.totalorder %s22, 0
    %p278 = por %p276, %p277
    %p279 = scmp.ne.s32.totalorder %s271, %s273
    %p280 = scmp.eq.s32.totalorder %s27, 1
    %p281 = por %p279, %p280
    %p282 = scmp.ne.s32.totalorder %s273, %s274
    %p283 = scmp.eq.s32.totalorder %s27, 0
    %p284 = por %p282, %p283
    %p285 = scmp.ne.s32.totalorder %s273, %s274
    %p286 = scmp.eq.s32.totalorder %s28, 1
    %p287 = por %p285, %p286
    %p289 = scmp.ne.s32.totalorder %s274, %s288
    %p290 = scmp.eq.s32.totalorder %s28, 0
    %p291 = por %p289, %p290
    %s293 = sadd.s32 %s292, 1
    %p296 = scmp.eq.s32.totalorder %s22, 1
    %p297 = scmp.ne.s32.totalorder %s292, %s294
    %p298 = scmp.eq.s32.totalorder %s22, 0
    %p299 = por %p297, %p298
    %p300 = scmp.ne.s32.totalorder %s292, %s294
    %p301 = scmp.eq.s32.totalorder %s27, 1
    %p302 = por %p300, %p301
    %p303 = scmp.ne.s32.totalorder %s294, %s295
    %p304 = scmp.eq.s32.totalorder %s27, 0
    %p305 = por %p303, %p304
    %p306 = scmp.ne.s32.totalorder %s294, %s295
    %p307 = scmp.eq.s32.totalorder %s28, 1
    %p308 = por %p306, %p307
    %p310 = scmp.ne.s32.totalorder %s295, %s309
    %p311 = scmp.eq.s32.totalorder %s28, 0
    %p312 = por %p310, %p311
    %s314 = sadd.s32 %s313, 1
    %p317 = scmp.eq.s32.totalorder %s22, 1
    %p318 = scmp.ne.s32.totalorder %s313, %s315
    %p319 = scmp.eq.s32.totalorder %s22, 0
    %p320 = por %p318, %p319
    %p321 = scmp.ne.s32.totalorder %s313, %s315
    %p322 = scmp.eq.s32.totalorder %s27, 1
    %p323 = por %p321, %p322
    %p324 = scmp.ne.s32.totalorder %s315, %s316
    %p325 = scmp.eq.s32.totalorder %s27, 0
    %p326 = por %p324, %p325
    %p327 = scmp.ne.s32.totalorder %s315, %s316
    %p328 = scmp.eq.s32.totalorder %s28, 1
    %p329 = por %p327, %p328
    %p331 = scmp.ne.s32.totalorder %s316, %s330
    %p332 = scmp.eq.s32.totalorder %s28, 0
    %p333 = por %p331, %p332
    %s335 = sadd.s32 %s334, 1
    %p338 = scmp.eq.s32.totalorder %s22, 1
    %p339 = scmp.ne.s32.totalorder %s334, %s336
    %p340 = scmp.eq.s32.totalorder %s22, 0
    %p341 = por %p339, %p340
    %p342 = scmp.ne.s32.totalorder %s334, %s336
    %p343 = scmp.eq.s32.totalorder %s27, 1
    %p344 = por %p342, %p343
    %p345 = scmp.ne.s32.totalorder %s336, %s337
    %p346 = scmp.eq.s32.totalorder %s27, 0
    %p347 = por %p345, %p346
    %p348 = scmp.ne.s32.totalorder %s336, %s337
    %p349 = scmp.eq.s32.totalorder %s28, 1
    %p350 = por %p348, %p349
    %p352 = scmp.ne.s32.totalorder %s337, %s351
    %p353 = scmp.eq.s32.totalorder %s28, 0
    %p354 = por %p352, %p353
    %s356 = sadd.s32 %s355, 1
    %p359 = scmp.eq.s32.totalorder %s22, 1
    %p360 = scmp.ne.s32.totalorder %s355, %s357
    %p361 = scmp.eq.s32.totalorder %s22, 0
    %p362 = por %p360, %p361
    %p363 = scmp.ne.s32.totalorder %s355, %s357
    %p364 = scmp.eq.s32.totalorder %s27, 1
    %p365 = por %p363, %p364
    %p366 = scmp.ne.s32.totalorder %s357, %s358
    %p367 = scmp.eq.s32.totalorder %s27, 0
    %p368 = por %p366, %p367
    %p369 = scmp.ne.s32.totalorder %s357, %s358
    %p370 = scmp.eq.s32.totalorder %s28, 1
    %p371 = por %p369, %p370
    %p373 = scmp.ne.s32.totalorder %s358, %s372
    %p374 = scmp.eq.s32.totalorder %s28, 0
    %p375 = por %p373, %p374
    %s376 = ssub.s32 %s22, %s29
    %p377 = scmp.eq.s32.totalorder %s376, 0
    %s379 = sadd.s32 %s378, 1
    %s380 = scalar_select %p377, %s378, %s379
    %p383 = pneg %p377
    %p384 = scmp.eq.s32.totalorder %s22, 1
    %p385 = por %p383, %p384
    %p386 = scmp.ne.s32.totalorder %s378, %s381
    %p387 = scmp.eq.s32.totalorder %s22, 0
    %p388 = por %p386, %p387
    %p389 = scmp.ne.s32.totalorder %s378, %s381
    %p390 = scmp.eq.s32.totalorder %s27, 1
    %p391 = por %p389, %p390
    %p392 = scmp.ne.s32.totalorder %s381, %s382
    %p393 = scmp.eq.s32.totalorder %s27, 0
    %p394 = por %p392, %p393
    %p395 = scmp.ne.s32.totalorder %s381, %s382
    %p396 = scmp.eq.s32.totalorder %s28, 1
    %p397 = por %p395, %p396
    %p399 = scmp.ne.s32.totalorder %s382, %s398
    %p400 = scmp.eq.s32.totalorder %s28, 0
    %p401 = por %p399, %p400
    %p402 = scmp.le.s32.totalorder 1, %s22
    %p403 = scmp.lt.s32.totalorder %s22, 3
    %p404 = pnand %p402, %p403
    %p405 = pneg %p404
    // Predicated region
    $region9: #{synthesis_model_forward.1} parent=5 // pred_check
      _
    $region10: #{synthesis_model_forward.1} parent=5 // pred_check_branch
      %407 = sbr.rel (%p404) target = $region12
    $region11: #{synthesis_model_forward.1} parent=5 // pred_region
      %s408 = ssub.s32 %s22, 1
      // Predicated region
      $region13: #{synthesis_model_forward.1} parent=11 // pred_check
        %p409 = pneg %p95
      $region14: #{synthesis_model_forward.1} parent=11 // pred_check_branch
        %411 = sbr.rel (%p409) target = $region16
      $region15: #{synthesis_model_forward.1} parent=11 // pred_region
        _
      $region16: #{synthesis_model_forward.1} parent=11 // pred_fallthru
        _
      // Predicated region
      $region17: #{synthesis_model_forward.1} parent=11 // pred_check
        %p412 = pneg %p116
      $region18: #{synthesis_model_forward.1} parent=11 // pred_check_branch
        %414 = sbr.rel (%p412) target = $region20
      $region19: #{synthesis_model_forward.1} parent=11 // pred_region
        _
      $region20: #{synthesis_model_forward.1} parent=11 // pred_fallthru
        _
      // Predicated region
      $region21: #{synthesis_model_forward.1} parent=11 // pred_check
        %p415 = pneg %p137
      $region22: #{synthesis_model_forward.1} parent=11 // pred_check_branch
        %417 = sbr.rel (%p415) target = $region24
      $region23: #{synthesis_model_forward.1} parent=11 // pred_region
        _
      $region24: #{synthesis_model_forward.1} parent=11 // pred_fallthru
        _
      // Predicated region
      $region25: #{synthesis_model_forward.1} parent=11 // pred_check
        %p418 = pneg %p158
      $region26: #{synthesis_model_forward.1} parent=11 // pred_check_branch
        %420 = sbr.rel (%p418) target = $region28
      $region27: #{synthesis_model_forward.1} parent=11 // pred_region
        _
      $region28: #{synthesis_model_forward.1} parent=11 // pred_fallthru
        _
      // Predicated region
      $region29: #{synthesis_model_forward.1} parent=11 // pred_check
        %p421 = pneg %p179
      $region30: #{synthesis_model_forward.1} parent=11 // pred_check_branch
        %423 = sbr.rel (%p421) target = $region32
      $region31: #{synthesis_model_forward.1} parent=11 // pred_region
        _
      $region32: #{synthesis_model_forward.1} parent=11 // pred_fallthru
        _
      // Predicated region
      $region33: #{synthesis_model_forward.1} parent=11 // pred_check
        %p424 = pneg %p200
      $region34: #{synthesis_model_forward.1} parent=11 // pred_check_branch
        %426 = sbr.rel (%p424) target = $region36
      $region35: #{synthesis_model_forward.1} parent=11 // pred_region
        _
      $region36: #{synthesis_model_forward.1} parent=11 // pred_fallthru
        _
      // Predicated region
      $region37: #{synthesis_model_forward.1} parent=11 // pred_check
        %p427 = pneg %p221
      $region38: #{synthesis_model_forward.1} parent=11 // pred_check_branch
        %429 = sbr.rel (%p427) target = $region40
      $region39: #{synthesis_model_forward.1} parent=11 // pred_region
        _
      $region40: #{synthesis_model_forward.1} parent=11 // pred_fallthru
        _
      // Predicated region
      $region41: #{synthesis_model_forward.1} parent=11 // pred_check
        %p430 = pneg %p242
      $region42: #{synthesis_model_forward.1} parent=11 // pred_check_branch
        %432 = sbr.rel (%p430) target = $region44
      $region43: #{synthesis_model_forward.1} parent=11 // pred_region
        _
      $region44: #{synthesis_model_forward.1} parent=11 // pred_fallthru
        _
      // Predicated region
      $region45: #{synthesis_model_forward.1} parent=11 // pred_check
        %p433 = pneg %p263
      $region46: #{synthesis_model_forward.1} parent=11 // pred_check_branch
        %435 = sbr.rel (%p433) target = $region48
      $region47: #{synthesis_model_forward.1} parent=11 // pred_region
        _
      $region48: #{synthesis_model_forward.1} parent=11 // pred_fallthru
        _
      // Predicated region
      $region49: #{synthesis_model_forward.1} parent=11 // pred_check
        %p436 = pneg %p284
      $region50: #{synthesis_model_forward.1} parent=11 // pred_check_branch
        %438 = sbr.rel (%p436) target = $region52
      $region51: #{synthesis_model_forward.1} parent=11 // pred_region
        _
      $region52: #{synthesis_model_forward.1} parent=11 // pred_fallthru
        _
      // Predicated region
      $region53: #{synthesis_model_forward.1} parent=11 // pred_check
        %p439 = pneg %p305
      $region54: #{synthesis_model_forward.1} parent=11 // pred_check_branch
        %441 = sbr.rel (%p439) target = $region56
      $region55: #{synthesis_model_forward.1} parent=11 // pred_region
        _
      $region56: #{synthesis_model_forward.1} parent=11 // pred_fallthru
        _
      // Predicated region
      $region57: #{synthesis_model_forward.1} parent=11 // pred_check
        %p442 = pneg %p326
      $region58: #{synthesis_model_forward.1} parent=11 // pred_check_branch
        %444 = sbr.rel (%p442) target = $region60
      $region59: #{synthesis_model_forward.1} parent=11 // pred_region
        _
      $region60: #{synthesis_model_forward.1} parent=11 // pred_fallthru
        _
      // Predicated region
      $region61: #{synthesis_model_forward.1} parent=11 // pred_check
        %p445 = pneg %p347
      $region62: #{synthesis_model_forward.1} parent=11 // pred_check_branch
        %447 = sbr.rel (%p445) target = $region64
      $region63: #{synthesis_model_forward.1} parent=11 // pred_region
        _
      $region64: #{synthesis_model_forward.1} parent=11 // pred_fallthru
        _
      // Predicated region
      $region65: #{synthesis_model_forward.1} parent=11 // pred_check
        %p448 = pneg %p368
      $region66: #{synthesis_model_forward.1} parent=11 // pred_check_branch
        %450 = sbr.rel (%p448) target = $region68
      $region67: #{synthesis_model_forward.1} parent=11 // pred_region
        _
      $region68: #{synthesis_model_forward.1} parent=11 // pred_fallthru
        _
    $region12: #{synthesis_model_forward.1} parent=5 // pred_fallthru
      _
    %p451 = scmp.lt.s32.totalorder %s22, 2
    // Predicated region
    $region69: #{synthesis_model_forward.1} parent=5 // pred_check
      %p452 = pneg %p451
    $region70: #{synthesis_model_forward.1} parent=5 // pred_check_branch
      %454 = sbr.rel (%p452) target = $region72
    $region71: #{synthesis_model_forward.1} parent=5 // pred_region
      // Predicated region
      $region73: #{synthesis_model_forward.1} parent=71 // pred_check
        %p455 = pneg %p42
      $region74: #{synthesis_model_forward.1} parent=71 // pred_check_branch
        %457 = sbr.rel (%p455) target = $region76
      $region75: #{synthesis_model_forward.1} parent=71 // pred_region
        %p458 = scmp.lt.s32.totalorder %s22, 1
        %s459 = scalar_select %p458, %s22, 1
        %s460 = smul.addr %s459, 32
        %s461 = smul.addr %s460, 8
        %s462 = scalar_lea.vmem %s0, %s461
      $region76: #{synthesis_model_forward.1} parent=71 // pred_fallthru
        _
      // Predicated region
      $region77: #{synthesis_model_forward.1} parent=71 // pred_check
        %p463 = pneg %p68
      $region78: #{synthesis_model_forward.1} parent=71 // pred_check_branch
        %465 = sbr.rel (%p463) target = $region80
      $region79: #{synthesis_model_forward.1} parent=71 // pred_region
        %p466 = scmp.lt.s32.totalorder %s22, 1
        %s467 = scalar_select %p466, %s22, 1
        %s468 = smul.addr %s467, 32
        %s469 = smul.addr %s468, 8
        %s470 = scalar_lea.vmem %s1, %s469
      $region80: #{synthesis_model_forward.1} parent=71 // pred_fallthru
        _
    $region72: #{synthesis_model_forward.1} parent=5 // pred_fallthru
      _
    %p471 = scmp.le.s32.totalorder 1, %s22
    %p472 = scmp.lt.s32.totalorder %s22, 3
    %p473 = pnand %p471, %p472
    %p474 = pneg %p473
    // Predicated region
    $region81: #{synthesis_model_forward.1} parent=5 // pred_check
      _
    $region82: #{synthesis_model_forward.1} parent=5 // pred_check_branch
      %476 = sbr.rel (%p473) target = $region84
    $region83: #{synthesis_model_forward.1} parent=5 // pred_region
      %s477 = ssub.s32 %s22, 1
      %p478 = scmp.lt.s32.totalorder %s27, 1
      %s479 = scalar_select %p478, %s27, 1
      %s480 = smul.addr %s479, 32
      %s481 = smul.addr %s480, 8
      %s482 = scalar_lea.vmem %s0, %s481
      %p483 = pneg %p48
      %p484 = pneg %p45
      %p485 = scmp.lt.s32.totalorder %s27, 1
      %s486 = scalar_select %p485, %s27, 1
      %s487 = smul.addr %s486, 32
      %s488 = smul.addr %s487, 8
      %s489 = scalar_lea.vmem %s1, %s488
      %p490 = pneg %p74
      %p491 = pneg %p71
      %p492 = pneg %p95
      %p493 = pneg %p92
      %p494 = pneg %p116
      %p495 = pneg %p113
      %p496 = pneg %p137
      %p497 = pneg %p134
      %p498 = pneg %p158
      %p499 = pneg %p155
      %p500 = pneg %p179
      %p501 = pneg %p176
      %p502 = pneg %p200
      %p503 = pneg %p197
      %p504 = pneg %p221
      %p505 = pneg %p218
      %p506 = pneg %p242
      %p507 = pneg %p239
      %p508 = pneg %p263
      %p509 = pneg %p260
      %p510 = pneg %p284
      %p511 = pneg %p281
      %p512 = pneg %p305
      %p513 = pneg %p302
      %p514 = pneg %p326
      %p515 = pneg %p323
      %p516 = pneg %p347
      %p517 = pneg %p344
      %p518 = pneg %p368
      %p519 = pneg %p365
      %p520 = pneg %p394
      %p521 = pneg %p391
      %p522 = scmp.lt.s32.totalorder %s27, 1
      %s523 = scalar_select %p522, %s27, 1
      %s524 = smul.addr %s523, 32
      %s525 = smul.addr %s524, 4
      %s526 = scalar_lea.vmem %s16, %s525
      %p527 = scmp.lt.s32.totalorder %s27, 1
      %s528 = scalar_select %p527, %s27, 1
      %s529 = smul.addr %s528, 32
      %s530 = smul.addr %s529, 8
      %s531 = scalar_lea.vmem %s0, %s530
      %p532 = scmp.lt.s32.totalorder %s27, 1
      %s533 = scalar_select %p532, %s27, 1
      %s534 = smul.addr %s533, 32
      %s535 = smul.addr %s534, 8
      %s536 = scalar_lea.vmem %s1, %s535
      %p537 = scmp.lt.s32.totalorder %s27, 1
      %s538 = scalar_select %p537, %s27, 1
      %s539 = smul.addr %s538, 32
      %s540 = smul.addr %s539, 4
      %s541 = scalar_lea.vmem %s16, %s540
      %v543 = vld [vmem:[%s531] sm:$0xff]
      %v544 = vld [vmem:[%s531 + $0x8] sm:$0xff]
      %v545 = vld [vmem:[%s531 + $0x10] sm:$0xff]
      %v546 = vld [vmem:[%s531 + $0x18] sm:$0xff]
      %v547 = vld [vmem:[%s531 + $0x20] sm:$0xff]
      %v548 = vld [vmem:[%s531 + $0x28] sm:$0xff]
      %v549 = vld [vmem:[%s531 + $0x30] sm:$0xff]
      %v550 = vld [vmem:[%s531 + $0x38] sm:$0xff]
      %v551 = vld [vmem:[%s531 + $0x40] sm:$0xff]
      %v552 = vld [vmem:[%s531 + $0x48] sm:$0xff]
      %v553 = vld [vmem:[%s531 + $0x50] sm:$0xff]
      %v554 = vld [vmem:[%s531 + $0x58] sm:$0xff]
      %v555 = vld [vmem:[%s531 + $0x60] sm:$0xff]
      %v556 = vld [vmem:[%s531 + $0x68] sm:$0xff]
      %v557 = vld [vmem:[%s531 + $0x70] sm:$0xff]
      %v558 = vld [vmem:[%s531 + $0x78] sm:$0xff]
      %v559 = vld [vmem:[%s531 + $0x80] sm:$0xff]
      %v560 = vld [vmem:[%s531 + $0x88] sm:$0xff]
      %v561 = vld [vmem:[%s531 + $0x90] sm:$0xff]
      %v562 = vld [vmem:[%s531 + $0x98] sm:$0xff]
      %v563 = vld [vmem:[%s531 + $0xa0] sm:$0xff]
      %v564 = vld [vmem:[%s531 + $0xa8] sm:$0xff]
      %v565 = vld [vmem:[%s531 + $0xb0] sm:$0xff]
      %v566 = vld [vmem:[%s531 + $0xb8] sm:$0xff]
      %v567 = vld [vmem:[%s531 + $0xc0] sm:$0xff]
      %v568 = vld [vmem:[%s531 + $0xc8] sm:$0xff]
      %v569 = vld [vmem:[%s531 + $0xd0] sm:$0xff]
      %v570 = vld [vmem:[%s531 + $0xd8] sm:$0xff]
      %v571 = vld [vmem:[%s531 + $0xe0] sm:$0xff]
      %v572 = vld [vmem:[%s531 + $0xe8] sm:$0xff]
      %v573 = vld [vmem:[%s531 + $0xf0] sm:$0xff]
      %v574 = vld [vmem:[%s531 + $0xf8] sm:$0xff]
      %v575 = vld [vmem:[%s2] sm:$0xff]
      %v576 = vld [vmem:[%s2 + $0x8] sm:$0xff]
      %v577 = vld [vmem:[%s2 + $0x10] sm:$0xff]
      %v578 = vld [vmem:[%s2 + $0x18] sm:$0xff]
      %v579 = vld [vmem:[%s2 + $0x20] sm:$0xff]
      %v580 = vld [vmem:[%s2 + $0x28] sm:$0xff]
      %v581 = vld [vmem:[%s2 + $0x30] sm:$0xff]
      %v582 = vld [vmem:[%s2 + $0x38] sm:$0xff]
      %v583 = vld [vmem:[%s2 + $0x40] sm:$0xff]
      %v584 = vld [vmem:[%s2 + $0x48] sm:$0xff]
      %v585 = vld [vmem:[%s2 + $0x50] sm:$0xff]
      %v586 = vld [vmem:[%s2 + $0x58] sm:$0xff]
      %v587 = vld [vmem:[%s2 + $0x60] sm:$0xff]
      %v588 = vld [vmem:[%s2 + $0x68] sm:$0xff]
      %v589 = vld [vmem:[%s2 + $0x70] sm:$0xff]
      %v590 = vld [vmem:[%s2 + $0x78] sm:$0xff]
      %v591 = vld [vmem:[%s2 + $0x80] sm:$0xff]
      %v592 = vld [vmem:[%s2 + $0x88] sm:$0xff]
      %v593 = vld [vmem:[%s2 + $0x90] sm:$0xff]
      %v594 = vld [vmem:[%s2 + $0x98] sm:$0xff]
      %v595 = vld [vmem:[%s2 + $0xa0] sm:$0xff]
      %v596 = vld [vmem:[%s2 + $0xa8] sm:$0xff]
      %v597 = vld [vmem:[%s2 + $0xb0] sm:$0xff]
      %v598 = vld [vmem:[%s2 + $0xb8] sm:$0xff]
      %v599 = vld [vmem:[%s2 + $0xc0] sm:$0xff]
      %v600 = vld [vmem:[%s2 + $0xc8] sm:$0xff]
      %v601 = vld [vmem:[%s2 + $0xd0] sm:$0xff]
      %v602 = vld [vmem:[%s2 + $0xd8] sm:$0xff]
      %v603 = vld [vmem:[%s2 + $0xe0] sm:$0xff]
      %v604 = vld [vmem:[%s2 + $0xe8] sm:$0xff]
      %v605 = vld [vmem:[%s2 + $0xf0] sm:$0xff]
      %v606 = vld [vmem:[%s2 + $0xf8] sm:$0xff]
      %vm610 = vcmask 1040384
      %v611 = vrot.slane %v572, 7
      %v612 = vrot.slane %v573, 7
      %v613 = vsel %vm610, %v611, %v612
      %v614 = vrot.slane %v574, 7
      %v615 = vsel %vm610, %v612, %v614
      %v648 = vrot.slane %v543, 7
      %v649 = vrot.slane %v544, 7
      %v650 = vsel %vm610, %v648, %v649
      %v651 = vrot.slane %v545, 7
      %v652 = vsel %vm610, %v649, %v651
      %v653 = vrot.slane %v546, 7
      %v654 = vsel %vm610, %v651, %v653
      %v655 = vrot.slane %v547, 7
      %v656 = vsel %vm610, %v653, %v655
      %v657 = vrot.slane %v548, 7
      %v658 = vsel %vm610, %v655, %v657
      %v659 = vrot.slane %v549, 7
      %v660 = vsel %vm610, %v657, %v659
      %v661 = vrot.slane %v550, 7
      %v662 = vsel %vm610, %v659, %v661
      %v663 = vrot.slane %v551, 7
      %v664 = vsel %vm610, %v661, %v663
      %v665 = vrot.slane %v552, 7
      %v666 = vsel %vm610, %v663, %v665
      %v667 = vrot.slane %v553, 7
      %v668 = vsel %vm610, %v665, %v667
      %v669 = vrot.slane %v554, 7
      %v670 = vsel %vm610, %v667, %v669
      %v671 = vrot.slane %v555, 7
      %v672 = vsel %vm610, %v669, %v671
      %v673 = vrot.slane %v556, 7
      %v674 = vsel %vm610, %v671, %v673
      %v675 = vrot.slane %v557, 7
      %v676 = vsel %vm610, %v673, %v675
      %v677 = vrot.slane %v558, 7
      %v678 = vsel %vm610, %v675, %v677
      %v679 = vrot.slane %v559, 7
      %v680 = vsel %vm610, %v677, %v679
      %v681 = vrot.slane %v560, 7
      %v682 = vsel %vm610, %v679, %v681
      %v683 = vrot.slane %v561, 7
      %v684 = vsel %vm610, %v681, %v683
      %v685 = vrot.slane %v562, 7
      %v686 = vsel %vm610, %v683, %v685
      %v687 = vrot.slane %v563, 7
      %v688 = vsel %vm610, %v685, %v687
      %v689 = vrot.slane %v564, 7
      %v690 = vsel %vm610, %v687, %v689
      %v691 = vrot.slane %v565, 7
      %v692 = vsel %vm610, %v689, %v691
      %v693 = vrot.slane %v566, 7
      %v694 = vsel %vm610, %v691, %v693
      %v695 = vrot.slane %v567, 7
      %v696 = vsel %vm610, %v693, %v695
      %v697 = vrot.slane %v568, 7
      %v698 = vsel %vm610, %v695, %v697
      %v699 = vrot.slane %v569, 7
      %v700 = vsel %vm610, %v697, %v699
      %v701 = vrot.slane %v570, 7
      %v702 = vsel %vm610, %v699, %v701
      %v703 = vrot.slane %v571, 7
      %v704 = vsel %vm610, %v701, %v703
      %v705 = vsel %vm610, %v703, %v611
      %v736 = vsel %vm610, %v614, %v648
      %vm737 = vcmask 1046528
      %v738 = vrot.slane %v573, 1
      %v739 = vrot.slane %v574, 1
      %v740 = vsel %vm737, %v738, %v739
      %v742 = vrot.slane %v543, 1
      %v743 = vrot.slane %v544, 1
      %v744 = vsel %vm737, %v742, %v743
      %v745 = vrot.slane %v545, 1
      %v746 = vsel %vm737, %v743, %v745
      %v747 = vrot.slane %v546, 1
      %v748 = vsel %vm737, %v745, %v747
      %v749 = vrot.slane %v547, 1
      %v750 = vsel %vm737, %v747, %v749
      %v751 = vrot.slane %v548, 1
      %v752 = vsel %vm737, %v749, %v751
      %v753 = vrot.slane %v549, 1
      %v754 = vsel %vm737, %v751, %v753
      %v755 = vrot.slane %v550, 1
      %v756 = vsel %vm737, %v753, %v755
      %v757 = vrot.slane %v551, 1
      %v758 = vsel %vm737, %v755, %v757
      %v759 = vrot.slane %v552, 1
      %v760 = vsel %vm737, %v757, %v759
      %v761 = vrot.slane %v553, 1
      %v762 = vsel %vm737, %v759, %v761
      %v763 = vrot.slane %v554, 1
      %v764 = vsel %vm737, %v761, %v763
      %v765 = vrot.slane %v555, 1
      %v766 = vsel %vm737, %v763, %v765
      %v767 = vrot.slane %v556, 1
      %v768 = vsel %vm737, %v765, %v767
      %v769 = vrot.slane %v557, 1
      %v770 = vsel %vm737, %v767, %v769
      %v771 = vrot.slane %v558, 1
      %v772 = vsel %vm737, %v769, %v771
      %v773 = vrot.slane %v559, 1
      %v774 = vsel %vm737, %v771, %v773
      %v775 = vrot.slane %v560, 1
      %v776 = vsel %vm737, %v773, %v775
      %v777 = vrot.slane %v561, 1
      %v778 = vsel %vm737, %v775, %v777
      %v779 = vrot.slane %v562, 1
      %v780 = vsel %vm737, %v777, %v779
      %v781 = vrot.slane %v563, 1
      %v782 = vsel %vm737, %v779, %v781
      %v783 = vrot.slane %v564, 1
      %v784 = vsel %vm737, %v781, %v783
      %v785 = vrot.slane %v565, 1
      %v786 = vsel %vm737, %v783, %v785
      %v787 = vrot.slane %v566, 1
      %v788 = vsel %vm737, %v785, %v787
      %v789 = vrot.slane %v567, 1
      %v790 = vsel %vm737, %v787, %v789
      %v791 = vrot.slane %v568, 1
      %v792 = vsel %vm737, %v789, %v791
      %v793 = vrot.slane %v569, 1
      %v794 = vsel %vm737, %v791, %v793
      %v795 = vrot.slane %v570, 1
      %v796 = vsel %vm737, %v793, %v795
      %v797 = vrot.slane %v571, 1
      %v798 = vsel %vm737, %v795, %v797
      %v799 = vrot.slane %v572, 1
      %v800 = vsel %vm737, %v797, %v799
      %v801 = vsel %vm737, %v799, %v738
      %v803 = vsel %vm737, %v739, %v742
      %804 = vrot.lane.b32.xlu0 %v573, 4
      %v805 = vpop.permute.xlu0 %804
      %806 = vrot.lane.b32.xlu0 %v574, 4
      %v807 = vpop.permute.xlu0 %806
      %808 = vrot.lane.b32.xlu0 %v543, 4
      %v809 = vpop.permute.xlu0 %808
      %810 = vrot.lane.b32.xlu0 %v544, 4
      %v811 = vpop.permute.xlu0 %810
      %812 = vrot.lane.b32.xlu0 %v545, 4
      %v813 = vpop.permute.xlu0 %812
      %814 = vrot.lane.b32.xlu0 %v546, 4
      %v815 = vpop.permute.xlu0 %814
      %816 = vrot.lane.b32.xlu0 %v547, 4
      %v817 = vpop.permute.xlu0 %816
      %818 = vrot.lane.b32.xlu0 %v548, 4
      %v819 = vpop.permute.xlu0 %818
      %820 = vrot.lane.b32.xlu0 %v549, 4
      %v821 = vpop.permute.xlu0 %820
      %822 = vrot.lane.b32.xlu0 %v550, 4
      %v823 = vpop.permute.xlu0 %822
      %824 = vrot.lane.b32.xlu0 %v551, 4
      %v825 = vpop.permute.xlu0 %824
      %826 = vrot.lane.b32.xlu0 %v552, 4
      %v827 = vpop.permute.xlu0 %826
      %828 = vrot.lane.b32.xlu0 %v553, 4
      %v829 = vpop.permute.xlu0 %828
      %830 = vrot.lane.b32.xlu0 %v554, 4
      %v831 = vpop.permute.xlu0 %830
      %832 = vrot.lane.b32.xlu0 %v555, 4
      %v833 = vpop.permute.xlu0 %832
      %834 = vrot.lane.b32.xlu0 %v556, 4
      %v835 = vpop.permute.xlu0 %834
      %836 = vrot.lane.b32.xlu0 %v557, 4
      %v837 = vpop.permute.xlu0 %836
      %838 = vrot.lane.b32.xlu0 %v558, 4
      %v839 = vpop.permute.xlu0 %838
      %840 = vrot.lane.b32.xlu0 %v559, 4
      %v841 = vpop.permute.xlu0 %840
      %842 = vrot.lane.b32.xlu0 %v560, 4
      %v843 = vpop.permute.xlu0 %842
      %844 = vrot.lane.b32.xlu0 %v561, 4
      %v845 = vpop.permute.xlu0 %844
      %846 = vrot.lane.b32.xlu0 %v562, 4
      %v847 = vpop.permute.xlu0 %846
      %848 = vrot.lane.b32.xlu0 %v563, 4
      %v849 = vpop.permute.xlu0 %848
      %850 = vrot.lane.b32.xlu0 %v564, 4
      %v851 = vpop.permute.xlu0 %850
      %852 = vrot.lane.b32.xlu0 %v565, 4
      %v853 = vpop.permute.xlu0 %852
      %854 = vrot.lane.b32.xlu0 %v566, 4
      %v855 = vpop.permute.xlu0 %854
      %856 = vrot.lane.b32.xlu0 %v567, 4
      %v857 = vpop.permute.xlu0 %856
      %858 = vrot.lane.b32.xlu0 %v568, 4
      %v859 = vpop.permute.xlu0 %858
      %860 = vrot.lane.b32.xlu0 %v569, 4
      %v861 = vpop.permute.xlu0 %860
      %862 = vrot.lane.b32.xlu0 %v570, 4
      %v863 = vpop.permute.xlu0 %862
      %864 = vrot.lane.b32.xlu0 %v571, 4
      %v865 = vpop.permute.xlu0 %864
      %866 = vrot.lane.b32.xlu0 %v572, 4
      %v867 = vpop.permute.xlu0 %866
      %901 = vrot.lane.b32.xlu0 %v740, 8
      %v902 = vpop.permute.xlu0 %901
      %903 = vrot.lane.b32.xlu0 %v803, 8
      %v904 = vpop.permute.xlu0 %903
      %905 = vrot.lane.b32.xlu0 %v744, 8
      %v906 = vpop.permute.xlu0 %905
      %907 = vrot.lane.b32.xlu0 %v746, 8
      %v908 = vpop.permute.xlu0 %907
      %909 = vrot.lane.b32.xlu0 %v748, 8
      %v910 = vpop.permute.xlu0 %909
      %911 = vrot.lane.b32.xlu0 %v750, 8
      %v912 = vpop.permute.xlu0 %911
      %913 = vrot.lane.b32.xlu0 %v752, 8
      %v914 = vpop.permute.xlu0 %913
      %915 = vrot.lane.b32.xlu0 %v754, 8
      %v916 = vpop.permute.xlu0 %915
      %917 = vrot.lane.b32.xlu0 %v756, 8
      %v918 = vpop.permute.xlu0 %917
      %919 = vrot.lane.b32.xlu0 %v758, 8
      %v920 = vpop.permute.xlu0 %919
      %921 = vrot.lane.b32.xlu0 %v760, 8
      %v922 = vpop.permute.xlu0 %921
      %923 = vrot.lane.b32.xlu0 %v762, 8
      %v924 = vpop.permute.xlu0 %923
      %925 = vrot.lane.b32.xlu0 %v764, 8
      %v926 = vpop.permute.xlu0 %925
      %927 = vrot.lane.b32.xlu0 %v766, 8
      %v928 = vpop.permute.xlu0 %927
      %929 = vrot.lane.b32.xlu0 %v768, 8
      %v930 = vpop.permute.xlu0 %929
      %931 = vrot.lane.b32.xlu0 %v770, 8
      %v932 = vpop.permute.xlu0 %931
      %933 = vrot.lane.b32.xlu0 %v772, 8
      %v934 = vpop.permute.xlu0 %933
      %935 = vrot.lane.b32.xlu0 %v774, 8
      %v936 = vpop.permute.xlu0 %935
      %937 = vrot.lane.b32.xlu0 %v776, 8
      %v938 = vpop.permute.xlu0 %937
      %939 = vrot.lane.b32.xlu0 %v778, 8
      %v940 = vpop.permute.xlu0 %939
      %941 = vrot.lane.b32.xlu0 %v780, 8
      %v942 = vpop.permute.xlu0 %941
      %943 = vrot.lane.b32.xlu0 %v782, 8
      %v944 = vpop.permute.xlu0 %943
      %945 = vrot.lane.b32.xlu0 %v784, 8
      %v946 = vpop.permute.xlu0 %945
      %947 = vrot.lane.b32.xlu0 %v786, 8
      %v948 = vpop.permute.xlu0 %947
      %949 = vrot.lane.b32.xlu0 %v788, 8
      %v950 = vpop.permute.xlu0 %949
      %951 = vrot.lane.b32.xlu0 %v790, 8
      %v952 = vpop.permute.xlu0 %951
      %953 = vrot.lane.b32.xlu0 %v792, 8
      %v954 = vpop.permute.xlu0 %953
      %955 = vrot.lane.b32.xlu0 %v794, 8
      %v956 = vpop.permute.xlu0 %955
      %957 = vrot.lane.b32.xlu0 %v796, 8
      %v958 = vpop.permute.xlu0 %957
      %959 = vrot.lane.b32.xlu0 %v798, 8
      %v960 = vpop.permute.xlu0 %959
      %961 = vrot.lane.b32.xlu0 %v800, 8
      %v962 = vpop.permute.xlu0 %961
      %963 = vrot.lane.b32.xlu0 %v801, 8
      %v964 = vpop.permute.xlu0 %963
      %998 = vrot.lane.b32.xlu0 %v736, 12
      %v999 = vpop.permute.xlu0 %998
      %1000 = vrot.lane.b32.xlu0 %v650, 12
      %v1001 = vpop.permute.xlu0 %1000
      %1002 = vrot.lane.b32.xlu0 %v652, 12
      %v1003 = vpop.permute.xlu0 %1002
      %1004 = vrot.lane.b32.xlu0 %v654, 12
      %v1005 = vpop.permute.xlu0 %1004
      %1006 = vrot.lane.b32.xlu0 %v656, 12
      %v1007 = vpop.permute.xlu0 %1006
      %1008 = vrot.lane.b32.xlu0 %v658, 12
      %v1009 = vpop.permute.xlu0 %1008
      %1010 = vrot.lane.b32.xlu0 %v660, 12
      %v1011 = vpop.permute.xlu0 %1010
      %1012 = vrot.lane.b32.xlu0 %v662, 12
      %v1013 = vpop.permute.xlu0 %1012
      %1014 = vrot.lane.b32.xlu0 %v664, 12
      %v1015 = vpop.permute.xlu0 %1014
      %1016 = vrot.lane.b32.xlu0 %v666, 12
      %v1017 = vpop.permute.xlu0 %1016
      %1018 = vrot.lane.b32.xlu0 %v668, 12
      %v1019 = vpop.permute.xlu0 %1018
      %1020 = vrot.lane.b32.xlu0 %v670, 12
      %v1021 = vpop.permute.xlu0 %1020
      %1022 = vrot.lane.b32.xlu0 %v672, 12
      %v1023 = vpop.permute.xlu0 %1022
      %1024 = vrot.lane.b32.xlu0 %v674, 12
      %v1025 = vpop.permute.xlu0 %1024
      %1026 = vrot.lane.b32.xlu0 %v676, 12
      %v1027 = vpop.permute.xlu0 %1026
      %1028 = vrot.lane.b32.xlu0 %v678, 12
      %v1029 = vpop.permute.xlu0 %1028
      %1030 = vrot.lane.b32.xlu0 %v680, 12
      %v1031 = vpop.permute.xlu0 %1030
      %1032 = vrot.lane.b32.xlu0 %v682, 12
      %v1033 = vpop.permute.xlu0 %1032
      %1034 = vrot.lane.b32.xlu0 %v684, 12
      %v1035 = vpop.permute.xlu0 %1034
      %1036 = vrot.lane.b32.xlu0 %v686, 12
      %v1037 = vpop.permute.xlu0 %1036
      %1038 = vrot.lane.b32.xlu0 %v688, 12
      %v1039 = vpop.permute.xlu0 %1038
      %1040 = vrot.lane.b32.xlu0 %v690, 12
      %v1041 = vpop.permute.xlu0 %1040
      %1042 = vrot.lane.b32.xlu0 %v692, 12
      %v1043 = vpop.permute.xlu0 %1042
      %1044 = vrot.lane.b32.xlu0 %v694, 12
      %v1045 = vpop.permute.xlu0 %1044
      %1046 = vrot.lane.b32.xlu0 %v696, 12
      %v1047 = vpop.permute.xlu0 %1046
      %1048 = vrot.lane.b32.xlu0 %v698, 12
      %v1049 = vpop.permute.xlu0 %1048
      %1050 = vrot.lane.b32.xlu0 %v700, 12
      %v1051 = vpop.permute.xlu0 %1050
      %1052 = vrot.lane.b32.xlu0 %v702, 12
      %v1053 = vpop.permute.xlu0 %1052
      %1054 = vrot.lane.b32.xlu0 %v704, 12
      %v1055 = vpop.permute.xlu0 %1054
      %1056 = vrot.lane.b32.xlu0 %v705, 12
      %v1057 = vpop.permute.xlu0 %1056
      %1058 = vrot.lane.b32.xlu0 %v613, 12
      %v1059 = vpop.permute.xlu0 %1058
      %1060 = vrot.lane.b32.xlu0 %v615, 12
      %v1061 = vpop.permute.xlu0 %1060
      %1094 = vrot.lane.b32.xlu0 %v543, 16
      %v1095 = vpop.permute.xlu0 %1094
      %1096 = vrot.lane.b32.xlu0 %v544, 16
      %v1097 = vpop.permute.xlu0 %1096
      %1098 = vrot.lane.b32.xlu0 %v545, 16
      %v1099 = vpop.permute.xlu0 %1098
      %1100 = vrot.lane.b32.xlu0 %v546, 16
      %v1101 = vpop.permute.xlu0 %1100
      %1102 = vrot.lane.b32.xlu0 %v547, 16
      %v1103 = vpop.permute.xlu0 %1102
      %1104 = vrot.lane.b32.xlu0 %v548, 16
      %v1105 = vpop.permute.xlu0 %1104
      %1106 = vrot.lane.b32.xlu0 %v549, 16
      %v1107 = vpop.permute.xlu0 %1106
      %1108 = vrot.lane.b32.xlu0 %v550, 16
      %v1109 = vpop.permute.xlu0 %1108
      %1110 = vrot.lane.b32.xlu0 %v551, 16
      %v1111 = vpop.permute.xlu0 %1110
      %1112 = vrot.lane.b32.xlu0 %v552, 16
      %v1113 = vpop.permute.xlu0 %1112
      %1114 = vrot.lane.b32.xlu0 %v553, 16
      %v1115 = vpop.permute.xlu0 %1114
      %1116 = vrot.lane.b32.xlu0 %v554, 16
      %v1117 = vpop.permute.xlu0 %1116
      %1118 = vrot.lane.b32.xlu0 %v555, 16
      %v1119 = vpop.permute.xlu0 %1118
      %1120 = vrot.lane.b32.xlu0 %v556, 16
      %v1121 = vpop.permute.xlu0 %1120
      %1122 = vrot.lane.b32.xlu0 %v557, 16
      %v1123 = vpop.permute.xlu0 %1122
      %1124 = vrot.lane.b32.xlu0 %v558, 16
      %v1125 = vpop.permute.xlu0 %1124
      %1126 = vrot.lane.b32.xlu0 %v559, 16
      %v1127 = vpop.permute.xlu0 %1126
      %1128 = vrot.lane.b32.xlu0 %v560, 16
      %v1129 = vpop.permute.xlu0 %1128
      %1130 = vrot.lane.b32.xlu0 %v561, 16
      %v1131 = vpop.permute.xlu0 %1130
      %1132 = vrot.lane.b32.xlu0 %v562, 16
      %v1133 = vpop.permute.xlu0 %1132
      %1134 = vrot.lane.b32.xlu0 %v563, 16
      %v1135 = vpop.permute.xlu0 %1134
      %1136 = vrot.lane.b32.xlu0 %v564, 16
      %v1137 = vpop.permute.xlu0 %1136
      %1138 = vrot.lane.b32.xlu0 %v565, 16
      %v1139 = vpop.permute.xlu0 %1138
      %1140 = vrot.lane.b32.xlu0 %v566, 16
      %v1141 = vpop.permute.xlu0 %1140
      %1142 = vrot.lane.b32.xlu0 %v567, 16
      %v1143 = vpop.permute.xlu0 %1142
      %1144 = vrot.lane.b32.xlu0 %v568, 16
      %v1145 = vpop.permute.xlu0 %1144
      %1146 = vrot.lane.b32.xlu0 %v569, 16
      %v1147 = vpop.permute.xlu0 %1146
      %1148 = vrot.lane.b32.xlu0 %v570, 16
      %v1149 = vpop.permute.xlu0 %1148
      %1150 = vrot.lane.b32.xlu0 %v571, 16
      %v1151 = vpop.permute.xlu0 %1150
      %1152 = vrot.lane.b32.xlu0 %v572, 16
      %v1153 = vpop.permute.xlu0 %1152
      %1154 = vrot.lane.b32.xlu0 %v573, 16
      %v1155 = vpop.permute.xlu0 %1154
      %1156 = vrot.lane.b32.xlu0 %v574, 16
      %v1157 = vpop.permute.xlu0 %1156
      %1190 = vrot.lane.b32.xlu0 %v744, 20
      %v1191 = vpop.permute.xlu0 %1190
      %1192 = vrot.lane.b32.xlu0 %v746, 20
      %v1193 = vpop.permute.xlu0 %1192
      %1194 = vrot.lane.b32.xlu0 %v748, 20
      %v1195 = vpop.permute.xlu0 %1194
      %1196 = vrot.lane.b32.xlu0 %v750, 20
      %v1197 = vpop.permute.xlu0 %1196
      %1198 = vrot.lane.b32.xlu0 %v752, 20
      %v1199 = vpop.permute.xlu0 %1198
      %1200 = vrot.lane.b32.xlu0 %v754, 20
      %v1201 = vpop.permute.xlu0 %1200
      %1202 = vrot.lane.b32.xlu0 %v756, 20
      %v1203 = vpop.permute.xlu0 %1202
      %1204 = vrot.lane.b32.xlu0 %v758, 20
      %v1205 = vpop.permute.xlu0 %1204
      %1206 = vrot.lane.b32.xlu0 %v760, 20
      %v1207 = vpop.permute.xlu0 %1206
      %1208 = vrot.lane.b32.xlu0 %v762, 20
      %v1209 = vpop.permute.xlu0 %1208
      %1210 = vrot.lane.b32.xlu0 %v764, 20
      %v1211 = vpop.permute.xlu0 %1210
      %1212 = vrot.lane.b32.xlu0 %v766, 20
      %v1213 = vpop.permute.xlu0 %1212
      %1214 = vrot.lane.b32.xlu0 %v768, 20
      %v1215 = vpop.permute.xlu0 %1214
      %1216 = vrot.lane.b32.xlu0 %v770, 20
      %v1217 = vpop.permute.xlu0 %1216
      %1218 = vrot.lane.b32.xlu0 %v772, 20
      %v1219 = vpop.permute.xlu0 %1218
      %1220 = vrot.lane.b32.xlu0 %v774, 20
      %v1221 = vpop.permute.xlu0 %1220
      %1222 = vrot.lane.b32.xlu0 %v776, 20
      %v1223 = vpop.permute.xlu0 %1222
      %1224 = vrot.lane.b32.xlu0 %v778, 20
      %v1225 = vpop.permute.xlu0 %1224
      %1226 = vrot.lane.b32.xlu0 %v780, 20
      %v1227 = vpop.permute.xlu0 %1226
      %1228 = vrot.lane.b32.xlu0 %v782, 20
      %v1229 = vpop.permute.xlu0 %1228
      %1230 = vrot.lane.b32.xlu0 %v784, 20
      %v1231 = vpop.permute.xlu0 %1230
      %1232 = vrot.lane.b32.xlu0 %v786, 20
      %v1233 = vpop.permute.xlu0 %1232
      %1234 = vrot.lane.b32.xlu0 %v788, 20
      %v1235 = vpop.permute.xlu0 %1234
      %1236 = vrot.lane.b32.xlu0 %v790, 20
      %v1237 = vpop.permute.xlu0 %1236
      %1238 = vrot.lane.b32.xlu0 %v792, 20
      %v1239 = vpop.permute.xlu0 %1238
      %1240 = vrot.lane.b32.xlu0 %v794, 20
      %v1241 = vpop.permute.xlu0 %1240
      %1242 = vrot.lane.b32.xlu0 %v796, 20
      %v1243 = vpop.permute.xlu0 %1242
      %1244 = vrot.lane.b32.xlu0 %v798, 20
      %v1245 = vpop.permute.xlu0 %1244
      %1246 = vrot.lane.b32.xlu0 %v800, 20
      %v1247 = vpop.permute.xlu0 %1246
      %1248 = vrot.lane.b32.xlu0 %v801, 20
      %v1249 = vpop.permute.xlu0 %1248
      %1250 = vrot.lane.b32.xlu0 %v740, 20
      %v1251 = vpop.permute.xlu0 %1250
      %1252 = vrot.lane.b32.xlu0 %v803, 20
      %v1253 = vpop.permute.xlu0 %1252
      %1286 = vrot.lane.b32.xlu0 %v652, 24
      %v1287 = vpop.permute.xlu0 %1286
      %1288 = vrot.lane.b32.xlu0 %v654, 24
      %v1289 = vpop.permute.xlu0 %1288
      %1290 = vrot.lane.b32.xlu0 %v656, 24
      %v1291 = vpop.permute.xlu0 %1290
      %1292 = vrot.lane.b32.xlu0 %v658, 24
      %v1293 = vpop.permute.xlu0 %1292
      %1294 = vrot.lane.b32.xlu0 %v660, 24
      %v1295 = vpop.permute.xlu0 %1294
      %1296 = vrot.lane.b32.xlu0 %v662, 24
      %v1297 = vpop.permute.xlu0 %1296
      %1298 = vrot.lane.b32.xlu0 %v664, 24
      %v1299 = vpop.permute.xlu0 %1298
      %1300 = vrot.lane.b32.xlu0 %v666, 24
      %v1301 = vpop.permute.xlu0 %1300
      %1302 = vrot.lane.b32.xlu0 %v668, 24
      %v1303 = vpop.permute.xlu0 %1302
      %1304 = vrot.lane.b32.xlu0 %v670, 24
      %v1305 = vpop.permute.xlu0 %1304
      %1306 = vrot.lane.b32.xlu0 %v672, 24
      %v1307 = vpop.permute.xlu0 %1306
      %1308 = vrot.lane.b32.xlu0 %v674, 24
      %v1309 = vpop.permute.xlu0 %1308
      %1310 = vrot.lane.b32.xlu0 %v676, 24
      %v1311 = vpop.permute.xlu0 %1310
      %1312 = vrot.lane.b32.xlu0 %v678, 24
      %v1313 = vpop.permute.xlu0 %1312
      %1314 = vrot.lane.b32.xlu0 %v680, 24
      %v1315 = vpop.permute.xlu0 %1314
      %1316 = vrot.lane.b32.xlu0 %v682, 24
      %v1317 = vpop.permute.xlu0 %1316
      %1318 = vrot.lane.b32.xlu0 %v684, 24
      %v1319 = vpop.permute.xlu0 %1318
      %1320 = vrot.lane.b32.xlu0 %v686, 24
      %v1321 = vpop.permute.xlu0 %1320
      %1322 = vrot.lane.b32.xlu0 %v688, 24
      %v1323 = vpop.permute.xlu0 %1322
      %1324 = vrot.lane.b32.xlu0 %v690, 24
      %v1325 = vpop.permute.xlu0 %1324
      %1326 = vrot.lane.b32.xlu0 %v692, 24
      %v1327 = vpop.permute.xlu0 %1326
      %1328 = vrot.lane.b32.xlu0 %v694, 24
      %v1329 = vpop.permute.xlu0 %1328
      %1330 = vrot.lane.b32.xlu0 %v696, 24
      %v1331 = vpop.permute.xlu0 %1330
      %1332 = vrot.lane.b32.xlu0 %v698, 24
      %v1333 = vpop.permute.xlu0 %1332
      %1334 = vrot.lane.b32.xlu0 %v700, 24
      %v1335 = vpop.permute.xlu0 %1334
      %1336 = vrot.lane.b32.xlu0 %v702, 24
      %v1337 = vpop.permute.xlu0 %1336
      %1338 = vrot.lane.b32.xlu0 %v704, 24
      %v1339 = vpop.permute.xlu0 %1338
      %1340 = vrot.lane.b32.xlu0 %v705, 24
      %v1341 = vpop.permute.xlu0 %1340
      %1342 = vrot.lane.b32.xlu0 %v613, 24
      %v1343 = vpop.permute.xlu0 %1342
      %1344 = vrot.lane.b32.xlu0 %v615, 24
      %v1345 = vpop.permute.xlu0 %1344
      %1346 = vrot.lane.b32.xlu0 %v736, 24
      %v1347 = vpop.permute.xlu0 %1346
      %1348 = vrot.lane.b32.xlu0 %v650, 24
      %v1349 = vpop.permute.xlu0 %1348
      %1382 = vrot.lane.b32.xlu0 %v545, 28
      %v1383 = vpop.permute.xlu0 %1382
      %1384 = vrot.lane.b32.xlu0 %v546, 28
      %v1385 = vpop.permute.xlu0 %1384
      %1386 = vrot.lane.b32.xlu0 %v547, 28
      %v1387 = vpop.permute.xlu0 %1386
      %1388 = vrot.lane.b32.xlu0 %v548, 28
      %v1389 = vpop.permute.xlu0 %1388
      %1390 = vrot.lane.b32.xlu0 %v549, 28
      %v1391 = vpop.permute.xlu0 %1390
      %1392 = vrot.lane.b32.xlu0 %v550, 28
      %v1393 = vpop.permute.xlu0 %1392
      %1394 = vrot.lane.b32.xlu0 %v551, 28
      %v1395 = vpop.permute.xlu0 %1394
      %1396 = vrot.lane.b32.xlu0 %v552, 28
      %v1397 = vpop.permute.xlu0 %1396
      %1398 = vrot.lane.b32.xlu0 %v553, 28
      %v1399 = vpop.permute.xlu0 %1398
      %1400 = vrot.lane.b32.xlu0 %v554, 28
      %v1401 = vpop.permute.xlu0 %1400
      %1402 = vrot.lane.b32.xlu0 %v555, 28
      %v1403 = vpop.permute.xlu0 %1402
      %1404 = vrot.lane.b32.xlu0 %v556, 28
      %v1405 = vpop.permute.xlu0 %1404
      %1406 = vrot.lane.b32.xlu0 %v557, 28
      %v1407 = vpop.permute.xlu0 %1406
      %1408 = vrot.lane.b32.xlu0 %v558, 28
      %v1409 = vpop.permute.xlu0 %1408
      %1410 = vrot.lane.b32.xlu0 %v559, 28
      %v1411 = vpop.permute.xlu0 %1410
      %1412 = vrot.lane.b32.xlu0 %v560, 28
      %v1413 = vpop.permute.xlu0 %1412
      %1414 = vrot.lane.b32.xlu0 %v561, 28
      %v1415 = vpop.permute.xlu0 %1414
      %1416 = vrot.lane.b32.xlu0 %v562, 28
      %v1417 = vpop.permute.xlu0 %1416
      %1418 = vrot.lane.b32.xlu0 %v563, 28
      %v1419 = vpop.permute.xlu0 %1418
      %1420 = vrot.lane.b32.xlu0 %v564, 28
      %v1421 = vpop.permute.xlu0 %1420
      %1422 = vrot.lane.b32.xlu0 %v565, 28
      %v1423 = vpop.permute.xlu0 %1422
      %1424 = vrot.lane.b32.xlu0 %v566, 28
      %v1425 = vpop.permute.xlu0 %1424
      %1426 = vrot.lane.b32.xlu0 %v567, 28
      %v1427 = vpop.permute.xlu0 %1426
      %1428 = vrot.lane.b32.xlu0 %v568, 28
      %v1429 = vpop.permute.xlu0 %1428
      %1430 = vrot.lane.b32.xlu0 %v569, 28
      %v1431 = vpop.permute.xlu0 %1430
      %1432 = vrot.lane.b32.xlu0 %v570, 28
      %v1433 = vpop.permute.xlu0 %1432
      %1434 = vrot.lane.b32.xlu0 %v571, 28
      %v1435 = vpop.permute.xlu0 %1434
      %1436 = vrot.lane.b32.xlu0 %v572, 28
      %v1437 = vpop.permute.xlu0 %1436
      %1438 = vrot.lane.b32.xlu0 %v573, 28
      %v1439 = vpop.permute.xlu0 %1438
      %1440 = vrot.lane.b32.xlu0 %v574, 28
      %v1441 = vpop.permute.xlu0 %1440
      %1442 = vrot.lane.b32.xlu0 %v543, 28
      %v1443 = vpop.permute.xlu0 %1442
      %1444 = vrot.lane.b32.xlu0 %v544, 28
      %v1445 = vpop.permute.xlu0 %1444
      %1478 = vrot.lane.b32.xlu0 %v748, 32
      %v1479 = vpop.permute.xlu0 %1478
      %1480 = vrot.lane.b32.xlu0 %v750, 32
      %v1481 = vpop.permute.xlu0 %1480
      %1482 = vrot.lane.b32.xlu0 %v752, 32
      %v1483 = vpop.permute.xlu0 %1482
      %1484 = vrot.lane.b32.xlu0 %v754, 32
      %v1485 = vpop.permute.xlu0 %1484
      %1486 = vrot.lane.b32.xlu0 %v756, 32
      %v1487 = vpop.permute.xlu0 %1486
      %1488 = vrot.lane.b32.xlu0 %v758, 32
      %v1489 = vpop.permute.xlu0 %1488
      %1490 = vrot.lane.b32.xlu0 %v760, 32
      %v1491 = vpop.permute.xlu0 %1490
      %1492 = vrot.lane.b32.xlu0 %v762, 32
      %v1493 = vpop.permute.xlu0 %1492
      %1494 = vrot.lane.b32.xlu0 %v764, 32
      %v1495 = vpop.permute.xlu0 %1494
      %1496 = vrot.lane.b32.xlu0 %v766, 32
      %v1497 = vpop.permute.xlu0 %1496
      %1498 = vrot.lane.b32.xlu0 %v768, 32
      %v1499 = vpop.permute.xlu0 %1498
      %1500 = vrot.lane.b32.xlu0 %v770, 32
      %v1501 = vpop.permute.xlu0 %1500
      %1502 = vrot.lane.b32.xlu0 %v772, 32
      %v1503 = vpop.permute.xlu0 %1502
      %1504 = vrot.lane.b32.xlu0 %v774, 32
      %v1505 = vpop.permute.xlu0 %1504
      %1506 = vrot.lane.b32.xlu0 %v776, 32
      %v1507 = vpop.permute.xlu0 %1506
      %1508 = vrot.lane.b32.xlu0 %v778, 32
      %v1509 = vpop.permute.xlu0 %1508
      %1510 = vrot.lane.b32.xlu0 %v780, 32
      %v1511 = vpop.permute.xlu0 %1510
      %1512 = vrot.lane.b32.xlu0 %v782, 32
      %v1513 = vpop.permute.xlu0 %1512
      %1514 = vrot.lane.b32.xlu0 %v784, 32
      %v1515 = vpop.permute.xlu0 %1514
      %1516 = vrot.lane.b32.xlu0 %v786, 32
      %v1517 = vpop.permute.xlu0 %1516
      %1518 = vrot.lane.b32.xlu0 %v788, 32
      %v1519 = vpop.permute.xlu0 %1518
      %1520 = vrot.lane.b32.xlu0 %v790, 32
      %v1521 = vpop.permute.xlu0 %1520
      %1522 = vrot.lane.b32.xlu0 %v792, 32
      %v1523 = vpop.permute.xlu0 %1522
      %1524 = vrot.lane.b32.xlu0 %v794, 32
      %v1525 = vpop.permute.xlu0 %1524
      %1526 = vrot.lane.b32.xlu0 %v796, 32
      %v1527 = vpop.permute.xlu0 %1526
      %1528 = vrot.lane.b32.xlu0 %v798, 32
      %v1529 = vpop.permute.xlu0 %1528
      %1530 = vrot.lane.b32.xlu0 %v800, 32
      %v1531 = vpop.permute.xlu0 %1530
      %1532 = vrot.lane.b32.xlu0 %v801, 32
      %v1533 = vpop.permute.xlu0 %1532
      %1534 = vrot.lane.b32.xlu0 %v740, 32
      %v1535 = vpop.permute.xlu0 %1534
      %1536 = vrot.lane.b32.xlu0 %v803, 32
      %v1537 = vpop.permute.xlu0 %1536
      %1538 = vrot.lane.b32.xlu0 %v744, 32
      %v1539 = vpop.permute.xlu0 %1538
      %1540 = vrot.lane.b32.xlu0 %v746, 32
      %v1541 = vpop.permute.xlu0 %1540
      %vm1574 = vcmask 31744
      %v1575 = vsel %vm1574, %v613, %v805
      %v1576 = vsel %vm1574, %v615, %v807
      %v1577 = vsel %vm1574, %v736, %v809
      %v1578 = vsel %vm1574, %v650, %v811
      %v1579 = vsel %vm1574, %v652, %v813
      %v1580 = vsel %vm1574, %v654, %v815
      %v1581 = vsel %vm1574, %v656, %v817
      %v1582 = vsel %vm1574, %v658, %v819
      %v1583 = vsel %vm1574, %v660, %v821
      %v1584 = vsel %vm1574, %v662, %v823
      %v1585 = vsel %vm1574, %v664, %v825
      %v1586 = vsel %vm1574, %v666, %v827
      %v1587 = vsel %vm1574, %v668, %v829
      %v1588 = vsel %vm1574, %v670, %v831
      %v1589 = vsel %vm1574, %v672, %v833
      %v1590 = vsel %vm1574, %v674, %v835
      %v1591 = vsel %vm1574, %v676, %v837
      %v1592 = vsel %vm1574, %v678, %v839
      %v1593 = vsel %vm1574, %v680, %v841
      %v1594 = vsel %vm1574, %v682, %v843
      %v1595 = vsel %vm1574, %v684, %v845
      %v1596 = vsel %vm1574, %v686, %v847
      %v1597 = vsel %vm1574, %v688, %v849
      %v1598 = vsel %vm1574, %v690, %v851
      %v1599 = vsel %vm1574, %v692, %v853
      %v1600 = vsel %vm1574, %v694, %v855
      %v1601 = vsel %vm1574, %v696, %v857
      %v1602 = vsel %vm1574, %v698, %v859
      %v1603 = vsel %vm1574, %v700, %v861
      %v1604 = vsel %vm1574, %v702, %v863
      %v1605 = vsel %vm1574, %v704, %v865
      %v1606 = vsel %vm1574, %v705, %v867
      %vm1607 = vcmask 64512
      %v1608 = vsel %vm1607, %v1575, %v902
      %v1609 = vsel %vm1607, %v1576, %v904
      %v1610 = vsel %vm1607, %v1577, %v906
      %v1611 = vsel %vm1607, %v1578, %v908
      %v1612 = vsel %vm1607, %v1579, %v910
      %v1613 = vsel %vm1607, %v1580, %v912
      %v1614 = vsel %vm1607, %v1581, %v914
      %v1615 = vsel %vm1607, %v1582, %v916
      %v1616 = vsel %vm1607, %v1583, %v918
      %v1617 = vsel %vm1607, %v1584, %v920
      %v1618 = vsel %vm1607, %v1585, %v922
      %v1619 = vsel %vm1607, %v1586, %v924
      %v1620 = vsel %vm1607, %v1587, %v926
      %v1621 = vsel %vm1607, %v1588, %v928
      %v1622 = vsel %vm1607, %v1589, %v930
      %v1623 = vsel %vm1607, %v1590, %v932
      %v1624 = vsel %vm1607, %v1591, %v934
      %v1625 = vsel %vm1607, %v1592, %v936
      %v1626 = vsel %vm1607, %v1593, %v938
      %v1627 = vsel %vm1607, %v1594, %v940
      %v1628 = vsel %vm1607, %v1595, %v942
      %v1629 = vsel %vm1607, %v1596, %v944
      %v1630 = vsel %vm1607, %v1597, %v946
      %v1631 = vsel %vm1607, %v1598, %v948
      %v1632 = vsel %vm1607, %v1599, %v950
      %v1633 = vsel %vm1607, %v1600, %v952
      %v1634 = vsel %vm1607, %v1601, %v954
      %v1635 = vsel %vm1607, %v1602, %v956
      %v1636 = vsel %vm1607, %v1603, %v958
      %v1637 = vsel %vm1607, %v1604, %v960
      %v1638 = vsel %vm1607, %v1605, %v962
      %v1639 = vsel %vm1607, %v1606, %v964
      %vm1640 = vcmask 97280
      %v1641 = vsel %vm1640, %v1608, %v999
      %v1642 = vsel %vm1640, %v1609, %v1001
      %v1643 = vsel %vm1640, %v1610, %v1003
      %v1644 = vsel %vm1640, %v1611, %v1005
      %v1645 = vsel %vm1640, %v1612, %v1007
      %v1646 = vsel %vm1640, %v1613, %v1009
      %v1647 = vsel %vm1640, %v1614, %v1011
      %v1648 = vsel %vm1640, %v1615, %v1013
      %v1649 = vsel %vm1640, %v1616, %v1015
      %v1650 = vsel %vm1640, %v1617, %v1017
      %v1651 = vsel %vm1640, %v1618, %v1019
      %v1652 = vsel %vm1640, %v1619, %v1021
      %v1653 = vsel %vm1640, %v1620, %v1023
      %v1654 = vsel %vm1640, %v1621, %v1025
      %v1655 = vsel %vm1640, %v1622, %v1027
      %v1656 = vsel %vm1640, %v1623, %v1029
      %v1657 = vsel %vm1640, %v1624, %v1031
      %v1658 = vsel %vm1640, %v1625, %v1033
      %v1659 = vsel %vm1640, %v1626, %v1035
      %v1660 = vsel %vm1640, %v1627, %v1037
      %v1661 = vsel %vm1640, %v1628, %v1039
      %v1662 = vsel %vm1640, %v1629, %v1041
      %v1663 = vsel %vm1640, %v1630, %v1043
      %v1664 = vsel %vm1640, %v1631, %v1045
      %v1665 = vsel %vm1640, %v1632, %v1047
      %v1666 = vsel %vm1640, %v1633, %v1049
      %v1667 = vsel %vm1640, %v1634, %v1051
      %v1668 = vsel %vm1640, %v1635, %v1053
      %v1669 = vsel %vm1640, %v1636, %v1055
      %v1670 = vsel %vm1640, %v1637, %v1057
      %v1671 = vsel %vm1640, %v1638, %v1059
      %v1672 = vsel %vm1640, %v1639, %v1061
      %vm1673 = vcmask 130048
      %v1674 = vsel %vm1673, %v1641, %v1095
      %v1675 = vsel %vm1673, %v1642, %v1097
      %v1676 = vsel %vm1673, %v1643, %v1099
      %v1677 = vsel %vm1673, %v1644, %v1101
      %v1678 = vsel %vm1673, %v1645, %v1103
      %v1679 = vsel %vm1673, %v1646, %v1105
      %v1680 = vsel %vm1673, %v1647, %v1107
      %v1681 = vsel %vm1673, %v1648, %v1109
      %v1682 = vsel %vm1673, %v1649, %v1111
      %v1683 = vsel %vm1673, %v1650, %v1113
      %v1684 = vsel %vm1673, %v1651, %v1115
      %v1685 = vsel %vm1673, %v1652, %v1117
      %v1686 = vsel %vm1673, %v1653, %v1119
      %v1687 = vsel %vm1673, %v1654, %v1121
      %v1688 = vsel %vm1673, %v1655, %v1123
      %v1689 = vsel %vm1673, %v1656, %v1125
      %v1690 = vsel %vm1673, %v1657, %v1127
      %v1691 = vsel %vm1673, %v1658, %v1129
      %v1692 = vsel %vm1673, %v1659, %v1131
      %v1693 = vsel %vm1673, %v1660, %v1133
      %v1694 = vsel %vm1673, %v1661, %v1135
      %v1695 = vsel %vm1673, %v1662, %v1137
      %v1696 = vsel %vm1673, %v1663, %v1139
      %v1697 = vsel %vm1673, %v1664, %v1141
      %v1698 = vsel %vm1673, %v1665, %v1143
      %v1699 = vsel %vm1673, %v1666, %v1145
      %v1700 = vsel %vm1673, %v1667, %v1147
      %v1701 = vsel %vm1673, %v1668, %v1149
      %v1702 = vsel %vm1673, %v1669, %v1151
      %v1703 = vsel %vm1673, %v1670, %v1153
      %v1704 = vsel %vm1673, %v1671, %v1155
      %v1705 = vsel %vm1673, %v1672, %v1157
      %vm1706 = vcmask 162816
      %v1707 = vsel %vm1706, %v1674, %v1191
      %v1708 = vsel %vm1706, %v1675, %v1193
      %v1709 = vsel %vm1706, %v1676, %v1195
      %v1710 = vsel %vm1706, %v1677, %v1197
      %v1711 = vsel %vm1706, %v1678, %v1199
      %v1712 = vsel %vm1706, %v1679, %v1201
      %v1713 = vsel %vm1706, %v1680, %v1203
      %v1714 = vsel %vm1706, %v1681, %v1205
      %v1715 = vsel %vm1706, %v1682, %v1207
      %v1716 = vsel %vm1706, %v1683, %v1209
      %v1717 = vsel %vm1706, %v1684, %v1211
      %v1718 = vsel %vm1706, %v1685, %v1213
      %v1719 = vsel %vm1706, %v1686, %v1215
      %v1720 = vsel %vm1706, %v1687, %v1217
      %v1721 = vsel %vm1706, %v1688, %v1219
      %v1722 = vsel %vm1706, %v1689, %v1221
      %v1723 = vsel %vm1706, %v1690, %v1223
      %v1724 = vsel %vm1706, %v1691, %v1225
      %v1725 = vsel %vm1706, %v1692, %v1227
      %v1726 = vsel %vm1706, %v1693, %v1229
      %v1727 = vsel %vm1706, %v1694, %v1231
      %v1728 = vsel %vm1706, %v1695, %v1233
      %v1729 = vsel %vm1706, %v1696, %v1235
      %v1730 = vsel %vm1706, %v1697, %v1237
      %v1731 = vsel %vm1706, %v1698, %v1239
      %v1732 = vsel %vm1706, %v1699, %v1241
      %v1733 = vsel %vm1706, %v1700, %v1243
      %v1734 = vsel %vm1706, %v1701, %v1245
      %v1735 = vsel %vm1706, %v1702, %v1247
      %v1736 = vsel %vm1706, %v1703, %v1249
      %v1737 = vsel %vm1706, %v1704, %v1251
      %v1738 = vsel %vm1706, %v1705, %v1253
      %vm1739 = vcmask 195584
      %v1740 = vsel %vm1739, %v1707, %v1287
      %v1741 = vsel %vm1739, %v1708, %v1289
      %v1742 = vsel %vm1739, %v1709, %v1291
      %v1743 = vsel %vm1739, %v1710, %v1293
      %v1744 = vsel %vm1739, %v1711, %v1295
      %v1745 = vsel %vm1739, %v1712, %v1297
      %v1746 = vsel %vm1739, %v1713, %v1299
      %v1747 = vsel %vm1739, %v1714, %v1301
      %v1748 = vsel %vm1739, %v1715, %v1303
      %v1749 = vsel %vm1739, %v1716, %v1305
      %v1750 = vsel %vm1739, %v1717, %v1307
      %v1751 = vsel %vm1739, %v1718, %v1309
      %v1752 = vsel %vm1739, %v1719, %v1311
      %v1753 = vsel %vm1739, %v1720, %v1313
      %v1754 = vsel %vm1739, %v1721, %v1315
      %v1755 = vsel %vm1739, %v1722, %v1317
      %v1756 = vsel %vm1739, %v1723, %v1319
      %v1757 = vsel %vm1739, %v1724, %v1321
      %v1758 = vsel %vm1739, %v1725, %v1323
      %v1759 = vsel %vm1739, %v1726, %v1325
      %v1760 = vsel %vm1739, %v1727, %v1327
      %v1761 = vsel %vm1739, %v1728, %v1329
      %v1762 = vsel %vm1739, %v1729, %v1331
      %v1763 = vsel %vm1739, %v1730, %v1333
      %v1764 = vsel %vm1739, %v1731, %v1335
      %v1765 = vsel %vm1739, %v1732, %v1337
      %v1766 = vsel %vm1739, %v1733, %v1339
      %v1767 = vsel %vm1739, %v1734, %v1341
      %v1768 = vsel %vm1739, %v1735, %v1343
      %v1769 = vsel %vm1739, %v1736, %v1345
      %v1770 = vsel %vm1739, %v1737, %v1347
      %v1771 = vsel %vm1739, %v1738, %v1349
      %vm1772 = vcmask 228352
      %v1773 = vsel %vm1772, %v1740, %v1383
      %v1774 = vsel %vm1772, %v1741, %v1385
      %v1775 = vsel %vm1772, %v1742, %v1387
      %v1776 = vsel %vm1772, %v1743, %v1389
      %v1777 = vsel %vm1772, %v1744, %v1391
      %v1778 = vsel %vm1772, %v1745, %v1393
      %v1779 = vsel %vm1772, %v1746, %v1395
      %v1780 = vsel %vm1772, %v1747, %v1397
      %v1781 = vsel %vm1772, %v1748, %v1399
      %v1782 = vsel %vm1772, %v1749, %v1401
      %v1783 = vsel %vm1772, %v1750, %v1403
      %v1784 = vsel %vm1772, %v1751, %v1405
      %v1785 = vsel %vm1772, %v1752, %v1407
      %v1786 = vsel %vm1772, %v1753, %v1409
      %v1787 = vsel %vm1772, %v1754, %v1411
      %v1788 = vsel %vm1772, %v1755, %v1413
      %v1789 = vsel %vm1772, %v1756, %v1415
      %v1790 = vsel %vm1772, %v1757, %v1417
      %v1791 = vsel %vm1772, %v1758, %v1419
      %v1792 = vsel %vm1772, %v1759, %v1421
      %v1793 = vsel %vm1772, %v1760, %v1423
      %v1794 = vsel %vm1772, %v1761, %v1425
      %v1795 = vsel %vm1772, %v1762, %v1427
      %v1796 = vsel %vm1772, %v1763, %v1429
      %v1797 = vsel %vm1772, %v1764, %v1431
      %v1798 = vsel %vm1772, %v1765, %v1433
      %v1799 = vsel %vm1772, %v1766, %v1435
      %v1800 = vsel %vm1772, %v1767, %v1437
      %v1801 = vsel %vm1772, %v1768, %v1439
      %v1802 = vsel %vm1772, %v1769, %v1441
      %v1803 = vsel %vm1772, %v1770, %v1443
      %v1804 = vsel %vm1772, %v1771, %v1445
      %vm1805 = vcmask 261120
      %v1806 = vsel %vm1805, %v1773, %v1479
      %v1807 = vsel %vm1805, %v1774, %v1481
      %v1808 = vsel %vm1805, %v1775, %v1483
      %v1809 = vsel %vm1805, %v1776, %v1485
      %v1810 = vsel %vm1805, %v1777, %v1487
      %v1811 = vsel %vm1805, %v1778, %v1489
      %v1812 = vsel %vm1805, %v1779, %v1491
      %v1813 = vsel %vm1805, %v1780, %v1493
      %v1814 = vsel %vm1805, %v1781, %v1495
      %v1815 = vsel %vm1805, %v1782, %v1497
      %v1816 = vsel %vm1805, %v1783, %v1499
      %v1817 = vsel %vm1805, %v1784, %v1501
      %v1818 = vsel %vm1805, %v1785, %v1503
      %v1819 = vsel %vm1805, %v1786, %v1505
      %v1820 = vsel %vm1805, %v1787, %v1507
      %v1821 = vsel %vm1805, %v1788, %v1509
      %v1822 = vsel %vm1805, %v1789, %v1511
      %v1823 = vsel %vm1805, %v1790, %v1513
      %v1824 = vsel %vm1805, %v1791, %v1515
      %v1825 = vsel %vm1805, %v1792, %v1517
      %v1826 = vsel %vm1805, %v1793, %v1519
      %v1827 = vsel %vm1805, %v1794, %v1521
      %v1828 = vsel %vm1805, %v1795, %v1523
      %v1829 = vsel %vm1805, %v1796, %v1525
      %v1830 = vsel %vm1805, %v1797, %v1527
      %v1831 = vsel %vm1805, %v1798, %v1529
      %v1832 = vsel %vm1805, %v1799, %v1531
      %v1833 = vsel %vm1805, %v1800, %v1533
      %v1834 = vsel %vm1805, %v1801, %v1535
      %v1835 = vsel %vm1805, %v1802, %v1537
      %v1836 = vsel %vm1805, %v1803, %v1539
      %v1837 = vsel %vm1805, %v1804, %v1541
      %v1838 = vmul.f32 %v1806, %v575
      %v1839 = vmul.f32 %v1807, %v576
      %v1840 = vmul.f32 %v1808, %v577
      %v1841 = vmul.f32 %v1809, %v578
      %v1842 = vmul.f32 %v1810, %v579
      %v1843 = vmul.f32 %v1811, %v580
      %v1844 = vmul.f32 %v1812, %v581
      %v1845 = vmul.f32 %v1813, %v582
      %v1846 = vmul.f32 %v1814, %v583
      %v1847 = vmul.f32 %v1815, %v584
      %v1848 = vmul.f32 %v1816, %v585
      %v1849 = vmul.f32 %v1817, %v586
      %v1850 = vmul.f32 %v1818, %v587
      %v1851 = vmul.f32 %v1819, %v588
      %v1852 = vmul.f32 %v1820, %v589
      %v1853 = vmul.f32 %v1821, %v590
      %v1854 = vmul.f32 %v1822, %v591
      %v1855 = vmul.f32 %v1823, %v592
      %v1856 = vmul.f32 %v1824, %v593
      %v1857 = vmul.f32 %v1825, %v594
      %v1858 = vmul.f32 %v1826, %v595
      %v1859 = vmul.f32 %v1827, %v596
      %v1860 = vmul.f32 %v1828, %v597
      %v1861 = vmul.f32 %v1829, %v598
      %v1862 = vmul.f32 %v1830, %v599
      %v1863 = vmul.f32 %v1831, %v600
      %v1864 = vmul.f32 %v1832, %v601
      %v1865 = vmul.f32 %v1833, %v602
      %v1866 = vmul.f32 %v1834, %v603
      %v1867 = vmul.f32 %v1835, %v604
      %v1868 = vmul.f32 %v1836, %v605
      %v1869 = vmul.f32 %v1837, %v606
      %v1870 = vpack.c.bf16 %v1839, %v1838
      %v1871 = vpack.c.bf16 %v1841, %v1840
      %v1872 = vpack.c.bf16 %v1843, %v1842
      %v1873 = vpack.c.bf16 %v1845, %v1844
      %v1874 = vpack.c.bf16 %v1847, %v1846
      %v1875 = vpack.c.bf16 %v1849, %v1848
      %v1876 = vpack.c.bf16 %v1851, %v1850
      %v1877 = vpack.c.bf16 %v1853, %v1852
      %v1878 = vpack.c.bf16 %v1855, %v1854
      %v1879 = vpack.c.bf16 %v1857, %v1856
      %v1880 = vpack.c.bf16 %v1859, %v1858
      %v1881 = vpack.c.bf16 %v1861, %v1860
      %v1882 = vpack.c.bf16 %v1863, %v1862
      %v1883 = vpack.c.bf16 %v1865, %v1864
      %v1884 = vpack.c.bf16 %v1867, %v1866
      %v1885 = vpack.c.bf16 %v1869, %v1868
      %v1886 = vld [vmem:[%s6] sm:$0xf]
      %v1887 = vld [vmem:[%s6 + $0x4] sm:$0xf]
      %v1888 = vld [vmem:[%s6 + $0x8] sm:$0xf]
      %v1889 = vld [vmem:[%s6 + $0xc] sm:$0xf]
      %v1890 = vld [vmem:[%s6 + $0x10] sm:$0x3]
      %v1891 = vld [vmem:[%s7] sm:$0x1]
      %v1893 = vlaneseq
      %v1894 = vshrl.u32 %v1893, 7
      %v1895 = vsub.s32 0, %v1894
      %v1896 = vrot.slane %v1891, %v1895
      %v1903 = vunpack.c.l.b16 %v1886
      %v1904 = vunpack.c.l.b16 %v1887
      %v1905 = vunpack.c.l.b16 %v1888
      %v1906 = vunpack.c.l.b16 %v1889
      %v1907 = vunpack.c.l.b16 %v1890
      %v1908 = vpack.c.b16 %v1904, %v1903
      %v1909 = vpack.c.b16 %v1906, %v1905
      %v1910 = vpack.c.b16 %v1907, %v1907
      %vm1913 = vcmask 293888
      %v1915 = vsel %vm1913, %v1870, 0
      %v1918 = vsel %vm1913, %v1871, 0
      %v1921 = vsel %vm1913, %v1872, 0
      %v1924 = vsel %vm1913, %v1873, 0
      %v1927 = vsel %vm1913, %v1874, 0
      %v1930 = vsel %vm1913, %v1875, 0
      %v1933 = vsel %vm1913, %v1876, 0
      %v1936 = vsel %vm1913, %v1877, 0
      %v1939 = vsel %vm1913, %v1878, 0
      %v1942 = vsel %vm1913, %v1879, 0
      %v1945 = vsel %vm1913, %v1880, 0
      %v1948 = vsel %vm1913, %v1881, 0
      %v1951 = vsel %vm1913, %v1882, 0
      %v1954 = vsel %vm1913, %v1883, 0
      %v1957 = vsel %vm1913, %v1884, 0
      %v1960 = vsel %vm1913, %v1885, 0
      %vm1962 = vcmask 1041408
      %v1964 = vsel %vm1962, %v1910, 0
      %1966 = vmatprep.subr.bf16.mxu0 0
      %1967 = vmatpush1.bf16.msra.mxu0 %v1908
      %1968 = vmatprep.subr.bf16.mxu0 0
      %1969 = vmatpush1.bf16.msra.mxu0 %v1909
      %1970 = vmatprep.subr.bf16.mxu0 0
      %1971 = vmatpush1.bf16.msra.mxu0 %v1964
      %1972 = vmatprep.subr.bf16.mxu0 0
      %1973 = vmatpush1.bf16.msra.mxu0 0
      %1974 = vmatprep.subr.bf16.mxu0 0
      %1975 = vmatpush1.bf16.msra.mxu0 0
      %1976 = vmatprep.subr.bf16.mxu0 0
      %1977 = vmatpush1.bf16.msra.mxu0 0
      %1978 = vmatprep.subr.bf16.mxu0 0
      %1979 = vmatpush1.bf16.msra.mxu0 0
      %1980 = vmatprep.subr.bf16.mxu0 0
      %1981 = vmatpush1.bf16.msra.mxu0 0
      %1982 = vmatprep.subr.bf16.mxu0 0
      %1983 = vmatpush1.bf16.msra.mxu0 0
      %1984 = vmatprep.subr.bf16.mxu0 0
      %1985 = vmatpush1.bf16.msra.mxu0 0
      %1986 = vmatprep.subr.bf16.mxu0 0
      %1987 = vmatpush1.bf16.msra.mxu0 0
      %1988 = vmatprep.subr.bf16.mxu0 0
      %1989 = vmatpush1.bf16.msra.mxu0 0
      %1990 = vmatprep.subr.bf16.mxu0 0
      %1991 = vmatpush1.bf16.msra.mxu0 0
      %1992 = vmatprep.subr.bf16.mxu0 0
      %1993 = vmatpush1.bf16.msra.mxu0 0
      %1994 = vmatprep.subr.bf16.mxu0 0
      %1995 = vmatpush1.bf16.msra.mxu0 0
      %1996 = vmatprep.subr.bf16.mxu0 0
      %1997 = vmatpush1.bf16.msra.mxu0 0
      %1998 = vmatprep.mubr.bf16.mxu0 0
      %1999 = vmatmul.mubr.bf16.gmra.mrb[0].mxu0 %v1915
      %v2000 = vpop.f32.mrb[0].mxu0
      %v2001 = vadd.f32 %v1896, %v2000
      %v2002 = vpop.f32.mrb[0].mxu0
      %v2003 = vpop.f32.mrb[0].mxu0
      %v2004 = vadd.f32 %v1896, %v2003
      %v2005 = vpop.f32.mrb[0].mxu0
      %2006 = vmatprep.mubr.bf16.mxu0 0
      %2007 = vmatmul.mubr.bf16.gmra.mrb[0].mxu0 %v1918
      %v2008 = vpop.f32.mrb[0].mxu0
      %v2009 = vadd.f32 %v1896, %v2008
      %v2010 = vpop.f32.mrb[0].mxu0
      %v2011 = vpop.f32.mrb[0].mxu0
      %v2012 = vadd.f32 %v1896, %v2011
      %v2013 = vpop.f32.mrb[0].mxu0
      %2014 = vmatprep.mubr.bf16.mxu0 0
      %2015 = vmatmul.mubr.bf16.gmra.mrb[0].mxu0 %v1921
      %v2016 = vpop.f32.mrb[0].mxu0
      %v2017 = vadd.f32 %v1896, %v2016
      %v2018 = vpop.f32.mrb[0].mxu0
      %v2019 = vpop.f32.mrb[0].mxu0
      %v2020 = vadd.f32 %v1896, %v2019
      %v2021 = vpop.f32.mrb[0].mxu0
      %2022 = vmatprep.mubr.bf16.mxu0 0
      %2023 = vmatmul.mubr.bf16.gmra.mrb[0].mxu0 %v1924
      %v2024 = vpop.f32.mrb[0].mxu0
      %v2025 = vadd.f32 %v1896, %v2024
      %v2026 = vpop.f32.mrb[0].mxu0
      %v2027 = vpop.f32.mrb[0].mxu0
      %v2028 = vadd.f32 %v1896, %v2027
      %v2029 = vpop.f32.mrb[0].mxu0
      %2030 = vmatprep.mubr.bf16.mxu0 0
      %2031 = vmatmul.mubr.bf16.gmra.mrb[0].mxu0 %v1927
      %v2032 = vpop.f32.mrb[0].mxu0
      %v2033 = vadd.f32 %v1896, %v2032
      %v2034 = vpop.f32.mrb[0].mxu0
      %v2035 = vpop.f32.mrb[0].mxu0
      %v2036 = vadd.f32 %v1896, %v2035
      %v2037 = vpop.f32.mrb[0].mxu0
      %2038 = vmatprep.mubr.bf16.mxu0 0
      %2039 = vmatmul.mubr.bf16.gmra.mrb[0].mxu0 %v1930
      %v2040 = vpop.f32.mrb[0].mxu0
      %v2041 = vadd.f32 %v1896, %v2040
      %v2042 = vpop.f32.mrb[0].mxu0
      %v2043 = vpop.f32.mrb[0].mxu0
      %v2044 = vadd.f32 %v1896, %v2043
      %v2045 = vpop.f32.mrb[0].mxu0
      %2046 = vmatprep.mubr.bf16.mxu0 0
      %2047 = vmatmul.mubr.bf16.gmra.mrb[0].mxu0 %v1933
      %v2048 = vpop.f32.mrb[0].mxu0
      %v2049 = vadd.f32 %v1896, %v2048
      %v2050 = vpop.f32.mrb[0].mxu0
      %v2051 = vpop.f32.mrb[0].mxu0
      %v2052 = vadd.f32 %v1896, %v2051
      %v2053 = vpop.f32.mrb[0].mxu0
      %2054 = vmatprep.mubr.bf16.mxu0 0
      %2055 = vmatmul.mubr.bf16.gmra.mrb[0].mxu0 %v1936
      %v2056 = vpop.f32.mrb[0].mxu0
      %v2057 = vadd.f32 %v1896, %v2056
      %v2058 = vpop.f32.mrb[0].mxu0
      %v2059 = vpop.f32.mrb[0].mxu0
      %v2060 = vadd.f32 %v1896, %v2059
      %v2061 = vpop.f32.mrb[0].mxu0
      %2062 = vmatprep.mubr.bf16.mxu0 0
      %2063 = vmatmul.mubr.bf16.gmra.mrb[0].mxu0 %v1939
      %v2064 = vpop.f32.mrb[0].mxu0
      %v2065 = vadd.f32 %v1896, %v2064
      %v2066 = vpop.f32.mrb[0].mxu0
      %v2067 = vpop.f32.mrb[0].mxu0
      %v2068 = vadd.f32 %v1896, %v2067
      %v2069 = vpop.f32.mrb[0].mxu0
      %2070 = vmatprep.mubr.bf16.mxu0 0
      %2071 = vmatmul.mubr.bf16.gmra.mrb[0].mxu0 %v1942
      %v2072 = vpop.f32.mrb[0].mxu0
      %v2073 = vadd.f32 %v1896, %v2072
      %v2074 = vpop.f32.mrb[0].mxu0
      %v2075 = vpop.f32.mrb[0].mxu0
      %v2076 = vadd.f32 %v1896, %v2075
      %v2077 = vpop.f32.mrb[0].mxu0
      %2078 = vmatprep.mubr.bf16.mxu0 0
      %2079 = vmatmul.mubr.bf16.gmra.mrb[0].mxu0 %v1945
      %v2080 = vpop.f32.mrb[0].mxu0
      %v2081 = vadd.f32 %v1896, %v2080
      %v2082 = vpop.f32.mrb[0].mxu0
      %v2083 = vpop.f32.mrb[0].mxu0
      %v2084 = vadd.f32 %v1896, %v2083
      %v2085 = vpop.f32.mrb[0].mxu0
      %2086 = vmatprep.mubr.bf16.mxu0 0
      %2087 = vmatmul.mubr.bf16.gmra.mrb[0].mxu0 %v1948
      %v2088 = vpop.f32.mrb[0].mxu0
      %v2089 = vadd.f32 %v1896, %v2088
      %v2090 = vpop.f32.mrb[0].mxu0
      %v2091 = vpop.f32.mrb[0].mxu0
      %v2092 = vadd.f32 %v1896, %v2091
      %v2093 = vpop.f32.mrb[0].mxu0
      %2094 = vmatprep.mubr.bf16.mxu0 0
      %2095 = vmatmul.mubr.bf16.gmra.mrb[0].mxu0 %v1951
      %v2096 = vpop.f32.mrb[0].mxu0
      %v2097 = vadd.f32 %v1896, %v2096
      %v2098 = vpop.f32.mrb[0].mxu0
      %v2099 = vpop.f32.mrb[0].mxu0
      %v2100 = vadd.f32 %v1896, %v2099
      %v2101 = vpop.f32.mrb[0].mxu0
      %2102 = vmatprep.mubr.bf16.mxu0 0
      %2103 = vmatmul.mubr.bf16.gmra.mrb[0].mxu0 %v1954
      %v2104 = vpop.f32.mrb[0].mxu0
      %v2105 = vadd.f32 %v1896, %v2104
      %v2106 = vpop.f32.mrb[0].mxu0
      %v2107 = vpop.f32.mrb[0].mxu0
      %v2108 = vadd.f32 %v1896, %v2107
      %v2109 = vpop.f32.mrb[0].mxu0
      %2110 = vmatprep.mubr.bf16.mxu0 0
      %2111 = vmatmul.mubr.bf16.gmra.mrb[0].mxu0 %v1957
      %v2112 = vpop.f32.mrb[0].mxu0
      %v2113 = vadd.f32 %v1896, %v2112
      %v2114 = vpop.f32.mrb[0].mxu0
      %v2115 = vpop.f32.mrb[0].mxu0
      %v2116 = vadd.f32 %v1896, %v2115
      %v2117 = vpop.f32.mrb[0].mxu0
      %2118 = vmatprep.mubr.bf16.mxu0 0
      %2119 = vmatmul.mubr.bf16.gmra.mrb[0].mxu0 %v1960
      %v2120 = vpop.f32.mrb[0].mxu0
      %v2121 = vadd.f32 %v1896, %v2120
      %v2122 = vpop.f32.mrb[0].mxu0
      %v2123 = vpop.f32.mrb[0].mxu0
      %v2124 = vadd.f32 %v1896, %v2123
      %v2125 = vpop.f32.mrb[0].mxu0
      %2126 = vdwg.mxu0
      %v2127 = vmax.f32 %v2001, 0.0
      %v2128 = vmax.f32 %v2004, 0.0
      %v2129 = vmax.f32 %v2009, 0.0
      %v2130 = vmax.f32 %v2012, 0.0
      %v2131 = vmax.f32 %v2017, 0.0
      %v2132 = vmax.f32 %v2020, 0.0
      %v2133 = vmax.f32 %v2025, 0.0
      %v2134 = vmax.f32 %v2028, 0.0
      %v2135 = vmax.f32 %v2033, 0.0
      %v2136 = vmax.f32 %v2036, 0.0
      %v2137 = vmax.f32 %v2041, 0.0
      %v2138 = vmax.f32 %v2044, 0.0
      %v2139 = vmax.f32 %v2049, 0.0
      %v2140 = vmax.f32 %v2052, 0.0
      %v2141 = vmax.f32 %v2057, 0.0
      %v2142 = vmax.f32 %v2060, 0.0
      %v2143 = vmax.f32 %v2065, 0.0
      %v2144 = vmax.f32 %v2068, 0.0
      %v2145 = vmax.f32 %v2073, 0.0
      %v2146 = vmax.f32 %v2076, 0.0
      %v2147 = vmax.f32 %v2081, 0.0
      %v2148 = vmax.f32 %v2084, 0.0
      %v2149 = vmax.f32 %v2089, 0.0
      %v2150 = vmax.f32 %v2092, 0.0
      %v2151 = vmax.f32 %v2097, 0.0
      %v2152 = vmax.f32 %v2100, 0.0
      %v2153 = vmax.f32 %v2105, 0.0
      %v2154 = vmax.f32 %v2108, 0.0
      %v2155 = vmax.f32 %v2113, 0.0
      %v2156 = vmax.f32 %v2116, 0.0
      %v2157 = vmax.f32 %v2121, 0.0
      %v2158 = vmax.f32 %v2124, 0.0
      %v2159 = vld [vmem:[%s3] sm:$0xff]
      %v2160 = vld [vmem:[%s3 + $0x8] sm:$0xff]
      %v2161 = vld [vmem:[%s3 + $0x10] sm:$0xff]
      %v2162 = vld [vmem:[%s3 + $0x18] sm:$0xff]
      %v2163 = vld [vmem:[%s3 + $0x20] sm:$0xff]
      %v2164 = vld [vmem:[%s3 + $0x28] sm:$0xff]
      %v2165 = vld [vmem:[%s3 + $0x30] sm:$0xff]
      %v2166 = vld [vmem:[%s3 + $0x38] sm:$0xff]
      %v2167 = vld [vmem:[%s3 + $0x40] sm:$0xff]
      %v2168 = vld [vmem:[%s3 + $0x48] sm:$0xff]
      %v2169 = vld [vmem:[%s3 + $0x50] sm:$0xff]
      %v2170 = vld [vmem:[%s3 + $0x58] sm:$0xff]
      %v2171 = vld [vmem:[%s3 + $0x60] sm:$0xff]
      %v2172 = vld [vmem:[%s3 + $0x68] sm:$0xff]
      %v2173 = vld [vmem:[%s3 + $0x70] sm:$0xff]
      %v2174 = vld [vmem:[%s3 + $0x78] sm:$0xff]
      %v2175 = vld [vmem:[%s3 + $0x80] sm:$0xff]
      %v2176 = vld [vmem:[%s3 + $0x88] sm:$0xff]
      %v2177 = vld [vmem:[%s3 + $0x90] sm:$0xff]
      %v2178 = vld [vmem:[%s3 + $0x98] sm:$0xff]
      %v2179 = vld [vmem:[%s3 + $0xa0] sm:$0xff]
      %v2180 = vld [vmem:[%s3 + $0xa8] sm:$0xff]
      %v2181 = vld [vmem:[%s3 + $0xb0] sm:$0xff]
      %v2182 = vld [vmem:[%s3 + $0xb8] sm:$0xff]
      %v2183 = vld [vmem:[%s3 + $0xc0] sm:$0xff]
      %v2184 = vld [vmem:[%s3 + $0xc8] sm:$0xff]
      %v2185 = vld [vmem:[%s3 + $0xd0] sm:$0xff]
      %v2186 = vld [vmem:[%s3 + $0xd8] sm:$0xff]
      %v2187 = vld [vmem:[%s3 + $0xe0] sm:$0xff]
      %v2188 = vld [vmem:[%s3 + $0xe8] sm:$0xff]
      %v2189 = vld [vmem:[%s3 + $0xf0] sm:$0xff]
      %v2190 = vld [vmem:[%s3 + $0xf8] sm:$0xff]
      %v2191 = vld [vmem:[%s3 + $0x100] sm:$0xff]
      %v2192 = vld [vmem:[%s3 + $0x108] sm:$0xff]
      %v2193 = vld [vmem:[%s3 + $0x110] sm:$0xff]
      %v2194 = vld [vmem:[%s3 + $0x118] sm:$0xff]
      %v2195 = vld [vmem:[%s3 + $0x120] sm:$0xff]
      %v2196 = vld [vmem:[%s3 + $0x128] sm:$0xff]
      %v2197 = vld [vmem:[%s3 + $0x130] sm:$0xff]
      %v2198 = vld [vmem:[%s3 + $0x138] sm:$0xff]
      %v2199 = vld [vmem:[%s3 + $0x140] sm:$0xff]
      %v2200 = vld [vmem:[%s3 + $0x148] sm:$0xff]
      %v2201 = vld [vmem:[%s3 + $0x150] sm:$0xff]
      %v2202 = vld [vmem:[%s3 + $0x158] sm:$0xff]
      %v2203 = vld [vmem:[%s3 + $0x160] sm:$0xff]
      %v2204 = vld [vmem:[%s3 + $0x168] sm:$0xff]
      %v2205 = vld [vmem:[%s3 + $0x170] sm:$0xff]
      %v2206 = vld [vmem:[%s3 + $0x178] sm:$0xff]
      %v2207 = vld [vmem:[%s3 + $0x180] sm:$0xff]
      %v2208 = vld [vmem:[%s3 + $0x188] sm:$0xff]
      %v2209 = vld [vmem:[%s3 + $0x190] sm:$0xff]
      %v2210 = vld [vmem:[%s3 + $0x198] sm:$0xff]
      %v2211 = vld [vmem:[%s3 + $0x1a0] sm:$0xff]
      %v2212 = vld [vmem:[%s3 + $0x1a8] sm:$0xff]
      %v2213 = vld [vmem:[%s3 + $0x1b0] sm:$0xff]
      %v2214 = vld [vmem:[%s3 + $0x1b8] sm:$0xff]
      %v2215 = vld [vmem:[%s3 + $0x1c0] sm:$0xff]
      %v2216 = vld [vmem:[%s3 + $0x1c8] sm:$0xff]
      %v2217 = vld [vmem:[%s3 + $0x1d0] sm:$0xff]
      %v2218 = vld [vmem:[%s3 + $0x1d8] sm:$0xff]
      %v2219 = vld [vmem:[%s3 + $0x1e0] sm:$0xff]
      %v2220 = vld [vmem:[%s3 + $0x1e8] sm:$0xff]
      %v2221 = vld [vmem:[%s3 + $0x1f0] sm:$0xff]
      %v2222 = vld [vmem:[%s3 + $0x1f8] sm:$0xff]
      %v2223 = vld [vmem:[%s3 + $0x200] sm:$0xff]
      %v2224 = vld [vmem:[%s3 + $0x208] sm:$0xff]
      %v2225 = vld [vmem:[%s3 + $0x210] sm:$0xff]
      %v2226 = vld [vmem:[%s3 + $0x218] sm:$0xff]
      %v2227 = vld [vmem:[%s3 + $0x220] sm:$0xff]
      %v2228 = vld [vmem:[%s3 + $0x228] sm:$0xff]
      %v2229 = vld [vmem:[%s3 + $0x230] sm:$0xff]
      %v2230 = vld [vmem:[%s3 + $0x238] sm:$0xff]
      %v2231 = vld [vmem:[%s3 + $0x240] sm:$0xff]
      %v2232 = vld [vmem:[%s3 + $0x248] sm:$0xff]
      %v2233 = vld [vmem:[%s3 + $0x250] sm:$0xff]
      %v2234 = vld [vmem:[%s3 + $0x258] sm:$0xff]
      %v2235 = vld [vmem:[%s3 + $0x260] sm:$0xff]
      %v2236 = vld [vmem:[%s3 + $0x268] sm:$0xff]
      %v2237 = vld [vmem:[%s3 + $0x270] sm:$0xff]
      %v2238 = vld [vmem:[%s3 + $0x278] sm:$0xff]
      %v2239 = vld [vmem:[%s3 + $0x280] sm:$0xff]
      %v2240 = vld [vmem:[%s3 + $0x288] sm:$0xff]
      %v2241 = vld [vmem:[%s3 + $0x290] sm:$0xff]
      %v2242 = vld [vmem:[%s3 + $0x298] sm:$0xff]
      %v2243 = vld [vmem:[%s3 + $0x2a0] sm:$0xff]
      %v2244 = vld [vmem:[%s3 + $0x2a8] sm:$0xff]
      %v2245 = vld [vmem:[%s3 + $0x2b0] sm:$0xff]
      %v2246 = vld [vmem:[%s3 + $0x2b8] sm:$0xff]
      %v2247 = vld [vmem:[%s3 + $0x2c0] sm:$0xff]
      %v2248 = vld [vmem:[%s3 + $0x2c8] sm:$0xff]
      %v2249 = vld [vmem:[%s3 + $0x2d0] sm:$0xff]
      %v2250 = vld [vmem:[%s3 + $0x2d8] sm:$0xff]
      %v2251 = vld [vmem:[%s3 + $0x2e0] sm:$0xff]
      %v2252 = vld [vmem:[%s3 + $0x2e8] sm:$0xff]
      %v2253 = vld [vmem:[%s3 + $0x2f0] sm:$0xff]
      %v2254 = vld [vmem:[%s3 + $0x2f8] sm:$0xff]
      %v2258 = vrot.slane %v2156, 7
      %v2259 = vrot.slane %v2157, 7
      %v2260 = vsel %vm610, %v2258, %v2259
      %v2261 = vrot.slane %v2158, 7
      %v2262 = vsel %vm610, %v2259, %v2261
      %v2295 = vrot.slane %v2127, 7
      %v2296 = vrot.slane %v2128, 7
      %v2297 = vsel %vm610, %v2295, %v2296
      %v2298 = vrot.slane %v2129, 7
      %v2299 = vsel %vm610, %v2296, %v2298
      %v2300 = vrot.slane %v2130, 7
      %v2301 = vsel %vm610, %v2298, %v2300
      %v2302 = vrot.slane %v2131, 7
      %v2303 = vsel %vm610, %v2300, %v2302
      %v2304 = vrot.slane %v2132, 7
      %v2305 = vsel %vm610, %v2302, %v2304
      %v2306 = vrot.slane %v2133, 7
      %v2307 = vsel %vm610, %v2304, %v2306
      %v2308 = vrot.slane %v2134, 7
      %v2309 = vsel %vm610, %v2306, %v2308
      %v2310 = vrot.slane %v2135, 7
      %v2311 = vsel %vm610, %v2308, %v2310
      %v2312 = vrot.slane %v2136, 7
      %v2313 = vsel %vm610, %v2310, %v2312
      %v2314 = vrot.slane %v2137, 7
      %v2315 = vsel %vm610, %v2312, %v2314
      %v2316 = vrot.slane %v2138, 7
      %v2317 = vsel %vm610, %v2314, %v2316
      %v2318 = vrot.slane %v2139, 7
      %v2319 = vsel %vm610, %v2316, %v2318
      %v2320 = vrot.slane %v2140, 7
      %v2321 = vsel %vm610, %v2318, %v2320
      %v2322 = vrot.slane %v2141, 7
      %v2323 = vsel %vm610, %v2320, %v2322
      %v2324 = vrot.slane %v2142, 7
      %v2325 = vsel %vm610, %v2322, %v2324
      %v2326 = vrot.slane %v2143, 7
      %v2327 = vsel %vm610, %v2324, %v2326
      %v2328 = vrot.slane %v2144, 7
      %v2329 = vsel %vm610, %v2326, %v2328
      %v2330 = vrot.slane %v2145, 7
      %v2331 = vsel %vm610, %v2328, %v2330
      %v2332 = vrot.slane %v2146, 7
      %v2333 = vsel %vm610, %v2330, %v2332
      %v2334 = vrot.slane %v2147, 7
      %v2335 = vsel %vm610, %v2332, %v2334
      %v2336 = vrot.slane %v2148, 7
      %v2337 = vsel %vm610, %v2334, %v2336
      %v2338 = vrot.slane %v2149, 7
      %v2339 = vsel %vm610, %v2336, %v2338
      %v2340 = vrot.slane %v2150, 7
      %v2341 = vsel %vm610, %v2338, %v2340
      %v2342 = vrot.slane %v2151, 7
      %v2343 = vsel %vm610, %v2340, %v2342
      %v2344 = vrot.slane %v2152, 7
      %v2345 = vsel %vm610, %v2342, %v2344
      %v2346 = vrot.slane %v2153, 7
      %v2347 = vsel %vm610, %v2344, %v2346
      %v2348 = vrot.slane %v2154, 7
      %v2349 = vsel %vm610, %v2346, %v2348
      %v2350 = vrot.slane %v2155, 7
      %v2351 = vsel %vm610, %v2348, %v2350
      %v2352 = vsel %vm610, %v2350, %v2258
      %v2383 = vsel %vm610, %v2261, %v2295
      %v2384 = vrot.slane %v2157, 1
      %v2385 = vrot.slane %v2158, 1
      %v2386 = vsel %vm737, %v2384, %v2385
      %v2388 = vrot.slane %v2127, 1
      %v2389 = vrot.slane %v2128, 1
      %v2390 = vsel %vm737, %v2388, %v2389
      %v2391 = vrot.slane %v2129, 1
      %v2392 = vsel %vm737, %v2389, %v2391
      %v2393 = vrot.slane %v2130, 1
      %v2394 = vsel %vm737, %v2391, %v2393
      %v2395 = vrot.slane %v2131, 1
      %v2396 = vsel %vm737, %v2393, %v2395
      %v2397 = vrot.slane %v2132, 1
      %v2398 = vsel %vm737, %v2395, %v2397
      %v2399 = vrot.slane %v2133, 1
      %v2400 = vsel %vm737, %v2397, %v2399
      %v2401 = vrot.slane %v2134, 1
      %v2402 = vsel %vm737, %v2399, %v2401
      %v2403 = vrot.slane %v2135, 1
      %v2404 = vsel %vm737, %v2401, %v2403
      %v2405 = vrot.slane %v2136, 1
      %v2406 = vsel %vm737, %v2403, %v2405
      %v2407 = vrot.slane %v2137, 1
      %v2408 = vsel %vm737, %v2405, %v2407
      %v2409 = vrot.slane %v2138, 1
      %v2410 = vsel %vm737, %v2407, %v2409
      %v2411 = vrot.slane %v2139, 1
      %v2412 = vsel %vm737, %v2409, %v2411
      %v2413 = vrot.slane %v2140, 1
      %v2414 = vsel %vm737, %v2411, %v2413
      %v2415 = vrot.slane %v2141, 1
      %v2416 = vsel %vm737, %v2413, %v2415
      %v2417 = vrot.slane %v2142, 1
      %v2418 = vsel %vm737, %v2415, %v2417
      %v2419 = vrot.slane %v2143, 1
      %v2420 = vsel %vm737, %v2417, %v2419
      %v2421 = vrot.slane %v2144, 1
      %v2422 = vsel %vm737, %v2419, %v2421
      %v2423 = vrot.slane %v2145, 1
      %v2424 = vsel %vm737, %v2421, %v2423
      %v2425 = vrot.slane %v2146, 1
      %v2426 = vsel %vm737, %v2423, %v2425
      %v2427 = vrot.slane %v2147, 1
      %v2428 = vsel %vm737, %v2425, %v2427
      %v2429 = vrot.slane %v2148, 1
      %v2430 = vsel %vm737, %v2427, %v2429
      %v2431 = vrot.slane %v2149, 1
      %v2432 = vsel %vm737, %v2429, %v2431
      %v2433 = vrot.slane %v2150, 1
      %v2434 = vsel %vm737, %v2431, %v2433
      %v2435 = vrot.slane %v2151, 1
      %v2436 = vsel %vm737, %v2433, %v2435
      %v2437 = vrot.slane %v2152, 1
      %v2438 = vsel %vm737, %v2435, %v2437
      %v2439 = vrot.slane %v2153, 1
      %v2440 = vsel %vm737, %v2437, %v2439
      %v2441 = vrot.slane %v2154, 1
      %v2442 = vsel %vm737, %v2439, %v2441
      %v2443 = vrot.slane %v2155, 1
      %v2444 = vsel %vm737, %v2441, %v2443
      %v2445 = vrot.slane %v2156, 1
      %v2446 = vsel %vm737, %v2443, %v2445
      %v2447 = vsel %vm737, %v2445, %v2384
      %v2449 = vsel %vm737, %v2385, %v2388
      %2481 = vrot.lane.b32.xlu0 %v2157, 32
      %v2482 = vpop.permute.xlu0 %2481
      %2483 = vrot.lane.b32.xlu0 %v2158, 32
      %v2484 = vpop.permute.xlu0 %2483
      %2485 = vrot.lane.b32.xlu0 %v2127, 32
      %v2486 = vpop.permute.xlu0 %2485
      %2487 = vrot.lane.b32.xlu0 %v2128, 32
      %v2488 = vpop.permute.xlu0 %2487
      %2489 = vrot.lane.b32.xlu0 %v2129, 32
      %v2490 = vpop.permute.xlu0 %2489
      %2491 = vrot.lane.b32.xlu0 %v2130, 32
      %v2492 = vpop.permute.xlu0 %2491
      %2493 = vrot.lane.b32.xlu0 %v2131, 32
      %v2494 = vpop.permute.xlu0 %2493
      %2495 = vrot.lane.b32.xlu0 %v2132, 32
      %v2496 = vpop.permute.xlu0 %2495
      %2497 = vrot.lane.b32.xlu0 %v2133, 32
      %v2498 = vpop.permute.xlu0 %2497
      %2499 = vrot.lane.b32.xlu0 %v2134, 32
      %v2500 = vpop.permute.xlu0 %2499
      %2501 = vrot.lane.b32.xlu0 %v2135, 32
      %v2502 = vpop.permute.xlu0 %2501
      %2503 = vrot.lane.b32.xlu0 %v2136, 32
      %v2504 = vpop.permute.xlu0 %2503
      %2505 = vrot.lane.b32.xlu0 %v2137, 32
      %v2506 = vpop.permute.xlu0 %2505
      %2507 = vrot.lane.b32.xlu0 %v2138, 32
      %v2508 = vpop.permute.xlu0 %2507
      %2509 = vrot.lane.b32.xlu0 %v2139, 32
      %v2510 = vpop.permute.xlu0 %2509
      %2511 = vrot.lane.b32.xlu0 %v2140, 32
      %v2512 = vpop.permute.xlu0 %2511
      %2513 = vrot.lane.b32.xlu0 %v2141, 32
      %v2514 = vpop.permute.xlu0 %2513
      %2515 = vrot.lane.b32.xlu0 %v2142, 32
      %v2516 = vpop.permute.xlu0 %2515
      %2517 = vrot.lane.b32.xlu0 %v2143, 32
      %v2518 = vpop.permute.xlu0 %2517
      %2519 = vrot.lane.b32.xlu0 %v2144, 32
      %v2520 = vpop.permute.xlu0 %2519
      %2521 = vrot.lane.b32.xlu0 %v2145, 32
      %v2522 = vpop.permute.xlu0 %2521
      %2523 = vrot.lane.b32.xlu0 %v2146, 32
      %v2524 = vpop.permute.xlu0 %2523
      %2525 = vrot.lane.b32.xlu0 %v2147, 32
      %v2526 = vpop.permute.xlu0 %2525
      %2527 = vrot.lane.b32.xlu0 %v2148, 32
      %v2528 = vpop.permute.xlu0 %2527
      %2529 = vrot.lane.b32.xlu0 %v2149, 32
      %v2530 = vpop.permute.xlu0 %2529
      %2531 = vrot.lane.b32.xlu0 %v2150, 32
      %v2532 = vpop.permute.xlu0 %2531
      %2533 = vrot.lane.b32.xlu0 %v2151, 32
      %v2534 = vpop.permute.xlu0 %2533
      %2535 = vrot.lane.b32.xlu0 %v2152, 32
      %v2536 = vpop.permute.xlu0 %2535
      %2537 = vrot.lane.b32.xlu0 %v2153, 32
      %v2538 = vpop.permute.xlu0 %2537
      %2539 = vrot.lane.b32.xlu0 %v2154, 32
      %v2540 = vpop.permute.xlu0 %2539
      %2541 = vrot.lane.b32.xlu0 %v2155, 32
      %v2542 = vpop.permute.xlu0 %2541
      %2543 = vrot.lane.b32.xlu0 %v2156, 32
      %v2544 = vpop.permute.xlu0 %2543
      %2578 = vrot.lane.b32.xlu0 %v2386, 64
      %v2579 = vpop.permute.xlu0 %2578
      %2580 = vrot.lane.b32.xlu0 %v2449, 64
      %v2581 = vpop.permute.xlu0 %2580
      %2582 = vrot.lane.b32.xlu0 %v2390, 64
      %v2583 = vpop.permute.xlu0 %2582
      %2584 = vrot.lane.b32.xlu0 %v2392, 64
      %v2585 = vpop.permute.xlu0 %2584
      %2586 = vrot.lane.b32.xlu0 %v2394, 64
      %v2587 = vpop.permute.xlu0 %2586
      %2588 = vrot.lane.b32.xlu0 %v2396, 64
      %v2589 = vpop.permute.xlu0 %2588
      %2590 = vrot.lane.b32.xlu0 %v2398, 64
      %v2591 = vpop.permute.xlu0 %2590
      %2592 = vrot.lane.b32.xlu0 %v2400, 64
      %v2593 = vpop.permute.xlu0 %2592
      %2594 = vrot.lane.b32.xlu0 %v2402, 64
      %v2595 = vpop.permute.xlu0 %2594
      %2596 = vrot.lane.b32.xlu0 %v2404, 64
      %v2597 = vpop.permute.xlu0 %2596
      %2598 = vrot.lane.b32.xlu0 %v2406, 64
      %v2599 = vpop.permute.xlu0 %2598
      %2600 = vrot.lane.b32.xlu0 %v2408, 64
      %v2601 = vpop.permute.xlu0 %2600
      %2602 = vrot.lane.b32.xlu0 %v2410, 64
      %v2603 = vpop.permute.xlu0 %2602
      %2604 = vrot.lane.b32.xlu0 %v2412, 64
      %v2605 = vpop.permute.xlu0 %2604
      %2606 = vrot.lane.b32.xlu0 %v2414, 64
      %v2607 = vpop.permute.xlu0 %2606
      %2608 = vrot.lane.b32.xlu0 %v2416, 64
      %v2609 = vpop.permute.xlu0 %2608
      %2610 = vrot.lane.b32.xlu0 %v2418, 64
      %v2611 = vpop.permute.xlu0 %2610
      %2612 = vrot.lane.b32.xlu0 %v2420, 64
      %v2613 = vpop.permute.xlu0 %2612
      %2614 = vrot.lane.b32.xlu0 %v2422, 64
      %v2615 = vpop.permute.xlu0 %2614
      %2616 = vrot.lane.b32.xlu0 %v2424, 64
      %v2617 = vpop.permute.xlu0 %2616
      %2618 = vrot.lane.b32.xlu0 %v2426, 64
      %v2619 = vpop.permute.xlu0 %2618
      %2620 = vrot.lane.b32.xlu0 %v2428, 64
      %v2621 = vpop.permute.xlu0 %2620
      %2622 = vrot.lane.b32.xlu0 %v2430, 64
      %v2623 = vpop.permute.xlu0 %2622
      %2624 = vrot.lane.b32.xlu0 %v2432, 64
      %v2625 = vpop.permute.xlu0 %2624
      %2626 = vrot.lane.b32.xlu0 %v2434, 64
      %v2627 = vpop.permute.xlu0 %2626
      %2628 = vrot.lane.b32.xlu0 %v2436, 64
      %v2629 = vpop.permute.xlu0 %2628
      %2630 = vrot.lane.b32.xlu0 %v2438, 64
      %v2631 = vpop.permute.xlu0 %2630
      %2632 = vrot.lane.b32.xlu0 %v2440, 64
      %v2633 = vpop.permute.xlu0 %2632
      %2634 = vrot.lane.b32.xlu0 %v2442, 64
      %v2635 = vpop.permute.xlu0 %2634
      %2636 = vrot.lane.b32.xlu0 %v2444, 64
      %v2637 = vpop.permute.xlu0 %2636
      %2638 = vrot.lane.b32.xlu0 %v2446, 64
      %v2639 = vpop.permute.xlu0 %2638
      %2640 = vrot.lane.b32.xlu0 %v2447, 64
      %v2641 = vpop.permute.xlu0 %2640
      %2675 = vrot.lane.b32.xlu0 %v2383, 96
      %v2676 = vpop.permute.xlu0 %2675
      %2677 = vrot.lane.b32.xlu0 %v2297, 96
      %v2678 = vpop.permute.xlu0 %2677
      %2679 = vrot.lane.b32.xlu0 %v2299, 96
      %v2680 = vpop.permute.xlu0 %2679
      %2681 = vrot.lane.b32.xlu0 %v2301, 96
      %v2682 = vpop.permute.xlu0 %2681
      %2683 = vrot.lane.b32.xlu0 %v2303, 96
      %v2684 = vpop.permute.xlu0 %2683
      %2685 = vrot.lane.b32.xlu0 %v2305, 96
      %v2686 = vpop.permute.xlu0 %2685
      %2687 = vrot.lane.b32.xlu0 %v2307, 96
      %v2688 = vpop.permute.xlu0 %2687
      %2689 = vrot.lane.b32.xlu0 %v2309, 96
      %v2690 = vpop.permute.xlu0 %2689
      %2691 = vrot.lane.b32.xlu0 %v2311, 96
      %v2692 = vpop.permute.xlu0 %2691
      %2693 = vrot.lane.b32.xlu0 %v2313, 96
      %v2694 = vpop.permute.xlu0 %2693
      %2695 = vrot.lane.b32.xlu0 %v2315, 96
      %v2696 = vpop.permute.xlu0 %2695
      %2697 = vrot.lane.b32.xlu0 %v2317, 96
      %v2698 = vpop.permute.xlu0 %2697
      %2699 = vrot.lane.b32.xlu0 %v2319, 96
      %v2700 = vpop.permute.xlu0 %2699
      %2701 = vrot.lane.b32.xlu0 %v2321, 96
      %v2702 = vpop.permute.xlu0 %2701
      %2703 = vrot.lane.b32.xlu0 %v2323, 96
      %v2704 = vpop.permute.xlu0 %2703
      %2705 = vrot.lane.b32.xlu0 %v2325, 96
      %v2706 = vpop.permute.xlu0 %2705
      %2707 = vrot.lane.b32.xlu0 %v2327, 96
      %v2708 = vpop.permute.xlu0 %2707
      %2709 = vrot.lane.b32.xlu0 %v2329, 96
      %v2710 = vpop.permute.xlu0 %2709
      %2711 = vrot.lane.b32.xlu0 %v2331, 96
      %v2712 = vpop.permute.xlu0 %2711
      %2713 = vrot.lane.b32.xlu0 %v2333, 96
      %v2714 = vpop.permute.xlu0 %2713
      %2715 = vrot.lane.b32.xlu0 %v2335, 96
      %v2716 = vpop.permute.xlu0 %2715
      %2717 = vrot.lane.b32.xlu0 %v2337, 96
      %v2718 = vpop.permute.xlu0 %2717
      %2719 = vrot.lane.b32.xlu0 %v2339, 96
      %v2720 = vpop.permute.xlu0 %2719
      %2721 = vrot.lane.b32.xlu0 %v2341, 96
      %v2722 = vpop.permute.xlu0 %2721
      %2723 = vrot.lane.b32.xlu0 %v2343, 96
      %v2724 = vpop.permute.xlu0 %2723
      %2725 = vrot.lane.b32.xlu0 %v2345, 96
      %v2726 = vpop.permute.xlu0 %2725
      %2727 = vrot.lane.b32.xlu0 %v2347, 96
      %v2728 = vpop.permute.xlu0 %2727
      %2729 = vrot.lane.b32.xlu0 %v2349, 96
      %v2730 = vpop.permute.xlu0 %2729
      %2731 = vrot.lane.b32.xlu0 %v2351, 96
      %v2732 = vpop.permute.xlu0 %2731
      %2733 = vrot.lane.b32.xlu0 %v2352, 96
      %v2734 = vpop.permute.xlu0 %2733
      %2735 = vrot.lane.b32.xlu0 %v2260, 96
      %v2736 = vpop.permute.xlu0 %2735
      %2737 = vrot.lane.b32.xlu0 %v2262, 96
      %v2738 = vpop.permute.xlu0 %2737
      %2771 = vrot.lane.b32.xlu0 %v2390, 32
      %v2772 = vpop.permute.xlu0 %2771
      %2773 = vrot.lane.b32.xlu0 %v2392, 32
      %v2774 = vpop.permute.xlu0 %2773
      %2775 = vrot.lane.b32.xlu0 %v2394, 32
      %v2776 = vpop.permute.xlu0 %2775
      %2777 = vrot.lane.b32.xlu0 %v2396, 32
      %v2778 = vpop.permute.xlu0 %2777
      %2779 = vrot.lane.b32.xlu0 %v2398, 32
      %v2780 = vpop.permute.xlu0 %2779
      %2781 = vrot.lane.b32.xlu0 %v2400, 32
      %v2782 = vpop.permute.xlu0 %2781
      %2783 = vrot.lane.b32.xlu0 %v2402, 32
      %v2784 = vpop.permute.xlu0 %2783
      %2785 = vrot.lane.b32.xlu0 %v2404, 32
      %v2786 = vpop.permute.xlu0 %2785
      %2787 = vrot.lane.b32.xlu0 %v2406, 32
      %v2788 = vpop.permute.xlu0 %2787
      %2789 = vrot.lane.b32.xlu0 %v2408, 32
      %v2790 = vpop.permute.xlu0 %2789
      %2791 = vrot.lane.b32.xlu0 %v2410, 32
      %v2792 = vpop.permute.xlu0 %2791
      %2793 = vrot.lane.b32.xlu0 %v2412, 32
      %v2794 = vpop.permute.xlu0 %2793
      %2795 = vrot.lane.b32.xlu0 %v2414, 32
      %v2796 = vpop.permute.xlu0 %2795
      %2797 = vrot.lane.b32.xlu0 %v2416, 32
      %v2798 = vpop.permute.xlu0 %2797
      %2799 = vrot.lane.b32.xlu0 %v2418, 32
      %v2800 = vpop.permute.xlu0 %2799
      %2801 = vrot.lane.b32.xlu0 %v2420, 32
      %v2802 = vpop.permute.xlu0 %2801
      %2803 = vrot.lane.b32.xlu0 %v2422, 32
      %v2804 = vpop.permute.xlu0 %2803
      %2805 = vrot.lane.b32.xlu0 %v2424, 32
      %v2806 = vpop.permute.xlu0 %2805
      %2807 = vrot.lane.b32.xlu0 %v2426, 32
      %v2808 = vpop.permute.xlu0 %2807
      %2809 = vrot.lane.b32.xlu0 %v2428, 32
      %v2810 = vpop.permute.xlu0 %2809
      %2811 = vrot.lane.b32.xlu0 %v2430, 32
      %v2812 = vpop.permute.xlu0 %2811
      %2813 = vrot.lane.b32.xlu0 %v2432, 32
      %v2814 = vpop.permute.xlu0 %2813
      %2815 = vrot.lane.b32.xlu0 %v2434, 32
      %v2816 = vpop.permute.xlu0 %2815
      %2817 = vrot.lane.b32.xlu0 %v2436, 32
      %v2818 = vpop.permute.xlu0 %2817
      %2819 = vrot.lane.b32.xlu0 %v2438, 32
      %v2820 = vpop.permute.xlu0 %2819
      %2821 = vrot.lane.b32.xlu0 %v2440, 32
      %v2822 = vpop.permute.xlu0 %2821
      %2823 = vrot.lane.b32.xlu0 %v2442, 32
      %v2824 = vpop.permute.xlu0 %2823
      %2825 = vrot.lane.b32.xlu0 %v2444, 32
      %v2826 = vpop.permute.xlu0 %2825
      %2827 = vrot.lane.b32.xlu0 %v2446, 32
      %v2828 = vpop.permute.xlu0 %2827
      %2829 = vrot.lane.b32.xlu0 %v2447, 32
      %v2830 = vpop.permute.xlu0 %2829
      %2831 = vrot.lane.b32.xlu0 %v2386, 32
      %v2832 = vpop.permute.xlu0 %2831
      %2833 = vrot.lane.b32.xlu0 %v2449, 32
      %v2834 = vpop.permute.xlu0 %2833
      %2867 = vrot.lane.b32.xlu0 %v2299, 64
      %v2868 = vpop.permute.xlu0 %2867
      %2869 = vrot.lane.b32.xlu0 %v2301, 64
      %v2870 = vpop.permute.xlu0 %2869
      %2871 = vrot.lane.b32.xlu0 %v2303, 64
      %v2872 = vpop.permute.xlu0 %2871
      %2873 = vrot.lane.b32.xlu0 %v2305, 64
      %v2874 = vpop.permute.xlu0 %2873
      %2875 = vrot.lane.b32.xlu0 %v2307, 64
      %v2876 = vpop.permute.xlu0 %2875
      %2877 = vrot.lane.b32.xlu0 %v2309, 64
      %v2878 = vpop.permute.xlu0 %2877
      %2879 = vrot.lane.b32.xlu0 %v2311, 64
      %v2880 = vpop.permute.xlu0 %2879
      %2881 = vrot.lane.b32.xlu0 %v2313, 64
      %v2882 = vpop.permute.xlu0 %2881
      %2883 = vrot.lane.b32.xlu0 %v2315, 64
      %v2884 = vpop.permute.xlu0 %2883
      %2885 = vrot.lane.b32.xlu0 %v2317, 64
      %v2886 = vpop.permute.xlu0 %2885
      %2887 = vrot.lane.b32.xlu0 %v2319, 64
      %v2888 = vpop.permute.xlu0 %2887
      %2889 = vrot.lane.b32.xlu0 %v2321, 64
      %v2890 = vpop.permute.xlu0 %2889
      %2891 = vrot.lane.b32.xlu0 %v2323, 64
      %v2892 = vpop.permute.xlu0 %2891
      %2893 = vrot.lane.b32.xlu0 %v2325, 64
      %v2894 = vpop.permute.xlu0 %2893
      %2895 = vrot.lane.b32.xlu0 %v2327, 64
      %v2896 = vpop.permute.xlu0 %2895
      %2897 = vrot.lane.b32.xlu0 %v2329, 64
      %v2898 = vpop.permute.xlu0 %2897
      %2899 = vrot.lane.b32.xlu0 %v2331, 64
      %v2900 = vpop.permute.xlu0 %2899
      %2901 = vrot.lane.b32.xlu0 %v2333, 64
      %v2902 = vpop.permute.xlu0 %2901
      %2903 = vrot.lane.b32.xlu0 %v2335, 64
      %v2904 = vpop.permute.xlu0 %2903
      %2905 = vrot.lane.b32.xlu0 %v2337, 64
      %v2906 = vpop.permute.xlu0 %2905
      %2907 = vrot.lane.b32.xlu0 %v2339, 64
      %v2908 = vpop.permute.xlu0 %2907
      %2909 = vrot.lane.b32.xlu0 %v2341, 64
      %v2910 = vpop.permute.xlu0 %2909
      %2911 = vrot.lane.b32.xlu0 %v2343, 64
      %v2912 = vpop.permute.xlu0 %2911
      %2913 = vrot.lane.b32.xlu0 %v2345, 64
      %v2914 = vpop.permute.xlu0 %2913
      %2915 = vrot.lane.b32.xlu0 %v2347, 64
      %v2916 = vpop.permute.xlu0 %2915
      %2917 = vrot.lane.b32.xlu0 %v2349, 64
      %v2918 = vpop.permute.xlu0 %2917
      %2919 = vrot.lane.b32.xlu0 %v2351, 64
      %v2920 = vpop.permute.xlu0 %2919
      %2921 = vrot.lane.b32.xlu0 %v2352, 64
      %v2922 = vpop.permute.xlu0 %2921
      %2923 = vrot.lane.b32.xlu0 %v2260, 64
      %v2924 = vpop.permute.xlu0 %2923
      %2925 = vrot.lane.b32.xlu0 %v2262, 64
      %v2926 = vpop.permute.xlu0 %2925
      %2927 = vrot.lane.b32.xlu0 %v2383, 64
      %v2928 = vpop.permute.xlu0 %2927
      %2929 = vrot.lane.b32.xlu0 %v2297, 64
      %v2930 = vpop.permute.xlu0 %2929
      %2963 = vrot.lane.b32.xlu0 %v2129, 96
      %v2964 = vpop.permute.xlu0 %2963
      %2965 = vrot.lane.b32.xlu0 %v2130, 96
      %v2966 = vpop.permute.xlu0 %2965
      %2967 = vrot.lane.b32.xlu0 %v2131, 96
      %v2968 = vpop.permute.xlu0 %2967
      %2969 = vrot.lane.b32.xlu0 %v2132, 96
      %v2970 = vpop.permute.xlu0 %2969
      %2971 = vrot.lane.b32.xlu0 %v2133, 96
      %v2972 = vpop.permute.xlu0 %2971
      %2973 = vrot.lane.b32.xlu0 %v2134, 96
      %v2974 = vpop.permute.xlu0 %2973
      %2975 = vrot.lane.b32.xlu0 %v2135, 96
      %v2976 = vpop.permute.xlu0 %2975
      %2977 = vrot.lane.b32.xlu0 %v2136, 96
      %v2978 = vpop.permute.xlu0 %2977
      %2979 = vrot.lane.b32.xlu0 %v2137, 96
      %v2980 = vpop.permute.xlu0 %2979
      %2981 = vrot.lane.b32.xlu0 %v2138, 96
      %v2982 = vpop.permute.xlu0 %2981
      %2983 = vrot.lane.b32.xlu0 %v2139, 96
      %v2984 = vpop.permute.xlu0 %2983
      %2985 = vrot.lane.b32.xlu0 %v2140, 96
      %v2986 = vpop.permute.xlu0 %2985
      %2987 = vrot.lane.b32.xlu0 %v2141, 96
      %v2988 = vpop.permute.xlu0 %2987
      %2989 = vrot.lane.b32.xlu0 %v2142, 96
      %v2990 = vpop.permute.xlu0 %2989
      %2991 = vrot.lane.b32.xlu0 %v2143, 96
      %v2992 = vpop.permute.xlu0 %2991
      %2993 = vrot.lane.b32.xlu0 %v2144, 96
      %v2994 = vpop.permute.xlu0 %2993
      %2995 = vrot.lane.b32.xlu0 %v2145, 96
      %v2996 = vpop.permute.xlu0 %2995
      %2997 = vrot.lane.b32.xlu0 %v2146, 96
      %v2998 = vpop.permute.xlu0 %2997
      %2999 = vrot.lane.b32.xlu0 %v2147, 96
      %v3000 = vpop.permute.xlu0 %2999
      %3001 = vrot.lane.b32.xlu0 %v2148, 96
      %v3002 = vpop.permute.xlu0 %3001
      %3003 = vrot.lane.b32.xlu0 %v2149, 96
      %v3004 = vpop.permute.xlu0 %3003
      %3005 = vrot.lane.b32.xlu0 %v2150, 96
      %v3006 = vpop.permute.xlu0 %3005
      %3007 = vrot.lane.b32.xlu0 %v2151, 96
      %v3008 = vpop.permute.xlu0 %3007
      %3009 = vrot.lane.b32.xlu0 %v2152, 96
      %v3010 = vpop.permute.xlu0 %3009
      %3011 = vrot.lane.b32.xlu0 %v2153, 96
      %v3012 = vpop.permute.xlu0 %3011
      %3013 = vrot.lane.b32.xlu0 %v2154, 96
      %v3014 = vpop.permute.xlu0 %3013
      %3015 = vrot.lane.b32.xlu0 %v2155, 96
      %v3016 = vpop.permute.xlu0 %3015
      %3017 = vrot.lane.b32.xlu0 %v2156, 96
      %v3018 = vpop.permute.xlu0 %3017
      %3019 = vrot.lane.b32.xlu0 %v2157, 96
      %v3020 = vpop.permute.xlu0 %3019
      %3021 = vrot.lane.b32.xlu0 %v2158, 96
      %v3022 = vpop.permute.xlu0 %3021
      %3023 = vrot.lane.b32.xlu0 %v2127, 96
      %v3024 = vpop.permute.xlu0 %3023
      %3025 = vrot.lane.b32.xlu0 %v2128, 96
      %v3026 = vpop.permute.xlu0 %3025
      %v3059 = vsel %vm1805, %v2260, %v2482
      %v3060 = vsel %vm1805, %v2262, %v2484
      %v3061 = vsel %vm1805, %v2383, %v2486
      %v3062 = vsel %vm1805, %v2297, %v2488
      %v3063 = vsel %vm1805, %v2299, %v2490
      %v3064 = vsel %vm1805, %v2301, %v2492
      %v3065 = vsel %vm1805, %v2303, %v2494
      %v3066 = vsel %vm1805, %v2305, %v2496
      %v3067 = vsel %vm1805, %v2307, %v2498
      %v3068 = vsel %vm1805, %v2309, %v2500
      %v3069 = vsel %vm1805, %v2311, %v2502
      %v3070 = vsel %vm1805, %v2313, %v2504
      %v3071 = vsel %vm1805, %v2315, %v2506
      %v3072 = vsel %vm1805, %v2317, %v2508
      %v3073 = vsel %vm1805, %v2319, %v2510
      %v3074 = vsel %vm1805, %v2321, %v2512
      %v3075 = vsel %vm1805, %v2323, %v2514
      %v3076 = vsel %vm1805, %v2325, %v2516
      %v3077 = vsel %vm1805, %v2327, %v2518
      %v3078 = vsel %vm1805, %v2329, %v2520
      %v3079 = vsel %vm1805, %v2331, %v2522
      %v3080 = vsel %vm1805, %v2333, %v2524
      %v3081 = vsel %vm1805, %v2335, %v2526
      %v3082 = vsel %vm1805, %v2337, %v2528
      %v3083 = vsel %vm1805, %v2339, %v2530
      %v3084 = vsel %vm1805, %v2341, %v2532
      %v3085 = vsel %vm1805, %v2343, %v2534
      %v3086 = vsel %vm1805, %v2345, %v2536
      %v3087 = vsel %vm1805, %v2347, %v2538
      %v3088 = vsel %vm1805, %v2349, %v2540
      %v3089 = vsel %vm1805, %v2351, %v2542
      %v3090 = vsel %vm1805, %v2352, %v2544
      %vm3091 = vcmask 523264
      %v3092 = vsel %vm3091, %v3059, %v2579
      %v3093 = vsel %vm3091, %v3060, %v2581
      %v3094 = vsel %vm3091, %v3061, %v2583
      %v3095 = vsel %vm3091, %v3062, %v2585
      %v3096 = vsel %vm3091, %v3063, %v2587
      %v3097 = vsel %vm3091, %v3064, %v2589
      %v3098 = vsel %vm3091, %v3065, %v2591
      %v3099 = vsel %vm3091, %v3066, %v2593
      %v3100 = vsel %vm3091, %v3067, %v2595
      %v3101 = vsel %vm3091, %v3068, %v2597
      %v3102 = vsel %vm3091, %v3069, %v2599
      %v3103 = vsel %vm3091, %v3070, %v2601
      %v3104 = vsel %vm3091, %v3071, %v2603
      %v3105 = vsel %vm3091, %v3072, %v2605
      %v3106 = vsel %vm3091, %v3073, %v2607
      %v3107 = vsel %vm3091, %v3074, %v2609
      %v3108 = vsel %vm3091, %v3075, %v2611
      %v3109 = vsel %vm3091, %v3076, %v2613
      %v3110 = vsel %vm3091, %v3077, %v2615
      %v3111 = vsel %vm3091, %v3078, %v2617
      %v3112 = vsel %vm3091, %v3079, %v2619
      %v3113 = vsel %vm3091, %v3080, %v2621
      %v3114 = vsel %vm3091, %v3081, %v2623
      %v3115 = vsel %vm3091, %v3082, %v2625
      %v3116 = vsel %vm3091, %v3083, %v2627
      %v3117 = vsel %vm3091, %v3084, %v2629
      %v3118 = vsel %vm3091, %v3085, %v2631
      %v3119 = vsel %vm3091, %v3086, %v2633
      %v3120 = vsel %vm3091, %v3087, %v2635
      %v3121 = vsel %vm3091, %v3088, %v2637
      %v3122 = vsel %vm3091, %v3089, %v2639
      %v3123 = vsel %vm3091, %v3090, %v2641
      %vm3124 = vcmask 785408
      %v3125 = vsel %vm3124, %v3092, %v2676
      %v3126 = vsel %vm3124, %v3093, %v2678
      %v3127 = vsel %vm3124, %v3094, %v2680
      %v3128 = vsel %vm3124, %v3095, %v2682
      %v3129 = vsel %vm3124, %v3096, %v2684
      %v3130 = vsel %vm3124, %v3097, %v2686
      %v3131 = vsel %vm3124, %v3098, %v2688
      %v3132 = vsel %vm3124, %v3099, %v2690
      %v3133 = vsel %vm3124, %v3100, %v2692
      %v3134 = vsel %vm3124, %v3101, %v2694
      %v3135 = vsel %vm3124, %v3102, %v2696
      %v3136 = vsel %vm3124, %v3103, %v2698
      %v3137 = vsel %vm3124, %v3104, %v2700
      %v3138 = vsel %vm3124, %v3105, %v2702
      %v3139 = vsel %vm3124, %v3106, %v2704
      %v3140 = vsel %vm3124, %v3107, %v2706
      %v3141 = vsel %vm3124, %v3108, %v2708
      %v3142 = vsel %vm3124, %v3109, %v2710
      %v3143 = vsel %vm3124, %v3110, %v2712
      %v3144 = vsel %vm3124, %v3111, %v2714
      %v3145 = vsel %vm3124, %v3112, %v2716
      %v3146 = vsel %vm3124, %v3113, %v2718
      %v3147 = vsel %vm3124, %v3114, %v2720
      %v3148 = vsel %vm3124, %v3115, %v2722
      %v3149 = vsel %vm3124, %v3116, %v2724
      %v3150 = vsel %vm3124, %v3117, %v2726
      %v3151 = vsel %vm3124, %v3118, %v2728
      %v3152 = vsel %vm3124, %v3119, %v2730
      %v3153 = vsel %vm3124, %v3120, %v2732
      %v3154 = vsel %vm3124, %v3121, %v2734
      %v3155 = vsel %vm3124, %v3122, %v2736
      %v3156 = vsel %vm3124, %v3123, %v2738
      %v3157 = vsel %vm1805, %v2127, %v2772
      %v3158 = vsel %vm1805, %v2128, %v2774
      %v3159 = vsel %vm1805, %v2129, %v2776
      %v3160 = vsel %vm1805, %v2130, %v2778
      %v3161 = vsel %vm1805, %v2131, %v2780
      %v3162 = vsel %vm1805, %v2132, %v2782
      %v3163 = vsel %vm1805, %v2133, %v2784
      %v3164 = vsel %vm1805, %v2134, %v2786
      %v3165 = vsel %vm1805, %v2135, %v2788
      %v3166 = vsel %vm1805, %v2136, %v2790
      %v3167 = vsel %vm1805, %v2137, %v2792
      %v3168 = vsel %vm1805, %v2138, %v2794
      %v3169 = vsel %vm1805, %v2139, %v2796
      %v3170 = vsel %vm1805, %v2140, %v2798
      %v3171 = vsel %vm1805, %v2141, %v2800
      %v3172 = vsel %vm1805, %v2142, %v2802
      %v3173 = vsel %vm1805, %v2143, %v2804
      %v3174 = vsel %vm1805, %v2144, %v2806
      %v3175 = vsel %vm1805, %v2145, %v2808
      %v3176 = vsel %vm1805, %v2146, %v2810
      %v3177 = vsel %vm1805, %v2147, %v2812
      %v3178 = vsel %vm1805, %v2148, %v2814
      %v3179 = vsel %vm1805, %v2149, %v2816
      %v3180 = vsel %vm1805, %v2150, %v2818
      %v3181 = vsel %vm1805, %v2151, %v2820
      %v3182 = vsel %vm1805, %v2152, %v2822
      %v3183 = vsel %vm1805, %v2153, %v2824
      %v3184 = vsel %vm1805, %v2154, %v2826
      %v3185 = vsel %vm1805, %v2155, %v2828
      %v3186 = vsel %vm1805, %v2156, %v2830
      %v3187 = vsel %vm1805, %v2157, %v2832
      %v3188 = vsel %vm1805, %v2158, %v2834
      %v3189 = vsel %vm3091, %v3157, %v2868
      %v3190 = vsel %vm3091, %v3158, %v2870
      %v3191 = vsel %vm3091, %v3159, %v2872
      %v3192 = vsel %vm3091, %v3160, %v2874
      %v3193 = vsel %vm3091, %v3161, %v2876
      %v3194 = vsel %vm3091, %v3162, %v2878
      %v3195 = vsel %vm3091, %v3163, %v2880
      %v3196 = vsel %vm3091, %v3164, %v2882
      %v3197 = vsel %vm3091, %v3165, %v2884
      %v3198 = vsel %vm3091, %v3166, %v2886
      %v3199 = vsel %vm3091, %v3167, %v2888
      %v3200 = vsel %vm3091, %v3168, %v2890
      %v3201 = vsel %vm3091, %v3169, %v2892
      %v3202 = vsel %vm3091, %v3170, %v2894
      %v3203 = vsel %vm3091, %v3171, %v2896
      %v3204 = vsel %vm3091, %v3172, %v2898
      %v3205 = vsel %vm3091, %v3173, %v2900
      %v3206 = vsel %vm3091, %v3174, %v2902
      %v3207 = vsel %vm3091, %v3175, %v2904
      %v3208 = vsel %vm3091, %v3176, %v2906
      %v3209 = vsel %vm3091, %v3177, %v2908
      %v3210 = vsel %vm3091, %v3178, %v2910
      %v3211 = vsel %vm3091, %v3179, %v2912
      %v3212 = vsel %vm3091, %v3180, %v2914
      %v3213 = vsel %vm3091, %v3181, %v2916
      %v3214 = vsel %vm3091, %v3182, %v2918
      %v3215 = vsel %vm3091, %v3183, %v2920
      %v3216 = vsel %vm3091, %v3184, %v2922
      %v3217 = vsel %vm3091, %v3185, %v2924
      %v3218 = vsel %vm3091, %v3186, %v2926
      %v3219 = vsel %vm3091, %v3187, %v2928
      %v3220 = vsel %vm3091, %v3188, %v2930
      %v3221 = vsel %vm3124, %v3189, %v2964
      %v3222 = vsel %vm3124, %v3190, %v2966
      %v3223 = vsel %vm3124, %v3191, %v2968
      %v3224 = vsel %vm3124, %v3192, %v2970
      %v3225 = vsel %vm3124, %v3193, %v2972
      %v3226 = vsel %vm3124, %v3194, %v2974
      %v3227 = vsel %vm3124, %v3195, %v2976
      %v3228 = vsel %vm3124, %v3196, %v2978
      %v3229 = vsel %vm3124, %v3197, %v2980
      %v3230 = vsel %vm3124, %v3198, %v2982
      %v3231 = vsel %vm3124, %v3199, %v2984
      %v3232 = vsel %vm3124, %v3200, %v2986
      %v3233 = vsel %vm3124, %v3201, %v2988
      %v3234 = vsel %vm3124, %v3202, %v2990
      %v3235 = vsel %vm3124, %v3203, %v2992
      %v3236 = vsel %vm3124, %v3204, %v2994
      %v3237 = vsel %vm3124, %v3205, %v2996
      %v3238 = vsel %vm3124, %v3206, %v2998
      %v3239 = vsel %vm3124, %v3207, %v3000
      %v3240 = vsel %vm3124, %v3208, %v3002
      %v3241 = vsel %vm3124, %v3209, %v3004
      %v3242 = vsel %vm3124, %v3210, %v3006
      %v3243 = vsel %vm3124, %v3211, %v3008
      %v3244 = vsel %vm3124, %v3212, %v3010
      %v3245 = vsel %vm3124, %v3213, %v3012
      %v3246 = vsel %vm3124, %v3214, %v3014
      %v3247 = vsel %vm3124, %v3215, %v3016
      %v3248 = vsel %vm3124, %v3216, %v3018
      %v3249 = vsel %vm3124, %v3217, %v3020
      %v3250 = vsel %vm3124, %v3218, %v3022
      %v3251 = vsel %vm3124, %v3219, %v3024
      %v3252 = vsel %vm3124, %v3220, %v3026
      %v3253 = vmul.f32 %v3125, %v2159
      %v3254 = vmul.f32 %v3221, %v2160
      %v3255 = vmul.f32 %v2394, %v2161
      %v3256 = vmul.f32 %v3126, %v2162
      %v3257 = vmul.f32 %v3222, %v2163
      %v3258 = vmul.f32 %v2396, %v2164
      %v3259 = vmul.f32 %v3127, %v2165
      %v3260 = vmul.f32 %v3223, %v2166
      %v3261 = vmul.f32 %v2398, %v2167
      %v3262 = vmul.f32 %v3128, %v2168
      %v3263 = vmul.f32 %v3224, %v2169
      %v3264 = vmul.f32 %v2400, %v2170
      %v3265 = vmul.f32 %v3129, %v2171
      %v3266 = vmul.f32 %v3225, %v2172
      %v3267 = vmul.f32 %v2402, %v2173
      %v3268 = vmul.f32 %v3130, %v2174
      %v3269 = vmul.f32 %v3226, %v2175
      %v3270 = vmul.f32 %v2404, %v2176
      %v3271 = vmul.f32 %v3131, %v2177
      %v3272 = vmul.f32 %v3227, %v2178
      %v3273 = vmul.f32 %v2406, %v2179
      %v3274 = vmul.f32 %v3132, %v2180
      %v3275 = vmul.f32 %v3228, %v2181
      %v3276 = vmul.f32 %v2408, %v2182
      %v3277 = vmul.f32 %v3133, %v2183
      %v3278 = vmul.f32 %v3229, %v2184
      %v3279 = vmul.f32 %v2410, %v2185
      %v3280 = vmul.f32 %v3134, %v2186
      %v3281 = vmul.f32 %v3230, %v2187
      %v3282 = vmul.f32 %v2412, %v2188
      %v3283 = vmul.f32 %v3135, %v2189
      %v3284 = vmul.f32 %v3231, %v2190
      %v3285 = vmul.f32 %v2414, %v2191
      %v3286 = vmul.f32 %v3136, %v2192
      %v3287 = vmul.f32 %v3232, %v2193
      %v3288 = vmul.f32 %v2416, %v2194
      %v3289 = vmul.f32 %v3137, %v2195
      %v3290 = vmul.f32 %v3233, %v2196
      %v3291 = vmul.f32 %v2418, %v2197
      %v3292 = vmul.f32 %v3138, %v2198
      %v3293 = vmul.f32 %v3234, %v2199
      %v3294 = vmul.f32 %v2420, %v2200
      %v3295 = vmul.f32 %v3139, %v2201
      %v3296 = vmul.f32 %v3235, %v2202
      %v3297 = vmul.f32 %v2422, %v2203
      %v3298 = vmul.f32 %v3140, %v2204
      %v3299 = vmul.f32 %v3236, %v2205
      %v3300 = vmul.f32 %v2424, %v2206
      %v3301 = vmul.f32 %v3141, %v2207
      %v3302 = vmul.f32 %v3237, %v2208
      %v3303 = vmul.f32 %v2426, %v2209
      %v3304 = vmul.f32 %v3142, %v2210
      %v3305 = vmul.f32 %v3238, %v2211
      %v3306 = vmul.f32 %v2428, %v2212
      %v3307 = vmul.f32 %v3143, %v2213
      %v3308 = vmul.f32 %v3239, %v2214
      %v3309 = vmul.f32 %v2430, %v2215
      %v3310 = vmul.f32 %v3144, %v2216
      %v3311 = vmul.f32 %v3240, %v2217
      %v3312 = vmul.f32 %v2432, %v2218
      %v3313 = vmul.f32 %v3145, %v2219
      %v3314 = vmul.f32 %v3241, %v2220
      %v3315 = vmul.f32 %v2434, %v2221
      %v3316 = vmul.f32 %v3146, %v2222
      %v3317 = vmul.f32 %v3242, %v2223
      %v3318 = vmul.f32 %v2436, %v2224
      %v3319 = vmul.f32 %v3147, %v2225
      %v3320 = vmul.f32 %v3243, %v2226
      %v3321 = vmul.f32 %v2438, %v2227
      %v3322 = vmul.f32 %v3148, %v2228
      %v3323 = vmul.f32 %v3244, %v2229
      %v3324 = vmul.f32 %v2440, %v2230
      %v3325 = vmul.f32 %v3149, %v2231
      %v3326 = vmul.f32 %v3245, %v2232
      %v3327 = vmul.f32 %v2442, %v2233
      %v3328 = vmul.f32 %v3150, %v2234
      %v3329 = vmul.f32 %v3246, %v2235
      %v3330 = vmul.f32 %v2444, %v2236
      %v3331 = vmul.f32 %v3151, %v2237
      %v3332 = vmul.f32 %v3247, %v2238
      %v3333 = vmul.f32 %v2446, %v2239
      %v3334 = vmul.f32 %v3152, %v2240
      %v3335 = vmul.f32 %v3248, %v2241
      %v3336 = vmul.f32 %v2447, %v2242
      %v3337 = vmul.f32 %v3153, %v2243
      %v3338 = vmul.f32 %v3249, %v2244
      %v3339 = vmul.f32 %v2386, %v2245
      %v3340 = vmul.f32 %v3154, %v2246
      %v3341 = vmul.f32 %v3250, %v2247
      %v3342 = vmul.f32 %v2449, %v2248
      %v3343 = vmul.f32 %v3155, %v2249
      %v3344 = vmul.f32 %v3251, %v2250
      %v3345 = vmul.f32 %v2390, %v2251
      %v3346 = vmul.f32 %v3156, %v2252
      %v3347 = vmul.f32 %v3252, %v2253
      %v3348 = vmul.f32 %v2392, %v2254
      %v3349 = vpack.c.bf16 %v3256, %v3253
      %v3350 = vpack.c.bf16 %v3257, %v3254
      %v3351 = vpack.c.bf16 %v3258, %v3255
      %v3352 = vpack.c.bf16 %v3262, %v3259
      %v3353 = vpack.c.bf16 %v3263, %v3260
      %v3354 = vpack.c.bf16 %v3264, %v3261
      %v3355 = vpack.c.bf16 %v3268, %v3265
      %v3356 = vpack.c.bf16 %v3269, %v3266
      %v3357 = vpack.c.bf16 %v3270, %v3267
      %v3358 = vpack.c.bf16 %v3274, %v3271
      %v3359 = vpack.c.bf16 %v3275, %v3272
      %v3360 = vpack.c.bf16 %v3276, %v3273
      %v3361 = vpack.c.bf16 %v3280, %v3277
      %v3362 = vpack.c.bf16 %v3281, %v3278
      %v3363 = vpack.c.bf16 %v3282, %v3279
      %v3364 = vpack.c.bf16 %v3286, %v3283
      %v3365 = vpack.c.bf16 %v3287, %v3284
      %v3366 = vpack.c.bf16 %v3288, %v3285
      %v3367 = vpack.c.bf16 %v3292, %v3289
      %v3368 = vpack.c.bf16 %v3293, %v3290
      %v3369 = vpack.c.bf16 %v3294, %v3291
      %v3370 = vpack.c.bf16 %v3298, %v3295
      %v3371 = vpack.c.bf16 %v3299, %v3296
      %v3372 = vpack.c.bf16 %v3300, %v3297
      %v3373 = vpack.c.bf16 %v3304, %v3301
      %v3374 = vpack.c.bf16 %v3305, %v3302
      %v3375 = vpack.c.bf16 %v3306, %v3303
      %v3376 = vpack.c.bf16 %v3310, %v3307
      %v3377 = vpack.c.bf16 %v3311, %v3308
      %v3378 = vpack.c.bf16 %v3312, %v3309
      %v3379 = vpack.c.bf16 %v3316, %v3313
      %v3380 = vpack.c.bf16 %v3317, %v3314
      %v3381 = vpack.c.bf16 %v3318, %v3315
      %v3382 = vpack.c.bf16 %v3322, %v3319
      %v3383 = vpack.c.bf16 %v3323, %v3320
      %v3384 = vpack.c.bf16 %v3324, %v3321
      %v3385 = vpack.c.bf16 %v3328, %v3325
      %v3386 = vpack.c.bf16 %v3329, %v3326
      %v3387 = vpack.c.bf16 %v3330, %v3327
      %v3388 = vpack.c.bf16 %v3334, %v3331
      %v3389 = vpack.c.bf16 %v3335, %v3332
      %v3390 = vpack.c.bf16 %v3336, %v3333
      %v3391 = vpack.c.bf16 %v3340, %v3337
      %v3392 = vpack.c.bf16 %v3341, %v3338
      %v3393 = vpack.c.bf16 %v3342, %v3339
      %v3394 = vpack.c.bf16 %v3346, %v3343
      %v3395 = vpack.c.bf16 %v3347, %v3344
      %v3396 = vpack.c.bf16 %v3348, %v3345
      %v3397 = vld [vmem:[%s8] sm:$0xf]
      %v3398 = vld [vmem:[%s8 + $0x4] sm:$0xf]
      %v3399 = vld [vmem:[%s8 + $0x8] sm:$0xf]
      %v3400 = vld [vmem:[%s8 + $0xc] sm:$0xf]
      %v3401 = vld [vmem:[%s8 + $0x10] sm:$0xf]
      %v3402 = vld [vmem:[%s8 + $0x14] sm:$0xf]
      %v3403 = vld [vmem:[%s8 + $0x18] sm:$0xf]
      %v3404 = vld [vmem:[%s8 + $0x1c] sm:$0xf]
      %v3405 = vld [vmem:[%s8 + $0x20] sm:$0xf]
      %v3406 = vld [vmem:[%s8 + $0x24] sm:$0xf]
      %v3407 = vld [vmem:[%s8 + $0x28] sm:$0xf]
      %v3408 = vld [vmem:[%s8 + $0x2c] sm:$0xf]
      %v3409 = vld [vmem:[%s8 + $0x30] sm:$0xf]
      %v3410 = vld [vmem:[%s8 + $0x34] sm:$0xf]
      %v3411 = vld [vmem:[%s8 + $0x38] sm:$0xf]
      %v3412 = vld [vmem:[%s8 + $0x3c] sm:$0xf]
      %v3413 = vld [vmem:[%s8 + $0x40] sm:$0xf]
      %v3414 = vld [vmem:[%s8 + $0x44] sm:$0xf]
      %v3415 = vld [vmem:[%s8 + $0x48] sm:$0xf]
      %v3416 = vld [vmem:[%s8 + $0x4c] sm:$0xf]
      %v3417 = vld [vmem:[%s8 + $0x50] sm:$0xf]
      %v3418 = vld [vmem:[%s8 + $0x54] sm:$0xf]
      %v3419 = vld [vmem:[%s8 + $0x58] sm:$0xf]
      %v3420 = vld [vmem:[%s8 + $0x5c] sm:$0xf]
      %v3421 = vld [vmem:[%s8 + $0x60] sm:$0xf]
      %v3422 = vld [vmem:[%s8 + $0x64] sm:$0xf]
      %v3423 = vld [vmem:[%s8 + $0x68] sm:$0xf]
      %v3424 = vld [vmem:[%s8 + $0x6c] sm:$0xf]
      %v3425 = vld [vmem:[%s8 + $0x70] sm:$0xf]
      %v3426 = vld [vmem:[%s8 + $0x74] sm:$0xf]
      %v3427 = vld [vmem:[%s8 + $0x78] sm:$0xf]
      %v3428 = vld [vmem:[%s8 + $0x7c] sm:$0xf]
      %v3429 = vld [vmem:[%s8 + $0x80] sm:$0xf]
      %v3430 = vld [vmem:[%s8 + $0x84] sm:$0xf]
      %v3431 = vld [vmem:[%s8 + $0x88] sm:$0xf]
      %v3432 = vld [vmem:[%s8 + $0x8c] sm:$0xf]
      %v3433 = vld [vmem:[%s9] sm:$0x1]
      %v3435 = vlaneseq
      %v3436 = vshrl.u32 %v3435, 7
      %v3437 = vsub.s32 0, %v3436
      %v3438 = vrot.slane %v3433, %v3437
      %v3476 = vunpack.c.l.b16 %v3397
      %v3477 = vunpack.c.l.b16 %v3398
      %v3478 = vunpack.c.l.b16 %v3399
      %v3479 = vunpack.c.l.b16 %v3400
      %v3480 = vunpack.c.l.b16 %v3401
      %v3481 = vunpack.c.l.b16 %v3402
      %v3482 = vunpack.c.l.b16 %v3403
      %v3483 = vunpack.c.l.b16 %v3404
      %v3484 = vunpack.c.l.b16 %v3405
      %v3485 = vunpack.c.l.b16 %v3406
      %v3486 = vunpack.c.l.b16 %v3407
      %v3487 = vunpack.c.l.b16 %v3408
      %v3488 = vunpack.c.l.b16 %v3409
      %v3489 = vunpack.c.l.b16 %v3410
      %v3490 = vunpack.c.l.b16 %v3411
      %v3491 = vunpack.c.l.b16 %v3412
      %v3492 = vunpack.c.l.b16 %v3413
      %v3493 = vunpack.c.l.b16 %v3414
      %v3494 = vunpack.c.l.b16 %v3415
      %v3495 = vunpack.c.l.b16 %v3416
      %v3496 = vunpack.c.l.b16 %v3417
      %v3497 = vunpack.c.l.b16 %v3418
      %v3498 = vunpack.c.l.b16 %v3419
      %v3499 = vunpack.c.l.b16 %v3420
      %v3500 = vunpack.c.l.b16 %v3421
      %v3501 = vunpack.c.l.b16 %v3422
      %v3502 = vunpack.c.l.b16 %v3423
      %v3503 = vunpack.c.l.b16 %v3424
      %v3504 = vunpack.c.l.b16 %v3425
      %v3505 = vunpack.c.l.b16 %v3426
      %v3506 = vunpack.c.l.b16 %v3427
      %v3507 = vunpack.c.l.b16 %v3428
      %v3508 = vunpack.c.l.b16 %v3429
      %v3509 = vunpack.c.l.b16 %v3430
      %v3510 = vunpack.c.l.b16 %v3431
      %v3511 = vunpack.c.l.b16 %v3432
      %v3512 = vpack.c.b16 %v3477, %v3476
      %v3513 = vpack.c.b16 %v3479, %v3478
      %v3514 = vpack.c.b16 %v3481, %v3480
      %v3515 = vpack.c.b16 %v3483, %v3482
      %v3516 = vpack.c.b16 %v3485, %v3484
      %v3517 = vpack.c.b16 %v3487, %v3486
      %v3518 = vpack.c.b16 %v3489, %v3488
      %v3519 = vpack.c.b16 %v3491, %v3490
      %v3520 = vpack.c.b16 %v3493, %v3492
      %v3521 = vpack.c.b16 %v3495, %v3494
      %v3522 = vpack.c.b16 %v3497, %v3496
      %v3523 = vpack.c.b16 %v3499, %v3498
      %v3524 = vpack.c.b16 %v3501, %v3500
      %v3525 = vpack.c.b16 %v3503, %v3502
      %v3526 = vpack.c.b16 %v3505, %v3504
      %v3527 = vpack.c.b16 %v3507, %v3506
      %v3528 = vpack.c.b16 %v3509, %v3508
      %v3529 = vpack.c.b16 %v3511, %v3510
      %v3549 = vsel %vm1805, %v3351, 0
      %v3552 = vsel %vm1805, %v3354, 0
      %v3555 = vsel %vm1805, %v3357, 0
      %v3558 = vsel %vm1805, %v3360, 0
      %v3561 = vsel %vm1805, %v3363, 0
      %v3564 = vsel %vm1805, %v3366, 0
      %v3567 = vsel %vm1805, %v3369, 0
      %v3570 = vsel %vm1805, %v3372, 0
      %v3573 = vsel %vm1805, %v3375, 0
      %v3576 = vsel %vm1805, %v3378, 0
      %v3579 = vsel %vm1805, %v3381, 0
      %v3582 = vsel %vm1805, %v3384, 0
      %v3585 = vsel %vm1805, %v3387, 0
      %v3588 = vsel %vm1805, %v3390, 0
      %v3591 = vsel %vm1805, %v3393, 0
      %v3594 = vsel %vm1805, %v3396, 0
      %3596 = vmatprep.subr.bf16.mxu0 0
      %3597 = vmatpush1.bf16.msra.mxu0 %v3512
      %3598 = vmatprep.subr.bf16.mxu0 0
      %3599 = vmatpush1.bf16.msra.mxu0 %v3513
      %3600 = vmatprep.subr.bf16.mxu0 0
      %3601 = vmatpush1.bf16.msra.mxu0 %v3514
      %3602 = vmatprep.subr.bf16.mxu0 0
      %3603 = vmatpush1.bf16.msra.mxu0 %v3515
      %3604 = vmatprep.subr.bf16.mxu0 0
      %3605 = vmatpush1.bf16.msra.mxu0 %v3516
      %3606 = vmatprep.subr.bf16.mxu0 0
      %3607 = vmatpush1.bf16.msra.mxu0 %v3517
      %3608 = vmatprep.subr.bf16.mxu0 0
      %3609 = vmatpush1.bf16.msra.mxu0 %v3518
      %3610 = vmatprep.subr.bf16.mxu0 0
      %3611 = vmatpush1.bf16.msra.mxu0 %v3519
      %3612 = vmatprep.subr.bf16.mxu0 0
      %3613 = vmatpush1.bf16.msra.mxu0 %v3520
      %3614 = vmatprep.subr.bf16.mxu0 0
      %3615 = vmatpush1.bf16.msra.mxu0 %v3521
      %3616 = vmatprep.subr.bf16.mxu0 0
      %3617 = vmatpush1.bf16.msra.mxu0 %v3522
      %3618 = vmatprep.subr.bf16.mxu0 0
      %3619 = vmatpush1.bf16.msra.mxu0 %v3523
      %3620 = vmatprep.subr.bf16.mxu0 0
      %3621 = vmatpush1.bf16.msra.mxu0 %v3524
      %3622 = vmatprep.subr.bf16.mxu0 0
      %3623 = vmatpush1.bf16.msra.mxu0 %v3525
      %3624 = vmatprep.subr.bf16.mxu0 0
      %3625 = vmatpush1.bf16.msra.mxu0 %v3526
      %3626 = vmatprep.subr.bf16.mxu0 0
      %3627 = vmatpush1.bf16.msra.mxu0 %v3527
      %3628 = vmatprep.mubr.bf16.mxu0 %v3350
      %3629 = vmatmul.mubr.bf16.gmra.mrb[0].mxu0 %v3349
      %v3630 = vpop.f32.mrb[0].mxu0
      %v3631 = vadd.f32 %v3438, %v3630
      %v3632 = vpop.f32.mrb[0].mxu0
      %v3633 = vpop.f32.mrb[0].mxu0
      %v3634 = vadd.f32 %v3438, %v3633
      %v3635 = vpop.f32.mrb[0].mxu0
      %3636 = vmatprep.mubr.bf16.mxu0 %v3353
      %3637 = vmatmul.mubr.bf16.gmra.mrb[0].mxu0 %v3352
      %v3638 = vpop.f32.mrb[0].mxu0
      %v3639 = vadd.f32 %v3438, %v3638
      %v3640 = vpop.f32.mrb[0].mxu0
      %v3641 = vpop.f32.mrb[0].mxu0
      %v3642 = vadd.f32 %v3438, %v3641
      %v3643 = vpop.f32.mrb[0].mxu0
      %3644 = vmatprep.mubr.bf16.mxu0 %v3356
      %3645 = vmatmul.mubr.bf16.gmra.mrb[0].mxu0 %v3355
      %v3646 = vpop.f32.mrb[0].mxu0
      %v3647 = vadd.f32 %v3438, %v3646
      %v3648 = vpop.f32.mrb[0].mxu0
      %v3649 = vpop.f32.mrb[0].mxu0
      %v3650 = vadd.f32 %v3438, %v3649
      %v3651 = vpop.f32.mrb[0].mxu0
      %3652 = vmatprep.mubr.bf16.mxu0 %v3359
      %3653 = vmatmul.mubr.bf16.gmra.mrb[0].mxu0 %v3358
      %v3654 = vpop.f32.mrb[0].mxu0
      %v3655 = vadd.f32 %v3438, %v3654
      %v3656 = vpop.f32.mrb[0].mxu0
      %v3657 = vpop.f32.mrb[0].mxu0
      %v3658 = vadd.f32 %v3438, %v3657
      %v3659 = vpop.f32.mrb[0].mxu0
      %3660 = vmatprep.mubr.bf16.mxu0 %v3362
      %3661 = vmatmul.mubr.bf16.gmra.mrb[0].mxu0 %v3361
      %v3662 = vpop.f32.mrb[0].mxu0
      %v3663 = vadd.f32 %v3438, %v3662
      %v3664 = vpop.f32.mrb[0].mxu0
      %v3665 = vpop.f32.mrb[0].mxu0
      %v3666 = vadd.f32 %v3438, %v3665
      %v3667 = vpop.f32.mrb[0].mxu0
      %3668 = vmatprep.mubr.bf16.mxu0 %v3365
      %3669 = vmatmul.mubr.bf16.gmra.mrb[0].mxu0 %v3364
      %v3670 = vpop.f32.mrb[0].mxu0
      %v3671 = vadd.f32 %v3438, %v3670
      %v3672 = vpop.f32.mrb[0].mxu0
      %v3673 = vpop.f32.mrb[0].mxu0
      %v3674 = vadd.f32 %v3438, %v3673
      %v3675 = vpop.f32.mrb[0].mxu0
      %3676 = vmatprep.mubr.bf16.mxu0 %v3368
      %3677 = vmatmul.mubr.bf16.gmra.mrb[0].mxu0 %v3367
      %v3678 = vpop.f32.mrb[0].mxu0
      %v3679 = vadd.f32 %v3438, %v3678
      %v3680 = vpop.f32.mrb[0].mxu0
      %v3681 = vpop.f32.mrb[0].mxu0
      %v3682 = vadd.f32 %v3438, %v3681
      %v3683 = vpop.f32.mrb[0].mxu0
      %3684 = vmatprep.mubr.bf16.mxu0 %v3371
      %3685 = vmatmul.mubr.bf16.gmra.mrb[0].mxu0 %v3370
      %v3686 = vpop.f32.mrb[0].mxu0
      %v3687 = vadd.f32 %v3438, %v3686
      %v3688 = vpop.f32.mrb[0].mxu0
      %v3689 = vpop.f32.mrb[0].mxu0
      %v3690 = vadd.f32 %v3438, %v3689
      %v3691 = vpop.f32.mrb[0].mxu0
      %3692 = vmatprep.mubr.bf16.mxu0 %v3374
      %3693 = vmatmul.mubr.bf16.gmra.mrb[0].mxu0 %v3373
      %v3694 = vpop.f32.mrb[0].mxu0
      %v3695 = vadd.f32 %v3438, %v3694
      %v3696 = vpop.f32.mrb[0].mxu0
      %v3697 = vpop.f32.mrb[0].mxu0
      %v3698 = vadd.f32 %v3438, %v3697
      %v3699 = vpop.f32.mrb[0].mxu0
      %3700 = vmatprep.mubr.bf16.mxu0 %v3377
      %3701 = vmatmul.mubr.bf16.gmra.mrb[0].mxu0 %v3376
      %v3702 = vpop.f32.mrb[0].mxu0
      %v3703 = vadd.f32 %v3438, %v3702
      %v3704 = vpop.f32.mrb[0].mxu0
      %v3705 = vpop.f32.mrb[0].mxu0
      %v3706 = vadd.f32 %v3438, %v3705
      %v3707 = vpop.f32.mrb[0].mxu0
      %3708 = vmatprep.mubr.bf16.mxu0 %v3380
      %3709 = vmatmul.mubr.bf16.gmra.mrb[0].mxu0 %v3379
      %v3710 = vpop.f32.mrb[0].mxu0
      %v3711 = vadd.f32 %v3438, %v3710
      %v3712 = vpop.f32.mrb[0].mxu0
      %v3713 = vpop.f32.mrb[0].mxu0
      %v3714 = vadd.f32 %v3438, %v3713
      %v3715 = vpop.f32.mrb[0].mxu0
      %3716 = vmatprep.mubr.bf16.mxu0 %v3383
      %3717 = vmatmul.mubr.bf16.gmra.mrb[0].mxu0 %v3382
      %v3718 = vpop.f32.mrb[0].mxu0
      %v3719 = vadd.f32 %v3438, %v3718
      %v3720 = vpop.f32.mrb[0].mxu0
      %v3721 = vpop.f32.mrb[0].mxu0
      %v3722 = vadd.f32 %v3438, %v3721
      %v3723 = vpop.f32.mrb[0].mxu0
      %3724 = vmatprep.mubr.bf16.mxu0 %v3386
      %3725 = vmatmul.mubr.bf16.gmra.mrb[0].mxu0 %v3385
      %v3726 = vpop.f32.mrb[0].mxu0
      %v3727 = vadd.f32 %v3438, %v3726
      %v3728 = vpop.f32.mrb[0].mxu0
      %v3729 = vpop.f32.mrb[0].mxu0
      %v3730 = vadd.f32 %v3438, %v3729
      %v3731 = vpop.f32.mrb[0].mxu0
      %3732 = vmatprep.mubr.bf16.mxu0 %v3389
      %3733 = vmatmul.mubr.bf16.gmra.mrb[0].mxu0 %v3388
      %v3734 = vpop.f32.mrb[0].mxu0
      %v3735 = vadd.f32 %v3438, %v3734
      %v3736 = vpop.f32.mrb[0].mxu0
      %v3737 = vpop.f32.mrb[0].mxu0
      %v3738 = vadd.f32 %v3438, %v3737
      %v3739 = vpop.f32.mrb[0].mxu0
      %3740 = vmatprep.mubr.bf16.mxu0 %v3392
      %3741 = vmatmul.mubr.bf16.gmra.mrb[0].mxu0 %v3391
      %v3742 = vpop.f32.mrb[0].mxu0
      %v3743 = vadd.f32 %v3438, %v3742
      %v3744 = vpop.f32.mrb[0].mxu0
      %v3745 = vpop.f32.mrb[0].mxu0
      %v3746 = vadd.f32 %v3438, %v3745
      %v3747 = vpop.f32.mrb[0].mxu0
      %3748 = vmatprep.mubr.bf16.mxu0 %v3395
      %3749 = vmatmul.mubr.bf16.gmra.mrb[0].mxu0 %v3394
      %v3750 = vpop.f32.mrb[0].mxu0
      %v3751 = vadd.f32 %v3438, %v3750
      %v3752 = vpop.f32.mrb[0].mxu0
      %v3753 = vpop.f32.mrb[0].mxu0
      %v3754 = vadd.f32 %v3438, %v3753
      %v3755 = vpop.f32.mrb[0].mxu0
      %3756 = vdwg.mxu0
      %3757 = vmatprep.subr.bf16.mxu0 0
      %3758 = vmatpush1.bf16.msra.mxu0 %v3528
      %3759 = vmatprep.subr.bf16.mxu0 0
      %3760 = vmatpush1.bf16.msra.mxu0 %v3529
      %3761 = vmatprep.subr.bf16.mxu0 0
      %3762 = vmatpush1.bf16.msra.mxu0 0
      %3763 = vmatprep.subr.bf16.mxu0 0
      %3764 = vmatpush1.bf16.msra.mxu0 0
      %3765 = vmatprep.subr.bf16.mxu0 0
      %3766 = vmatpush1.bf16.msra.mxu0 0
      %3767 = vmatprep.subr.bf16.mxu0 0
      %3768 = vmatpush1.bf16.msra.mxu0 0
      %3769 = vmatprep.subr.bf16.mxu0 0
      %3770 = vmatpush1.bf16.msra.mxu0 0
      %3771 = vmatprep.subr.bf16.mxu0 0
      %3772 = vmatpush1.bf16.msra.mxu0 0
      %3773 = vmatprep.subr.bf16.mxu0 0
      %3774 = vmatpush1.bf16.msra.mxu0 0
      %3775 = vmatprep.subr.bf16.mxu0 0
      %3776 = vmatpush1.bf16.msra.mxu0 0
      %3777 = vmatprep.subr.bf16.mxu0 0
      %3778 = vmatpush1.bf16.msra.mxu0 0
      %3779 = vmatprep.subr.bf16.mxu0 0
      %3780 = vmatpush1.bf16.msra.mxu0 0
      %3781 = vmatprep.subr.bf16.mxu0 0
      %3782 = vmatpush1.bf16.msra.mxu0 0
      %3783 = vmatprep.subr.bf16.mxu0 0
      %3784 = vmatpush1.bf16.msra.mxu0 0
      %3785 = vmatprep.subr.bf16.mxu0 0
      %3786 = vmatpush1.bf16.msra.mxu0 0
      %3787 = vmatprep.subr.bf16.mxu0 0
      %3788 = vmatpush1.bf16.msra.mxu0 0
      %3789 = vmatprep.mubr.bf16.mxu0 0
      %3790 = vmatmul.mubr.bf16.gmra.mrb[0].mxu0 %v3549
      %v3791 = vpop.f32.mrb[0].mxu0
      %v3792 = vadd.f32 %v3631, %v3791
      %v3793 = vpop.f32.mrb[0].mxu0
      %v3794 = vpop.f32.mrb[0].mxu0
      %v3795 = vadd.f32 %v3634, %v3794
      %v3796 = vpop.f32.mrb[0].mxu0
      %3797 = vmatprep.mubr.bf16.mxu0 0
      %3798 = vmatmul.mubr.bf16.gmra.mrb[0].mxu0 %v3552
      %v3799 = vpop.f32.mrb[0].mxu0
      %v3800 = vadd.f32 %v3639, %v3799
      %v3801 = vpop.f32.mrb[0].mxu0
      %v3802 = vpop.f32.mrb[0].mxu0
      %v3803 = vadd.f32 %v3642, %v3802
      %v3804 = vpop.f32.mrb[0].mxu0
      %3805 = vmatprep.mubr.bf16.mxu0 0
      %3806 = vmatmul.mubr.bf16.gmra.mrb[0].mxu0 %v3555
      %v3807 = vpop.f32.mrb[0].mxu0
      %v3808 = vadd.f32 %v3647, %v3807
      %v3809 = vpop.f32.mrb[0].mxu0
      %v3810 = vpop.f32.mrb[0].mxu0
      %v3811 = vadd.f32 %v3650, %v3810
      %v3812 = vpop.f32.mrb[0].mxu0
      %3813 = vmatprep.mubr.bf16.mxu0 0
      %3814 = vmatmul.mubr.bf16.gmra.mrb[0].mxu0 %v3558
      %v3815 = vpop.f32.mrb[0].mxu0
      %v3816 = vadd.f32 %v3655, %v3815
      %v3817 = vpop.f32.mrb[0].mxu0
      %v3818 = vpop.f32.mrb[0].mxu0
      %v3819 = vadd.f32 %v3658, %v3818
      %v3820 = vpop.f32.mrb[0].mxu0
      %3821 = vmatprep.mubr.bf16.mxu0 0
      %3822 = vmatmul.mubr.bf16.gmra.mrb[0].mxu0 %v3561
      %v3823 = vpop.f32.mrb[0].mxu0
      %v3824 = vadd.f32 %v3663, %v3823
      %v3825 = vpop.f32.mrb[0].mxu0
      %v3826 = vpop.f32.mrb[0].mxu0
      %v3827 = vadd.f32 %v3666, %v3826
      %v3828 = vpop.f32.mrb[0].mxu0
      %3829 = vmatprep.mubr.bf16.mxu0 0
      %3830 = vmatmul.mubr.bf16.gmra.mrb[0].mxu0 %v3564
      %v3831 = vpop.f32.mrb[0].mxu0
      %v3832 = vadd.f32 %v3671, %v3831
      %v3833 = vpop.f32.mrb[0].mxu0
      %v3834 = vpop.f32.mrb[0].mxu0
      %v3835 = vadd.f32 %v3674, %v3834
      %v3836 = vpop.f32.mrb[0].mxu0
      %3837 = vmatprep.mubr.bf16.mxu0 0
      %3838 = vmatmul.mubr.bf16.gmra.mrb[0].mxu0 %v3567
      %v3839 = vpop.f32.mrb[0].mxu0
      %v3840 = vadd.f32 %v3679, %v3839
      %v3841 = vpop.f32.mrb[0].mxu0
      %v3842 = vpop.f32.mrb[0].mxu0
      %v3843 = vadd.f32 %v3682, %v3842
      %v3844 = vpop.f32.mrb[0].mxu0
      %3845 = vmatprep.mubr.bf16.mxu0 0
      %3846 = vmatmul.mubr.bf16.gmra.mrb[0].mxu0 %v3570
      %v3847 = vpop.f32.mrb[0].mxu0
      %v3848 = vadd.f32 %v3687, %v3847
      %v3849 = vpop.f32.mrb[0].mxu0
      %v3850 = vpop.f32.mrb[0].mxu0
      %v3851 = vadd.f32 %v3690, %v3850
      %v3852 = vpop.f32.mrb[0].mxu0
      %3853 = vmatprep.mubr.bf16.mxu0 0
      %3854 = vmatmul.mubr.bf16.gmra.mrb[0].mxu0 %v3573
      %v3855 = vpop.f32.mrb[0].mxu0
      %v3856 = vadd.f32 %v3695, %v3855
      %v3857 = vpop.f32.mrb[0].mxu0
      %v3858 = vpop.f32.mrb[0].mxu0
      %v3859 = vadd.f32 %v3698, %v3858
      %v3860 = vpop.f32.mrb[0].mxu0
      %3861 = vmatprep.mubr.bf16.mxu0 0
      %3862 = vmatmul.mubr.bf16.gmra.mrb[0].mxu0 %v3576
      %v3863 = vpop.f32.mrb[0].mxu0
      %v3864 = vadd.f32 %v3703, %v3863
      %v3865 = vpop.f32.mrb[0].mxu0
      %v3866 = vpop.f32.mrb[0].mxu0
      %v3867 = vadd.f32 %v3706, %v3866
      %v3868 = vpop.f32.mrb[0].mxu0
      %3869 = vmatprep.mubr.bf16.mxu0 0
      %3870 = vmatmul.mubr.bf16.gmra.mrb[0].mxu0 %v3579
      %v3871 = vpop.f32.mrb[0].mxu0
      %v3872 = vadd.f32 %v3711, %v3871
      %v3873 = vpop.f32.mrb[0].mxu0
      %v3874 = vpop.f32.mrb[0].mxu0
      %v3875 = vadd.f32 %v3714, %v3874
      %v3876 = vpop.f32.mrb[0].mxu0
      %3877 = vmatprep.mubr.bf16.mxu0 0
      %3878 = vmatmul.mubr.bf16.gmra.mrb[0].mxu0 %v3582
      %v3879 = vpop.f32.mrb[0].mxu0
      %v3880 = vadd.f32 %v3719, %v3879
      %v3881 = vpop.f32.mrb[0].mxu0
      %v3882 = vpop.f32.mrb[0].mxu0
      %v3883 = vadd.f32 %v3722, %v3882
      %v3884 = vpop.f32.mrb[0].mxu0
      %3885 = vmatprep.mubr.bf16.mxu0 0
      %3886 = vmatmul.mubr.bf16.gmra.mrb[0].mxu0 %v3585
      %v3887 = vpop.f32.mrb[0].mxu0
      %v3888 = vadd.f32 %v3727, %v3887
      %v3889 = vpop.f32.mrb[0].mxu0
      %v3890 = vpop.f32.mrb[0].mxu0
      %v3891 = vadd.f32 %v3730, %v3890
      %v3892 = vpop.f32.mrb[0].mxu0
      %3893 = vmatprep.mubr.bf16.mxu0 0
      %3894 = vmatmul.mubr.bf16.gmra.mrb[0].mxu0 %v3588
      %v3895 = vpop.f32.mrb[0].mxu0
      %v3896 = vadd.f32 %v3735, %v3895
      %v3897 = vpop.f32.mrb[0].mxu0
      %v3898 = vpop.f32.mrb[0].mxu0
      %v3899 = vadd.f32 %v3738, %v3898
      %v3900 = vpop.f32.mrb[0].mxu0
      %3901 = vmatprep.mubr.bf16.mxu0 0
      %3902 = vmatmul.mubr.bf16.gmra.mrb[0].mxu0 %v3591
      %v3903 = vpop.f32.mrb[0].mxu0
      %v3904 = vadd.f32 %v3743, %v3903
      %v3905 = vpop.f32.mrb[0].mxu0
      %v3906 = vpop.f32.mrb[0].mxu0
      %v3907 = vadd.f32 %v3746, %v3906
      %v3908 = vpop.f32.mrb[0].mxu0
      %3909 = vmatprep.mubr.bf16.mxu0 0
      %3910 = vmatmul.mubr.bf16.gmra.mrb[0].mxu0 %v3594
      %v3911 = vpop.f32.mrb[0].mxu0
      %v3912 = vadd.f32 %v3751, %v3911
      %v3913 = vpop.f32.mrb[0].mxu0
      %v3914 = vpop.f32.mrb[0].mxu0
      %v3915 = vadd.f32 %v3754, %v3914
      %v3916 = vpop.f32.mrb[0].mxu0
      %3917 = vdwg.mxu0
      %v3918 = vmax.f32 %v3792, 0.0
      %v3919 = vmax.f32 %v3795, 0.0
      %v3920 = vmax.f32 %v3800, 0.0
      %v3921 = vmax.f32 %v3803, 0.0
      %v3922 = vmax.f32 %v3808, 0.0
      %v3923 = vmax.f32 %v3811, 0.0
      %v3924 = vmax.f32 %v3816, 0.0
      %v3925 = vmax.f32 %v3819, 0.0
      %v3926 = vmax.f32 %v3824, 0.0
      %v3927 = vmax.f32 %v3827, 0.0
      %v3928 = vmax.f32 %v3832, 0.0
      %v3929 = vmax.f32 %v3835, 0.0
      %v3930 = vmax.f32 %v3840, 0.0
      %v3931 = vmax.f32 %v3843, 0.0
      %v3932 = vmax.f32 %v3848, 0.0
      %v3933 = vmax.f32 %v3851, 0.0
      %v3934 = vmax.f32 %v3856, 0.0
      %v3935 = vmax.f32 %v3859, 0.0
      %v3936 = vmax.f32 %v3864, 0.0
      %v3937 = vmax.f32 %v3867, 0.0
      %v3938 = vmax.f32 %v3872, 0.0
      %v3939 = vmax.f32 %v3875, 0.0
      %v3940 = vmax.f32 %v3880, 0.0
      %v3941 = vmax.f32 %v3883, 0.0
      %v3942 = vmax.f32 %v3888, 0.0
      %v3943 = vmax.f32 %v3891, 0.0
      %v3944 = vmax.f32 %v3896, 0.0
      %v3945 = vmax.f32 %v3899, 0.0
      %v3946 = vmax.f32 %v3904, 0.0
      %v3947 = vmax.f32 %v3907, 0.0
      %v3948 = vmax.f32 %v3912, 0.0
      %v3949 = vmax.f32 %v3915, 0.0
      %v3953 = vrot.slane %v3947, 7
      %v3954 = vrot.slane %v3948, 7
      %v3955 = vsel %vm610, %v3953, %v3954
      %v3956 = vrot.slane %v3949, 7
      %v3957 = vsel %vm610, %v3954, %v3956
      %v3990 = vrot.slane %v3918, 7
      %v3991 = vrot.slane %v3919, 7
      %v3992 = vsel %vm610, %v3990, %v3991
      %v3993 = vrot.slane %v3920, 7
      %v3994 = vsel %vm610, %v3991, %v3993
      %v3995 = vrot.slane %v3921, 7
      %v3996 = vsel %vm610, %v3993, %v3995
      %v3997 = vrot.slane %v3922, 7
      %v3998 = vsel %vm610, %v3995, %v3997
      %v3999 = vrot.slane %v3923, 7
      %v4000 = vsel %vm610, %v3997, %v3999
      %v4001 = vrot.slane %v3924, 7
      %v4002 = vsel %vm610, %v3999, %v4001
      %v4003 = vrot.slane %v3925, 7
      %v4004 = vsel %vm610, %v4001, %v4003
      %v4005 = vrot.slane %v3926, 7
      %v4006 = vsel %vm610, %v4003, %v4005
      %v4007 = vrot.slane %v3927, 7
      %v4008 = vsel %vm610, %v4005, %v4007
      %v4009 = vrot.slane %v3928, 7
      %v4010 = vsel %vm610, %v4007, %v4009
      %v4011 = vrot.slane %v3929, 7
      %v4012 = vsel %vm610, %v4009, %v4011
      %v4013 = vrot.slane %v3930, 7
      %v4014 = vsel %vm610, %v4011, %v4013
      %v4015 = vrot.slane %v3931, 7
      %v4016 = vsel %vm610, %v4013, %v4015
      %v4017 = vrot.slane %v3932, 7
      %v4018 = vsel %vm610, %v4015, %v4017
      %v4019 = vrot.slane %v3933, 7
      %v4020 = vsel %vm610, %v4017, %v4019
      %v4021 = vrot.slane %v3934, 7
      %v4022 = vsel %vm610, %v4019, %v4021
      %v4023 = vrot.slane %v3935, 7
      %v4024 = vsel %vm610, %v4021, %v4023
      %v4025 = vrot.slane %v3936, 7
      %v4026 = vsel %vm610, %v4023, %v4025
      %v4027 = vrot.slane %v3937, 7
      %v4028 = vsel %vm610, %v4025, %v4027
      %v4029 = vrot.slane %v3938, 7
      %v4030 = vsel %vm610, %v4027, %v4029
      %v4031 = vrot.slane %v3939, 7
      %v4032 = vsel %vm610, %v4029, %v4031
      %v4033 = vrot.slane %v3940, 7
      %v4034 = vsel %vm610, %v4031, %v4033
      %v4035 = vrot.slane %v3941, 7
      %v4036 = vsel %vm610, %v4033, %v4035
      %v4037 = vrot.slane %v3942, 7
      %v4038 = vsel %vm610, %v4035, %v4037
      %v4039 = vrot.slane %v3943, 7
      %v4040 = vsel %vm610, %v4037, %v4039
      %v4041 = vrot.slane %v3944, 7
      %v4042 = vsel %vm610, %v4039, %v4041
      %v4043 = vrot.slane %v3945, 7
      %v4044 = vsel %vm610, %v4041, %v4043
      %v4045 = vrot.slane %v3946, 7
      %v4046 = vsel %vm610, %v4043, %v4045
      %v4047 = vsel %vm610, %v4045, %v3953
      %v4078 = vsel %vm610, %v3956, %v3990
      %v4079 = vrot.slane %v3948, 1
      %v4080 = vrot.slane %v3949, 1
      %v4081 = vsel %vm737, %v4079, %v4080
      %v4083 = vrot.slane %v3918, 1
      %v4084 = vrot.slane %v3919, 1
      %v4085 = vsel %vm737, %v4083, %v4084
      %v4086 = vrot.slane %v3920, 1
      %v4087 = vsel %vm737, %v4084, %v4086
      %v4088 = vrot.slane %v3921, 1
      %v4089 = vsel %vm737, %v4086, %v4088
      %v4090 = vrot.slane %v3922, 1
      %v4091 = vsel %vm737, %v4088, %v4090
      %v4092 = vrot.slane %v3923, 1
      %v4093 = vsel %vm737, %v4090, %v4092
      %v4094 = vrot.slane %v3924, 1
      %v4095 = vsel %vm737, %v4092, %v4094
      %v4096 = vrot.slane %v3925, 1
      %v4097 = vsel %vm737, %v4094, %v4096
      %v4098 = vrot.slane %v3926, 1
      %v4099 = vsel %vm737, %v4096, %v4098
      %v4100 = vrot.slane %v3927, 1
      %v4101 = vsel %vm737, %v4098, %v4100
      %v4102 = vrot.slane %v3928, 1
      %v4103 = vsel %vm737, %v4100, %v4102
      %v4104 = vrot.slane %v3929, 1
      %v4105 = vsel %vm737, %v4102, %v4104
      %v4106 = vrot.slane %v3930, 1
      %v4107 = vsel %vm737, %v4104, %v4106
      %v4108 = vrot.slane %v3931, 1
      %v4109 = vsel %vm737, %v4106, %v4108
      %v4110 = vrot.slane %v3932, 1
      %v4111 = vsel %vm737, %v4108, %v4110
      %v4112 = vrot.slane %v3933, 1
      %v4113 = vsel %vm737, %v4110, %v4112
      %v4114 = vrot.slane %v3934, 1
      %v4115 = vsel %vm737, %v4112, %v4114
      %v4116 = vrot.slane %v3935, 1
      %v4117 = vsel %vm737, %v4114, %v4116
      %v4118 = vrot.slane %v3936, 1
      %v4119 = vsel %vm737, %v4116, %v4118
      %v4120 = vrot.slane %v3937, 1
      %v4121 = vsel %vm737, %v4118, %v4120
      %v4122 = vrot.slane %v3938, 1
      %v4123 = vsel %vm737, %v4120, %v4122
      %v4124 = vrot.slane %v3939, 1
      %v4125 = vsel %vm737, %v4122, %v4124
      %v4126 = vrot.slane %v3940, 1
      %v4127 = vsel %vm737, %v4124, %v4126
      %v4128 = vrot.slane %v3941, 1
      %v4129 = vsel %vm737, %v4126, %v4128
      %v4130 = vrot.slane %v3942, 1
      %v4131 = vsel %vm737, %v4128, %v4130
      %v4132 = vrot.slane %v3943, 1
      %v4133 = vsel %vm737, %v4130, %v4132
      %v4134 = vrot.slane %v3944, 1
      %v4135 = vsel %vm737, %v4132, %v4134
      %v4136 = vrot.slane %v3945, 1
      %v4137 = vsel %vm737, %v4134, %v4136
      %v4138 = vrot.slane %v3946, 1
      %v4139 = vsel %vm737, %v4136, %v4138
      %v4140 = vrot.slane %v3947, 1
      %v4141 = vsel %vm737, %v4138, %v4140
      %v4142 = vsel %vm737, %v4140, %v4079
      %v4144 = vsel %vm737, %v4080, %v4083
      %4176 = vrot.lane.b32.xlu0 %v3948, 32
      %v4177 = vpop.permute.xlu0 %4176
      %4178 = vrot.lane.b32.xlu0 %v3949, 32
      %v4179 = vpop.permute.xlu0 %4178
      %4180 = vrot.lane.b32.xlu0 %v3918, 32
      %v4181 = vpop.permute.xlu0 %4180
      %4182 = vrot.lane.b32.xlu0 %v3919, 32
      %v4183 = vpop.permute.xlu0 %4182
      %4184 = vrot.lane.b32.xlu0 %v3920, 32
      %v4185 = vpop.permute.xlu0 %4184
      %4186 = vrot.lane.b32.xlu0 %v3921, 32
      %v4187 = vpop.permute.xlu0 %4186
      %4188 = vrot.lane.b32.xlu0 %v3922, 32
      %v4189 = vpop.permute.xlu0 %4188
      %4190 = vrot.lane.b32.xlu0 %v3923, 32
      %v4191 = vpop.permute.xlu0 %4190
      %4192 = vrot.lane.b32.xlu0 %v3924, 32
      %v4193 = vpop.permute.xlu0 %4192
      %4194 = vrot.lane.b32.xlu0 %v3925, 32
      %v4195 = vpop.permute.xlu0 %4194
      %4196 = vrot.lane.b32.xlu0 %v3926, 32
      %v4197 = vpop.permute.xlu0 %4196
      %4198 = vrot.lane.b32.xlu0 %v3927, 32
      %v4199 = vpop.permute.xlu0 %4198
      %4200 = vrot.lane.b32.xlu0 %v3928, 32
      %v4201 = vpop.permute.xlu0 %4200
      %4202 = vrot.lane.b32.xlu0 %v3929, 32
      %v4203 = vpop.permute.xlu0 %4202
      %4204 = vrot.lane.b32.xlu0 %v3930, 32
      %v4205 = vpop.permute.xlu0 %4204
      %4206 = vrot.lane.b32.xlu0 %v3931, 32
      %v4207 = vpop.permute.xlu0 %4206
      %4208 = vrot.lane.b32.xlu0 %v3932, 32
      %v4209 = vpop.permute.xlu0 %4208
      %4210 = vrot.lane.b32.xlu0 %v3933, 32
      %v4211 = vpop.permute.xlu0 %4210
      %4212 = vrot.lane.b32.xlu0 %v3934, 32
      %v4213 = vpop.permute.xlu0 %4212
      %4214 = vrot.lane.b32.xlu0 %v3935, 32
      %v4215 = vpop.permute.xlu0 %4214
      %4216 = vrot.lane.b32.xlu0 %v3936, 32
      %v4217 = vpop.permute.xlu0 %4216
      %4218 = vrot.lane.b32.xlu0 %v3937, 32
      %v4219 = vpop.permute.xlu0 %4218
      %4220 = vrot.lane.b32.xlu0 %v3938, 32
      %v4221 = vpop.permute.xlu0 %4220
      %4222 = vrot.lane.b32.xlu0 %v3939, 32
      %v4223 = vpop.permute.xlu0 %4222
      %4224 = vrot.lane.b32.xlu0 %v3940, 32
      %v4225 = vpop.permute.xlu0 %4224
      %4226 = vrot.lane.b32.xlu0 %v3941, 32
      %v4227 = vpop.permute.xlu0 %4226
      %4228 = vrot.lane.b32.xlu0 %v3942, 32
      %v4229 = vpop.permute.xlu0 %4228
      %4230 = vrot.lane.b32.xlu0 %v3943, 32
      %v4231 = vpop.permute.xlu0 %4230
      %4232 = vrot.lane.b32.xlu0 %v3944, 32
      %v4233 = vpop.permute.xlu0 %4232
      %4234 = vrot.lane.b32.xlu0 %v3945, 32
      %v4235 = vpop.permute.xlu0 %4234
      %4236 = vrot.lane.b32.xlu0 %v3946, 32
      %v4237 = vpop.permute.xlu0 %4236
      %4238 = vrot.lane.b32.xlu0 %v3947, 32
      %v4239 = vpop.permute.xlu0 %4238
      %4273 = vrot.lane.b32.xlu0 %v4081, 64
      %v4274 = vpop.permute.xlu0 %4273
      %4275 = vrot.lane.b32.xlu0 %v4144, 64
      %v4276 = vpop.permute.xlu0 %4275
      %4277 = vrot.lane.b32.xlu0 %v4085, 64
      %v4278 = vpop.permute.xlu0 %4277
      %4279 = vrot.lane.b32.xlu0 %v4087, 64
      %v4280 = vpop.permute.xlu0 %4279
      %4281 = vrot.lane.b32.xlu0 %v4089, 64
      %v4282 = vpop.permute.xlu0 %4281
      %4283 = vrot.lane.b32.xlu0 %v4091, 64
      %v4284 = vpop.permute.xlu0 %4283
      %4285 = vrot.lane.b32.xlu0 %v4093, 64
      %v4286 = vpop.permute.xlu0 %4285
      %4287 = vrot.lane.b32.xlu0 %v4095, 64
      %v4288 = vpop.permute.xlu0 %4287
      %4289 = vrot.lane.b32.xlu0 %v4097, 64
      %v4290 = vpop.permute.xlu0 %4289
      %4291 = vrot.lane.b32.xlu0 %v4099, 64
      %v4292 = vpop.permute.xlu0 %4291
      %4293 = vrot.lane.b32.xlu0 %v4101, 64
      %v4294 = vpop.permute.xlu0 %4293
      %4295 = vrot.lane.b32.xlu0 %v4103, 64
      %v4296 = vpop.permute.xlu0 %4295
      %4297 = vrot.lane.b32.xlu0 %v4105, 64
      %v4298 = vpop.permute.xlu0 %4297
      %4299 = vrot.lane.b32.xlu0 %v4107, 64
      %v4300 = vpop.permute.xlu0 %4299
      %4301 = vrot.lane.b32.xlu0 %v4109, 64
      %v4302 = vpop.permute.xlu0 %4301
      %4303 = vrot.lane.b32.xlu0 %v4111, 64
      %v4304 = vpop.permute.xlu0 %4303
      %4305 = vrot.lane.b32.xlu0 %v4113, 64
      %v4306 = vpop.permute.xlu0 %4305
      %4307 = vrot.lane.b32.xlu0 %v4115, 64
      %v4308 = vpop.permute.xlu0 %4307
      %4309 = vrot.lane.b32.xlu0 %v4117, 64
      %v4310 = vpop.permute.xlu0 %4309
      %4311 = vrot.lane.b32.xlu0 %v4119, 64
      %v4312 = vpop.permute.xlu0 %4311
      %4313 = vrot.lane.b32.xlu0 %v4121, 64
      %v4314 = vpop.permute.xlu0 %4313
      %4315 = vrot.lane.b32.xlu0 %v4123, 64
      %v4316 = vpop.permute.xlu0 %4315
      %4317 = vrot.lane.b32.xlu0 %v4125, 64
      %v4318 = vpop.permute.xlu0 %4317
      %4319 = vrot.lane.b32.xlu0 %v4127, 64
      %v4320 = vpop.permute.xlu0 %4319
      %4321 = vrot.lane.b32.xlu0 %v4129, 64
      %v4322 = vpop.permute.xlu0 %4321
      %4323 = vrot.lane.b32.xlu0 %v4131, 64
      %v4324 = vpop.permute.xlu0 %4323
      %4325 = vrot.lane.b32.xlu0 %v4133, 64
      %v4326 = vpop.permute.xlu0 %4325
      %4327 = vrot.lane.b32.xlu0 %v4135, 64
      %v4328 = vpop.permute.xlu0 %4327
      %4329 = vrot.lane.b32.xlu0 %v4137, 64
      %v4330 = vpop.permute.xlu0 %4329
      %4331 = vrot.lane.b32.xlu0 %v4139, 64
      %v4332 = vpop.permute.xlu0 %4331
      %4333 = vrot.lane.b32.xlu0 %v4141, 64
      %v4334 = vpop.permute.xlu0 %4333
      %4335 = vrot.lane.b32.xlu0 %v4142, 64
      %v4336 = vpop.permute.xlu0 %4335
      %4370 = vrot.lane.b32.xlu0 %v4078, 96
      %v4371 = vpop.permute.xlu0 %4370
      %4372 = vrot.lane.b32.xlu0 %v3992, 96
      %v4373 = vpop.permute.xlu0 %4372
      %4374 = vrot.lane.b32.xlu0 %v3994, 96
      %v4375 = vpop.permute.xlu0 %4374
      %4376 = vrot.lane.b32.xlu0 %v3996, 96
      %v4377 = vpop.permute.xlu0 %4376
      %4378 = vrot.lane.b32.xlu0 %v3998, 96
      %v4379 = vpop.permute.xlu0 %4378
      %4380 = vrot.lane.b32.xlu0 %v4000, 96
      %v4381 = vpop.permute.xlu0 %4380
      %4382 = vrot.lane.b32.xlu0 %v4002, 96
      %v4383 = vpop.permute.xlu0 %4382
      %4384 = vrot.lane.b32.xlu0 %v4004, 96
      %v4385 = vpop.permute.xlu0 %4384
      %4386 = vrot.lane.b32.xlu0 %v4006, 96
      %v4387 = vpop.permute.xlu0 %4386
      %4388 = vrot.lane.b32.xlu0 %v4008, 96
      %v4389 = vpop.permute.xlu0 %4388
      %4390 = vrot.lane.b32.xlu0 %v4010, 96
      %v4391 = vpop.permute.xlu0 %4390
      %4392 = vrot.lane.b32.xlu0 %v4012, 96
      %v4393 = vpop.permute.xlu0 %4392
      %4394 = vrot.lane.b32.xlu0 %v4014, 96
      %v4395 = vpop.permute.xlu0 %4394
      %4396 = vrot.lane.b32.xlu0 %v4016, 96
      %v4397 = vpop.permute.xlu0 %4396
      %4398 = vrot.lane.b32.xlu0 %v4018, 96
      %v4399 = vpop.permute.xlu0 %4398
      %4400 = vrot.lane.b32.xlu0 %v4020, 96
      %v4401 = vpop.permute.xlu0 %4400
      %4402 = vrot.lane.b32.xlu0 %v4022, 96
      %v4403 = vpop.permute.xlu0 %4402
      %4404 = vrot.lane.b32.xlu0 %v4024, 96
      %v4405 = vpop.permute.xlu0 %4404
      %4406 = vrot.lane.b32.xlu0 %v4026, 96
      %v4407 = vpop.permute.xlu0 %4406
      %4408 = vrot.lane.b32.xlu0 %v4028, 96
      %v4409 = vpop.permute.xlu0 %4408
      %4410 = vrot.lane.b32.xlu0 %v4030, 96
      %v4411 = vpop.permute.xlu0 %4410
      %4412 = vrot.lane.b32.xlu0 %v4032, 96
      %v4413 = vpop.permute.xlu0 %4412
      %4414 = vrot.lane.b32.xlu0 %v4034, 96
      %v4415 = vpop.permute.xlu0 %4414
      %4416 = vrot.lane.b32.xlu0 %v4036, 96
      %v4417 = vpop.permute.xlu0 %4416
      %4418 = vrot.lane.b32.xlu0 %v4038, 96
      %v4419 = vpop.permute.xlu0 %4418
      %4420 = vrot.lane.b32.xlu0 %v4040, 96
      %v4421 = vpop.permute.xlu0 %4420
      %4422 = vrot.lane.b32.xlu0 %v4042, 96
      %v4423 = vpop.permute.xlu0 %4422
      %4424 = vrot.lane.b32.xlu0 %v4044, 96
      %v4425 = vpop.permute.xlu0 %4424
      %4426 = vrot.lane.b32.xlu0 %v4046, 96
      %v4427 = vpop.permute.xlu0 %4426
      %4428 = vrot.lane.b32.xlu0 %v4047, 96
      %v4429 = vpop.permute.xlu0 %4428
      %4430 = vrot.lane.b32.xlu0 %v3955, 96
      %v4431 = vpop.permute.xlu0 %4430
      %4432 = vrot.lane.b32.xlu0 %v3957, 96
      %v4433 = vpop.permute.xlu0 %4432
      %4466 = vrot.lane.b32.xlu0 %v4085, 32
      %v4467 = vpop.permute.xlu0 %4466
      %4468 = vrot.lane.b32.xlu0 %v4087, 32
      %v4469 = vpop.permute.xlu0 %4468
      %4470 = vrot.lane.b32.xlu0 %v4089, 32
      %v4471 = vpop.permute.xlu0 %4470
      %4472 = vrot.lane.b32.xlu0 %v4091, 32
      %v4473 = vpop.permute.xlu0 %4472
      %4474 = vrot.lane.b32.xlu0 %v4093, 32
      %v4475 = vpop.permute.xlu0 %4474
      %4476 = vrot.lane.b32.xlu0 %v4095, 32
      %v4477 = vpop.permute.xlu0 %4476
      %4478 = vrot.lane.b32.xlu0 %v4097, 32
      %v4479 = vpop.permute.xlu0 %4478
      %4480 = vrot.lane.b32.xlu0 %v4099, 32
      %v4481 = vpop.permute.xlu0 %4480
      %4482 = vrot.lane.b32.xlu0 %v4101, 32
      %v4483 = vpop.permute.xlu0 %4482
      %4484 = vrot.lane.b32.xlu0 %v4103, 32
      %v4485 = vpop.permute.xlu0 %4484
      %4486 = vrot.lane.b32.xlu0 %v4105, 32
      %v4487 = vpop.permute.xlu0 %4486
      %4488 = vrot.lane.b32.xlu0 %v4107, 32
      %v4489 = vpop.permute.xlu0 %4488
      %4490 = vrot.lane.b32.xlu0 %v4109, 32
      %v4491 = vpop.permute.xlu0 %4490
      %4492 = vrot.lane.b32.xlu0 %v4111, 32
      %v4493 = vpop.permute.xlu0 %4492
      %4494 = vrot.lane.b32.xlu0 %v4113, 32
      %v4495 = vpop.permute.xlu0 %4494
      %4496 = vrot.lane.b32.xlu0 %v4115, 32
      %v4497 = vpop.permute.xlu0 %4496
      %4498 = vrot.lane.b32.xlu0 %v4117, 32
      %v4499 = vpop.permute.xlu0 %4498
      %4500 = vrot.lane.b32.xlu0 %v4119, 32
      %v4501 = vpop.permute.xlu0 %4500
      %4502 = vrot.lane.b32.xlu0 %v4121, 32
      %v4503 = vpop.permute.xlu0 %4502
      %4504 = vrot.lane.b32.xlu0 %v4123, 32
      %v4505 = vpop.permute.xlu0 %4504
      %4506 = vrot.lane.b32.xlu0 %v4125, 32
      %v4507 = vpop.permute.xlu0 %4506
      %4508 = vrot.lane.b32.xlu0 %v4127, 32
      %v4509 = vpop.permute.xlu0 %4508
      %4510 = vrot.lane.b32.xlu0 %v4129, 32
      %v4511 = vpop.permute.xlu0 %4510
      %4512 = vrot.lane.b32.xlu0 %v4131, 32
      %v4513 = vpop.permute.xlu0 %4512
      %4514 = vrot.lane.b32.xlu0 %v4133, 32
      %v4515 = vpop.permute.xlu0 %4514
      %4516 = vrot.lane.b32.xlu0 %v4135, 32
      %v4517 = vpop.permute.xlu0 %4516
      %4518 = vrot.lane.b32.xlu0 %v4137, 32
      %v4519 = vpop.permute.xlu0 %4518
      %4520 = vrot.lane.b32.xlu0 %v4139, 32
      %v4521 = vpop.permute.xlu0 %4520
      %4522 = vrot.lane.b32.xlu0 %v4141, 32
      %v4523 = vpop.permute.xlu0 %4522
      %4524 = vrot.lane.b32.xlu0 %v4142, 32
      %v4525 = vpop.permute.xlu0 %4524
      %4526 = vrot.lane.b32.xlu0 %v4081, 32
      %v4527 = vpop.permute.xlu0 %4526
      %4528 = vrot.lane.b32.xlu0 %v4144, 32
      %v4529 = vpop.permute.xlu0 %4528
      %4562 = vrot.lane.b32.xlu0 %v3994, 64
      %v4563 = vpop.permute.xlu0 %4562
      %4564 = vrot.lane.b32.xlu0 %v3996, 64
      %v4565 = vpop.permute.xlu0 %4564
      %4566 = vrot.lane.b32.xlu0 %v3998, 64
      %v4567 = vpop.permute.xlu0 %4566
      %4568 = vrot.lane.b32.xlu0 %v4000, 64
      %v4569 = vpop.permute.xlu0 %4568
      %4570 = vrot.lane.b32.xlu0 %v4002, 64
      %v4571 = vpop.permute.xlu0 %4570
      %4572 = vrot.lane.b32.xlu0 %v4004, 64
      %v4573 = vpop.permute.xlu0 %4572
      %4574 = vrot.lane.b32.xlu0 %v4006, 64
      %v4575 = vpop.permute.xlu0 %4574
      %4576 = vrot.lane.b32.xlu0 %v4008, 64
      %v4577 = vpop.permute.xlu0 %4576
      %4578 = vrot.lane.b32.xlu0 %v4010, 64
      %v4579 = vpop.permute.xlu0 %4578
      %4580 = vrot.lane.b32.xlu0 %v4012, 64
      %v4581 = vpop.permute.xlu0 %4580
      %4582 = vrot.lane.b32.xlu0 %v4014, 64
      %v4583 = vpop.permute.xlu0 %4582
      %4584 = vrot.lane.b32.xlu0 %v4016, 64
      %v4585 = vpop.permute.xlu0 %4584
      %4586 = vrot.lane.b32.xlu0 %v4018, 64
      %v4587 = vpop.permute.xlu0 %4586
      %4588 = vrot.lane.b32.xlu0 %v4020, 64
      %v4589 = vpop.permute.xlu0 %4588
      %4590 = vrot.lane.b32.xlu0 %v4022, 64
      %v4591 = vpop.permute.xlu0 %4590
      %4592 = vrot.lane.b32.xlu0 %v4024, 64
      %v4593 = vpop.permute.xlu0 %4592
      %4594 = vrot.lane.b32.xlu0 %v4026, 64
      %v4595 = vpop.permute.xlu0 %4594
      %4596 = vrot.lane.b32.xlu0 %v4028, 64
      %v4597 = vpop.permute.xlu0 %4596
      %4598 = vrot.lane.b32.xlu0 %v4030, 64
      %v4599 = vpop.permute.xlu0 %4598
      %4600 = vrot.lane.b32.xlu0 %v4032, 64
      %v4601 = vpop.permute.xlu0 %4600
      %4602 = vrot.lane.b32.xlu0 %v4034, 64
      %v4603 = vpop.permute.xlu0 %4602
      %4604 = vrot.lane.b32.xlu0 %v4036, 64
      %v4605 = vpop.permute.xlu0 %4604
      %4606 = vrot.lane.b32.xlu0 %v4038, 64
      %v4607 = vpop.permute.xlu0 %4606
      %4608 = vrot.lane.b32.xlu0 %v4040, 64
      %v4609 = vpop.permute.xlu0 %4608
      %4610 = vrot.lane.b32.xlu0 %v4042, 64
      %v4611 = vpop.permute.xlu0 %4610
      %4612 = vrot.lane.b32.xlu0 %v4044, 64
      %v4613 = vpop.permute.xlu0 %4612
      %4614 = vrot.lane.b32.xlu0 %v4046, 64
      %v4615 = vpop.permute.xlu0 %4614
      %4616 = vrot.lane.b32.xlu0 %v4047, 64
      %v4617 = vpop.permute.xlu0 %4616
      %4618 = vrot.lane.b32.xlu0 %v3955, 64
      %v4619 = vpop.permute.xlu0 %4618
      %4620 = vrot.lane.b32.xlu0 %v3957, 64
      %v4621 = vpop.permute.xlu0 %4620
      %4622 = vrot.lane.b32.xlu0 %v4078, 64
      %v4623 = vpop.permute.xlu0 %4622
      %4624 = vrot.lane.b32.xlu0 %v3992, 64
      %v4625 = vpop.permute.xlu0 %4624
      %4658 = vrot.lane.b32.xlu0 %v3920, 96
      %v4659 = vpop.permute.xlu0 %4658
      %4660 = vrot.lane.b32.xlu0 %v3921, 96
      %v4661 = vpop.permute.xlu0 %4660
      %4662 = vrot.lane.b32.xlu0 %v3922, 96
      %v4663 = vpop.permute.xlu0 %4662
      %4664 = vrot.lane.b32.xlu0 %v3923, 96
      %v4665 = vpop.permute.xlu0 %4664
      %4666 = vrot.lane.b32.xlu0 %v3924, 96
      %v4667 = vpop.permute.xlu0 %4666
      %4668 = vrot.lane.b32.xlu0 %v3925, 96
      %v4669 = vpop.permute.xlu0 %4668
      %4670 = vrot.lane.b32.xlu0 %v3926, 96
      %v4671 = vpop.permute.xlu0 %4670
      %4672 = vrot.lane.b32.xlu0 %v3927, 96
      %v4673 = vpop.permute.xlu0 %4672
      %4674 = vrot.lane.b32.xlu0 %v3928, 96
      %v4675 = vpop.permute.xlu0 %4674
      %4676 = vrot.lane.b32.xlu0 %v3929, 96
      %v4677 = vpop.permute.xlu0 %4676
      %4678 = vrot.lane.b32.xlu0 %v3930, 96
      %v4679 = vpop.permute.xlu0 %4678
      %4680 = vrot.lane.b32.xlu0 %v3931, 96
      %v4681 = vpop.permute.xlu0 %4680
      %4682 = vrot.lane.b32.xlu0 %v3932, 96
      %v4683 = vpop.permute.xlu0 %4682
      %4684 = vrot.lane.b32.xlu0 %v3933, 96
      %v4685 = vpop.permute.xlu0 %4684
      %4686 = vrot.lane.b32.xlu0 %v3934, 96
      %v4687 = vpop.permute.xlu0 %4686
      %4688 = vrot.lane.b32.xlu0 %v3935, 96
      %v4689 = vpop.permute.xlu0 %4688
      %4690 = vrot.lane.b32.xlu0 %v3936, 96
      %v4691 = vpop.permute.xlu0 %4690
      %4692 = vrot.lane.b32.xlu0 %v3937, 96
      %v4693 = vpop.permute.xlu0 %4692
      %4694 = vrot.lane.b32.xlu0 %v3938, 96
      %v4695 = vpop.permute.xlu0 %4694
      %4696 = vrot.lane.b32.xlu0 %v3939, 96
      %v4697 = vpop.permute.xlu0 %4696
      %4698 = vrot.lane.b32.xlu0 %v3940, 96
      %v4699 = vpop.permute.xlu0 %4698
      %4700 = vrot.lane.b32.xlu0 %v3941, 96
      %v4701 = vpop.permute.xlu0 %4700
      %4702 = vrot.lane.b32.xlu0 %v3942, 96
      %v4703 = vpop.permute.xlu0 %4702
      %4704 = vrot.lane.b32.xlu0 %v3943, 96
      %v4705 = vpop.permute.xlu0 %4704
      %4706 = vrot.lane.b32.xlu0 %v3944, 96
      %v4707 = vpop.permute.xlu0 %4706
      %4708 = vrot.lane.b32.xlu0 %v3945, 96
      %v4709 = vpop.permute.xlu0 %4708
      %4710 = vrot.lane.b32.xlu0 %v3946, 96
      %v4711 = vpop.permute.xlu0 %4710
      %4712 = vrot.lane.b32.xlu0 %v3947, 96
      %v4713 = vpop.permute.xlu0 %4712
      %4714 = vrot.lane.b32.xlu0 %v3948, 96
      %v4715 = vpop.permute.xlu0 %4714
      %4716 = vrot.lane.b32.xlu0 %v3949, 96
      %v4717 = vpop.permute.xlu0 %4716
      %4718 = vrot.lane.b32.xlu0 %v3918, 96
      %v4719 = vpop.permute.xlu0 %4718
      %4720 = vrot.lane.b32.xlu0 %v3919, 96
      %v4721 = vpop.permute.xlu0 %4720
      %v4754 = vsel %vm1805, %v3955, %v4177
      %v4755 = vsel %vm1805, %v3957, %v4179
      %v4756 = vsel %vm1805, %v4078, %v4181
      %v4757 = vsel %vm1805, %v3992, %v4183
      %v4758 = vsel %vm1805, %v3994, %v4185
      %v4759 = vsel %vm1805, %v3996, %v4187
      %v4760 = vsel %vm1805, %v3998, %v4189
      %v4761 = vsel %vm1805, %v4000, %v4191
      %v4762 = vsel %vm1805, %v4002, %v4193
      %v4763 = vsel %vm1805, %v4004, %v4195
      %v4764 = vsel %vm1805, %v4006, %v4197
      %v4765 = vsel %vm1805, %v4008, %v4199
      %v4766 = vsel %vm1805, %v4010, %v4201
      %v4767 = vsel %vm1805, %v4012, %v4203
      %v4768 = vsel %vm1805, %v4014, %v4205
      %v4769 = vsel %vm1805, %v4016, %v4207
      %v4770 = vsel %vm1805, %v4018, %v4209
      %v4771 = vsel %vm1805, %v4020, %v4211
      %v4772 = vsel %vm1805, %v4022, %v4213
      %v4773 = vsel %vm1805, %v4024, %v4215
      %v4774 = vsel %vm1805, %v4026, %v4217
      %v4775 = vsel %vm1805, %v4028, %v4219
      %v4776 = vsel %vm1805, %v4030, %v4221
      %v4777 = vsel %vm1805, %v4032, %v4223
      %v4778 = vsel %vm1805, %v4034, %v4225
      %v4779 = vsel %vm1805, %v4036, %v4227
      %v4780 = vsel %vm1805, %v4038, %v4229
      %v4781 = vsel %vm1805, %v4040, %v4231
      %v4782 = vsel %vm1805, %v4042, %v4233
      %v4783 = vsel %vm1805, %v4044, %v4235
      %v4784 = vsel %vm1805, %v4046, %v4237
      %v4785 = vsel %vm1805, %v4047, %v4239
      %v4786 = vsel %vm3091, %v4754, %v4274
      %v4787 = vsel %vm3091, %v4755, %v4276
      %v4788 = vsel %vm3091, %v4756, %v4278
      %v4789 = vsel %vm3091, %v4757, %v4280
      %v4790 = vsel %vm3091, %v4758, %v4282
      %v4791 = vsel %vm3091, %v4759, %v4284
      %v4792 = vsel %vm3091, %v4760, %v4286
      %v4793 = vsel %vm3091, %v4761, %v4288
      %v4794 = vsel %vm3091, %v4762, %v4290
      %v4795 = vsel %vm3091, %v4763, %v4292
      %v4796 = vsel %vm3091, %v4764, %v4294
      %v4797 = vsel %vm3091, %v4765, %v4296
      %v4798 = vsel %vm3091, %v4766, %v4298
      %v4799 = vsel %vm3091, %v4767, %v4300
      %v4800 = vsel %vm3091, %v4768, %v4302
      %v4801 = vsel %vm3091, %v4769, %v4304
      %v4802 = vsel %vm3091, %v4770, %v4306
      %v4803 = vsel %vm3091, %v4771, %v4308
      %v4804 = vsel %vm3091, %v4772, %v4310
      %v4805 = vsel %vm3091, %v4773, %v4312
      %v4806 = vsel %vm3091, %v4774, %v4314
      %v4807 = vsel %vm3091, %v4775, %v4316
      %v4808 = vsel %vm3091, %v4776, %v4318
      %v4809 = vsel %vm3091, %v4777, %v4320
      %v4810 = vsel %vm3091, %v4778, %v4322
      %v4811 = vsel %vm3091, %v4779, %v4324
      %v4812 = vsel %vm3091, %v4780, %v4326
      %v4813 = vsel %vm3091, %v4781, %v4328
      %v4814 = vsel %vm3091, %v4782, %v4330
      %v4815 = vsel %vm3091, %v4783, %v4332
      %v4816 = vsel %vm3091, %v4784, %v4334
      %v4817 = vsel %vm3091, %v4785, %v4336
      %v4818 = vsel %vm3124, %v4786, %v4371
      %v4819 = vsel %vm3124, %v4787, %v4373
      %v4820 = vsel %vm3124, %v4788, %v4375
      %v4821 = vsel %vm3124, %v4789, %v4377
      %v4822 = vsel %vm3124, %v4790, %v4379
      %v4823 = vsel %vm3124, %v4791, %v4381
      %v4824 = vsel %vm3124, %v4792, %v4383
      %v4825 = vsel %vm3124, %v4793, %v4385
      %v4826 = vsel %vm3124, %v4794, %v4387
      %v4827 = vsel %vm3124, %v4795, %v4389
      %v4828 = vsel %vm3124, %v4796, %v4391
      %v4829 = vsel %vm3124, %v4797, %v4393
      %v4830 = vsel %vm3124, %v4798, %v4395
      %v4831 = vsel %vm3124, %v4799, %v4397
      %v4832 = vsel %vm3124, %v4800, %v4399
      %v4833 = vsel %vm3124, %v4801, %v4401
      %v4834 = vsel %vm3124, %v4802, %v4403
      %v4835 = vsel %vm3124, %v4803, %v4405
      %v4836 = vsel %vm3124, %v4804, %v4407
      %v4837 = vsel %vm3124, %v4805, %v4409
      %v4838 = vsel %vm3124, %v4806, %v4411
      %v4839 = vsel %vm3124, %v4807, %v4413
      %v4840 = vsel %vm3124, %v4808, %v4415
      %v4841 = vsel %vm3124, %v4809, %v4417
      %v4842 = vsel %vm3124, %v4810, %v4419
      %v4843 = vsel %vm3124, %v4811, %v4421
      %v4844 = vsel %vm3124, %v4812, %v4423
      %v4845 = vsel %vm3124, %v4813, %v4425
      %v4846 = vsel %vm3124, %v4814, %v4427
      %v4847 = vsel %vm3124, %v4815, %v4429
      %v4848 = vsel %vm3124, %v4816, %v4431
      %v4849 = vsel %vm3124, %v4817, %v4433
      %v4850 = vsel %vm1805, %v3918, %v4467
      %v4851 = vsel %vm1805, %v3919, %v4469
      %v4852 = vsel %vm1805, %v3920, %v4471
      %v4853 = vsel %vm1805, %v3921, %v4473
      %v4854 = vsel %vm1805, %v3922, %v4475
      %v4855 = vsel %vm1805, %v3923, %v4477
      %v4856 = vsel %vm1805, %v3924, %v4479
      %v4857 = vsel %vm1805, %v3925, %v4481
      %v4858 = vsel %vm1805, %v3926, %v4483
      %v4859 = vsel %vm1805, %v3927, %v4485
      %v4860 = vsel %vm1805, %v3928, %v4487
      %v4861 = vsel %vm1805, %v3929, %v4489
      %v4862 = vsel %vm1805, %v3930, %v4491
      %v4863 = vsel %vm1805, %v3931, %v4493
      %v4864 = vsel %vm1805, %v3932, %v4495
      %v4865 = vsel %vm1805, %v3933, %v4497
      %v4866 = vsel %vm1805, %v3934, %v4499
      %v4867 = vsel %vm1805, %v3935, %v4501
      %v4868 = vsel %vm1805, %v3936, %v4503
      %v4869 = vsel %vm1805, %v3937, %v4505
      %v4870 = vsel %vm1805, %v3938, %v4507
      %v4871 = vsel %vm1805, %v3939, %v4509
      %v4872 = vsel %vm1805, %v3940, %v4511
      %v4873 = vsel %vm1805, %v3941, %v4513
      %v4874 = vsel %vm1805, %v3942, %v4515
      %v4875 = vsel %vm1805, %v3943, %v4517
      %v4876 = vsel %vm1805, %v3944, %v4519
      %v4877 = vsel %vm1805, %v3945, %v4521
      %v4878 = vsel %vm1805, %v3946, %v4523
      %v4879 = vsel %vm1805, %v3947, %v4525
      %v4880 = vsel %vm1805, %v3948, %v4527
      %v4881 = vsel %vm1805, %v3949, %v4529
      %v4882 = vsel %vm3091, %v4850, %v4563
      %v4883 = vsel %vm3091, %v4851, %v4565
      %v4884 = vsel %vm3091, %v4852, %v4567
      %v4885 = vsel %vm3091, %v4853, %v4569
      %v4886 = vsel %vm3091, %v4854, %v4571
      %v4887 = vsel %vm3091, %v4855, %v4573
      %v4888 = vsel %vm3091, %v4856, %v4575
      %v4889 = vsel %vm3091, %v4857, %v4577
      %v4890 = vsel %vm3091, %v4858, %v4579
      %v4891 = vsel %vm3091, %v4859, %v4581
      %v4892 = vsel %vm3091, %v4860, %v4583
      %v4893 = vsel %vm3091, %v4861, %v4585
      %v4894 = vsel %vm3091, %v4862, %v4587
      %v4895 = vsel %vm3091, %v4863, %v4589
      %v4896 = vsel %vm3091, %v4864, %v4591
      %v4897 = vsel %vm3091, %v4865, %v4593
      %v4898 = vsel %vm3091, %v4866, %v4595
      %v4899 = vsel %vm3091, %v4867, %v4597
      %v4900 = vsel %vm3091, %v4868, %v4599
      %v4901 = vsel %vm3091, %v4869, %v4601
      %v4902 = vsel %vm3091, %v4870, %v4603
      %v4903 = vsel %vm3091, %v4871, %v4605
      %v4904 = vsel %vm3091, %v4872, %v4607
      %v4905 = vsel %vm3091, %v4873, %v4609
      %v4906 = vsel %vm3091, %v4874, %v4611
      %v4907 = vsel %vm3091, %v4875, %v4613
      %v4908 = vsel %vm3091, %v4876, %v4615
      %v4909 = vsel %vm3091, %v4877, %v4617
      %v4910 = vsel %vm3091, %v4878, %v4619
      %v4911 = vsel %vm3091, %v4879, %v4621
      %v4912 = vsel %vm3091, %v4880, %v4623
      %v4913 = vsel %vm3091, %v4881, %v4625
      %v4914 = vsel %vm3124, %v4882, %v4659
      %v4915 = vsel %vm3124, %v4883, %v4661
      %v4916 = vsel %vm3124, %v4884, %v4663
      %v4917 = vsel %vm3124, %v4885, %v4665
      %v4918 = vsel %vm3124, %v4886, %v4667
      %v4919 = vsel %vm3124, %v4887, %v4669
      %v4920 = vsel %vm3124, %v4888, %v4671
      %v4921 = vsel %vm3124, %v4889, %v4673
      %v4922 = vsel %vm3124, %v4890, %v4675
      %v4923 = vsel %vm3124, %v4891, %v4677
      %v4924 = vsel %vm3124, %v4892, %v4679
      %v4925 = vsel %vm3124, %v4893, %v4681
      %v4926 = vsel %vm3124, %v4894, %v4683
      %v4927 = vsel %vm3124, %v4895, %v4685
      %v4928 = vsel %vm3124, %v4896, %v4687
      %v4929 = vsel %vm3124, %v4897, %v4689
      %v4930 = vsel %vm3124, %v4898, %v4691
      %v4931 = vsel %vm3124, %v4899, %v4693
      %v4932 = vsel %vm3124, %v4900, %v4695
      %v4933 = vsel %vm3124, %v4901, %v4697
      %v4934 = vsel %vm3124, %v4902, %v4699
      %v4935 = vsel %vm3124, %v4903, %v4701
      %v4936 = vsel %vm3124, %v4904, %v4703
      %v4937 = vsel %vm3124, %v4905, %v4705
      %v4938 = vsel %vm3124, %v4906, %v4707
      %v4939 = vsel %vm3124, %v4907, %v4709
      %v4940 = vsel %vm3124, %v4908, %v4711
      %v4941 = vsel %vm3124, %v4909, %v4713
      %v4942 = vsel %vm3124, %v4910, %v4715
      %v4943 = vsel %vm3124, %v4911, %v4717
      %v4944 = vsel %vm3124, %v4912, %v4719
      %v4945 = vsel %vm3124, %v4913, %v4721
      %v4946 = vmul.f32 %v4818, %v2159
      %v4947 = vmul.f32 %v4914, %v2160
      %v4948 = vmul.f32 %v4089, %v2161
      %v4949 = vmul.f32 %v4819, %v2162
      %v4950 = vmul.f32 %v4915, %v2163
      %v4951 = vmul.f32 %v4091, %v2164
      %v4952 = vmul.f32 %v4820, %v2165
      %v4953 = vmul.f32 %v4916, %v2166
      %v4954 = vmul.f32 %v4093, %v2167
      %v4955 = vmul.f32 %v4821, %v2168
      %v4956 = vmul.f32 %v4917, %v2169
      %v4957 = vmul.f32 %v4095, %v2170
      %v4958 = vmul.f32 %v4822, %v2171
      %v4959 = vmul.f32 %v4918, %v2172
      %v4960 = vmul.f32 %v4097, %v2173
      %v4961 = vmul.f32 %v4823, %v2174
      %v4962 = vmul.f32 %v4919, %v2175
      %v4963 = vmul.f32 %v4099, %v2176
      %v4964 = vmul.f32 %v4824, %v2177
      %v4965 = vmul.f32 %v4920, %v2178
      %v4966 = vmul.f32 %v4101, %v2179
      %v4967 = vmul.f32 %v4825, %v2180
      %v4968 = vmul.f32 %v4921, %v2181
      %v4969 = vmul.f32 %v4103, %v2182
      %v4970 = vmul.f32 %v4826, %v2183
      %v4971 = vmul.f32 %v4922, %v2184
      %v4972 = vmul.f32 %v4105, %v2185
      %v4973 = vmul.f32 %v4827, %v2186
      %v4974 = vmul.f32 %v4923, %v2187
      %v4975 = vmul.f32 %v4107, %v2188
      %v4976 = vmul.f32 %v4828, %v2189
      %v4977 = vmul.f32 %v4924, %v2190
      %v4978 = vmul.f32 %v4109, %v2191
      %v4979 = vmul.f32 %v4829, %v2192
      %v4980 = vmul.f32 %v4925, %v2193
      %v4981 = vmul.f32 %v4111, %v2194
      %v4982 = vmul.f32 %v4830, %v2195
      %v4983 = vmul.f32 %v4926, %v2196
      %v4984 = vmul.f32 %v4113, %v2197
      %v4985 = vmul.f32 %v4831, %v2198
      %v4986 = vmul.f32 %v4927, %v2199
      %v4987 = vmul.f32 %v4115, %v2200
      %v4988 = vmul.f32 %v4832, %v2201
      %v4989 = vmul.f32 %v4928, %v2202
      %v4990 = vmul.f32 %v4117, %v2203
      %v4991 = vmul.f32 %v4833, %v2204
      %v4992 = vmul.f32 %v4929, %v2205
      %v4993 = vmul.f32 %v4119, %v2206
      %v4994 = vmul.f32 %v4834, %v2207
      %v4995 = vmul.f32 %v4930, %v2208
      %v4996 = vmul.f32 %v4121, %v2209
      %v4997 = vmul.f32 %v4835, %v2210
      %v4998 = vmul.f32 %v4931, %v2211
      %v4999 = vmul.f32 %v4123, %v2212
      %v5000 = vmul.f32 %v4836, %v2213
      %v5001 = vmul.f32 %v4932, %v2214
      %v5002 = vmul.f32 %v4125, %v2215
      %v5003 = vmul.f32 %v4837, %v2216
      %v5004 = vmul.f32 %v4933, %v2217
      %v5005 = vmul.f32 %v4127, %v2218
      %v5006 = vmul.f32 %v4838, %v2219
      %v5007 = vmul.f32 %v4934, %v2220
      %v5008 = vmul.f32 %v4129, %v2221
      %v5009 = vmul.f32 %v4839, %v2222
      %v5010 = vmul.f32 %v4935, %v2223
      %v5011 = vmul.f32 %v4131, %v2224
      %v5012 = vmul.f32 %v4840, %v2225
      %v5013 = vmul.f32 %v4936, %v2226
      %v5014 = vmul.f32 %v4133, %v2227
      %v5015 = vmul.f32 %v4841, %v2228
      %v5016 = vmul.f32 %v4937, %v2229
      %v5017 = vmul.f32 %v4135, %v2230
      %v5018 = vmul.f32 %v4842, %v2231
      %v5019 = vmul.f32 %v4938, %v2232
      %v5020 = vmul.f32 %v4137, %v2233
      %v5021 = vmul.f32 %v4843, %v2234
      %v5022 = vmul.f32 %v4939, %v2235
      %v5023 = vmul.f32 %v4139, %v2236
      %v5024 = vmul.f32 %v4844, %v2237
      %v5025 = vmul.f32 %v4940, %v2238
      %v5026 = vmul.f32 %v4141, %v2239
      %v5027 = vmul.f32 %v4845, %v2240
      %v5028 = vmul.f32 %v4941, %v2241
      %v5029 = vmul.f32 %v4142, %v2242
      %v5030 = vmul.f32 %v4846, %v2243
      %v5031 = vmul.f32 %v4942, %v2244
      %v5032 = vmul.f32 %v4081, %v2245
      %v5033 = vmul.f32 %v4847, %v2246
      %v5034 = vmul.f32 %v4943, %v2247
      %v5035 = vmul.f32 %v4144, %v2248
      %v5036 = vmul.f32 %v4848, %v2249
      %v5037 = vmul.f32 %v4944, %v2250
      %v5038 = vmul.f32 %v4085, %v2251
      %v5039 = vmul.f32 %v4849, %v2252
      %v5040 = vmul.f32 %v4945, %v2253
      %v5041 = vmul.f32 %v4087, %v2254
      %v5042 = vpack.c.bf16 %v4949, %v4946
      %v5043 = vpack.c.bf16 %v4950, %v4947
      %v5044 = vpack.c.bf16 %v4951, %v4948
      %v5045 = vpack.c.bf16 %v4955, %v4952
      %v5046 = vpack.c.bf16 %v4956, %v4953
      %v5047 = vpack.c.bf16 %v4957, %v4954
      %v5048 = vpack.c.bf16 %v4961, %v4958
      %v5049 = vpack.c.bf16 %v4962, %v4959
      %v5050 = vpack.c.bf16 %v4963, %v4960
      %v5051 = vpack.c.bf16 %v4967, %v4964
      %v5052 = vpack.c.bf16 %v4968, %v4965
      %v5053 = vpack.c.bf16 %v4969, %v4966
      %v5054 = vpack.c.bf16 %v4973, %v4970
      %v5055 = vpack.c.bf16 %v4974, %v4971
      %v5056 = vpack.c.bf16 %v4975, %v4972
      %v5057 = vpack.c.bf16 %v4979, %v4976
      %v5058 = vpack.c.bf16 %v4980, %v4977
      %v5059 = vpack.c.bf16 %v4981, %v4978
      %v5060 = vpack.c.bf16 %v4985, %v4982
      %v5061 = vpack.c.bf16 %v4986, %v4983
      %v5062 = vpack.c.bf16 %v4987, %v4984
      %v5063 = vpack.c.bf16 %v4991, %v4988
      %v5064 = vpack.c.bf16 %v4992, %v4989
      %v5065 = vpack.c.bf16 %v4993, %v4990
      %v5066 = vpack.c.bf16 %v4997, %v4994
      %v5067 = vpack.c.bf16 %v4998, %v4995
      %v5068 = vpack.c.bf16 %v4999, %v4996
      %v5069 = vpack.c.bf16 %v5003, %v5000
      %v5070 = vpack.c.bf16 %v5004, %v5001
      %v5071 = vpack.c.bf16 %v5005, %v5002
      %v5072 = vpack.c.bf16 %v5009, %v5006
      %v5073 = vpack.c.bf16 %v5010, %v5007
      %v5074 = vpack.c.bf16 %v5011, %v5008
      %v5075 = vpack.c.bf16 %v5015, %v5012
      %v5076 = vpack.c.bf16 %v5016, %v5013
      %v5077 = vpack.c.bf16 %v5017, %v5014
      %v5078 = vpack.c.bf16 %v5021, %v5018
      %v5079 = vpack.c.bf16 %v5022, %v5019
      %v5080 = vpack.c.bf16 %v5023, %v5020
      %v5081 = vpack.c.bf16 %v5027, %v5024
      %v5082 = vpack.c.bf16 %v5028, %v5025
      %v5083 = vpack.c.bf16 %v5029, %v5026
      %v5084 = vpack.c.bf16 %v5033, %v5030
      %v5085 = vpack.c.bf16 %v5034, %v5031
      %v5086 = vpack.c.bf16 %v5035, %v5032
      %v5087 = vpack.c.bf16 %v5039, %v5036
      %v5088 = vpack.c.bf16 %v5040, %v5037
      %v5089 = vpack.c.bf16 %v5041, %v5038
      %v5090 = vld [vmem:[%s10] sm:$0xf]
      %v5091 = vld [vmem:[%s10 + $0x4] sm:$0xf]
      %v5092 = vld [vmem:[%s10 + $0x8] sm:$0xf]
      %v5093 = vld [vmem:[%s10 + $0xc] sm:$0xf]
      %v5094 = vld [vmem:[%s10 + $0x10] sm:$0xf]
      %v5095 = vld [vmem:[%s10 + $0x14] sm:$0xf]
      %v5096 = vld [vmem:[%s10 + $0x18] sm:$0xf]
      %v5097 = vld [vmem:[%s10 + $0x1c] sm:$0xf]
      %v5098 = vld [vmem:[%s10 + $0x20] sm:$0xf]
      %v5099 = vld [vmem:[%s10 + $0x24] sm:$0xf]
      %v5100 = vld [vmem:[%s10 + $0x28] sm:$0xf]
      %v5101 = vld [vmem:[%s10 + $0x2c] sm:$0xf]
      %v5102 = vld [vmem:[%s10 + $0x30] sm:$0xf]
      %v5103 = vld [vmem:[%s10 + $0x34] sm:$0xf]
      %v5104 = vld [vmem:[%s10 + $0x38] sm:$0xf]
      %v5105 = vld [vmem:[%s10 + $0x3c] sm:$0xf]
      %v5106 = vld [vmem:[%s10 + $0x40] sm:$0xf]
      %v5107 = vld [vmem:[%s10 + $0x44] sm:$0xf]
      %v5108 = vld [vmem:[%s10 + $0x48] sm:$0xf]
      %v5109 = vld [vmem:[%s10 + $0x4c] sm:$0xf]
      %v5110 = vld [vmem:[%s10 + $0x50] sm:$0xf]
      %v5111 = vld [vmem:[%s10 + $0x54] sm:$0xf]
      %v5112 = vld [vmem:[%s10 + $0x58] sm:$0xf]
      %v5113 = vld [vmem:[%s10 + $0x5c] sm:$0xf]
      %v5114 = vld [vmem:[%s10 + $0x60] sm:$0xf]
      %v5115 = vld [vmem:[%s10 + $0x64] sm:$0xf]
      %v5116 = vld [vmem:[%s10 + $0x68] sm:$0xf]
      %v5117 = vld [vmem:[%s10 + $0x6c] sm:$0xf]
      %v5118 = vld [vmem:[%s10 + $0x70] sm:$0xf]
      %v5119 = vld [vmem:[%s10 + $0x74] sm:$0xf]
      %v5120 = vld [vmem:[%s10 + $0x78] sm:$0xf]
      %v5121 = vld [vmem:[%s10 + $0x7c] sm:$0xf]
      %v5122 = vld [vmem:[%s10 + $0x80] sm:$0xf]
      %v5123 = vld [vmem:[%s10 + $0x84] sm:$0xf]
      %v5124 = vld [vmem:[%s10 + $0x88] sm:$0xf]
      %v5125 = vld [vmem:[%s10 + $0x8c] sm:$0xf]
      %v5126 = vld [vmem:[%s11] sm:$0x1]
      %v5128 = vlaneseq
      %v5129 = vshrl.u32 %v5128, 7
      %v5130 = vsub.s32 0, %v5129
      %v5131 = vrot.slane %v5126, %v5130
      %v5169 = vunpack.c.l.b16 %v5090
      %v5170 = vunpack.c.l.b16 %v5091
      %v5171 = vunpack.c.l.b16 %v5092
      %v5172 = vunpack.c.l.b16 %v5093
      %v5173 = vunpack.c.l.b16 %v5094
      %v5174 = vunpack.c.l.b16 %v5095
      %v5175 = vunpack.c.l.b16 %v5096
      %v5176 = vunpack.c.l.b16 %v5097
      %v5177 = vunpack.c.l.b16 %v5098
      %v5178 = vunpack.c.l.b16 %v5099
      %v5179 = vunpack.c.l.b16 %v5100
      %v5180 = vunpack.c.l.b16 %v5101
      %v5181 = vunpack.c.l.b16 %v5102
      %v5182 = vunpack.c.l.b16 %v5103
      %v5183 = vunpack.c.l.b16 %v5104
      %v5184 = vunpack.c.l.b16 %v5105
      %v5185 = vunpack.c.l.b16 %v5106
      %v5186 = vunpack.c.l.b16 %v5107
      %v5187 = vunpack.c.l.b16 %v5108
      %v5188 = vunpack.c.l.b16 %v5109
      %v5189 = vunpack.c.l.b16 %v5110
      %v5190 = vunpack.c.l.b16 %v5111
      %v5191 = vunpack.c.l.b16 %v5112
      %v5192 = vunpack.c.l.b16 %v5113
      %v5193 = vunpack.c.l.b16 %v5114
      %v5194 = vunpack.c.l.b16 %v5115
      %v5195 = vunpack.c.l.b16 %v5116
      %v5196 = vunpack.c.l.b16 %v5117
      %v5197 = vunpack.c.l.b16 %v5118
      %v5198 = vunpack.c.l.b16 %v5119
      %v5199 = vunpack.c.l.b16 %v5120
      %v5200 = vunpack.c.l.b16 %v5121
      %v5201 = vunpack.c.l.b16 %v5122
      %v5202 = vunpack.c.l.b16 %v5123
      %v5203 = vunpack.c.l.b16 %v5124
      %v5204 = vunpack.c.l.b16 %v5125
      %v5205 = vpack.c.b16 %v5170, %v5169
      %v5206 = vpack.c.b16 %v5172, %v5171
      %v5207 = vpack.c.b16 %v5174, %v5173
      %v5208 = vpack.c.b16 %v5176, %v5175
      %v5209 = vpack.c.b16 %v5178, %v5177
      %v5210 = vpack.c.b16 %v5180, %v5179
      %v5211 = vpack.c.b16 %v5182, %v5181
      %v5212 = vpack.c.b16 %v5184, %v5183
      %v5213 = vpack.c.b16 %v5186, %v5185
      %v5214 = vpack.c.b16 %v5188, %v5187
      %v5215 = vpack.c.b16 %v5190, %v5189
      %v5216 = vpack.c.b16 %v5192, %v5191
      %v5217 = vpack.c.b16 %v5194, %v5193
      %v5218 = vpack.c.b16 %v5196, %v5195
      %v5219 = vpack.c.b16 %v5198, %v5197
      %v5220 = vpack.c.b16 %v5200, %v5199
      %v5221 = vpack.c.b16 %v5202, %v5201
      %v5222 = vpack.c.b16 %v5204, %v5203
      %v5242 = vsel %vm1805, %v5044, 0
      %v5245 = vsel %vm1805, %v5047, 0
      %v5248 = vsel %vm1805, %v5050, 0
      %v5251 = vsel %vm1805, %v5053, 0
      %v5254 = vsel %vm1805, %v5056, 0
      %v5257 = vsel %vm1805, %v5059, 0
      %v5260 = vsel %vm1805, %v5062, 0
      %v5263 = vsel %vm1805, %v5065, 0
      %v5266 = vsel %vm1805, %v5068, 0
      %v5269 = vsel %vm1805, %v5071, 0
      %v5272 = vsel %vm1805, %v5074, 0
      %v5275 = vsel %vm1805, %v5077, 0
      %v5278 = vsel %vm1805, %v5080, 0
      %v5281 = vsel %vm1805, %v5083, 0
      %v5284 = vsel %vm1805, %v5086, 0
      %v5287 = vsel %vm1805, %v5089, 0
      %5289 = vmatprep.subr.bf16.mxu0 0
      %5290 = vmatpush1.bf16.msra.mxu0 %v5205
      %5291 = vmatprep.subr.bf16.mxu0 0
      %5292 = vmatpush1.bf16.msra.mxu0 %v5206
      %5293 = vmatprep.subr.bf16.mxu0 0
      %5294 = vmatpush1.bf16.msra.mxu0 %v5207
      %5295 = vmatprep.subr.bf16.mxu0 0
      %5296 = vmatpush1.bf16.msra.mxu0 %v5208
      %5297 = vmatprep.subr.bf16.mxu0 0
      %5298 = vmatpush1.bf16.msra.mxu0 %v5209
      %5299 = vmatprep.subr.bf16.mxu0 0
      %5300 = vmatpush1.bf16.msra.mxu0 %v5210
      %5301 = vmatprep.subr.bf16.mxu0 0
      %5302 = vmatpush1.bf16.msra.mxu0 %v5211
      %5303 = vmatprep.subr.bf16.mxu0 0
      %5304 = vmatpush1.bf16.msra.mxu0 %v5212
      %5305 = vmatprep.subr.bf16.mxu0 0
      %5306 = vmatpush1.bf16.msra.mxu0 %v5213
      %5307 = vmatprep.subr.bf16.mxu0 0
      %5308 = vmatpush1.bf16.msra.mxu0 %v5214
      %5309 = vmatprep.subr.bf16.mxu0 0
      %5310 = vmatpush1.bf16.msra.mxu0 %v5215
      %5311 = vmatprep.subr.bf16.mxu0 0
      %5312 = vmatpush1.bf16.msra.mxu0 %v5216
      %5313 = vmatprep.subr.bf16.mxu0 0
      %5314 = vmatpush1.bf16.msra.mxu0 %v5217
      %5315 = vmatprep.subr.bf16.mxu0 0
      %5316 = vmatpush1.bf16.msra.mxu0 %v5218
      %5317 = vmatprep.subr.bf16.mxu0 0
      %5318 = vmatpush1.bf16.msra.mxu0 %v5219
      %5319 = vmatprep.subr.bf16.mxu0 0
      %5320 = vmatpush1.bf16.msra.mxu0 %v5220
      %5321 = vmatprep.mubr.bf16.mxu0 %v5043
      %5322 = vmatmul.mubr.bf16.gmra.mrb[0].mxu0 %v5042
      %v5323 = vpop.f32.mrb[0].mxu0
      %v5324 = vadd.f32 %v5131, %v5323
      %v5325 = vpop.f32.mrb[0].mxu0
      %v5326 = vpop.f32.mrb[0].mxu0
      %v5327 = vadd.f32 %v5131, %v5326
      %v5328 = vpop.f32.mrb[0].mxu0
      %5329 = vmatprep.mubr.bf16.mxu0 %v5046
      %5330 = vmatmul.mubr.bf16.gmra.mrb[0].mxu0 %v5045
      %v5331 = vpop.f32.mrb[0].mxu0
      %v5332 = vadd.f32 %v5131, %v5331
      %v5333 = vpop.f32.mrb[0].mxu0
      %v5334 = vpop.f32.mrb[0].mxu0
      %v5335 = vadd.f32 %v5131, %v5334
      %v5336 = vpop.f32.mrb[0].mxu0
      %5337 = vmatprep.mubr.bf16.mxu0 %v5049
      %5338 = vmatmul.mubr.bf16.gmra.mrb[0].mxu0 %v5048
      %v5339 = vpop.f32.mrb[0].mxu0
      %v5340 = vadd.f32 %v5131, %v5339
      %v5341 = vpop.f32.mrb[0].mxu0
      %v5342 = vpop.f32.mrb[0].mxu0
      %v5343 = vadd.f32 %v5131, %v5342
      %v5344 = vpop.f32.mrb[0].mxu0
      %5345 = vmatprep.mubr.bf16.mxu0 %v5052
      %5346 = vmatmul.mubr.bf16.gmra.mrb[0].mxu0 %v5051
      %v5347 = vpop.f32.mrb[0].mxu0
      %v5348 = vadd.f32 %v5131, %v5347
      %v5349 = vpop.f32.mrb[0].mxu0
      %v5350 = vpop.f32.mrb[0].mxu0
      %v5351 = vadd.f32 %v5131, %v5350
      %v5352 = vpop.f32.mrb[0].mxu0
      %5353 = vmatprep.mubr.bf16.mxu0 %v5055
      %5354 = vmatmul.mubr.bf16.gmra.mrb[0].mxu0 %v5054
      %v5355 = vpop.f32.mrb[0].mxu0
      %v5356 = vadd.f32 %v5131, %v5355
      %v5357 = vpop.f32.mrb[0].mxu0
      %v5358 = vpop.f32.mrb[0].mxu0
      %v5359 = vadd.f32 %v5131, %v5358
      %v5360 = vpop.f32.mrb[0].mxu0
      %5361 = vmatprep.mubr.bf16.mxu0 %v5058
      %5362 = vmatmul.mubr.bf16.gmra.mrb[0].mxu0 %v5057
      %v5363 = vpop.f32.mrb[0].mxu0
      %v5364 = vadd.f32 %v5131, %v5363
      %v5365 = vpop.f32.mrb[0].mxu0
      %v5366 = vpop.f32.mrb[0].mxu0
      %v5367 = vadd.f32 %v5131, %v5366
      %v5368 = vpop.f32.mrb[0].mxu0
      %5369 = vmatprep.mubr.bf16.mxu0 %v5061
      %5370 = vmatmul.mubr.bf16.gmra.mrb[0].mxu0 %v5060
      %v5371 = vpop.f32.mrb[0].mxu0
      %v5372 = vadd.f32 %v5131, %v5371
      %v5373 = vpop.f32.mrb[0].mxu0
      %v5374 = vpop.f32.mrb[0].mxu0
      %v5375 = vadd.f32 %v5131, %v5374
      %v5376 = vpop.f32.mrb[0].mxu0
      %5377 = vmatprep.mubr.bf16.mxu0 %v5064
      %5378 = vmatmul.mubr.bf16.gmra.mrb[0].mxu0 %v5063
      %v5379 = vpop.f32.mrb[0].mxu0
      %v5380 = vadd.f32 %v5131, %v5379
      %v5381 = vpop.f32.mrb[0].mxu0
      %v5382 = vpop.f32.mrb[0].mxu0
      %v5383 = vadd.f32 %v5131, %v5382
      %v5384 = vpop.f32.mrb[0].mxu0
      %5385 = vmatprep.mubr.bf16.mxu0 %v5067
      %5386 = vmatmul.mubr.bf16.gmra.mrb[0].mxu0 %v5066
      %v5387 = vpop.f32.mrb[0].mxu0
      %v5388 = vadd.f32 %v5131, %v5387
      %v5389 = vpop.f32.mrb[0].mxu0
      %v5390 = vpop.f32.mrb[0].mxu0
      %v5391 = vadd.f32 %v5131, %v5390
      %v5392 = vpop.f32.mrb[0].mxu0
      %5393 = vmatprep.mubr.bf16.mxu0 %v5070
      %5394 = vmatmul.mubr.bf16.gmra.mrb[0].mxu0 %v5069
      %v5395 = vpop.f32.mrb[0].mxu0
      %v5396 = vadd.f32 %v5131, %v5395
      %v5397 = vpop.f32.mrb[0].mxu0
      %v5398 = vpop.f32.mrb[0].mxu0
      %v5399 = vadd.f32 %v5131, %v5398
      %v5400 = vpop.f32.mrb[0].mxu0
      %5401 = vmatprep.mubr.bf16.mxu0 %v5073
      %5402 = vmatmul.mubr.bf16.gmra.mrb[0].mxu0 %v5072
      %v5403 = vpop.f32.mrb[0].mxu0
      %v5404 = vadd.f32 %v5131, %v5403
      %v5405 = vpop.f32.mrb[0].mxu0
      %v5406 = vpop.f32.mrb[0].mxu0
      %v5407 = vadd.f32 %v5131, %v5406
      %v5408 = vpop.f32.mrb[0].mxu0
      %5409 = vmatprep.mubr.bf16.mxu0 %v5076
      %5410 = vmatmul.mubr.bf16.gmra.mrb[0].mxu0 %v5075
      %v5411 = vpop.f32.mrb[0].mxu0
      %v5412 = vadd.f32 %v5131, %v5411
      %v5413 = vpop.f32.mrb[0].mxu0
      %v5414 = vpop.f32.mrb[0].mxu0
      %v5415 = vadd.f32 %v5131, %v5414
      %v5416 = vpop.f32.mrb[0].mxu0
      %5417 = vmatprep.mubr.bf16.mxu0 %v5079
      %5418 = vmatmul.mubr.bf16.gmra.mrb[0].mxu0 %v5078
      %v5419 = vpop.f32.mrb[0].mxu0
      %v5420 = vadd.f32 %v5131, %v5419
      %v5421 = vpop.f32.mrb[0].mxu0
      %v5422 = vpop.f32.mrb[0].mxu0
      %v5423 = vadd.f32 %v5131, %v5422
      %v5424 = vpop.f32.mrb[0].mxu0
      %5425 = vmatprep.mubr.bf16.mxu0 %v5082
      %5426 = vmatmul.mubr.bf16.gmra.mrb[0].mxu0 %v5081
      %v5427 = vpop.f32.mrb[0].mxu0
      %v5428 = vadd.f32 %v5131, %v5427
      %v5429 = vpop.f32.mrb[0].mxu0
      %v5430 = vpop.f32.mrb[0].mxu0
      %v5431 = vadd.f32 %v5131, %v5430
      %v5432 = vpop.f32.mrb[0].mxu0
      %5433 = vmatprep.mubr.bf16.mxu0 %v5085
      %5434 = vmatmul.mubr.bf16.gmra.mrb[0].mxu0 %v5084
      %v5435 = vpop.f32.mrb[0].mxu0
      %v5436 = vadd.f32 %v5131, %v5435
      %v5437 = vpop.f32.mrb[0].mxu0
      %v5438 = vpop.f32.mrb[0].mxu0
      %v5439 = vadd.f32 %v5131, %v5438
      %v5440 = vpop.f32.mrb[0].mxu0
      %5441 = vmatprep.mubr.bf16.mxu0 %v5088
      %5442 = vmatmul.mubr.bf16.gmra.mrb[0].mxu0 %v5087
      %v5443 = vpop.f32.mrb[0].mxu0
      %v5444 = vadd.f32 %v5131, %v5443
      %v5445 = vpop.f32.mrb[0].mxu0
      %v5446 = vpop.f32.mrb[0].mxu0
      %v5447 = vadd.f32 %v5131, %v5446
      %v5448 = vpop.f32.mrb[0].mxu0
      %5449 = vdwg.mxu0
      %5450 = vmatprep.subr.bf16.mxu0 0
      %5451 = vmatpush1.bf16.msra.mxu0 %v5221
      %5452 = vmatprep.subr.bf16.mxu0 0
      %5453 = vmatpush1.bf16.msra.mxu0 %v5222
      %5454 = vmatprep.subr.bf16.mxu0 0
      %5455 = vmatpush1.bf16.msra.mxu0 0
      %5456 = vmatprep.subr.bf16.mxu0 0
      %5457 = vmatpush1.bf16.msra.mxu0 0
      %5458 = vmatprep.subr.bf16.mxu0 0
      %5459 = vmatpush1.bf16.msra.mxu0 0
      %5460 = vmatprep.subr.bf16.mxu0 0
      %5461 = vmatpush1.bf16.msra.mxu0 0
      %5462 = vmatprep.subr.bf16.mxu0 0
      %5463 = vmatpush1.bf16.msra.mxu0 0
      %5464 = vmatprep.subr.bf16.mxu0 0
      %5465 = vmatpush1.bf16.msra.mxu0 0
      %5466 = vmatprep.subr.bf16.mxu0 0
      %5467 = vmatpush1.bf16.msra.mxu0 0
      %5468 = vmatprep.subr.bf16.mxu0 0
      %5469 = vmatpush1.bf16.msra.mxu0 0
      %5470 = vmatprep.subr.bf16.mxu0 0
      %5471 = vmatpush1.bf16.msra.mxu0 0
      %5472 = vmatprep.subr.bf16.mxu0 0
      %5473 = vmatpush1.bf16.msra.mxu0 0
      %5474 = vmatprep.subr.bf16.mxu0 0
      %5475 = vmatpush1.bf16.msra.mxu0 0
      %5476 = vmatprep.subr.bf16.mxu0 0
      %5477 = vmatpush1.bf16.msra.mxu0 0
      %5478 = vmatprep.subr.bf16.mxu0 0
      %5479 = vmatpush1.bf16.msra.mxu0 0
      %5480 = vmatprep.subr.bf16.mxu0 0
      %5481 = vmatpush1.bf16.msra.mxu0 0
      %5482 = vmatprep.mubr.bf16.mxu0 0
      %5483 = vmatmul.mubr.bf16.gmra.mrb[0].mxu0 %v5242
      %v5484 = vpop.f32.mrb[0].mxu0
      %v5485 = vadd.f32 %v5324, %v5484
      %v5486 = vpop.f32.mrb[0].mxu0
      %v5487 = vpop.f32.mrb[0].mxu0
      %v5488 = vadd.f32 %v5327, %v5487
      %v5489 = vpop.f32.mrb[0].mxu0
      %5490 = vmatprep.mubr.bf16.mxu0 0
      %5491 = vmatmul.mubr.bf16.gmra.mrb[0].mxu0 %v5245
      %v5492 = vpop.f32.mrb[0].mxu0
      %v5493 = vadd.f32 %v5332, %v5492
      %v5494 = vpop.f32.mrb[0].mxu0
      %v5495 = vpop.f32.mrb[0].mxu0
      %v5496 = vadd.f32 %v5335, %v5495
      %v5497 = vpop.f32.mrb[0].mxu0
      %5498 = vmatprep.mubr.bf16.mxu0 0
      %5499 = vmatmul.mubr.bf16.gmra.mrb[0].mxu0 %v5248
      %v5500 = vpop.f32.mrb[0].mxu0
      %v5501 = vadd.f32 %v5340, %v5500
      %v5502 = vpop.f32.mrb[0].mxu0
      %v5503 = vpop.f32.mrb[0].mxu0
      %v5504 = vadd.f32 %v5343, %v5503
      %v5505 = vpop.f32.mrb[0].mxu0
      %5506 = vmatprep.mubr.bf16.mxu0 0
      %5507 = vmatmul.mubr.bf16.gmra.mrb[0].mxu0 %v5251
      %v5508 = vpop.f32.mrb[0].mxu0
      %v5509 = vadd.f32 %v5348, %v5508
      %v5510 = vpop.f32.mrb[0].mxu0
      %v5511 = vpop.f32.mrb[0].mxu0
      %v5512 = vadd.f32 %v5351, %v5511
      %v5513 = vpop.f32.mrb[0].mxu0
      %5514 = vmatprep.mubr.bf16.mxu0 0
      %5515 = vmatmul.mubr.bf16.gmra.mrb[0].mxu0 %v5254
      %v5516 = vpop.f32.mrb[0].mxu0
      %v5517 = vadd.f32 %v5356, %v5516
      %v5518 = vpop.f32.mrb[0].mxu0
      %v5519 = vpop.f32.mrb[0].mxu0
      %v5520 = vadd.f32 %v5359, %v5519
      %v5521 = vpop.f32.mrb[0].mxu0
      %5522 = vmatprep.mubr.bf16.mxu0 0
      %5523 = vmatmul.mubr.bf16.gmra.mrb[0].mxu0 %v5257
      %v5524 = vpop.f32.mrb[0].mxu0
      %v5525 = vadd.f32 %v5364, %v5524
      %v5526 = vpop.f32.mrb[0].mxu0
      %v5527 = vpop.f32.mrb[0].mxu0
      %v5528 = vadd.f32 %v5367, %v5527
      %v5529 = vpop.f32.mrb[0].mxu0
      %5530 = vmatprep.mubr.bf16.mxu0 0
      %5531 = vmatmul.mubr.bf16.gmra.mrb[0].mxu0 %v5260
      %v5532 = vpop.f32.mrb[0].mxu0
      %v5533 = vadd.f32 %v5372, %v5532
      %v5534 = vpop.f32.mrb[0].mxu0
      %v5535 = vpop.f32.mrb[0].mxu0
      %v5536 = vadd.f32 %v5375, %v5535
      %v5537 = vpop.f32.mrb[0].mxu0
      %5538 = vmatprep.mubr.bf16.mxu0 0
      %5539 = vmatmul.mubr.bf16.gmra.mrb[0].mxu0 %v5263
      %v5540 = vpop.f32.mrb[0].mxu0
      %v5541 = vadd.f32 %v5380, %v5540
      %v5542 = vpop.f32.mrb[0].mxu0
      %v5543 = vpop.f32.mrb[0].mxu0
      %v5544 = vadd.f32 %v5383, %v5543
      %v5545 = vpop.f32.mrb[0].mxu0
      %5546 = vmatprep.mubr.bf16.mxu0 0
      %5547 = vmatmul.mubr.bf16.gmra.mrb[0].mxu0 %v5266
      %v5548 = vpop.f32.mrb[0].mxu0
      %v5549 = vadd.f32 %v5388, %v5548
      %v5550 = vpop.f32.mrb[0].mxu0
      %v5551 = vpop.f32.mrb[0].mxu0
      %v5552 = vadd.f32 %v5391, %v5551
      %v5553 = vpop.f32.mrb[0].mxu0
      %5554 = vmatprep.mubr.bf16.mxu0 0
      %5555 = vmatmul.mubr.bf16.gmra.mrb[0].mxu0 %v5269
      %v5556 = vpop.f32.mrb[0].mxu0
      %v5557 = vadd.f32 %v5396, %v5556
      %v5558 = vpop.f32.mrb[0].mxu0
      %v5559 = vpop.f32.mrb[0].mxu0
      %v5560 = vadd.f32 %v5399, %v5559
      %v5561 = vpop.f32.mrb[0].mxu0
      %5562 = vmatprep.mubr.bf16.mxu0 0
      %5563 = vmatmul.mubr.bf16.gmra.mrb[0].mxu0 %v5272
      %v5564 = vpop.f32.mrb[0].mxu0
      %v5565 = vadd.f32 %v5404, %v5564
      %v5566 = vpop.f32.mrb[0].mxu0
      %v5567 = vpop.f32.mrb[0].mxu0
      %v5568 = vadd.f32 %v5407, %v5567
      %v5569 = vpop.f32.mrb[0].mxu0
      %5570 = vmatprep.mubr.bf16.mxu0 0
      %5571 = vmatmul.mubr.bf16.gmra.mrb[0].mxu0 %v5275
      %v5572 = vpop.f32.mrb[0].mxu0
      %v5573 = vadd.f32 %v5412, %v5572
      %v5574 = vpop.f32.mrb[0].mxu0
      %v5575 = vpop.f32.mrb[0].mxu0
      %v5576 = vadd.f32 %v5415, %v5575
      %v5577 = vpop.f32.mrb[0].mxu0
      %5578 = vmatprep.mubr.bf16.mxu0 0
      %5579 = vmatmul.mubr.bf16.gmra.mrb[0].mxu0 %v5278
      %v5580 = vpop.f32.mrb[0].mxu0
      %v5581 = vadd.f32 %v5420, %v5580
      %v5582 = vpop.f32.mrb[0].mxu0
      %v5583 = vpop.f32.mrb[0].mxu0
      %v5584 = vadd.f32 %v5423, %v5583
      %v5585 = vpop.f32.mrb[0].mxu0
      %5586 = vmatprep.mubr.bf16.mxu0 0
      %5587 = vmatmul.mubr.bf16.gmra.mrb[0].mxu0 %v5281
      %v5588 = vpop.f32.mrb[0].mxu0
      %v5589 = vadd.f32 %v5428, %v5588
      %v5590 = vpop.f32.mrb[0].mxu0
      %v5591 = vpop.f32.mrb[0].mxu0
      %v5592 = vadd.f32 %v5431, %v5591
      %v5593 = vpop.f32.mrb[0].mxu0
      %5594 = vmatprep.mubr.bf16.mxu0 0
      %5595 = vmatmul.mubr.bf16.gmra.mrb[0].mxu0 %v5284
      %v5596 = vpop.f32.mrb[0].mxu0
      %v5597 = vadd.f32 %v5436, %v5596
      %v5598 = vpop.f32.mrb[0].mxu0
      %v5599 = vpop.f32.mrb[0].mxu0
      %v5600 = vadd.f32 %v5439, %v5599
      %v5601 = vpop.f32.mrb[0].mxu0
      %5602 = vmatprep.mubr.bf16.mxu0 0
      %5603 = vmatmul.mubr.bf16.gmra.mrb[0].mxu0 %v5287
      %v5604 = vpop.f32.mrb[0].mxu0
      %v5605 = vadd.f32 %v5444, %v5604
      %v5606 = vpop.f32.mrb[0].mxu0
      %v5607 = vpop.f32.mrb[0].mxu0
      %v5608 = vadd.f32 %v5447, %v5607
      %v5609 = vpop.f32.mrb[0].mxu0
      %5610 = vdwg.mxu0
      %v5611 = vlaneseq
      %v5612 = vand.u32 %v5611, 127
      %vm5613 = vcmp.lt.s32.totalorder %v5612, 3
      %v5614 = vtanh.pop %v5485
      %v5615 = vtanh.pop %v5488
      %v5616 = vtanh.pop %v5493
      %v5617 = vtanh.pop %v5496
      %v5618 = vtanh.pop %v5501
      %v5619 = vtanh.pop %v5504
      %v5620 = vtanh.pop %v5509
      %v5621 = vtanh.pop %v5512
      %v5622 = vtanh.pop %v5517
      %v5623 = vtanh.pop %v5520
      %v5624 = vtanh.pop %v5525
      %v5625 = vtanh.pop %v5528
      %v5626 = vtanh.pop %v5533
      %v5627 = vtanh.pop %v5536
      %v5628 = vtanh.pop %v5541
      %v5629 = vtanh.pop %v5544
      %v5630 = vtanh.pop %v5549
      %v5631 = vtanh.pop %v5552
      %v5632 = vtanh.pop %v5557
      %v5633 = vtanh.pop %v5560
      %v5634 = vtanh.pop %v5565
      %v5635 = vtanh.pop %v5568
      %v5636 = vtanh.pop %v5573
      %v5637 = vtanh.pop %v5576
      %v5638 = vtanh.pop %v5581
      %v5639 = vtanh.pop %v5584
      %v5640 = vtanh.pop %v5589
      %v5641 = vtanh.pop %v5592
      %v5642 = vtanh.pop %v5597
      %v5643 = vtanh.pop %v5600
      %v5644 = vtanh.pop %v5605
      %v5645 = vtanh.pop %v5608
      %v5646 = vsel %vm5613, %v5614, %v5485
      %v5647 = vsel %vm5613, %v5615, %v5488
      %v5648 = vsel %vm5613, %v5616, %v5493
      %v5649 = vsel %vm5613, %v5617, %v5496
      %v5650 = vsel %vm5613, %v5618, %v5501
      %v5651 = vsel %vm5613, %v5619, %v5504
      %v5652 = vsel %vm5613, %v5620, %v5509
      %v5653 = vsel %vm5613, %v5621, %v5512
      %v5654 = vsel %vm5613, %v5622, %v5517
      %v5655 = vsel %vm5613, %v5623, %v5520
      %v5656 = vsel %vm5613, %v5624, %v5525
      %v5657 = vsel %vm5613, %v5625, %v5528
      %v5658 = vsel %vm5613, %v5626, %v5533
      %v5659 = vsel %vm5613, %v5627, %v5536
      %v5660 = vsel %vm5613, %v5628, %v5541
      %v5661 = vsel %vm5613, %v5629, %v5544
      %v5662 = vsel %vm5613, %v5630, %v5549
      %v5663 = vsel %vm5613, %v5631, %v5552
      %v5664 = vsel %vm5613, %v5632, %v5557
      %v5665 = vsel %vm5613, %v5633, %v5560
      %v5666 = vsel %vm5613, %v5634, %v5565
      %v5667 = vsel %vm5613, %v5635, %v5568
      %v5668 = vsel %vm5613, %v5636, %v5573
      %v5669 = vsel %vm5613, %v5637, %v5576
      %v5670 = vsel %vm5613, %v5638, %v5581
      %v5671 = vsel %vm5613, %v5639, %v5584
      %v5672 = vsel %vm5613, %v5640, %v5589
      %v5673 = vsel %vm5613, %v5641, %v5592
      %v5674 = vsel %vm5613, %v5642, %v5597
      %v5675 = vsel %vm5613, %v5643, %v5600
      %v5676 = vsel %vm5613, %v5644, %v5605
      %v5677 = vsel %vm5613, %v5645, %v5608
      %v5678 = vld [vmem:[%s536] sm:$0xff]
      %v5679 = vld [vmem:[%s536 + $0x8] sm:$0xff]
      %v5680 = vld [vmem:[%s536 + $0x10] sm:$0xff]
      %v5681 = vld [vmem:[%s536 + $0x18] sm:$0xff]
      %v5682 = vld [vmem:[%s536 + $0x20] sm:$0xff]
      %v5683 = vld [vmem:[%s536 + $0x28] sm:$0xff]
      %v5684 = vld [vmem:[%s536 + $0x30] sm:$0xff]
      %v5685 = vld [vmem:[%s536 + $0x38] sm:$0xff]
      %v5686 = vld [vmem:[%s536 + $0x40] sm:$0xff]
      %v5687 = vld [vmem:[%s536 + $0x48] sm:$0xff]
      %v5688 = vld [vmem:[%s536 + $0x50] sm:$0xff]
      %v5689 = vld [vmem:[%s536 + $0x58] sm:$0xff]
      %v5690 = vld [vmem:[%s536 + $0x60] sm:$0xff]
      %v5691 = vld [vmem:[%s536 + $0x68] sm:$0xff]
      %v5692 = vld [vmem:[%s536 + $0x70] sm:$0xff]
      %v5693 = vld [vmem:[%s536 + $0x78] sm:$0xff]
      %v5694 = vld [vmem:[%s536 + $0x80] sm:$0xff]
      %v5695 = vld [vmem:[%s536 + $0x88] sm:$0xff]
      %v5696 = vld [vmem:[%s536 + $0x90] sm:$0xff]
      %v5697 = vld [vmem:[%s536 + $0x98] sm:$0xff]
      %v5698 = vld [vmem:[%s536 + $0xa0] sm:$0xff]
      %v5699 = vld [vmem:[%s536 + $0xa8] sm:$0xff]
      %v5700 = vld [vmem:[%s536 + $0xb0] sm:$0xff]
      %v5701 = vld [vmem:[%s536 + $0xb8] sm:$0xff]
      %v5702 = vld [vmem:[%s536 + $0xc0] sm:$0xff]
      %v5703 = vld [vmem:[%s536 + $0xc8] sm:$0xff]
      %v5704 = vld [vmem:[%s536 + $0xd0] sm:$0xff]
      %v5705 = vld [vmem:[%s536 + $0xd8] sm:$0xff]
      %v5706 = vld [vmem:[%s536 + $0xe0] sm:$0xff]
      %v5707 = vld [vmem:[%s536 + $0xe8] sm:$0xff]
      %v5708 = vld [vmem:[%s536 + $0xf0] sm:$0xff]
      %v5709 = vld [vmem:[%s536 + $0xf8] sm:$0xff]
      %v5710 = vld [vmem:[%s4] sm:$0xff]
      %v5711 = vld [vmem:[%s4 + $0x8] sm:$0xff]
      %v5712 = vld [vmem:[%s4 + $0x10] sm:$0xff]
      %v5713 = vld [vmem:[%s4 + $0x18] sm:$0xff]
      %v5714 = vld [vmem:[%s4 + $0x20] sm:$0xff]
      %v5715 = vld [vmem:[%s4 + $0x28] sm:$0xff]
      %v5716 = vld [vmem:[%s4 + $0x30] sm:$0xff]
      %v5717 = vld [vmem:[%s4 + $0x38] sm:$0xff]
      %v5718 = vld [vmem:[%s4 + $0x40] sm:$0xff]
      %v5719 = vld [vmem:[%s4 + $0x48] sm:$0xff]
      %v5720 = vld [vmem:[%s4 + $0x50] sm:$0xff]
      %v5721 = vld [vmem:[%s4 + $0x58] sm:$0xff]
      %v5722 = vld [vmem:[%s4 + $0x60] sm:$0xff]
      %v5723 = vld [vmem:[%s4 + $0x68] sm:$0xff]
      %v5724 = vld [vmem:[%s4 + $0x70] sm:$0xff]
      %v5725 = vld [vmem:[%s4 + $0x78] sm:$0xff]
      %v5726 = vld [vmem:[%s4 + $0x80] sm:$0xff]
      %v5727 = vld [vmem:[%s4 + $0x88] sm:$0xff]
      %v5728 = vld [vmem:[%s4 + $0x90] sm:$0xff]
      %v5729 = vld [vmem:[%s4 + $0x98] sm:$0xff]
      %v5730 = vld [vmem:[%s4 + $0xa0] sm:$0xff]
      %v5731 = vld [vmem:[%s4 + $0xa8] sm:$0xff]
      %v5732 = vld [vmem:[%s4 + $0xb0] sm:$0xff]
      %v5733 = vld [vmem:[%s4 + $0xb8] sm:$0xff]
      %v5734 = vld [vmem:[%s4 + $0xc0] sm:$0xff]
      %v5735 = vld [vmem:[%s4 + $0xc8] sm:$0xff]
      %v5736 = vld [vmem:[%s4 + $0xd0] sm:$0xff]
      %v5737 = vld [vmem:[%s4 + $0xd8] sm:$0xff]
      %v5738 = vld [vmem:[%s4 + $0xe0] sm:$0xff]
      %v5739 = vld [vmem:[%s4 + $0xe8] sm:$0xff]
      %v5740 = vld [vmem:[%s4 + $0xf0] sm:$0xff]
      %v5741 = vld [vmem:[%s4 + $0xf8] sm:$0xff]
      %v5742 = vld [vmem:[%s4 + $0x100] sm:$0xff]
      %v5743 = vld [vmem:[%s4 + $0x108] sm:$0xff]
      %v5744 = vld [vmem:[%s4 + $0x110] sm:$0xff]
      %v5745 = vld [vmem:[%s4 + $0x118] sm:$0xff]
      %v5746 = vld [vmem:[%s4 + $0x120] sm:$0xff]
      %v5747 = vld [vmem:[%s4 + $0x128] sm:$0xff]
      %v5748 = vld [vmem:[%s4 + $0x130] sm:$0xff]
      %v5749 = vld [vmem:[%s4 + $0x138] sm:$0xff]
      %v5750 = vld [vmem:[%s4 + $0x140] sm:$0xff]
      %v5751 = vld [vmem:[%s4 + $0x148] sm:$0xff]
      %v5752 = vld [vmem:[%s4 + $0x150] sm:$0xff]
      %v5753 = vld [vmem:[%s4 + $0x158] sm:$0xff]
      %v5754 = vld [vmem:[%s4 + $0x160] sm:$0xff]
      %v5755 = vld [vmem:[%s4 + $0x168] sm:$0xff]
      %v5756 = vld [vmem:[%s4 + $0x170] sm:$0xff]
      %v5757 = vld [vmem:[%s4 + $0x178] sm:$0xff]
      %v5758 = vld [vmem:[%s4 + $0x180] sm:$0xff]
      %v5759 = vld [vmem:[%s4 + $0x188] sm:$0xff]
      %v5760 = vld [vmem:[%s4 + $0x190] sm:$0xff]
      %v5761 = vld [vmem:[%s4 + $0x198] sm:$0xff]
      %v5762 = vld [vmem:[%s4 + $0x1a0] sm:$0xff]
      %v5763 = vld [vmem:[%s4 + $0x1a8] sm:$0xff]
      %v5764 = vld [vmem:[%s4 + $0x1b0] sm:$0xff]
      %v5765 = vld [vmem:[%s4 + $0x1b8] sm:$0xff]
      %v5766 = vld [vmem:[%s4 + $0x1c0] sm:$0xff]
      %v5767 = vld [vmem:[%s4 + $0x1c8] sm:$0xff]
      %v5768 = vld [vmem:[%s4 + $0x1d0] sm:$0xff]
      %v5769 = vld [vmem:[%s4 + $0x1d8] sm:$0xff]
      %v5770 = vld [vmem:[%s4 + $0x1e0] sm:$0xff]
      %v5771 = vld [vmem:[%s4 + $0x1e8] sm:$0xff]
      %v5772 = vld [vmem:[%s4 + $0x1f0] sm:$0xff]
      %v5773 = vld [vmem:[%s4 + $0x1f8] sm:$0xff]
      %v5777 = vrot.slane %v5707, 7
      %v5778 = vrot.slane %v5708, 7
      %v5779 = vsel %vm610, %v5777, %v5778
      %v5780 = vrot.slane %v5709, 7
      %v5781 = vsel %vm610, %v5778, %v5780
      %v5846 = vrot.slane %v5646, 7
      %v5847 = vrot.slane %v5647, 7
      %v5848 = vsel %vm610, %v5846, %v5847
      %v5849 = vrot.slane %v5648, 7
      %v5850 = vsel %vm610, %v5847, %v5849
      %v5851 = vrot.slane %v5649, 7
      %v5852 = vsel %vm610, %v5849, %v5851
      %v5853 = vrot.slane %v5650, 7
      %v5854 = vsel %vm610, %v5851, %v5853
      %v5855 = vrot.slane %v5651, 7
      %v5856 = vsel %vm610, %v5853, %v5855
      %v5857 = vrot.slane %v5652, 7
      %v5858 = vsel %vm610, %v5855, %v5857
      %v5859 = vrot.slane %v5653, 7
      %v5860 = vsel %vm610, %v5857, %v5859
      %v5861 = vrot.slane %v5654, 7
      %v5862 = vsel %vm610, %v5859, %v5861
      %v5863 = vrot.slane %v5655, 7
      %v5864 = vsel %vm610, %v5861, %v5863
      %v5865 = vrot.slane %v5656, 7
      %v5866 = vsel %vm610, %v5863, %v5865
      %v5867 = vrot.slane %v5657, 7
      %v5868 = vsel %vm610, %v5865, %v5867
      %v5869 = vrot.slane %v5658, 7
      %v5870 = vsel %vm610, %v5867, %v5869
      %v5871 = vrot.slane %v5659, 7
      %v5872 = vsel %vm610, %v5869, %v5871
      %v5873 = vrot.slane %v5660, 7
      %v5874 = vsel %vm610, %v5871, %v5873
      %v5875 = vrot.slane %v5661, 7
      %v5876 = vsel %vm610, %v5873, %v5875
      %v5877 = vrot.slane %v5662, 7
      %v5878 = vsel %vm610, %v5875, %v5877
      %v5879 = vrot.slane %v5663, 7
      %v5880 = vsel %vm610, %v5877, %v5879
      %v5881 = vrot.slane %v5664, 7
      %v5882 = vsel %vm610, %v5879, %v5881
      %v5883 = vrot.slane %v5665, 7
      %v5884 = vsel %vm610, %v5881, %v5883
      %v5885 = vrot.slane %v5666, 7
      %v5886 = vsel %vm610, %v5883, %v5885
      %v5887 = vrot.slane %v5667, 7
      %v5888 = vsel %vm610, %v5885, %v5887
      %v5889 = vrot.slane %v5668, 7
      %v5890 = vsel %vm610, %v5887, %v5889
      %v5891 = vrot.slane %v5669, 7
      %v5892 = vsel %vm610, %v5889, %v5891
      %v5893 = vrot.slane %v5670, 7
      %v5894 = vsel %vm610, %v5891, %v5893
      %v5895 = vrot.slane %v5671, 7
      %v5896 = vsel %vm610, %v5893, %v5895
      %v5897 = vrot.slane %v5672, 7
      %v5898 = vsel %vm610, %v5895, %v5897
      %v5899 = vrot.slane %v5673, 7
      %v5900 = vsel %vm610, %v5897, %v5899
      %v5901 = vrot.slane %v5674, 7
      %v5902 = vsel %vm610, %v5899, %v5901
      %v5903 = vrot.slane %v5675, 7
      %v5904 = vsel %vm610, %v5901, %v5903
      %v5905 = vrot.slane %v5676, 7
      %v5906 = vsel %vm610, %v5903, %v5905
      %v5907 = vrot.slane %v5677, 7
      %v5908 = vsel %vm610, %v5905, %v5907
      %v5909 = vrot.slane %v5678, 7
      %v5910 = vsel %vm610, %v5907, %v5909
      %v5911 = vrot.slane %v5679, 7
      %v5912 = vsel %vm610, %v5909, %v5911
      %v5913 = vrot.slane %v5680, 7
      %v5914 = vsel %vm610, %v5911, %v5913
      %v5915 = vrot.slane %v5681, 7
      %v5916 = vsel %vm610, %v5913, %v5915
      %v5917 = vrot.slane %v5682, 7
      %v5918 = vsel %vm610, %v5915, %v5917
      %v5919 = vrot.slane %v5683, 7
      %v5920 = vsel %vm610, %v5917, %v5919
      %v5921 = vrot.slane %v5684, 7
      %v5922 = vsel %vm610, %v5919, %v5921
      %v5923 = vrot.slane %v5685, 7
      %v5924 = vsel %vm610, %v5921, %v5923
      %v5925 = vrot.slane %v5686, 7
      %v5926 = vsel %vm610, %v5923, %v5925
      %v5927 = vrot.slane %v5687, 7
      %v5928 = vsel %vm610, %v5925, %v5927
      %v5929 = vrot.slane %v5688, 7
      %v5930 = vsel %vm610, %v5927, %v5929
      %v5931 = vrot.slane %v5689, 7
      %v5932 = vsel %vm610, %v5929, %v5931
      %v5933 = vrot.slane %v5690, 7
      %v5934 = vsel %vm610, %v5931, %v5933
      %v5935 = vrot.slane %v5691, 7
      %v5936 = vsel %vm610, %v5933, %v5935
      %v5937 = vrot.slane %v5692, 7
      %v5938 = vsel %vm610, %v5935, %v5937
      %v5939 = vrot.slane %v5693, 7
      %v5940 = vsel %vm610, %v5937, %v5939
      %v5941 = vrot.slane %v5694, 7
      %v5942 = vsel %vm610, %v5939, %v5941
      %v5943 = vrot.slane %v5695, 7
      %v5944 = vsel %vm610, %v5941, %v5943
      %v5945 = vrot.slane %v5696, 7
      %v5946 = vsel %vm610, %v5943, %v5945
      %v5947 = vrot.slane %v5697, 7
      %v5948 = vsel %vm610, %v5945, %v5947
      %v5949 = vrot.slane %v5698, 7
      %v5950 = vsel %vm610, %v5947, %v5949
      %v5951 = vrot.slane %v5699, 7
      %v5952 = vsel %vm610, %v5949, %v5951
      %v5953 = vrot.slane %v5700, 7
      %v5954 = vsel %vm610, %v5951, %v5953
      %v5955 = vrot.slane %v5701, 7
      %v5956 = vsel %vm610, %v5953, %v5955
      %v5957 = vrot.slane %v5702, 7
      %v5958 = vsel %vm610, %v5955, %v5957
      %v5959 = vrot.slane %v5703, 7
      %v5960 = vsel %vm610, %v5957, %v5959
      %v5961 = vrot.slane %v5704, 7
      %v5962 = vsel %vm610, %v5959, %v5961
      %v5963 = vrot.slane %v5705, 7
      %v5964 = vsel %vm610, %v5961, %v5963
      %v5965 = vrot.slane %v5706, 7
      %v5966 = vsel %vm610, %v5963, %v5965
      %v5967 = vsel %vm610, %v5965, %v5777
      %v6030 = vsel %vm610, %v5780, %v5846
      %v6031 = vrot.slane %v5708, 1
      %v6032 = vrot.slane %v5709, 1
      %v6033 = vsel %vm737, %v6031, %v6032
      %v6035 = vrot.slane %v5646, 1
      %v6036 = vrot.slane %v5647, 1
      %v6037 = vsel %vm737, %v6035, %v6036
      %v6038 = vrot.slane %v5648, 1
      %v6039 = vsel %vm737, %v6036, %v6038
      %v6040 = vrot.slane %v5649, 1
      %v6041 = vsel %vm737, %v6038, %v6040
      %v6042 = vrot.slane %v5650, 1
      %v6043 = vsel %vm737, %v6040, %v6042
      %v6044 = vrot.slane %v5651, 1
      %v6045 = vsel %vm737, %v6042, %v6044
      %v6046 = vrot.slane %v5652, 1
      %v6047 = vsel %vm737, %v6044, %v6046
      %v6048 = vrot.slane %v5653, 1
      %v6049 = vsel %vm737, %v6046, %v6048
      %v6050 = vrot.slane %v5654, 1
      %v6051 = vsel %vm737, %v6048, %v6050
      %v6052 = vrot.slane %v5655, 1
      %v6053 = vsel %vm737, %v6050, %v6052
      %v6054 = vrot.slane %v5656, 1
      %v6055 = vsel %vm737, %v6052, %v6054
      %v6056 = vrot.slane %v5657, 1
      %v6057 = vsel %vm737, %v6054, %v6056
      %v6058 = vrot.slane %v5658, 1
      %v6059 = vsel %vm737, %v6056, %v6058
      %v6060 = vrot.slane %v5659, 1
      %v6061 = vsel %vm737, %v6058, %v6060
      %v6062 = vrot.slane %v5660, 1
      %v6063 = vsel %vm737, %v6060, %v6062
      %v6064 = vrot.slane %v5661, 1
      %v6065 = vsel %vm737, %v6062, %v6064
      %v6066 = vrot.slane %v5662, 1
      %v6067 = vsel %vm737, %v6064, %v6066
      %v6068 = vrot.slane %v5663, 1
      %v6069 = vsel %vm737, %v6066, %v6068
      %v6070 = vrot.slane %v5664, 1
      %v6071 = vsel %vm737, %v6068, %v6070
      %v6072 = vrot.slane %v5665, 1
      %v6073 = vsel %vm737, %v6070, %v6072
      %v6074 = vrot.slane %v5666, 1
      %v6075 = vsel %vm737, %v6072, %v6074
      %v6076 = vrot.slane %v5667, 1
      %v6077 = vsel %vm737, %v6074, %v6076
      %v6078 = vrot.slane %v5668, 1
      %v6079 = vsel %vm737, %v6076, %v6078
      %v6080 = vrot.slane %v5669, 1
      %v6081 = vsel %vm737, %v6078, %v6080
      %v6082 = vrot.slane %v5670, 1
      %v6083 = vsel %vm737, %v6080, %v6082
      %v6084 = vrot.slane %v5671, 1
      %v6085 = vsel %vm737, %v6082, %v6084
      %v6086 = vrot.slane %v5672, 1
      %v6087 = vsel %vm737, %v6084, %v6086
      %v6088 = vrot.slane %v5673, 1
      %v6089 = vsel %vm737, %v6086, %v6088
      %v6090 = vrot.slane %v5674, 1
      %v6091 = vsel %vm737, %v6088, %v6090
      %v6092 = vrot.slane %v5675, 1
      %v6093 = vsel %vm737, %v6090, %v6092
      %v6094 = vrot.slane %v5676, 1
      %v6095 = vsel %vm737, %v6092, %v6094
      %v6096 = vrot.slane %v5677, 1
      %v6097 = vsel %vm737, %v6094, %v6096
      %v6098 = vrot.slane %v5678, 1
      %v6099 = vsel %vm737, %v6096, %v6098
      %v6100 = vrot.slane %v5679, 1
      %v6101 = vsel %vm737, %v6098, %v6100
      %v6102 = vrot.slane %v5680, 1
      %v6103 = vsel %vm737, %v6100, %v6102
      %v6104 = vrot.slane %v5681, 1
      %v6105 = vsel %vm737, %v6102, %v6104
      %v6106 = vrot.slane %v5682, 1
      %v6107 = vsel %vm737, %v6104, %v6106
      %v6108 = vrot.slane %v5683, 1
      %v6109 = vsel %vm737, %v6106, %v6108
      %v6110 = vrot.slane %v5684, 1
      %v6111 = vsel %vm737, %v6108, %v6110
      %v6112 = vrot.slane %v5685, 1
      %v6113 = vsel %vm737, %v6110, %v6112
      %v6114 = vrot.slane %v5686, 1
      %v6115 = vsel %vm737, %v6112, %v6114
      %v6116 = vrot.slane %v5687, 1
      %v6117 = vsel %vm737, %v6114, %v6116
      %v6118 = vrot.slane %v5688, 1
      %v6119 = vsel %vm737, %v6116, %v6118
      %v6120 = vrot.slane %v5689, 1
      %v6121 = vsel %vm737, %v6118, %v6120
      %v6122 = vrot.slane %v5690, 1
      %v6123 = vsel %vm737, %v6120, %v6122
      %v6124 = vrot.slane %v5691, 1
      %v6125 = vsel %vm737, %v6122, %v6124
      %v6126 = vrot.slane %v5692, 1
      %v6127 = vsel %vm737, %v6124, %v6126
      %v6128 = vrot.slane %v5693, 1
      %v6129 = vsel %vm737, %v6126, %v6128
      %v6130 = vrot.slane %v5694, 1
      %v6131 = vsel %vm737, %v6128, %v6130
      %v6132 = vrot.slane %v5695, 1
      %v6133 = vsel %vm737, %v6130, %v6132
      %v6134 = vrot.slane %v5696, 1
      %v6135 = vsel %vm737, %v6132, %v6134
      %v6136 = vrot.slane %v5697, 1
      %v6137 = vsel %vm737, %v6134, %v6136
      %v6138 = vrot.slane %v5698, 1
      %v6139 = vsel %vm737, %v6136, %v6138
      %v6140 = vrot.slane %v5699, 1
      %v6141 = vsel %vm737, %v6138, %v6140
      %v6142 = vrot.slane %v5700, 1
      %v6143 = vsel %vm737, %v6140, %v6142
      %v6144 = vrot.slane %v5701, 1
      %v6145 = vsel %vm737, %v6142, %v6144
      %v6146 = vrot.slane %v5702, 1
      %v6147 = vsel %vm737, %v6144, %v6146
      %v6148 = vrot.slane %v5703, 1
      %v6149 = vsel %vm737, %v6146, %v6148
      %v6150 = vrot.slane %v5704, 1
      %v6151 = vsel %vm737, %v6148, %v6150
      %v6152 = vrot.slane %v5705, 1
      %v6153 = vsel %vm737, %v6150, %v6152
      %v6154 = vrot.slane %v5706, 1
      %v6155 = vsel %vm737, %v6152, %v6154
      %v6156 = vrot.slane %v5707, 1
      %v6157 = vsel %vm737, %v6154, %v6156
      %v6158 = vsel %vm737, %v6156, %v6031
      %v6160 = vsel %vm737, %v6032, %v6035
      %6161 = vrot.lane.b32.xlu0 %v5708, 4
      %v6162 = vpop.permute.xlu0 %6161
      %6163 = vrot.lane.b32.xlu0 %v5709, 4
      %v6164 = vpop.permute.xlu0 %6163
      %6165 = vrot.lane.b32.xlu0 %v5646, 4
      %v6166 = vpop.permute.xlu0 %6165
      %6167 = vrot.lane.b32.xlu0 %v5647, 4
      %v6168 = vpop.permute.xlu0 %6167
      %6169 = vrot.lane.b32.xlu0 %v5648, 4
      %v6170 = vpop.permute.xlu0 %6169
      %6171 = vrot.lane.b32.xlu0 %v5649, 4
      %v6172 = vpop.permute.xlu0 %6171
      %6173 = vrot.lane.b32.xlu0 %v5650, 4
      %v6174 = vpop.permute.xlu0 %6173
      %6175 = vrot.lane.b32.xlu0 %v5651, 4
      %v6176 = vpop.permute.xlu0 %6175
      %6177 = vrot.lane.b32.xlu0 %v5652, 4
      %v6178 = vpop.permute.xlu0 %6177
      %6179 = vrot.lane.b32.xlu0 %v5653, 4
      %v6180 = vpop.permute.xlu0 %6179
      %6181 = vrot.lane.b32.xlu0 %v5654, 4
      %v6182 = vpop.permute.xlu0 %6181
      %6183 = vrot.lane.b32.xlu0 %v5655, 4
      %v6184 = vpop.permute.xlu0 %6183
      %6185 = vrot.lane.b32.xlu0 %v5656, 4
      %v6186 = vpop.permute.xlu0 %6185
      %6187 = vrot.lane.b32.xlu0 %v5657, 4
      %v6188 = vpop.permute.xlu0 %6187
      %6189 = vrot.lane.b32.xlu0 %v5658, 4
      %v6190 = vpop.permute.xlu0 %6189
      %6191 = vrot.lane.b32.xlu0 %v5659, 4
      %v6192 = vpop.permute.xlu0 %6191
      %6193 = vrot.lane.b32.xlu0 %v5660, 4
      %v6194 = vpop.permute.xlu0 %6193
      %6195 = vrot.lane.b32.xlu0 %v5661, 4
      %v6196 = vpop.permute.xlu0 %6195
      %6197 = vrot.lane.b32.xlu0 %v5662, 4
      %v6198 = vpop.permute.xlu0 %6197
      %6199 = vrot.lane.b32.xlu0 %v5663, 4
      %v6200 = vpop.permute.xlu0 %6199
      %6201 = vrot.lane.b32.xlu0 %v5664, 4
      %v6202 = vpop.permute.xlu0 %6201
      %6203 = vrot.lane.b32.xlu0 %v5665, 4
      %v6204 = vpop.permute.xlu0 %6203
      %6205 = vrot.lane.b32.xlu0 %v5666, 4
      %v6206 = vpop.permute.xlu0 %6205
      %6207 = vrot.lane.b32.xlu0 %v5667, 4
      %v6208 = vpop.permute.xlu0 %6207
      %6209 = vrot.lane.b32.xlu0 %v5668, 4
      %v6210 = vpop.permute.xlu0 %6209
      %6211 = vrot.lane.b32.xlu0 %v5669, 4
      %v6212 = vpop.permute.xlu0 %6211
      %6213 = vrot.lane.b32.xlu0 %v5670, 4
      %v6214 = vpop.permute.xlu0 %6213
      %6215 = vrot.lane.b32.xlu0 %v5671, 4
      %v6216 = vpop.permute.xlu0 %6215
      %6217 = vrot.lane.b32.xlu0 %v5672, 4
      %v6218 = vpop.permute.xlu0 %6217
      %6219 = vrot.lane.b32.xlu0 %v5673, 4
      %v6220 = vpop.permute.xlu0 %6219
      %6221 = vrot.lane.b32.xlu0 %v5674, 4
      %v6222 = vpop.permute.xlu0 %6221
      %6223 = vrot.lane.b32.xlu0 %v5675, 4
      %v6224 = vpop.permute.xlu0 %6223
      %6225 = vrot.lane.b32.xlu0 %v5676, 4
      %v6226 = vpop.permute.xlu0 %6225
      %6227 = vrot.lane.b32.xlu0 %v5677, 4
      %v6228 = vpop.permute.xlu0 %6227
      %6229 = vrot.lane.b32.xlu0 %v5678, 4
      %v6230 = vpop.permute.xlu0 %6229
      %6231 = vrot.lane.b32.xlu0 %v5679, 4
      %v6232 = vpop.permute.xlu0 %6231
      %6233 = vrot.lane.b32.xlu0 %v5680, 4
      %v6234 = vpop.permute.xlu0 %6233
      %6235 = vrot.lane.b32.xlu0 %v5681, 4
      %v6236 = vpop.permute.xlu0 %6235
      %6237 = vrot.lane.b32.xlu0 %v5682, 4
      %v6238 = vpop.permute.xlu0 %6237
      %6239 = vrot.lane.b32.xlu0 %v5683, 4
      %v6240 = vpop.permute.xlu0 %6239
      %6241 = vrot.lane.b32.xlu0 %v5684, 4
      %v6242 = vpop.permute.xlu0 %6241
      %6243 = vrot.lane.b32.xlu0 %v5685, 4
      %v6244 = vpop.permute.xlu0 %6243
      %6245 = vrot.lane.b32.xlu0 %v5686, 4
      %v6246 = vpop.permute.xlu0 %6245
      %6247 = vrot.lane.b32.xlu0 %v5687, 4
      %v6248 = vpop.permute.xlu0 %6247
      %6249 = vrot.lane.b32.xlu0 %v5688, 4
      %v6250 = vpop.permute.xlu0 %6249
      %6251 = vrot.lane.b32.xlu0 %v5689, 4
      %v6252 = vpop.permute.xlu0 %6251
      %6253 = vrot.lane.b32.xlu0 %v5690, 4
      %v6254 = vpop.permute.xlu0 %6253
      %6255 = vrot.lane.b32.xlu0 %v5691, 4
      %v6256 = vpop.permute.xlu0 %6255
      %6257 = vrot.lane.b32.xlu0 %v5692, 4
      %v6258 = vpop.permute.xlu0 %6257
      %6259 = vrot.lane.b32.xlu0 %v5693, 4
      %v6260 = vpop.permute.xlu0 %6259
      %6261 = vrot.lane.b32.xlu0 %v5694, 4
      %v6262 = vpop.permute.xlu0 %6261
      %6263 = vrot.lane.b32.xlu0 %v5695, 4
      %v6264 = vpop.permute.xlu0 %6263
      %6265 = vrot.lane.b32.xlu0 %v5696, 4
      %v6266 = vpop.permute.xlu0 %6265
      %6267 = vrot.lane.b32.xlu0 %v5697, 4
      %v6268 = vpop.permute.xlu0 %6267
      %6269 = vrot.lane.b32.xlu0 %v5698, 4
      %v6270 = vpop.permute.xlu0 %6269
      %6271 = vrot.lane.b32.xlu0 %v5699, 4
      %v6272 = vpop.permute.xlu0 %6271
      %6273 = vrot.lane.b32.xlu0 %v5700, 4
      %v6274 = vpop.permute.xlu0 %6273
      %6275 = vrot.lane.b32.xlu0 %v5701, 4
      %v6276 = vpop.permute.xlu0 %6275
      %6277 = vrot.lane.b32.xlu0 %v5702, 4
      %v6278 = vpop.permute.xlu0 %6277
      %6279 = vrot.lane.b32.xlu0 %v5703, 4
      %v6280 = vpop.permute.xlu0 %6279
      %6281 = vrot.lane.b32.xlu0 %v5704, 4
      %v6282 = vpop.permute.xlu0 %6281
      %6283 = vrot.lane.b32.xlu0 %v5705, 4
      %v6284 = vpop.permute.xlu0 %6283
      %6285 = vrot.lane.b32.xlu0 %v5706, 4
      %v6286 = vpop.permute.xlu0 %6285
      %6287 = vrot.lane.b32.xlu0 %v5707, 4
      %v6288 = vpop.permute.xlu0 %6287
      %6354 = vrot.lane.b32.xlu0 %v6033, 8
      %v6355 = vpop.permute.xlu0 %6354
      %6356 = vrot.lane.b32.xlu0 %v6160, 8
      %v6357 = vpop.permute.xlu0 %6356
      %6358 = vrot.lane.b32.xlu0 %v6037, 8
      %v6359 = vpop.permute.xlu0 %6358
      %6360 = vrot.lane.b32.xlu0 %v6039, 8
      %v6361 = vpop.permute.xlu0 %6360
      %6362 = vrot.lane.b32.xlu0 %v6041, 8
      %v6363 = vpop.permute.xlu0 %6362
      %6364 = vrot.lane.b32.xlu0 %v6043, 8
      %v6365 = vpop.permute.xlu0 %6364
      %6366 = vrot.lane.b32.xlu0 %v6045, 8
      %v6367 = vpop.permute.xlu0 %6366
      %6368 = vrot.lane.b32.xlu0 %v6047, 8
      %v6369 = vpop.permute.xlu0 %6368
      %6370 = vrot.lane.b32.xlu0 %v6049, 8
      %v6371 = vpop.permute.xlu0 %6370
      %6372 = vrot.lane.b32.xlu0 %v6051, 8
      %v6373 = vpop.permute.xlu0 %6372
      %6374 = vrot.lane.b32.xlu0 %v6053, 8
      %v6375 = vpop.permute.xlu0 %6374
      %6376 = vrot.lane.b32.xlu0 %v6055, 8
      %v6377 = vpop.permute.xlu0 %6376
      %6378 = vrot.lane.b32.xlu0 %v6057, 8
      %v6379 = vpop.permute.xlu0 %6378
      %6380 = vrot.lane.b32.xlu0 %v6059, 8
      %v6381 = vpop.permute.xlu0 %6380
      %6382 = vrot.lane.b32.xlu0 %v6061, 8
      %v6383 = vpop.permute.xlu0 %6382
      %6384 = vrot.lane.b32.xlu0 %v6063, 8
      %v6385 = vpop.permute.xlu0 %6384
      %6386 = vrot.lane.b32.xlu0 %v6065, 8
      %v6387 = vpop.permute.xlu0 %6386
      %6388 = vrot.lane.b32.xlu0 %v6067, 8
      %v6389 = vpop.permute.xlu0 %6388
      %6390 = vrot.lane.b32.xlu0 %v6069, 8
      %v6391 = vpop.permute.xlu0 %6390
      %6392 = vrot.lane.b32.xlu0 %v6071, 8
      %v6393 = vpop.permute.xlu0 %6392
      %6394 = vrot.lane.b32.xlu0 %v6073, 8
      %v6395 = vpop.permute.xlu0 %6394
      %6396 = vrot.lane.b32.xlu0 %v6075, 8
      %v6397 = vpop.permute.xlu0 %6396
      %6398 = vrot.lane.b32.xlu0 %v6077, 8
      %v6399 = vpop.permute.xlu0 %6398
      %6400 = vrot.lane.b32.xlu0 %v6079, 8
      %v6401 = vpop.permute.xlu0 %6400
      %6402 = vrot.lane.b32.xlu0 %v6081, 8
      %v6403 = vpop.permute.xlu0 %6402
      %6404 = vrot.lane.b32.xlu0 %v6083, 8
      %v6405 = vpop.permute.xlu0 %6404
      %6406 = vrot.lane.b32.xlu0 %v6085, 8
      %v6407 = vpop.permute.xlu0 %6406
      %6408 = vrot.lane.b32.xlu0 %v6087, 8
      %v6409 = vpop.permute.xlu0 %6408
      %6410 = vrot.lane.b32.xlu0 %v6089, 8
      %v6411 = vpop.permute.xlu0 %6410
      %6412 = vrot.lane.b32.xlu0 %v6091, 8
      %v6413 = vpop.permute.xlu0 %6412
      %6414 = vrot.lane.b32.xlu0 %v6093, 8
      %v6415 = vpop.permute.xlu0 %6414
      %6416 = vrot.lane.b32.xlu0 %v6095, 8
      %v6417 = vpop.permute.xlu0 %6416
      %6418 = vrot.lane.b32.xlu0 %v6097, 8
      %v6419 = vpop.permute.xlu0 %6418
      %6420 = vrot.lane.b32.xlu0 %v6099, 8
      %v6421 = vpop.permute.xlu0 %6420
      %6422 = vrot.lane.b32.xlu0 %v6101, 8
      %v6423 = vpop.permute.xlu0 %6422
      %6424 = vrot.lane.b32.xlu0 %v6103, 8
      %v6425 = vpop.permute.xlu0 %6424
      %6426 = vrot.lane.b32.xlu0 %v6105, 8
      %v6427 = vpop.permute.xlu0 %6426
      %6428 = vrot.lane.b32.xlu0 %v6107, 8
      %v6429 = vpop.permute.xlu0 %6428
      %6430 = vrot.lane.b32.xlu0 %v6109, 8
      %v6431 = vpop.permute.xlu0 %6430
      %6432 = vrot.lane.b32.xlu0 %v6111, 8
      %v6433 = vpop.permute.xlu0 %6432
      %6434 = vrot.lane.b32.xlu0 %v6113, 8
      %v6435 = vpop.permute.xlu0 %6434
      %6436 = vrot.lane.b32.xlu0 %v6115, 8
      %v6437 = vpop.permute.xlu0 %6436
      %6438 = vrot.lane.b32.xlu0 %v6117, 8
      %v6439 = vpop.permute.xlu0 %6438
      %6440 = vrot.lane.b32.xlu0 %v6119, 8
      %v6441 = vpop.permute.xlu0 %6440
      %6442 = vrot.lane.b32.xlu0 %v6121, 8
      %v6443 = vpop.permute.xlu0 %6442
      %6444 = vrot.lane.b32.xlu0 %v6123, 8
      %v6445 = vpop.permute.xlu0 %6444
      %6446 = vrot.lane.b32.xlu0 %v6125, 8
      %v6447 = vpop.permute.xlu0 %6446
      %6448 = vrot.lane.b32.xlu0 %v6127, 8
      %v6449 = vpop.permute.xlu0 %6448
      %6450 = vrot.lane.b32.xlu0 %v6129, 8
      %v6451 = vpop.permute.xlu0 %6450
      %6452 = vrot.lane.b32.xlu0 %v6131, 8
      %v6453 = vpop.permute.xlu0 %6452
      %6454 = vrot.lane.b32.xlu0 %v6133, 8
      %v6455 = vpop.permute.xlu0 %6454
      %6456 = vrot.lane.b32.xlu0 %v6135, 8
      %v6457 = vpop.permute.xlu0 %6456
      %6458 = vrot.lane.b32.xlu0 %v6137, 8
      %v6459 = vpop.permute.xlu0 %6458
      %6460 = vrot.lane.b32.xlu0 %v6139, 8
      %v6461 = vpop.permute.xlu0 %6460
      %6462 = vrot.lane.b32.xlu0 %v6141, 8
      %v6463 = vpop.permute.xlu0 %6462
      %6464 = vrot.lane.b32.xlu0 %v6143, 8
      %v6465 = vpop.permute.xlu0 %6464
      %6466 = vrot.lane.b32.xlu0 %v6145, 8
      %v6467 = vpop.permute.xlu0 %6466
      %6468 = vrot.lane.b32.xlu0 %v6147, 8
      %v6469 = vpop.permute.xlu0 %6468
      %6470 = vrot.lane.b32.xlu0 %v6149, 8
      %v6471 = vpop.permute.xlu0 %6470
      %6472 = vrot.lane.b32.xlu0 %v6151, 8
      %v6473 = vpop.permute.xlu0 %6472
      %6474 = vrot.lane.b32.xlu0 %v6153, 8
      %v6475 = vpop.permute.xlu0 %6474
      %6476 = vrot.lane.b32.xlu0 %v6155, 8
      %v6477 = vpop.permute.xlu0 %6476
      %6478 = vrot.lane.b32.xlu0 %v6157, 8
      %v6479 = vpop.permute.xlu0 %6478
      %6480 = vrot.lane.b32.xlu0 %v6158, 8
      %v6481 = vpop.permute.xlu0 %6480
      %6547 = vrot.lane.b32.xlu0 %v6030, 12
      %v6548 = vpop.permute.xlu0 %6547
      %6549 = vrot.lane.b32.xlu0 %v5848, 12
      %v6550 = vpop.permute.xlu0 %6549
      %6551 = vrot.lane.b32.xlu0 %v5850, 12
      %v6552 = vpop.permute.xlu0 %6551
      %6553 = vrot.lane.b32.xlu0 %v5852, 12
      %v6554 = vpop.permute.xlu0 %6553
      %6555 = vrot.lane.b32.xlu0 %v5854, 12
      %v6556 = vpop.permute.xlu0 %6555
      %6557 = vrot.lane.b32.xlu0 %v5856, 12
      %v6558 = vpop.permute.xlu0 %6557
      %6559 = vrot.lane.b32.xlu0 %v5858, 12
      %v6560 = vpop.permute.xlu0 %6559
      %6561 = vrot.lane.b32.xlu0 %v5860, 12
      %v6562 = vpop.permute.xlu0 %6561
      %6563 = vrot.lane.b32.xlu0 %v5862, 12
      %v6564 = vpop.permute.xlu0 %6563
      %6565 = vrot.lane.b32.xlu0 %v5864, 12
      %v6566 = vpop.permute.xlu0 %6565
      %6567 = vrot.lane.b32.xlu0 %v5866, 12
      %v6568 = vpop.permute.xlu0 %6567
      %6569 = vrot.lane.b32.xlu0 %v5868, 12
      %v6570 = vpop.permute.xlu0 %6569
      %6571 = vrot.lane.b32.xlu0 %v5870, 12
      %v6572 = vpop.permute.xlu0 %6571
      %6573 = vrot.lane.b32.xlu0 %v5872, 12
      %v6574 = vpop.permute.xlu0 %6573
      %6575 = vrot.lane.b32.xlu0 %v5874, 12
      %v6576 = vpop.permute.xlu0 %6575
      %6577 = vrot.lane.b32.xlu0 %v5876, 12
      %v6578 = vpop.permute.xlu0 %6577
      %6579 = vrot.lane.b32.xlu0 %v5878, 12
      %v6580 = vpop.permute.xlu0 %6579
      %6581 = vrot.lane.b32.xlu0 %v5880, 12
      %v6582 = vpop.permute.xlu0 %6581
      %6583 = vrot.lane.b32.xlu0 %v5882, 12
      %v6584 = vpop.permute.xlu0 %6583
      %6585 = vrot.lane.b32.xlu0 %v5884, 12
      %v6586 = vpop.permute.xlu0 %6585
      %6587 = vrot.lane.b32.xlu0 %v5886, 12
      %v6588 = vpop.permute.xlu0 %6587
      %6589 = vrot.lane.b32.xlu0 %v5888, 12
      %v6590 = vpop.permute.xlu0 %6589
      %6591 = vrot.lane.b32.xlu0 %v5890, 12
      %v6592 = vpop.permute.xlu0 %6591
      %6593 = vrot.lane.b32.xlu0 %v5892, 12
      %v6594 = vpop.permute.xlu0 %6593
      %6595 = vrot.lane.b32.xlu0 %v5894, 12
      %v6596 = vpop.permute.xlu0 %6595
      %6597 = vrot.lane.b32.xlu0 %v5896, 12
      %v6598 = vpop.permute.xlu0 %6597
      %6599 = vrot.lane.b32.xlu0 %v5898, 12
      %v6600 = vpop.permute.xlu0 %6599
      %6601 = vrot.lane.b32.xlu0 %v5900, 12
      %v6602 = vpop.permute.xlu0 %6601
      %6603 = vrot.lane.b32.xlu0 %v5902, 12
      %v6604 = vpop.permute.xlu0 %6603
      %6605 = vrot.lane.b32.xlu0 %v5904, 12
      %v6606 = vpop.permute.xlu0 %6605
      %6607 = vrot.lane.b32.xlu0 %v5906, 12
      %v6608 = vpop.permute.xlu0 %6607
      %6609 = vrot.lane.b32.xlu0 %v5908, 12
      %v6610 = vpop.permute.xlu0 %6609
      %6611 = vrot.lane.b32.xlu0 %v5910, 12
      %v6612 = vpop.permute.xlu0 %6611
      %6613 = vrot.lane.b32.xlu0 %v5912, 12
      %v6614 = vpop.permute.xlu0 %6613
      %6615 = vrot.lane.b32.xlu0 %v5914, 12
      %v6616 = vpop.permute.xlu0 %6615
      %6617 = vrot.lane.b32.xlu0 %v5916, 12
      %v6618 = vpop.permute.xlu0 %6617
      %6619 = vrot.lane.b32.xlu0 %v5918, 12
      %v6620 = vpop.permute.xlu0 %6619
      %6621 = vrot.lane.b32.xlu0 %v5920, 12
      %v6622 = vpop.permute.xlu0 %6621
      %6623 = vrot.lane.b32.xlu0 %v5922, 12
      %v6624 = vpop.permute.xlu0 %6623
      %6625 = vrot.lane.b32.xlu0 %v5924, 12
      %v6626 = vpop.permute.xlu0 %6625
      %6627 = vrot.lane.b32.xlu0 %v5926, 12
      %v6628 = vpop.permute.xlu0 %6627
      %6629 = vrot.lane.b32.xlu0 %v5928, 12
      %v6630 = vpop.permute.xlu0 %6629
      %6631 = vrot.lane.b32.xlu0 %v5930, 12
      %v6632 = vpop.permute.xlu0 %6631
      %6633 = vrot.lane.b32.xlu0 %v5932, 12
      %v6634 = vpop.permute.xlu0 %6633
      %6635 = vrot.lane.b32.xlu0 %v5934, 12
      %v6636 = vpop.permute.xlu0 %6635
      %6637 = vrot.lane.b32.xlu0 %v5936, 12
      %v6638 = vpop.permute.xlu0 %6637
      %6639 = vrot.lane.b32.xlu0 %v5938, 12
      %v6640 = vpop.permute.xlu0 %6639
      %6641 = vrot.lane.b32.xlu0 %v5940, 12
      %v6642 = vpop.permute.xlu0 %6641
      %6643 = vrot.lane.b32.xlu0 %v5942, 12
      %v6644 = vpop.permute.xlu0 %6643
      %6645 = vrot.lane.b32.xlu0 %v5944, 12
      %v6646 = vpop.permute.xlu0 %6645
      %6647 = vrot.lane.b32.xlu0 %v5946, 12
      %v6648 = vpop.permute.xlu0 %6647
      %6649 = vrot.lane.b32.xlu0 %v5948, 12
      %v6650 = vpop.permute.xlu0 %6649
      %6651 = vrot.lane.b32.xlu0 %v5950, 12
      %v6652 = vpop.permute.xlu0 %6651
      %6653 = vrot.lane.b32.xlu0 %v5952, 12
      %v6654 = vpop.permute.xlu0 %6653
      %6655 = vrot.lane.b32.xlu0 %v5954, 12
      %v6656 = vpop.permute.xlu0 %6655
      %6657 = vrot.lane.b32.xlu0 %v5956, 12
      %v6658 = vpop.permute.xlu0 %6657
      %6659 = vrot.lane.b32.xlu0 %v5958, 12
      %v6660 = vpop.permute.xlu0 %6659
      %6661 = vrot.lane.b32.xlu0 %v5960, 12
      %v6662 = vpop.permute.xlu0 %6661
      %6663 = vrot.lane.b32.xlu0 %v5962, 12
      %v6664 = vpop.permute.xlu0 %6663
      %6665 = vrot.lane.b32.xlu0 %v5964, 12
      %v6666 = vpop.permute.xlu0 %6665
      %6667 = vrot.lane.b32.xlu0 %v5966, 12
      %v6668 = vpop.permute.xlu0 %6667
      %6669 = vrot.lane.b32.xlu0 %v5967, 12
      %v6670 = vpop.permute.xlu0 %6669
      %6671 = vrot.lane.b32.xlu0 %v5779, 12
      %v6672 = vpop.permute.xlu0 %6671
      %6673 = vrot.lane.b32.xlu0 %v5781, 12
      %v6674 = vpop.permute.xlu0 %6673
      %6739 = vrot.lane.b32.xlu0 %v5646, 16
      %v6740 = vpop.permute.xlu0 %6739
      %6741 = vrot.lane.b32.xlu0 %v5647, 16
      %v6742 = vpop.permute.xlu0 %6741
      %6743 = vrot.lane.b32.xlu0 %v5648, 16
      %v6744 = vpop.permute.xlu0 %6743
      %6745 = vrot.lane.b32.xlu0 %v5649, 16
      %v6746 = vpop.permute.xlu0 %6745
      %6747 = vrot.lane.b32.xlu0 %v5650, 16
      %v6748 = vpop.permute.xlu0 %6747
      %6749 = vrot.lane.b32.xlu0 %v5651, 16
      %v6750 = vpop.permute.xlu0 %6749
      %6751 = vrot.lane.b32.xlu0 %v5652, 16
      %v6752 = vpop.permute.xlu0 %6751
      %6753 = vrot.lane.b32.xlu0 %v5653, 16
      %v6754 = vpop.permute.xlu0 %6753
      %6755 = vrot.lane.b32.xlu0 %v5654, 16
      %v6756 = vpop.permute.xlu0 %6755
      %6757 = vrot.lane.b32.xlu0 %v5655, 16
      %v6758 = vpop.permute.xlu0 %6757
      %6759 = vrot.lane.b32.xlu0 %v5656, 16
      %v6760 = vpop.permute.xlu0 %6759
      %6761 = vrot.lane.b32.xlu0 %v5657, 16
      %v6762 = vpop.permute.xlu0 %6761
      %6763 = vrot.lane.b32.xlu0 %v5658, 16
      %v6764 = vpop.permute.xlu0 %6763
      %6765 = vrot.lane.b32.xlu0 %v5659, 16
      %v6766 = vpop.permute.xlu0 %6765
      %6767 = vrot.lane.b32.xlu0 %v5660, 16
      %v6768 = vpop.permute.xlu0 %6767
      %6769 = vrot.lane.b32.xlu0 %v5661, 16
      %v6770 = vpop.permute.xlu0 %6769
      %6771 = vrot.lane.b32.xlu0 %v5662, 16
      %v6772 = vpop.permute.xlu0 %6771
      %6773 = vrot.lane.b32.xlu0 %v5663, 16
      %v6774 = vpop.permute.xlu0 %6773
      %6775 = vrot.lane.b32.xlu0 %v5664, 16
      %v6776 = vpop.permute.xlu0 %6775
      %6777 = vrot.lane.b32.xlu0 %v5665, 16
      %v6778 = vpop.permute.xlu0 %6777
      %6779 = vrot.lane.b32.xlu0 %v5666, 16
      %v6780 = vpop.permute.xlu0 %6779
      %6781 = vrot.lane.b32.xlu0 %v5667, 16
      %v6782 = vpop.permute.xlu0 %6781
      %6783 = vrot.lane.b32.xlu0 %v5668, 16
      %v6784 = vpop.permute.xlu0 %6783
      %6785 = vrot.lane.b32.xlu0 %v5669, 16
      %v6786 = vpop.permute.xlu0 %6785
      %6787 = vrot.lane.b32.xlu0 %v5670, 16
      %v6788 = vpop.permute.xlu0 %6787
      %6789 = vrot.lane.b32.xlu0 %v5671, 16
      %v6790 = vpop.permute.xlu0 %6789
      %6791 = vrot.lane.b32.xlu0 %v5672, 16
      %v6792 = vpop.permute.xlu0 %6791
      %6793 = vrot.lane.b32.xlu0 %v5673, 16
      %v6794 = vpop.permute.xlu0 %6793
      %6795 = vrot.lane.b32.xlu0 %v5674, 16
      %v6796 = vpop.permute.xlu0 %6795
      %6797 = vrot.lane.b32.xlu0 %v5675, 16
      %v6798 = vpop.permute.xlu0 %6797
      %6799 = vrot.lane.b32.xlu0 %v5676, 16
      %v6800 = vpop.permute.xlu0 %6799
      %6801 = vrot.lane.b32.xlu0 %v5677, 16
      %v6802 = vpop.permute.xlu0 %6801
      %6803 = vrot.lane.b32.xlu0 %v5678, 16
      %v6804 = vpop.permute.xlu0 %6803
      %6805 = vrot.lane.b32.xlu0 %v5679, 16
      %v6806 = vpop.permute.xlu0 %6805
      %6807 = vrot.lane.b32.xlu0 %v5680, 16
      %v6808 = vpop.permute.xlu0 %6807
      %6809 = vrot.lane.b32.xlu0 %v5681, 16
      %v6810 = vpop.permute.xlu0 %6809
      %6811 = vrot.lane.b32.xlu0 %v5682, 16
      %v6812 = vpop.permute.xlu0 %6811
      %6813 = vrot.lane.b32.xlu0 %v5683, 16
      %v6814 = vpop.permute.xlu0 %6813
      %6815 = vrot.lane.b32.xlu0 %v5684, 16
      %v6816 = vpop.permute.xlu0 %6815
      %6817 = vrot.lane.b32.xlu0 %v5685, 16
      %v6818 = vpop.permute.xlu0 %6817
      %6819 = vrot.lane.b32.xlu0 %v5686, 16
      %v6820 = vpop.permute.xlu0 %6819
      %6821 = vrot.lane.b32.xlu0 %v5687, 16
      %v6822 = vpop.permute.xlu0 %6821
      %6823 = vrot.lane.b32.xlu0 %v5688, 16
      %v6824 = vpop.permute.xlu0 %6823
      %6825 = vrot.lane.b32.xlu0 %v5689, 16
      %v6826 = vpop.permute.xlu0 %6825
      %6827 = vrot.lane.b32.xlu0 %v5690, 16
      %v6828 = vpop.permute.xlu0 %6827
      %6829 = vrot.lane.b32.xlu0 %v5691, 16
      %v6830 = vpop.permute.xlu0 %6829
      %6831 = vrot.lane.b32.xlu0 %v5692, 16
      %v6832 = vpop.permute.xlu0 %6831
      %6833 = vrot.lane.b32.xlu0 %v5693, 16
      %v6834 = vpop.permute.xlu0 %6833
      %6835 = vrot.lane.b32.xlu0 %v5694, 16
      %v6836 = vpop.permute.xlu0 %6835
      %6837 = vrot.lane.b32.xlu0 %v5695, 16
      %v6838 = vpop.permute.xlu0 %6837
      %6839 = vrot.lane.b32.xlu0 %v5696, 16
      %v6840 = vpop.permute.xlu0 %6839
      %6841 = vrot.lane.b32.xlu0 %v5697, 16
      %v6842 = vpop.permute.xlu0 %6841
      %6843 = vrot.lane.b32.xlu0 %v5698, 16
      %v6844 = vpop.permute.xlu0 %6843
      %6845 = vrot.lane.b32.xlu0 %v5699, 16
      %v6846 = vpop.permute.xlu0 %6845
      %6847 = vrot.lane.b32.xlu0 %v5700, 16
      %v6848 = vpop.permute.xlu0 %6847
      %6849 = vrot.lane.b32.xlu0 %v5701, 16
      %v6850 = vpop.permute.xlu0 %6849
      %6851 = vrot.lane.b32.xlu0 %v5702, 16
      %v6852 = vpop.permute.xlu0 %6851
      %6853 = vrot.lane.b32.xlu0 %v5703, 16
      %v6854 = vpop.permute.xlu0 %6853
      %6855 = vrot.lane.b32.xlu0 %v5704, 16
      %v6856 = vpop.permute.xlu0 %6855
      %6857 = vrot.lane.b32.xlu0 %v5705, 16
      %v6858 = vpop.permute.xlu0 %6857
      %6859 = vrot.lane.b32.xlu0 %v5706, 16
      %v6860 = vpop.permute.xlu0 %6859
      %6861 = vrot.lane.b32.xlu0 %v5707, 16
      %v6862 = vpop.permute.xlu0 %6861
      %6863 = vrot.lane.b32.xlu0 %v5708, 16
      %v6864 = vpop.permute.xlu0 %6863
      %6865 = vrot.lane.b32.xlu0 %v5709, 16
      %v6866 = vpop.permute.xlu0 %6865
      %6931 = vrot.lane.b32.xlu0 %v6037, 20
      %v6932 = vpop.permute.xlu0 %6931
      %6933 = vrot.lane.b32.xlu0 %v6039, 20
      %v6934 = vpop.permute.xlu0 %6933
      %6935 = vrot.lane.b32.xlu0 %v6041, 20
      %v6936 = vpop.permute.xlu0 %6935
      %6937 = vrot.lane.b32.xlu0 %v6043, 20
      %v6938 = vpop.permute.xlu0 %6937
      %6939 = vrot.lane.b32.xlu0 %v6045, 20
      %v6940 = vpop.permute.xlu0 %6939
      %6941 = vrot.lane.b32.xlu0 %v6047, 20
      %v6942 = vpop.permute.xlu0 %6941
      %6943 = vrot.lane.b32.xlu0 %v6049, 20
      %v6944 = vpop.permute.xlu0 %6943
      %6945 = vrot.lane.b32.xlu0 %v6051, 20
      %v6946 = vpop.permute.xlu0 %6945
      %6947 = vrot.lane.b32.xlu0 %v6053, 20
      %v6948 = vpop.permute.xlu0 %6947
      %6949 = vrot.lane.b32.xlu0 %v6055, 20
      %v6950 = vpop.permute.xlu0 %6949
      %6951 = vrot.lane.b32.xlu0 %v6057, 20
      %v6952 = vpop.permute.xlu0 %6951
      %6953 = vrot.lane.b32.xlu0 %v6059, 20
      %v6954 = vpop.permute.xlu0 %6953
      %6955 = vrot.lane.b32.xlu0 %v6061, 20
      %v6956 = vpop.permute.xlu0 %6955
      %6957 = vrot.lane.b32.xlu0 %v6063, 20
      %v6958 = vpop.permute.xlu0 %6957
      %6959 = vrot.lane.b32.xlu0 %v6065, 20
      %v6960 = vpop.permute.xlu0 %6959
      %6961 = vrot.lane.b32.xlu0 %v6067, 20
      %v6962 = vpop.permute.xlu0 %6961
      %6963 = vrot.lane.b32.xlu0 %v6069, 20
      %v6964 = vpop.permute.xlu0 %6963
      %6965 = vrot.lane.b32.xlu0 %v6071, 20
      %v6966 = vpop.permute.xlu0 %6965
      %6967 = vrot.lane.b32.xlu0 %v6073, 20
      %v6968 = vpop.permute.xlu0 %6967
      %6969 = vrot.lane.b32.xlu0 %v6075, 20
      %v6970 = vpop.permute.xlu0 %6969
      %6971 = vrot.lane.b32.xlu0 %v6077, 20
      %v6972 = vpop.permute.xlu0 %6971
      %6973 = vrot.lane.b32.xlu0 %v6079, 20
      %v6974 = vpop.permute.xlu0 %6973
      %6975 = vrot.lane.b32.xlu0 %v6081, 20
      %v6976 = vpop.permute.xlu0 %6975
      %6977 = vrot.lane.b32.xlu0 %v6083, 20
      %v6978 = vpop.permute.xlu0 %6977
      %6979 = vrot.lane.b32.xlu0 %v6085, 20
      %v6980 = vpop.permute.xlu0 %6979
      %6981 = vrot.lane.b32.xlu0 %v6087, 20
      %v6982 = vpop.permute.xlu0 %6981
      %6983 = vrot.lane.b32.xlu0 %v6089, 20
      %v6984 = vpop.permute.xlu0 %6983
      %6985 = vrot.lane.b32.xlu0 %v6091, 20
      %v6986 = vpop.permute.xlu0 %6985
      %6987 = vrot.lane.b32.xlu0 %v6093, 20
      %v6988 = vpop.permute.xlu0 %6987
      %6989 = vrot.lane.b32.xlu0 %v6095, 20
      %v6990 = vpop.permute.xlu0 %6989
      %6991 = vrot.lane.b32.xlu0 %v6097, 20
      %v6992 = vpop.permute.xlu0 %6991
      %6993 = vrot.lane.b32.xlu0 %v6099, 20
      %v6994 = vpop.permute.xlu0 %6993
      %6995 = vrot.lane.b32.xlu0 %v6101, 20
      %v6996 = vpop.permute.xlu0 %6995
      %6997 = vrot.lane.b32.xlu0 %v6103, 20
      %v6998 = vpop.permute.xlu0 %6997
      %6999 = vrot.lane.b32.xlu0 %v6105, 20
      %v7000 = vpop.permute.xlu0 %6999
      %7001 = vrot.lane.b32.xlu0 %v6107, 20
      %v7002 = vpop.permute.xlu0 %7001
      %7003 = vrot.lane.b32.xlu0 %v6109, 20
      %v7004 = vpop.permute.xlu0 %7003
      %7005 = vrot.lane.b32.xlu0 %v6111, 20
      %v7006 = vpop.permute.xlu0 %7005
      %7007 = vrot.lane.b32.xlu0 %v6113, 20
      %v7008 = vpop.permute.xlu0 %7007
      %7009 = vrot.lane.b32.xlu0 %v6115, 20
      %v7010 = vpop.permute.xlu0 %7009
      %7011 = vrot.lane.b32.xlu0 %v6117, 20
      %v7012 = vpop.permute.xlu0 %7011
      %7013 = vrot.lane.b32.xlu0 %v6119, 20
      %v7014 = vpop.permute.xlu0 %7013
      %7015 = vrot.lane.b32.xlu0 %v6121, 20
      %v7016 = vpop.permute.xlu0 %7015
      %7017 = vrot.lane.b32.xlu0 %v6123, 20
      %v7018 = vpop.permute.xlu0 %7017
      %7019 = vrot.lane.b32.xlu0 %v6125, 20
      %v7020 = vpop.permute.xlu0 %7019
      %7021 = vrot.lane.b32.xlu0 %v6127, 20
      %v7022 = vpop.permute.xlu0 %7021
      %7023 = vrot.lane.b32.xlu0 %v6129, 20
      %v7024 = vpop.permute.xlu0 %7023
      %7025 = vrot.lane.b32.xlu0 %v6131, 20
      %v7026 = vpop.permute.xlu0 %7025
      %7027 = vrot.lane.b32.xlu0 %v6133, 20
      %v7028 = vpop.permute.xlu0 %7027
      %7029 = vrot.lane.b32.xlu0 %v6135, 20
      %v7030 = vpop.permute.xlu0 %7029
      %7031 = vrot.lane.b32.xlu0 %v6137, 20
      %v7032 = vpop.permute.xlu0 %7031
      %7033 = vrot.lane.b32.xlu0 %v6139, 20
      %v7034 = vpop.permute.xlu0 %7033
      %7035 = vrot.lane.b32.xlu0 %v6141, 20
      %v7036 = vpop.permute.xlu0 %7035
      %7037 = vrot.lane.b32.xlu0 %v6143, 20
      %v7038 = vpop.permute.xlu0 %7037
      %7039 = vrot.lane.b32.xlu0 %v6145, 20
      %v7040 = vpop.permute.xlu0 %7039
      %7041 = vrot.lane.b32.xlu0 %v6147, 20
      %v7042 = vpop.permute.xlu0 %7041
      %7043 = vrot.lane.b32.xlu0 %v6149, 20
      %v7044 = vpop.permute.xlu0 %7043
      %7045 = vrot.lane.b32.xlu0 %v6151, 20
      %v7046 = vpop.permute.xlu0 %7045
      %7047 = vrot.lane.b32.xlu0 %v6153, 20
      %v7048 = vpop.permute.xlu0 %7047
      %7049 = vrot.lane.b32.xlu0 %v6155, 20
      %v7050 = vpop.permute.xlu0 %7049
      %7051 = vrot.lane.b32.xlu0 %v6157, 20
      %v7052 = vpop.permute.xlu0 %7051
      %7053 = vrot.lane.b32.xlu0 %v6158, 20
      %v7054 = vpop.permute.xlu0 %7053
      %7055 = vrot.lane.b32.xlu0 %v6033, 20
      %v7056 = vpop.permute.xlu0 %7055
      %7057 = vrot.lane.b32.xlu0 %v6160, 20
      %v7058 = vpop.permute.xlu0 %7057
      %7123 = vrot.lane.b32.xlu0 %v5850, 24
      %v7124 = vpop.permute.xlu0 %7123
      %7125 = vrot.lane.b32.xlu0 %v5852, 24
      %v7126 = vpop.permute.xlu0 %7125
      %7127 = vrot.lane.b32.xlu0 %v5854, 24
      %v7128 = vpop.permute.xlu0 %7127
      %7129 = vrot.lane.b32.xlu0 %v5856, 24
      %v7130 = vpop.permute.xlu0 %7129
      %7131 = vrot.lane.b32.xlu0 %v5858, 24
      %v7132 = vpop.permute.xlu0 %7131
      %7133 = vrot.lane.b32.xlu0 %v5860, 24
      %v7134 = vpop.permute.xlu0 %7133
      %7135 = vrot.lane.b32.xlu0 %v5862, 24
      %v7136 = vpop.permute.xlu0 %7135
      %7137 = vrot.lane.b32.xlu0 %v5864, 24
      %v7138 = vpop.permute.xlu0 %7137
      %7139 = vrot.lane.b32.xlu0 %v5866, 24
      %v7140 = vpop.permute.xlu0 %7139
      %7141 = vrot.lane.b32.xlu0 %v5868, 24
      %v7142 = vpop.permute.xlu0 %7141
      %7143 = vrot.lane.b32.xlu0 %v5870, 24
      %v7144 = vpop.permute.xlu0 %7143
      %7145 = vrot.lane.b32.xlu0 %v5872, 24
      %v7146 = vpop.permute.xlu0 %7145
      %7147 = vrot.lane.b32.xlu0 %v5874, 24
      %v7148 = vpop.permute.xlu0 %7147
      %7149 = vrot.lane.b32.xlu0 %v5876, 24
      %v7150 = vpop.permute.xlu0 %7149
      %7151 = vrot.lane.b32.xlu0 %v5878, 24
      %v7152 = vpop.permute.xlu0 %7151
      %7153 = vrot.lane.b32.xlu0 %v5880, 24
      %v7154 = vpop.permute.xlu0 %7153
      %7155 = vrot.lane.b32.xlu0 %v5882, 24
      %v7156 = vpop.permute.xlu0 %7155
      %7157 = vrot.lane.b32.xlu0 %v5884, 24
      %v7158 = vpop.permute.xlu0 %7157
      %7159 = vrot.lane.b32.xlu0 %v5886, 24
      %v7160 = vpop.permute.xlu0 %7159
      %7161 = vrot.lane.b32.xlu0 %v5888, 24
      %v7162 = vpop.permute.xlu0 %7161
      %7163 = vrot.lane.b32.xlu0 %v5890, 24
      %v7164 = vpop.permute.xlu0 %7163
      %7165 = vrot.lane.b32.xlu0 %v5892, 24
      %v7166 = vpop.permute.xlu0 %7165
      %7167 = vrot.lane.b32.xlu0 %v5894, 24
      %v7168 = vpop.permute.xlu0 %7167
      %7169 = vrot.lane.b32.xlu0 %v5896, 24
      %v7170 = vpop.permute.xlu0 %7169
      %7171 = vrot.lane.b32.xlu0 %v5898, 24
      %v7172 = vpop.permute.xlu0 %7171
      %7173 = vrot.lane.b32.xlu0 %v5900, 24
      %v7174 = vpop.permute.xlu0 %7173
      %7175 = vrot.lane.b32.xlu0 %v5902, 24
      %v7176 = vpop.permute.xlu0 %7175
      %7177 = vrot.lane.b32.xlu0 %v5904, 24
      %v7178 = vpop.permute.xlu0 %7177
      %7179 = vrot.lane.b32.xlu0 %v5906, 24
      %v7180 = vpop.permute.xlu0 %7179
      %7181 = vrot.lane.b32.xlu0 %v5908, 24
      %v7182 = vpop.permute.xlu0 %7181
      %7183 = vrot.lane.b32.xlu0 %v5910, 24
      %v7184 = vpop.permute.xlu0 %7183
      %7185 = vrot.lane.b32.xlu0 %v5912, 24
      %v7186 = vpop.permute.xlu0 %7185
      %7187 = vrot.lane.b32.xlu0 %v5914, 24
      %v7188 = vpop.permute.xlu0 %7187
      %7189 = vrot.lane.b32.xlu0 %v5916, 24
      %v7190 = vpop.permute.xlu0 %7189
      %7191 = vrot.lane.b32.xlu0 %v5918, 24
      %v7192 = vpop.permute.xlu0 %7191
      %7193 = vrot.lane.b32.xlu0 %v5920, 24
      %v7194 = vpop.permute.xlu0 %7193
      %7195 = vrot.lane.b32.xlu0 %v5922, 24
      %v7196 = vpop.permute.xlu0 %7195
      %7197 = vrot.lane.b32.xlu0 %v5924, 24
      %v7198 = vpop.permute.xlu0 %7197
      %7199 = vrot.lane.b32.xlu0 %v5926, 24
      %v7200 = vpop.permute.xlu0 %7199
      %7201 = vrot.lane.b32.xlu0 %v5928, 24
      %v7202 = vpop.permute.xlu0 %7201
      %7203 = vrot.lane.b32.xlu0 %v5930, 24
      %v7204 = vpop.permute.xlu0 %7203
      %7205 = vrot.lane.b32.xlu0 %v5932, 24
      %v7206 = vpop.permute.xlu0 %7205
      %7207 = vrot.lane.b32.xlu0 %v5934, 24
      %v7208 = vpop.permute.xlu0 %7207
      %7209 = vrot.lane.b32.xlu0 %v5936, 24
      %v7210 = vpop.permute.xlu0 %7209
      %7211 = vrot.lane.b32.xlu0 %v5938, 24
      %v7212 = vpop.permute.xlu0 %7211
      %7213 = vrot.lane.b32.xlu0 %v5940, 24
      %v7214 = vpop.permute.xlu0 %7213
      %7215 = vrot.lane.b32.xlu0 %v5942, 24
      %v7216 = vpop.permute.xlu0 %7215
      %7217 = vrot.lane.b32.xlu0 %v5944, 24
      %v7218 = vpop.permute.xlu0 %7217
      %7219 = vrot.lane.b32.xlu0 %v5946, 24
      %v7220 = vpop.permute.xlu0 %7219
      %7221 = vrot.lane.b32.xlu0 %v5948, 24
      %v7222 = vpop.permute.xlu0 %7221
      %7223 = vrot.lane.b32.xlu0 %v5950, 24
      %v7224 = vpop.permute.xlu0 %7223
      %7225 = vrot.lane.b32.xlu0 %v5952, 24
      %v7226 = vpop.permute.xlu0 %7225
      %7227 = vrot.lane.b32.xlu0 %v5954, 24
      %v7228 = vpop.permute.xlu0 %7227
      %7229 = vrot.lane.b32.xlu0 %v5956, 24
      %v7230 = vpop.permute.xlu0 %7229
      %7231 = vrot.lane.b32.xlu0 %v5958, 24
      %v7232 = vpop.permute.xlu0 %7231
      %7233 = vrot.lane.b32.xlu0 %v5960, 24
      %v7234 = vpop.permute.xlu0 %7233
      %7235 = vrot.lane.b32.xlu0 %v5962, 24
      %v7236 = vpop.permute.xlu0 %7235
      %7237 = vrot.lane.b32.xlu0 %v5964, 24
      %v7238 = vpop.permute.xlu0 %7237
      %7239 = vrot.lane.b32.xlu0 %v5966, 24
      %v7240 = vpop.permute.xlu0 %7239
      %7241 = vrot.lane.b32.xlu0 %v5967, 24
      %v7242 = vpop.permute.xlu0 %7241
      %7243 = vrot.lane.b32.xlu0 %v5779, 24
      %v7244 = vpop.permute.xlu0 %7243
      %7245 = vrot.lane.b32.xlu0 %v5781, 24
      %v7246 = vpop.permute.xlu0 %7245
      %7247 = vrot.lane.b32.xlu0 %v6030, 24
      %v7248 = vpop.permute.xlu0 %7247
      %7249 = vrot.lane.b32.xlu0 %v5848, 24
      %v7250 = vpop.permute.xlu0 %7249
      %7315 = vrot.lane.b32.xlu0 %v5648, 28
      %v7316 = vpop.permute.xlu0 %7315
      %7317 = vrot.lane.b32.xlu0 %v5649, 28
      %v7318 = vpop.permute.xlu0 %7317
      %7319 = vrot.lane.b32.xlu0 %v5650, 28
      %v7320 = vpop.permute.xlu0 %7319
      %7321 = vrot.lane.b32.xlu0 %v5651, 28
      %v7322 = vpop.permute.xlu0 %7321
      %7323 = vrot.lane.b32.xlu0 %v5652, 28
      %v7324 = vpop.permute.xlu0 %7323
      %7325 = vrot.lane.b32.xlu0 %v5653, 28
      %v7326 = vpop.permute.xlu0 %7325
      %7327 = vrot.lane.b32.xlu0 %v5654, 28
      %v7328 = vpop.permute.xlu0 %7327
      %7329 = vrot.lane.b32.xlu0 %v5655, 28
      %v7330 = vpop.permute.xlu0 %7329
      %7331 = vrot.lane.b32.xlu0 %v5656, 28
      %v7332 = vpop.permute.xlu0 %7331
      %7333 = vrot.lane.b32.xlu0 %v5657, 28
      %v7334 = vpop.permute.xlu0 %7333
      %7335 = vrot.lane.b32.xlu0 %v5658, 28
      %v7336 = vpop.permute.xlu0 %7335
      %7337 = vrot.lane.b32.xlu0 %v5659, 28
      %v7338 = vpop.permute.xlu0 %7337
      %7339 = vrot.lane.b32.xlu0 %v5660, 28
      %v7340 = vpop.permute.xlu0 %7339
      %7341 = vrot.lane.b32.xlu0 %v5661, 28
      %v7342 = vpop.permute.xlu0 %7341
      %7343 = vrot.lane.b32.xlu0 %v5662, 28
      %v7344 = vpop.permute.xlu0 %7343
      %7345 = vrot.lane.b32.xlu0 %v5663, 28
      %v7346 = vpop.permute.xlu0 %7345
      %7347 = vrot.lane.b32.xlu0 %v5664, 28
      %v7348 = vpop.permute.xlu0 %7347
      %7349 = vrot.lane.b32.xlu0 %v5665, 28
      %v7350 = vpop.permute.xlu0 %7349
      %7351 = vrot.lane.b32.xlu0 %v5666, 28
      %v7352 = vpop.permute.xlu0 %7351
      %7353 = vrot.lane.b32.xlu0 %v5667, 28
      %v7354 = vpop.permute.xlu0 %7353
      %7355 = vrot.lane.b32.xlu0 %v5668, 28
      %v7356 = vpop.permute.xlu0 %7355
      %7357 = vrot.lane.b32.xlu0 %v5669, 28
      %v7358 = vpop.permute.xlu0 %7357
      %7359 = vrot.lane.b32.xlu0 %v5670, 28
      %v7360 = vpop.permute.xlu0 %7359
      %7361 = vrot.lane.b32.xlu0 %v5671, 28
      %v7362 = vpop.permute.xlu0 %7361
      %7363 = vrot.lane.b32.xlu0 %v5672, 28
      %v7364 = vpop.permute.xlu0 %7363
      %7365 = vrot.lane.b32.xlu0 %v5673, 28
      %v7366 = vpop.permute.xlu0 %7365
      %7367 = vrot.lane.b32.xlu0 %v5674, 28
      %v7368 = vpop.permute.xlu0 %7367
      %7369 = vrot.lane.b32.xlu0 %v5675, 28
      %v7370 = vpop.permute.xlu0 %7369
      %7371 = vrot.lane.b32.xlu0 %v5676, 28
      %v7372 = vpop.permute.xlu0 %7371
      %7373 = vrot.lane.b32.xlu0 %v5677, 28
      %v7374 = vpop.permute.xlu0 %7373
      %7375 = vrot.lane.b32.xlu0 %v5678, 28
      %v7376 = vpop.permute.xlu0 %7375
      %7377 = vrot.lane.b32.xlu0 %v5679, 28
      %v7378 = vpop.permute.xlu0 %7377
      %7379 = vrot.lane.b32.xlu0 %v5680, 28
      %v7380 = vpop.permute.xlu0 %7379
      %7381 = vrot.lane.b32.xlu0 %v5681, 28
      %v7382 = vpop.permute.xlu0 %7381
      %7383 = vrot.lane.b32.xlu0 %v5682, 28
      %v7384 = vpop.permute.xlu0 %7383
      %7385 = vrot.lane.b32.xlu0 %v5683, 28
      %v7386 = vpop.permute.xlu0 %7385
      %7387 = vrot.lane.b32.xlu0 %v5684, 28
      %v7388 = vpop.permute.xlu0 %7387
      %7389 = vrot.lane.b32.xlu0 %v5685, 28
      %v7390 = vpop.permute.xlu0 %7389
      %7391 = vrot.lane.b32.xlu0 %v5686, 28
      %v7392 = vpop.permute.xlu0 %7391
      %7393 = vrot.lane.b32.xlu0 %v5687, 28
      %v7394 = vpop.permute.xlu0 %7393
      %7395 = vrot.lane.b32.xlu0 %v5688, 28
      %v7396 = vpop.permute.xlu0 %7395
      %7397 = vrot.lane.b32.xlu0 %v5689, 28
      %v7398 = vpop.permute.xlu0 %7397
      %7399 = vrot.lane.b32.xlu0 %v5690, 28
      %v7400 = vpop.permute.xlu0 %7399
      %7401 = vrot.lane.b32.xlu0 %v5691, 28
      %v7402 = vpop.permute.xlu0 %7401
      %7403 = vrot.lane.b32.xlu0 %v5692, 28
      %v7404 = vpop.permute.xlu0 %7403
      %7405 = vrot.lane.b32.xlu0 %v5693, 28
      %v7406 = vpop.permute.xlu0 %7405
      %7407 = vrot.lane.b32.xlu0 %v5694, 28
      %v7408 = vpop.permute.xlu0 %7407
      %7409 = vrot.lane.b32.xlu0 %v5695, 28
      %v7410 = vpop.permute.xlu0 %7409
      %7411 = vrot.lane.b32.xlu0 %v5696, 28
      %v7412 = vpop.permute.xlu0 %7411
      %7413 = vrot.lane.b32.xlu0 %v5697, 28
      %v7414 = vpop.permute.xlu0 %7413
      %7415 = vrot.lane.b32.xlu0 %v5698, 28
      %v7416 = vpop.permute.xlu0 %7415
      %7417 = vrot.lane.b32.xlu0 %v5699, 28
      %v7418 = vpop.permute.xlu0 %7417
      %7419 = vrot.lane.b32.xlu0 %v5700, 28
      %v7420 = vpop.permute.xlu0 %7419
      %7421 = vrot.lane.b32.xlu0 %v5701, 28
      %v7422 = vpop.permute.xlu0 %7421
      %7423 = vrot.lane.b32.xlu0 %v5702, 28
      %v7424 = vpop.permute.xlu0 %7423
      %7425 = vrot.lane.b32.xlu0 %v5703, 28
      %v7426 = vpop.permute.xlu0 %7425
      %7427 = vrot.lane.b32.xlu0 %v5704, 28
      %v7428 = vpop.permute.xlu0 %7427
      %7429 = vrot.lane.b32.xlu0 %v5705, 28
      %v7430 = vpop.permute.xlu0 %7429
      %7431 = vrot.lane.b32.xlu0 %v5706, 28
      %v7432 = vpop.permute.xlu0 %7431
      %7433 = vrot.lane.b32.xlu0 %v5707, 28
      %v7434 = vpop.permute.xlu0 %7433
      %7435 = vrot.lane.b32.xlu0 %v5708, 28
      %v7436 = vpop.permute.xlu0 %7435
      %7437 = vrot.lane.b32.xlu0 %v5709, 28
      %v7438 = vpop.permute.xlu0 %7437
      %7439 = vrot.lane.b32.xlu0 %v5646, 28
      %v7440 = vpop.permute.xlu0 %7439
      %7441 = vrot.lane.b32.xlu0 %v5647, 28
      %v7442 = vpop.permute.xlu0 %7441
      %7507 = vrot.lane.b32.xlu0 %v6041, 32
      %v7508 = vpop.permute.xlu0 %7507
      %7509 = vrot.lane.b32.xlu0 %v6043, 32
      %v7510 = vpop.permute.xlu0 %7509
      %7511 = vrot.lane.b32.xlu0 %v6045, 32
      %v7512 = vpop.permute.xlu0 %7511
      %7513 = vrot.lane.b32.xlu0 %v6047, 32
      %v7514 = vpop.permute.xlu0 %7513
      %7515 = vrot.lane.b32.xlu0 %v6049, 32
      %v7516 = vpop.permute.xlu0 %7515
      %7517 = vrot.lane.b32.xlu0 %v6051, 32
      %v7518 = vpop.permute.xlu0 %7517
      %7519 = vrot.lane.b32.xlu0 %v6053, 32
      %v7520 = vpop.permute.xlu0 %7519
      %7521 = vrot.lane.b32.xlu0 %v6055, 32
      %v7522 = vpop.permute.xlu0 %7521
      %7523 = vrot.lane.b32.xlu0 %v6057, 32
      %v7524 = vpop.permute.xlu0 %7523
      %7525 = vrot.lane.b32.xlu0 %v6059, 32
      %v7526 = vpop.permute.xlu0 %7525
      %7527 = vrot.lane.b32.xlu0 %v6061, 32
      %v7528 = vpop.permute.xlu0 %7527
      %7529 = vrot.lane.b32.xlu0 %v6063, 32
      %v7530 = vpop.permute.xlu0 %7529
      %7531 = vrot.lane.b32.xlu0 %v6065, 32
      %v7532 = vpop.permute.xlu0 %7531
      %7533 = vrot.lane.b32.xlu0 %v6067, 32
      %v7534 = vpop.permute.xlu0 %7533
      %7535 = vrot.lane.b32.xlu0 %v6069, 32
      %v7536 = vpop.permute.xlu0 %7535
      %7537 = vrot.lane.b32.xlu0 %v6071, 32
      %v7538 = vpop.permute.xlu0 %7537
      %7539 = vrot.lane.b32.xlu0 %v6073, 32
      %v7540 = vpop.permute.xlu0 %7539
      %7541 = vrot.lane.b32.xlu0 %v6075, 32
      %v7542 = vpop.permute.xlu0 %7541
      %7543 = vrot.lane.b32.xlu0 %v6077, 32
      %v7544 = vpop.permute.xlu0 %7543
      %7545 = vrot.lane.b32.xlu0 %v6079, 32
      %v7546 = vpop.permute.xlu0 %7545
      %7547 = vrot.lane.b32.xlu0 %v6081, 32
      %v7548 = vpop.permute.xlu0 %7547
      %7549 = vrot.lane.b32.xlu0 %v6083, 32
      %v7550 = vpop.permute.xlu0 %7549
      %7551 = vrot.lane.b32.xlu0 %v6085, 32
      %v7552 = vpop.permute.xlu0 %7551
      %7553 = vrot.lane.b32.xlu0 %v6087, 32
      %v7554 = vpop.permute.xlu0 %7553
      %7555 = vrot.lane.b32.xlu0 %v6089, 32
      %v7556 = vpop.permute.xlu0 %7555
      %7557 = vrot.lane.b32.xlu0 %v6091, 32
      %v7558 = vpop.permute.xlu0 %7557
      %7559 = vrot.lane.b32.xlu0 %v6093, 32
      %v7560 = vpop.permute.xlu0 %7559
      %7561 = vrot.lane.b32.xlu0 %v6095, 32
      %v7562 = vpop.permute.xlu0 %7561
      %7563 = vrot.lane.b32.xlu0 %v6097, 32
      %v7564 = vpop.permute.xlu0 %7563
      %7565 = vrot.lane.b32.xlu0 %v6099, 32
      %v7566 = vpop.permute.xlu0 %7565
      %7567 = vrot.lane.b32.xlu0 %v6101, 32
      %v7568 = vpop.permute.xlu0 %7567
      %7569 = vrot.lane.b32.xlu0 %v6103, 32
      %v7570 = vpop.permute.xlu0 %7569
      %7571 = vrot.lane.b32.xlu0 %v6105, 32
      %v7572 = vpop.permute.xlu0 %7571
      %7573 = vrot.lane.b32.xlu0 %v6107, 32
      %v7574 = vpop.permute.xlu0 %7573
      %7575 = vrot.lane.b32.xlu0 %v6109, 32
      %v7576 = vpop.permute.xlu0 %7575
      %7577 = vrot.lane.b32.xlu0 %v6111, 32
      %v7578 = vpop.permute.xlu0 %7577
      %7579 = vrot.lane.b32.xlu0 %v6113, 32
      %v7580 = vpop.permute.xlu0 %7579
      %7581 = vrot.lane.b32.xlu0 %v6115, 32
      %v7582 = vpop.permute.xlu0 %7581
      %7583 = vrot.lane.b32.xlu0 %v6117, 32
      %v7584 = vpop.permute.xlu0 %7583
      %7585 = vrot.lane.b32.xlu0 %v6119, 32
      %v7586 = vpop.permute.xlu0 %7585
      %7587 = vrot.lane.b32.xlu0 %v6121, 32
      %v7588 = vpop.permute.xlu0 %7587
      %7589 = vrot.lane.b32.xlu0 %v6123, 32
      %v7590 = vpop.permute.xlu0 %7589
      %7591 = vrot.lane.b32.xlu0 %v6125, 32
      %v7592 = vpop.permute.xlu0 %7591
      %7593 = vrot.lane.b32.xlu0 %v6127, 32
      %v7594 = vpop.permute.xlu0 %7593
      %7595 = vrot.lane.b32.xlu0 %v6129, 32
      %v7596 = vpop.permute.xlu0 %7595
      %7597 = vrot.lane.b32.xlu0 %v6131, 32
      %v7598 = vpop.permute.xlu0 %7597
      %7599 = vrot.lane.b32.xlu0 %v6133, 32
      %v7600 = vpop.permute.xlu0 %7599
      %7601 = vrot.lane.b32.xlu0 %v6135, 32
      %v7602 = vpop.permute.xlu0 %7601
      %7603 = vrot.lane.b32.xlu0 %v6137, 32
      %v7604 = vpop.permute.xlu0 %7603
      %7605 = vrot.lane.b32.xlu0 %v6139, 32
      %v7606 = vpop.permute.xlu0 %7605
      %7607 = vrot.lane.b32.xlu0 %v6141, 32
      %v7608 = vpop.permute.xlu0 %7607
      %7609 = vrot.lane.b32.xlu0 %v6143, 32
      %v7610 = vpop.permute.xlu0 %7609
      %7611 = vrot.lane.b32.xlu0 %v6145, 32
      %v7612 = vpop.permute.xlu0 %7611
      %7613 = vrot.lane.b32.xlu0 %v6147, 32
      %v7614 = vpop.permute.xlu0 %7613
      %7615 = vrot.lane.b32.xlu0 %v6149, 32
      %v7616 = vpop.permute.xlu0 %7615
      %7617 = vrot.lane.b32.xlu0 %v6151, 32
      %v7618 = vpop.permute.xlu0 %7617
      %7619 = vrot.lane.b32.xlu0 %v6153, 32
      %v7620 = vpop.permute.xlu0 %7619
      %7621 = vrot.lane.b32.xlu0 %v6155, 32
      %v7622 = vpop.permute.xlu0 %7621
      %7623 = vrot.lane.b32.xlu0 %v6157, 32
      %v7624 = vpop.permute.xlu0 %7623
      %7625 = vrot.lane.b32.xlu0 %v6158, 32
      %v7626 = vpop.permute.xlu0 %7625
      %7627 = vrot.lane.b32.xlu0 %v6033, 32
      %v7628 = vpop.permute.xlu0 %7627
      %7629 = vrot.lane.b32.xlu0 %v6160, 32
      %v7630 = vpop.permute.xlu0 %7629
      %7631 = vrot.lane.b32.xlu0 %v6037, 32
      %v7632 = vpop.permute.xlu0 %7631
      %7633 = vrot.lane.b32.xlu0 %v6039, 32
      %v7634 = vpop.permute.xlu0 %7633
      %v7699 = vsel %vm1574, %v5779, %v6162
      %v7700 = vsel %vm1574, %v5781, %v6164
      %v7701 = vsel %vm1574, %v6030, %v6166
      %v7702 = vsel %vm1574, %v5848, %v6168
      %v7703 = vsel %vm1574, %v5850, %v6170
      %v7704 = vsel %vm1574, %v5852, %v6172
      %v7705 = vsel %vm1574, %v5854, %v6174
      %v7706 = vsel %vm1574, %v5856, %v6176
      %v7707 = vsel %vm1574, %v5858, %v6178
      %v7708 = vsel %vm1574, %v5860, %v6180
      %v7709 = vsel %vm1574, %v5862, %v6182
      %v7710 = vsel %vm1574, %v5864, %v6184
      %v7711 = vsel %vm1574, %v5866, %v6186
      %v7712 = vsel %vm1574, %v5868, %v6188
      %v7713 = vsel %vm1574, %v5870, %v6190
      %v7714 = vsel %vm1574, %v5872, %v6192
      %v7715 = vsel %vm1574, %v5874, %v6194
      %v7716 = vsel %vm1574, %v5876, %v6196
      %v7717 = vsel %vm1574, %v5878, %v6198
      %v7718 = vsel %vm1574, %v5880, %v6200
      %v7719 = vsel %vm1574, %v5882, %v6202
      %v7720 = vsel %vm1574, %v5884, %v6204
      %v7721 = vsel %vm1574, %v5886, %v6206
      %v7722 = vsel %vm1574, %v5888, %v6208
      %v7723 = vsel %vm1574, %v5890, %v6210
      %v7724 = vsel %vm1574, %v5892, %v6212
      %v7725 = vsel %vm1574, %v5894, %v6214
      %v7726 = vsel %vm1574, %v5896, %v6216
      %v7727 = vsel %vm1574, %v5898, %v6218
      %v7728 = vsel %vm1574, %v5900, %v6220
      %v7729 = vsel %vm1574, %v5902, %v6222
      %v7730 = vsel %vm1574, %v5904, %v6224
      %v7731 = vsel %vm1574, %v5906, %v6226
      %v7732 = vsel %vm1574, %v5908, %v6228
      %v7733 = vsel %vm1574, %v5910, %v6230
      %v7734 = vsel %vm1574, %v5912, %v6232
      %v7735 = vsel %vm1574, %v5914, %v6234
      %v7736 = vsel %vm1574, %v5916, %v6236
      %v7737 = vsel %vm1574, %v5918, %v6238
      %v7738 = vsel %vm1574, %v5920, %v6240
      %v7739 = vsel %vm1574, %v5922, %v6242
      %v7740 = vsel %vm1574, %v5924, %v6244
      %v7741 = vsel %vm1574, %v5926, %v6246
      %v7742 = vsel %vm1574, %v5928, %v6248
      %v7743 = vsel %vm1574, %v5930, %v6250
      %v7744 = vsel %vm1574, %v5932, %v6252
      %v7745 = vsel %vm1574, %v5934, %v6254
      %v7746 = vsel %vm1574, %v5936, %v6256
      %v7747 = vsel %vm1574, %v5938, %v6258
      %v7748 = vsel %vm1574, %v5940, %v6260
      %v7749 = vsel %vm1574, %v5942, %v6262
      %v7750 = vsel %vm1574, %v5944, %v6264
      %v7751 = vsel %vm1574, %v5946, %v6266
      %v7752 = vsel %vm1574, %v5948, %v6268
      %v7753 = vsel %vm1574, %v5950, %v6270
      %v7754 = vsel %vm1574, %v5952, %v6272
      %v7755 = vsel %vm1574, %v5954, %v6274
      %v7756 = vsel %vm1574, %v5956, %v6276
      %v7757 = vsel %vm1574, %v5958, %v6278
      %v7758 = vsel %vm1574, %v5960, %v6280
      %v7759 = vsel %vm1574, %v5962, %v6282
      %v7760 = vsel %vm1574, %v5964, %v6284
      %v7761 = vsel %vm1574, %v5966, %v6286
      %v7762 = vsel %vm1574, %v5967, %v6288
      %v7763 = vsel %vm1607, %v7699, %v6355
      %v7764 = vsel %vm1607, %v7700, %v6357
      %v7765 = vsel %vm1607, %v7701, %v6359
      %v7766 = vsel %vm1607, %v7702, %v6361
      %v7767 = vsel %vm1607, %v7703, %v6363
      %v7768 = vsel %vm1607, %v7704, %v6365
      %v7769 = vsel %vm1607, %v7705, %v6367
      %v7770 = vsel %vm1607, %v7706, %v6369
      %v7771 = vsel %vm1607, %v7707, %v6371
      %v7772 = vsel %vm1607, %v7708, %v6373
      %v7773 = vsel %vm1607, %v7709, %v6375
      %v7774 = vsel %vm1607, %v7710, %v6377
      %v7775 = vsel %vm1607, %v7711, %v6379
      %v7776 = vsel %vm1607, %v7712, %v6381
      %v7777 = vsel %vm1607, %v7713, %v6383
      %v7778 = vsel %vm1607, %v7714, %v6385
      %v7779 = vsel %vm1607, %v7715, %v6387
      %v7780 = vsel %vm1607, %v7716, %v6389
      %v7781 = vsel %vm1607, %v7717, %v6391
      %v7782 = vsel %vm1607, %v7718, %v6393
      %v7783 = vsel %vm1607, %v7719, %v6395
      %v7784 = vsel %vm1607, %v7720, %v6397
      %v7785 = vsel %vm1607, %v7721, %v6399
      %v7786 = vsel %vm1607, %v7722, %v6401
      %v7787 = vsel %vm1607, %v7723, %v6403
      %v7788 = vsel %vm1607, %v7724, %v6405
      %v7789 = vsel %vm1607, %v7725, %v6407
      %v7790 = vsel %vm1607, %v7726, %v6409
      %v7791 = vsel %vm1607, %v7727, %v6411
      %v7792 = vsel %vm1607, %v7728, %v6413
      %v7793 = vsel %vm1607, %v7729, %v6415
      %v7794 = vsel %vm1607, %v7730, %v6417
      %v7795 = vsel %vm1607, %v7731, %v6419
      %v7796 = vsel %vm1607, %v7732, %v6421
      %v7797 = vsel %vm1607, %v7733, %v6423
      %v7798 = vsel %vm1607, %v7734, %v6425
      %v7799 = vsel %vm1607, %v7735, %v6427
      %v7800 = vsel %vm1607, %v7736, %v6429
      %v7801 = vsel %vm1607, %v7737, %v6431
      %v7802 = vsel %vm1607, %v7738, %v6433
      %v7803 = vsel %vm1607, %v7739, %v6435
      %v7804 = vsel %vm1607, %v7740, %v6437
      %v7805 = vsel %vm1607, %v7741, %v6439
      %v7806 = vsel %vm1607, %v7742, %v6441
      %v7807 = vsel %vm1607, %v7743, %v6443
      %v7808 = vsel %vm1607, %v7744, %v6445
      %v7809 = vsel %vm1607, %v7745, %v6447
      %v7810 = vsel %vm1607, %v7746, %v6449
      %v7811 = vsel %vm1607, %v7747, %v6451
      %v7812 = vsel %vm1607, %v7748, %v6453
      %v7813 = vsel %vm1607, %v7749, %v6455
      %v7814 = vsel %vm1607, %v7750, %v6457
      %v7815 = vsel %vm1607, %v7751, %v6459
      %v7816 = vsel %vm1607, %v7752, %v6461
      %v7817 = vsel %vm1607, %v7753, %v6463
      %v7818 = vsel %vm1607, %v7754, %v6465
      %v7819 = vsel %vm1607, %v7755, %v6467
      %v7820 = vsel %vm1607, %v7756, %v6469
      %v7821 = vsel %vm1607, %v7757, %v6471
      %v7822 = vsel %vm1607, %v7758, %v6473
      %v7823 = vsel %vm1607, %v7759, %v6475
      %v7824 = vsel %vm1607, %v7760, %v6477
      %v7825 = vsel %vm1607, %v7761, %v6479
      %v7826 = vsel %vm1607, %v7762, %v6481
      %v7827 = vsel %vm1640, %v7763, %v6548
      %v7828 = vsel %vm1640, %v7764, %v6550
      %v7829 = vsel %vm1640, %v7765, %v6552
      %v7830 = vsel %vm1640, %v7766, %v6554
      %v7831 = vsel %vm1640, %v7767, %v6556
      %v7832 = vsel %vm1640, %v7768, %v6558
      %v7833 = vsel %vm1640, %v7769, %v6560
      %v7834 = vsel %vm1640, %v7770, %v6562
      %v7835 = vsel %vm1640, %v7771, %v6564
      %v7836 = vsel %vm1640, %v7772, %v6566
      %v7837 = vsel %vm1640, %v7773, %v6568
      %v7838 = vsel %vm1640, %v7774, %v6570
      %v7839 = vsel %vm1640, %v7775, %v6572
      %v7840 = vsel %vm1640, %v7776, %v6574
      %v7841 = vsel %vm1640, %v7777, %v6576
      %v7842 = vsel %vm1640, %v7778, %v6578
      %v7843 = vsel %vm1640, %v7779, %v6580
      %v7844 = vsel %vm1640, %v7780, %v6582
      %v7845 = vsel %vm1640, %v7781, %v6584
      %v7846 = vsel %vm1640, %v7782, %v6586
      %v7847 = vsel %vm1640, %v7783, %v6588
      %v7848 = vsel %vm1640, %v7784, %v6590
      %v7849 = vsel %vm1640, %v7785, %v6592
      %v7850 = vsel %vm1640, %v7786, %v6594
      %v7851 = vsel %vm1640, %v7787, %v6596
      %v7852 = vsel %vm1640, %v7788, %v6598
      %v7853 = vsel %vm1640, %v7789, %v6600
      %v7854 = vsel %vm1640, %v7790, %v6602
      %v7855 = vsel %vm1640, %v7791, %v6604
      %v7856 = vsel %vm1640, %v7792, %v6606
      %v7857 = vsel %vm1640, %v7793, %v6608
      %v7858 = vsel %vm1640, %v7794, %v6610
      %v7859 = vsel %vm1640, %v7795, %v6612
      %v7860 = vsel %vm1640, %v7796, %v6614
      %v7861 = vsel %vm1640, %v7797, %v6616
      %v7862 = vsel %vm1640, %v7798, %v6618
      %v7863 = vsel %vm1640, %v7799, %v6620
      %v7864 = vsel %vm1640, %v7800, %v6622
      %v7865 = vsel %vm1640, %v7801, %v6624
      %v7866 = vsel %vm1640, %v7802, %v6626
      %v7867 = vsel %vm1640, %v7803, %v6628
      %v7868 = vsel %vm1640, %v7804, %v6630
      %v7869 = vsel %vm1640, %v7805, %v6632
      %v7870 = vsel %vm1640, %v7806, %v6634
      %v7871 = vsel %vm1640, %v7807, %v6636
      %v7872 = vsel %vm1640, %v7808, %v6638
      %v7873 = vsel %vm1640, %v7809, %v6640
      %v7874 = vsel %vm1640, %v7810, %v6642
      %v7875 = vsel %vm1640, %v7811, %v6644
      %v7876 = vsel %vm1640, %v7812, %v6646
      %v7877 = vsel %vm1640, %v7813, %v6648
      %v7878 = vsel %vm1640, %v7814, %v6650
      %v7879 = vsel %vm1640, %v7815, %v6652
      %v7880 = vsel %vm1640, %v7816, %v6654
      %v7881 = vsel %vm1640, %v7817, %v6656
      %v7882 = vsel %vm1640, %v7818, %v6658
      %v7883 = vsel %vm1640, %v7819, %v6660
      %v7884 = vsel %vm1640, %v7820, %v6662
      %v7885 = vsel %vm1640, %v7821, %v6664
      %v7886 = vsel %vm1640, %v7822, %v6666
      %v7887 = vsel %vm1640, %v7823, %v6668
      %v7888 = vsel %vm1640, %v7824, %v6670
      %v7889 = vsel %vm1640, %v7825, %v6672
      %v7890 = vsel %vm1640, %v7826, %v6674
      %v7891 = vsel %vm1673, %v7827, %v6740
      %v7892 = vsel %vm1673, %v7828, %v6742
      %v7893 = vsel %vm1673, %v7829, %v6744
      %v7894 = vsel %vm1673, %v7830, %v6746
      %v7895 = vsel %vm1673, %v7831, %v6748
      %v7896 = vsel %vm1673, %v7832, %v6750
      %v7897 = vsel %vm1673, %v7833, %v6752
      %v7898 = vsel %vm1673, %v7834, %v6754
      %v7899 = vsel %vm1673, %v7835, %v6756
      %v7900 = vsel %vm1673, %v7836, %v6758
      %v7901 = vsel %vm1673, %v7837, %v6760
      %v7902 = vsel %vm1673, %v7838, %v6762
      %v7903 = vsel %vm1673, %v7839, %v6764
      %v7904 = vsel %vm1673, %v7840, %v6766
      %v7905 = vsel %vm1673, %v7841, %v6768
      %v7906 = vsel %vm1673, %v7842, %v6770
      %v7907 = vsel %vm1673, %v7843, %v6772
      %v7908 = vsel %vm1673, %v7844, %v6774
      %v7909 = vsel %vm1673, %v7845, %v6776
      %v7910 = vsel %vm1673, %v7846, %v6778
      %v7911 = vsel %vm1673, %v7847, %v6780
      %v7912 = vsel %vm1673, %v7848, %v6782
      %v7913 = vsel %vm1673, %v7849, %v6784
      %v7914 = vsel %vm1673, %v7850, %v6786
      %v7915 = vsel %vm1673, %v7851, %v6788
      %v7916 = vsel %vm1673, %v7852, %v6790
      %v7917 = vsel %vm1673, %v7853, %v6792
      %v7918 = vsel %vm1673, %v7854, %v6794
      %v7919 = vsel %vm1673, %v7855, %v6796
      %v7920 = vsel %vm1673, %v7856, %v6798
      %v7921 = vsel %vm1673, %v7857, %v6800
      %v7922 = vsel %vm1673, %v7858, %v6802
      %v7923 = vsel %vm1673, %v7859, %v6804
      %v7924 = vsel %vm1673, %v7860, %v6806
      %v7925 = vsel %vm1673, %v7861, %v6808
      %v7926 = vsel %vm1673, %v7862, %v6810
      %v7927 = vsel %vm1673, %v7863, %v6812
      %v7928 = vsel %vm1673, %v7864, %v6814
      %v7929 = vsel %vm1673, %v7865, %v6816
      %v7930 = vsel %vm1673, %v7866, %v6818
      %v7931 = vsel %vm1673, %v7867, %v6820
      %v7932 = vsel %vm1673, %v7868, %v6822
      %v7933 = vsel %vm1673, %v7869, %v6824
      %v7934 = vsel %vm1673, %v7870, %v6826
      %v7935 = vsel %vm1673, %v7871, %v6828
      %v7936 = vsel %vm1673, %v7872, %v6830
      %v7937 = vsel %vm1673, %v7873, %v6832
      %v7938 = vsel %vm1673, %v7874, %v6834
      %v7939 = vsel %vm1673, %v7875, %v6836
      %v7940 = vsel %vm1673, %v7876, %v6838
      %v7941 = vsel %vm1673, %v7877, %v6840
      %v7942 = vsel %vm1673, %v7878, %v6842
      %v7943 = vsel %vm1673, %v7879, %v6844
      %v7944 = vsel %vm1673, %v7880, %v6846
      %v7945 = vsel %vm1673, %v7881, %v6848
      %v7946 = vsel %vm1673, %v7882, %v6850
      %v7947 = vsel %vm1673, %v7883, %v6852
      %v7948 = vsel %vm1673, %v7884, %v6854
      %v7949 = vsel %vm1673, %v7885, %v6856
      %v7950 = vsel %vm1673, %v7886, %v6858
      %v7951 = vsel %vm1673, %v7887, %v6860
      %v7952 = vsel %vm1673, %v7888, %v6862
      %v7953 = vsel %vm1673, %v7889, %v6864
      %v7954 = vsel %vm1673, %v7890, %v6866
      %v7955 = vsel %vm1706, %v7891, %v6932
      %v7956 = vsel %vm1706, %v7892, %v6934
      %v7957 = vsel %vm1706, %v7893, %v6936
      %v7958 = vsel %vm1706, %v7894, %v6938
      %v7959 = vsel %vm1706, %v7895, %v6940
      %v7960 = vsel %vm1706, %v7896, %v6942
      %v7961 = vsel %vm1706, %v7897, %v6944
      %v7962 = vsel %vm1706, %v7898, %v6946
      %v7963 = vsel %vm1706, %v7899, %v6948
      %v7964 = vsel %vm1706, %v7900, %v6950
      %v7965 = vsel %vm1706, %v7901, %v6952
      %v7966 = vsel %vm1706, %v7902, %v6954
      %v7967 = vsel %vm1706, %v7903, %v6956
      %v7968 = vsel %vm1706, %v7904, %v6958
      %v7969 = vsel %vm1706, %v7905, %v6960
      %v7970 = vsel %vm1706, %v7906, %v6962
      %v7971 = vsel %vm1706, %v7907, %v6964
      %v7972 = vsel %vm1706, %v7908, %v6966
      %v7973 = vsel %vm1706, %v7909, %v6968
      %v7974 = vsel %vm1706, %v7910, %v6970
      %v7975 = vsel %vm1706, %v7911, %v6972
      %v7976 = vsel %vm1706, %v7912, %v6974
      %v7977 = vsel %vm1706, %v7913, %v6976
      %v7978 = vsel %vm1706, %v7914, %v6978
      %v7979 = vsel %vm1706, %v7915, %v6980
      %v7980 = vsel %vm1706, %v7916, %v6982
      %v7981 = vsel %vm1706, %v7917, %v6984
      %v7982 = vsel %vm1706, %v7918, %v6986
      %v7983 = vsel %vm1706, %v7919, %v6988
      %v7984 = vsel %vm1706, %v7920, %v6990
      %v7985 = vsel %vm1706, %v7921, %v6992
      %v7986 = vsel %vm1706, %v7922, %v6994
      %v7987 = vsel %vm1706, %v7923, %v6996
      %v7988 = vsel %vm1706, %v7924, %v6998
      %v7989 = vsel %vm1706, %v7925, %v7000
      %v7990 = vsel %vm1706, %v7926, %v7002
      %v7991 = vsel %vm1706, %v7927, %v7004
      %v7992 = vsel %vm1706, %v7928, %v7006
      %v7993 = vsel %vm1706, %v7929, %v7008
      %v7994 = vsel %vm1706, %v7930, %v7010
      %v7995 = vsel %vm1706, %v7931, %v7012
      %v7996 = vsel %vm1706, %v7932, %v7014
      %v7997 = vsel %vm1706, %v7933, %v7016
      %v7998 = vsel %vm1706, %v7934, %v7018
      %v7999 = vsel %vm1706, %v7935, %v7020
      %v8000 = vsel %vm1706, %v7936, %v7022
      %v8001 = vsel %vm1706, %v7937, %v7024
      %v8002 = vsel %vm1706, %v7938, %v7026
      %v8003 = vsel %vm1706, %v7939, %v7028
      %v8004 = vsel %vm1706, %v7940, %v7030
      %v8005 = vsel %vm1706, %v7941, %v7032
      %v8006 = vsel %vm1706, %v7942, %v7034
      %v8007 = vsel %vm1706, %v7943, %v7036
      %v8008 = vsel %vm1706, %v7944, %v7038
      %v8009 = vsel %vm1706, %v7945, %v7040
      %v8010 = vsel %vm1706, %v7946, %v7042
      %v8011 = vsel %vm1706, %v7947, %v7044
      %v8012 = vsel %vm1706, %v7948, %v7046
      %v8013 = vsel %vm1706, %v7949, %v7048
      %v8014 = vsel %vm1706, %v7950, %v7050
      %v8015 = vsel %vm1706, %v7951, %v7052
      %v8016 = vsel %vm1706, %v7952, %v7054
      %v8017 = vsel %vm1706, %v7953, %v7056
      %v8018 = vsel %vm1706, %v7954, %v7058
      %v8019 = vsel %vm1739, %v7955, %v7124
      %v8020 = vsel %vm1739, %v7956, %v7126
      %v8021 = vsel %vm1739, %v7957, %v7128
      %v8022 = vsel %vm1739, %v7958, %v7130
      %v8023 = vsel %vm1739, %v7959, %v7132
      %v8024 = vsel %vm1739, %v7960, %v7134
      %v8025 = vsel %vm1739, %v7961, %v7136
      %v8026 = vsel %vm1739, %v7962, %v7138
      %v8027 = vsel %vm1739, %v7963, %v7140
      %v8028 = vsel %vm1739, %v7964, %v7142
      %v8029 = vsel %vm1739, %v7965, %v7144
      %v8030 = vsel %vm1739, %v7966, %v7146
      %v8031 = vsel %vm1739, %v7967, %v7148
      %v8032 = vsel %vm1739, %v7968, %v7150
      %v8033 = vsel %vm1739, %v7969, %v7152
      %v8034 = vsel %vm1739, %v7970, %v7154
      %v8035 = vsel %vm1739, %v7971, %v7156
      %v8036 = vsel %vm1739, %v7972, %v7158
      %v8037 = vsel %vm1739, %v7973, %v7160
      %v8038 = vsel %vm1739, %v7974, %v7162
      %v8039 = vsel %vm1739, %v7975, %v7164
      %v8040 = vsel %vm1739, %v7976, %v7166
      %v8041 = vsel %vm1739, %v7977, %v7168
      %v8042 = vsel %vm1739, %v7978, %v7170
      %v8043 = vsel %vm1739, %v7979, %v7172
      %v8044 = vsel %vm1739, %v7980, %v7174
      %v8045 = vsel %vm1739, %v7981, %v7176
      %v8046 = vsel %vm1739, %v7982, %v7178
      %v8047 = vsel %vm1739, %v7983, %v7180
      %v8048 = vsel %vm1739, %v7984, %v7182
      %v8049 = vsel %vm1739, %v7985, %v7184
      %v8050 = vsel %vm1739, %v7986, %v7186
      %v8051 = vsel %vm1739, %v7987, %v7188
      %v8052 = vsel %vm1739, %v7988, %v7190
      %v8053 = vsel %vm1739, %v7989, %v7192
      %v8054 = vsel %vm1739, %v7990, %v7194
      %v8055 = vsel %vm1739, %v7991, %v7196
      %v8056 = vsel %vm1739, %v7992, %v7198
      %v8057 = vsel %vm1739, %v7993, %v7200
      %v8058 = vsel %vm1739, %v7994, %v7202
      %v8059 = vsel %vm1739, %v7995, %v7204
      %v8060 = vsel %vm1739, %v7996, %v7206
      %v8061 = vsel %vm1739, %v7997, %v7208
      %v8062 = vsel %vm1739, %v7998, %v7210
      %v8063 = vsel %vm1739, %v7999, %v7212
      %v8064 = vsel %vm1739, %v8000, %v7214
      %v8065 = vsel %vm1739, %v8001, %v7216
      %v8066 = vsel %vm1739, %v8002, %v7218
      %v8067 = vsel %vm1739, %v8003, %v7220
      %v8068 = vsel %vm1739, %v8004, %v7222
      %v8069 = vsel %vm1739, %v8005, %v7224
      %v8070 = vsel %vm1739, %v8006, %v7226
      %v8071 = vsel %vm1739, %v8007, %v7228
      %v8072 = vsel %vm1739, %v8008, %v7230
      %v8073 = vsel %vm1739, %v8009, %v7232
      %v8074 = vsel %vm1739, %v8010, %v7234
      %v8075 = vsel %vm1739, %v8011, %v7236
      %v8076 = vsel %vm1739, %v8012, %v7238
      %v8077 = vsel %vm1739, %v8013, %v7240
      %v8078 = vsel %vm1739, %v8014, %v7242
      %v8079 = vsel %vm1739, %v8015, %v7244
      %v8080 = vsel %vm1739, %v8016, %v7246
      %v8081 = vsel %vm1739, %v8017, %v7248
      %v8082 = vsel %vm1739, %v8018, %v7250
      %v8083 = vsel %vm1772, %v8019, %v7316
      %v8084 = vsel %vm1772, %v8020, %v7318
      %v8085 = vsel %vm1772, %v8021, %v7320
      %v8086 = vsel %vm1772, %v8022, %v7322
      %v8087 = vsel %vm1772, %v8023, %v7324
      %v8088 = vsel %vm1772, %v8024, %v7326
      %v8089 = vsel %vm1772, %v8025, %v7328
      %v8090 = vsel %vm1772, %v8026, %v7330
      %v8091 = vsel %vm1772, %v8027, %v7332
      %v8092 = vsel %vm1772, %v8028, %v7334
      %v8093 = vsel %vm1772, %v8029, %v7336
      %v8094 = vsel %vm1772, %v8030, %v7338
      %v8095 = vsel %vm1772, %v8031, %v7340
      %v8096 = vsel %vm1772, %v8032, %v7342
      %v8097 = vsel %vm1772, %v8033, %v7344
      %v8098 = vsel %vm1772, %v8034, %v7346
      %v8099 = vsel %vm1772, %v8035, %v7348
      %v8100 = vsel %vm1772, %v8036, %v7350
      %v8101 = vsel %vm1772, %v8037, %v7352
      %v8102 = vsel %vm1772, %v8038, %v7354
      %v8103 = vsel %vm1772, %v8039, %v7356
      %v8104 = vsel %vm1772, %v8040, %v7358
      %v8105 = vsel %vm1772, %v8041, %v7360
      %v8106 = vsel %vm1772, %v8042, %v7362
      %v8107 = vsel %vm1772, %v8043, %v7364
      %v8108 = vsel %vm1772, %v8044, %v7366
      %v8109 = vsel %vm1772, %v8045, %v7368
      %v8110 = vsel %vm1772, %v8046, %v7370
      %v8111 = vsel %vm1772, %v8047, %v7372
      %v8112 = vsel %vm1772, %v8048, %v7374
      %v8113 = vsel %vm1772, %v8049, %v7376
      %v8114 = vsel %vm1772, %v8050, %v7378
      %v8115 = vsel %vm1772, %v8051, %v7380
      %v8116 = vsel %vm1772, %v8052, %v7382
      %v8117 = vsel %vm1772, %v8053, %v7384
      %v8118 = vsel %vm1772, %v8054, %v7386
      %v8119 = vsel %vm1772, %v8055, %v7388
      %v8120 = vsel %vm1772, %v8056, %v7390
      %v8121 = vsel %vm1772, %v8057, %v7392
      %v8122 = vsel %vm1772, %v8058, %v7394
      %v8123 = vsel %vm1772, %v8059, %v7396
      %v8124 = vsel %vm1772, %v8060, %v7398
      %v8125 = vsel %vm1772, %v8061, %v7400
      %v8126 = vsel %vm1772, %v8062, %v7402
      %v8127 = vsel %vm1772, %v8063, %v7404
      %v8128 = vsel %vm1772, %v8064, %v7406
      %v8129 = vsel %vm1772, %v8065, %v7408
      %v8130 = vsel %vm1772, %v8066, %v7410
      %v8131 = vsel %vm1772, %v8067, %v7412
      %v8132 = vsel %vm1772, %v8068, %v7414
      %v8133 = vsel %vm1772, %v8069, %v7416
      %v8134 = vsel %vm1772, %v8070, %v7418
      %v8135 = vsel %vm1772, %v8071, %v7420
      %v8136 = vsel %vm1772, %v8072, %v7422
      %v8137 = vsel %vm1772, %v8073, %v7424
      %v8138 = vsel %vm1772, %v8074, %v7426
      %v8139 = vsel %vm1772, %v8075, %v7428
      %v8140 = vsel %vm1772, %v8076, %v7430
      %v8141 = vsel %vm1772, %v8077, %v7432
      %v8142 = vsel %vm1772, %v8078, %v7434
      %v8143 = vsel %vm1772, %v8079, %v7436
      %v8144 = vsel %vm1772, %v8080, %v7438
      %v8145 = vsel %vm1772, %v8081, %v7440
      %v8146 = vsel %vm1772, %v8082, %v7442
      %v8147 = vsel %vm1805, %v8083, %v7508
      %v8148 = vsel %vm1805, %v8084, %v7510
      %v8149 = vsel %vm1805, %v8085, %v7512
      %v8150 = vsel %vm1805, %v8086, %v7514
      %v8151 = vsel %vm1805, %v8087, %v7516
      %v8152 = vsel %vm1805, %v8088, %v7518
      %v8153 = vsel %vm1805, %v8089, %v7520
      %v8154 = vsel %vm1805, %v8090, %v7522
      %v8155 = vsel %vm1805, %v8091, %v7524
      %v8156 = vsel %vm1805, %v8092, %v7526
      %v8157 = vsel %vm1805, %v8093, %v7528
      %v8158 = vsel %vm1805, %v8094, %v7530
      %v8159 = vsel %vm1805, %v8095, %v7532
      %v8160 = vsel %vm1805, %v8096, %v7534
      %v8161 = vsel %vm1805, %v8097, %v7536
      %v8162 = vsel %vm1805, %v8098, %v7538
      %v8163 = vsel %vm1805, %v8099, %v7540
      %v8164 = vsel %vm1805, %v8100, %v7542
      %v8165 = vsel %vm1805, %v8101, %v7544
      %v8166 = vsel %vm1805, %v8102, %v7546
      %v8167 = vsel %vm1805, %v8103, %v7548
      %v8168 = vsel %vm1805, %v8104, %v7550
      %v8169 = vsel %vm1805, %v8105, %v7552
      %v8170 = vsel %vm1805, %v8106, %v7554
      %v8171 = vsel %vm1805, %v8107, %v7556
      %v8172 = vsel %vm1805, %v8108, %v7558
      %v8173 = vsel %vm1805, %v8109, %v7560
      %v8174 = vsel %vm1805, %v8110, %v7562
      %v8175 = vsel %vm1805, %v8111, %v7564
      %v8176 = vsel %vm1805, %v8112, %v7566
      %v8177 = vsel %vm1805, %v8113, %v7568
      %v8178 = vsel %vm1805, %v8114, %v7570
      %v8179 = vsel %vm1805, %v8115, %v7572
      %v8180 = vsel %vm1805, %v8116, %v7574
      %v8181 = vsel %vm1805, %v8117, %v7576
      %v8182 = vsel %vm1805, %v8118, %v7578
      %v8183 = vsel %vm1805, %v8119, %v7580
      %v8184 = vsel %vm1805, %v8120, %v7582
      %v8185 = vsel %vm1805, %v8121, %v7584
      %v8186 = vsel %vm1805, %v8122, %v7586
      %v8187 = vsel %vm1805, %v8123, %v7588
      %v8188 = vsel %vm1805, %v8124, %v7590
      %v8189 = vsel %vm1805, %v8125, %v7592
      %v8190 = vsel %vm1805, %v8126, %v7594
      %v8191 = vsel %vm1805, %v8127, %v7596
      %v8192 = vsel %vm1805, %v8128, %v7598
      %v8193 = vsel %vm1805, %v8129, %v7600
      %v8194 = vsel %vm1805, %v8130, %v7602
      %v8195 = vsel %vm1805, %v8131, %v7604
      %v8196 = vsel %vm1805, %v8132, %v7606
      %v8197 = vsel %vm1805, %v8133, %v7608
      %v8198 = vsel %vm1805, %v8134, %v7610
      %v8199 = vsel %vm1805, %v8135, %v7612
      %v8200 = vsel %vm1805, %v8136, %v7614
      %v8201 = vsel %vm1805, %v8137, %v7616
      %v8202 = vsel %vm1805, %v8138, %v7618
      %v8203 = vsel %vm1805, %v8139, %v7620
      %v8204 = vsel %vm1805, %v8140, %v7622
      %v8205 = vsel %vm1805, %v8141, %v7624
      %v8206 = vsel %vm1805, %v8142, %v7626
      %v8207 = vsel %vm1805, %v8143, %v7628
      %v8208 = vsel %vm1805, %v8144, %v7630
      %v8209 = vsel %vm1805, %v8145, %v7632
      %v8210 = vsel %vm1805, %v8146, %v7634
      %v8211 = vmul.f32 %v8147, %v5710
      %v8212 = vmul.f32 %v8148, %v5711
      %v8213 = vmul.f32 %v8149, %v5712
      %v8214 = vmul.f32 %v8150, %v5713
      %v8215 = vmul.f32 %v8151, %v5714
      %v8216 = vmul.f32 %v8152, %v5715
      %v8217 = vmul.f32 %v8153, %v5716
      %v8218 = vmul.f32 %v8154, %v5717
      %v8219 = vmul.f32 %v8155, %v5718
      %v8220 = vmul.f32 %v8156, %v5719
      %v8221 = vmul.f32 %v8157, %v5720
      %v8222 = vmul.f32 %v8158, %v5721
      %v8223 = vmul.f32 %v8159, %v5722
      %v8224 = vmul.f32 %v8160, %v5723
      %v8225 = vmul.f32 %v8161, %v5724
      %v8226 = vmul.f32 %v8162, %v5725
      %v8227 = vmul.f32 %v8163, %v5726
      %v8228 = vmul.f32 %v8164, %v5727
      %v8229 = vmul.f32 %v8165, %v5728
      %v8230 = vmul.f32 %v8166, %v5729
      %v8231 = vmul.f32 %v8167, %v5730
      %v8232 = vmul.f32 %v8168, %v5731
      %v8233 = vmul.f32 %v8169, %v5732
      %v8234 = vmul.f32 %v8170, %v5733
      %v8235 = vmul.f32 %v8171, %v5734
      %v8236 = vmul.f32 %v8172, %v5735
      %v8237 = vmul.f32 %v8173, %v5736
      %v8238 = vmul.f32 %v8174, %v5737
      %v8239 = vmul.f32 %v8175, %v5738
      %v8240 = vmul.f32 %v8176, %v5739
      %v8241 = vmul.f32 %v8177, %v5740
      %v8242 = vmul.f32 %v8178, %v5741
      %v8243 = vmul.f32 %v8179, %v5742
      %v8244 = vmul.f32 %v8180, %v5743
      %v8245 = vmul.f32 %v8181, %v5744
      %v8246 = vmul.f32 %v8182, %v5745
      %v8247 = vmul.f32 %v8183, %v5746
      %v8248 = vmul.f32 %v8184, %v5747
      %v8249 = vmul.f32 %v8185, %v5748
      %v8250 = vmul.f32 %v8186, %v5749
      %v8251 = vmul.f32 %v8187, %v5750
      %v8252 = vmul.f32 %v8188, %v5751
      %v8253 = vmul.f32 %v8189, %v5752
      %v8254 = vmul.f32 %v8190, %v5753
      %v8255 = vmul.f32 %v8191, %v5754
      %v8256 = vmul.f32 %v8192, %v5755
      %v8257 = vmul.f32 %v8193, %v5756
      %v8258 = vmul.f32 %v8194, %v5757
      %v8259 = vmul.f32 %v8195, %v5758
      %v8260 = vmul.f32 %v8196, %v5759
      %v8261 = vmul.f32 %v8197, %v5760
      %v8262 = vmul.f32 %v8198, %v5761
      %v8263 = vmul.f32 %v8199, %v5762
      %v8264 = vmul.f32 %v8200, %v5763
      %v8265 = vmul.f32 %v8201, %v5764
      %v8266 = vmul.f32 %v8202, %v5765
      %v8267 = vmul.f32 %v8203, %v5766
      %v8268 = vmul.f32 %v8204, %v5767
      %v8269 = vmul.f32 %v8205, %v5768
      %v8270 = vmul.f32 %v8206, %v5769
      %v8271 = vmul.f32 %v8207, %v5770
      %v8272 = vmul.f32 %v8208, %v5771
      %v8273 = vmul.f32 %v8209, %v5772
      %v8274 = vmul.f32 %v8210, %v5773
      %v8275 = vpack.c.bf16 %v8212, %v8211
      %v8276 = vpack.c.bf16 %v8214, %v8213
      %v8277 = vpack.c.bf16 %v8216, %v8215
      %v8278 = vpack.c.bf16 %v8218, %v8217
      %v8279 = vpack.c.bf16 %v8220, %v8219
      %v8280 = vpack.c.bf16 %v8222, %v8221
      %v8281 = vpack.c.bf16 %v8224, %v8223
      %v8282 = vpack.c.bf16 %v8226, %v8225
      %v8283 = vpack.c.bf16 %v8228, %v8227
      %v8284 = vpack.c.bf16 %v8230, %v8229
      %v8285 = vpack.c.bf16 %v8232, %v8231
      %v8286 = vpack.c.bf16 %v8234, %v8233
      %v8287 = vpack.c.bf16 %v8236, %v8235
      %v8288 = vpack.c.bf16 %v8238, %v8237
      %v8289 = vpack.c.bf16 %v8240, %v8239
      %v8290 = vpack.c.bf16 %v8242, %v8241
      %v8291 = vpack.c.bf16 %v8244, %v8243
      %v8292 = vpack.c.bf16 %v8246, %v8245
      %v8293 = vpack.c.bf16 %v8248, %v8247
      %v8294 = vpack.c.bf16 %v8250, %v8249
      %v8295 = vpack.c.bf16 %v8252, %v8251
      %v8296 = vpack.c.bf16 %v8254, %v8253
      %v8297 = vpack.c.bf16 %v8256, %v8255
      %v8298 = vpack.c.bf16 %v8258, %v8257
      %v8299 = vpack.c.bf16 %v8260, %v8259
      %v8300 = vpack.c.bf16 %v8262, %v8261
      %v8301 = vpack.c.bf16 %v8264, %v8263
      %v8302 = vpack.c.bf16 %v8266, %v8265
      %v8303 = vpack.c.bf16 %v8268, %v8267
      %v8304 = vpack.c.bf16 %v8270, %v8269
      %v8305 = vpack.c.bf16 %v8272, %v8271
      %v8306 = vpack.c.bf16 %v8274, %v8273
      %v8307 = vld [vmem:[%s12] sm:$0xf]
      %v8308 = vld [vmem:[%s12 + $0x4] sm:$0xf]
      %v8309 = vld [vmem:[%s12 + $0x8] sm:$0xf]
      %v8310 = vld [vmem:[%s12 + $0xc] sm:$0xf]
      %v8311 = vld [vmem:[%s12 + $0x10] sm:$0x3]
      %v8312 = vld [vmem:[%s13] sm:$0x1]
      %v8314 = vlaneseq
      %v8315 = vshrl.u32 %v8314, 7
      %v8316 = vsub.s32 0, %v8315
      %v8317 = vrot.slane %v8312, %v8316
      %v8324 = vunpack.c.l.b16 %v8307
      %v8325 = vunpack.c.l.b16 %v8308
      %v8326 = vunpack.c.l.b16 %v8309
      %v8327 = vunpack.c.l.b16 %v8310
      %v8328 = vunpack.c.l.b16 %v8311
      %v8329 = vpack.c.b16 %v8325, %v8324
      %v8330 = vpack.c.b16 %v8327, %v8326
      %v8331 = vpack.c.b16 %v8328, %v8328
      %v8335 = vsel %vm1913, %v8275, 0
      %v8338 = vsel %vm1913, %v8276, 0
      %v8341 = vsel %vm1913, %v8277, 0
      %v8344 = vsel %vm1913, %v8278, 0
      %v8347 = vsel %vm1913, %v8279, 0
      %v8350 = vsel %vm1913, %v8280, 0
      %v8353 = vsel %vm1913, %v8281, 0
      %v8356 = vsel %vm1913, %v8282, 0
      %v8359 = vsel %vm1913, %v8283, 0
      %v8362 = vsel %vm1913, %v8284, 0
      %v8365 = vsel %vm1913, %v8285, 0
      %v8368 = vsel %vm1913, %v8286, 0
      %v8371 = vsel %vm1913, %v8287, 0
      %v8374 = vsel %vm1913, %v8288, 0
      %v8377 = vsel %vm1913, %v8289, 0
      %v8380 = vsel %vm1913, %v8290, 0
      %v8383 = vsel %vm1913, %v8291, 0
      %v8386 = vsel %vm1913, %v8292, 0
      %v8389 = vsel %vm1913, %v8293, 0
      %v8392 = vsel %vm1913, %v8294, 0
      %v8395 = vsel %vm1913, %v8295, 0
      %v8398 = vsel %vm1913, %v8296, 0
      %v8401 = vsel %vm1913, %v8297, 0
      %v8404 = vsel %vm1913, %v8298, 0
      %v8407 = vsel %vm1913, %v8299, 0
      %v8410 = vsel %vm1913, %v8300, 0
      %v8413 = vsel %vm1913, %v8301, 0
      %v8416 = vsel %vm1913, %v8302, 0
      %v8419 = vsel %vm1913, %v8303, 0
      %v8422 = vsel %vm1913, %v8304, 0
      %v8425 = vsel %vm1913, %v8305, 0
      %v8428 = vsel %vm1913, %v8306, 0
      %v8431 = vsel %vm1962, %v8331, 0
      %8433 = vmatprep.subr.bf16.mxu0 0
      %8434 = vmatpush1.bf16.msra.mxu0 %v8329
      %8435 = vmatprep.subr.bf16.mxu0 0
      %8436 = vmatpush1.bf16.msra.mxu0 %v8330
      %8437 = vmatprep.subr.bf16.mxu0 0
      %8438 = vmatpush1.bf16.msra.mxu0 %v8431
      %8439 = vmatprep.subr.bf16.mxu0 0
      %8440 = vmatpush1.bf16.msra.mxu0 0
      %8441 = vmatprep.subr.bf16.mxu0 0
      %8442 = vmatpush1.bf16.msra.mxu0 0
      %8443 = vmatprep.subr.bf16.mxu0 0
      %8444 = vmatpush1.bf16.msra.mxu0 0
      %8445 = vmatprep.subr.bf16.mxu0 0
      %8446 = vmatpush1.bf16.msra.mxu0 0
      %8447 = vmatprep.subr.bf16.mxu0 0
      %8448 = vmatpush1.bf16.msra.mxu0 0
      %8449 = vmatprep.subr.bf16.mxu0 0
      %8450 = vmatpush1.bf16.msra.mxu0 0
      %8451 = vmatprep.subr.bf16.mxu0 0
      %8452 = vmatpush1.bf16.msra.mxu0 0
      %8453 = vmatprep.subr.bf16.mxu0 0
      %8454 = vmatpush1.bf16.msra.mxu0 0
      %8455 = vmatprep.subr.bf16.mxu0 0
      %8456 = vmatpush1.bf16.msra.mxu0 0
      %8457 = vmatprep.subr.bf16.mxu0 0
      %8458 = vmatpush1.bf16.msra.mxu0 0
      %8459 = vmatprep.subr.bf16.mxu0 0
      %8460 = vmatpush1.bf16.msra.mxu0 0
      %8461 = vmatprep.subr.bf16.mxu0 0
      %8462 = vmatpush1.bf16.msra.mxu0 0
      %8463 = vmatprep.subr.bf16.mxu0 0
      %8464 = vmatpush1.bf16.msra.mxu0 0
      %8465 = vmatprep.mubr.bf16.mxu0 0
      %8466 = vmatmul.mubr.bf16.gmra.mrb[0].mxu0 %v8335
      %v8467 = vpop.f32.mrb[0].mxu0
      %v8468 = vadd.f32 %v8317, %v8467
      %v8469 = vpop.f32.mrb[0].mxu0
      %v8470 = vpop.f32.mrb[0].mxu0
      %v8471 = vadd.f32 %v8317, %v8470
      %v8472 = vpop.f32.mrb[0].mxu0
      %8473 = vmatprep.mubr.bf16.mxu0 0
      %8474 = vmatmul.mubr.bf16.gmra.mrb[0].mxu0 %v8338
      %v8475 = vpop.f32.mrb[0].mxu0
      %v8476 = vadd.f32 %v8317, %v8475
      %v8477 = vpop.f32.mrb[0].mxu0
      %v8478 = vpop.f32.mrb[0].mxu0
      %v8479 = vadd.f32 %v8317, %v8478
      %v8480 = vpop.f32.mrb[0].mxu0
      %8481 = vmatprep.mubr.bf16.mxu0 0
      %8482 = vmatmul.mubr.bf16.gmra.mrb[0].mxu0 %v8341
      %v8483 = vpop.f32.mrb[0].mxu0
      %v8484 = vadd.f32 %v8317, %v8483
      %v8485 = vpop.f32.mrb[0].mxu0
      %v8486 = vpop.f32.mrb[0].mxu0
      %v8487 = vadd.f32 %v8317, %v8486
      %v8488 = vpop.f32.mrb[0].mxu0
      %8489 = vmatprep.mubr.bf16.mxu0 0
      %8490 = vmatmul.mubr.bf16.gmra.mrb[0].mxu0 %v8344
      %v8491 = vpop.f32.mrb[0].mxu0
      %v8492 = vadd.f32 %v8317, %v8491
      %v8493 = vpop.f32.mrb[0].mxu0
      %v8494 = vpop.f32.mrb[0].mxu0
      %v8495 = vadd.f32 %v8317, %v8494
      %v8496 = vpop.f32.mrb[0].mxu0
      %8497 = vmatprep.mubr.bf16.mxu0 0
      %8498 = vmatmul.mubr.bf16.gmra.mrb[0].mxu0 %v8347
      %v8499 = vpop.f32.mrb[0].mxu0
      %v8500 = vadd.f32 %v8317, %v8499
      %v8501 = vpop.f32.mrb[0].mxu0
      %v8502 = vpop.f32.mrb[0].mxu0
      %v8503 = vadd.f32 %v8317, %v8502
      %v8504 = vpop.f32.mrb[0].mxu0
      %8505 = vmatprep.mubr.bf16.mxu0 0
      %8506 = vmatmul.mubr.bf16.gmra.mrb[0].mxu0 %v8350
      %v8507 = vpop.f32.mrb[0].mxu0
      %v8508 = vadd.f32 %v8317, %v8507
      %v8509 = vpop.f32.mrb[0].mxu0
      %v8510 = vpop.f32.mrb[0].mxu0
      %v8511 = vadd.f32 %v8317, %v8510
      %v8512 = vpop.f32.mrb[0].mxu0
      %8513 = vmatprep.mubr.bf16.mxu0 0
      %8514 = vmatmul.mubr.bf16.gmra.mrb[0].mxu0 %v8353
      %v8515 = vpop.f32.mrb[0].mxu0
      %v8516 = vadd.f32 %v8317, %v8515
      %v8517 = vpop.f32.mrb[0].mxu0
      %v8518 = vpop.f32.mrb[0].mxu0
      %v8519 = vadd.f32 %v8317, %v8518
      %v8520 = vpop.f32.mrb[0].mxu0
      %8521 = vmatprep.mubr.bf16.mxu0 0
      %8522 = vmatmul.mubr.bf16.gmra.mrb[0].mxu0 %v8356
      %v8523 = vpop.f32.mrb[0].mxu0
      %v8524 = vadd.f32 %v8317, %v8523
      %v8525 = vpop.f32.mrb[0].mxu0
      %v8526 = vpop.f32.mrb[0].mxu0
      %v8527 = vadd.f32 %v8317, %v8526
      %v8528 = vpop.f32.mrb[0].mxu0
      %8529 = vmatprep.mubr.bf16.mxu0 0
      %8530 = vmatmul.mubr.bf16.gmra.mrb[0].mxu0 %v8359
      %v8531 = vpop.f32.mrb[0].mxu0
      %v8532 = vadd.f32 %v8317, %v8531
      %v8533 = vpop.f32.mrb[0].mxu0
      %v8534 = vpop.f32.mrb[0].mxu0
      %v8535 = vadd.f32 %v8317, %v8534
      %v8536 = vpop.f32.mrb[0].mxu0
      %8537 = vmatprep.mubr.bf16.mxu0 0
      %8538 = vmatmul.mubr.bf16.gmra.mrb[0].mxu0 %v8362
      %v8539 = vpop.f32.mrb[0].mxu0
      %v8540 = vadd.f32 %v8317, %v8539
      %v8541 = vpop.f32.mrb[0].mxu0
      %v8542 = vpop.f32.mrb[0].mxu0
      %v8543 = vadd.f32 %v8317, %v8542
      %v8544 = vpop.f32.mrb[0].mxu0
      %8545 = vmatprep.mubr.bf16.mxu0 0
      %8546 = vmatmul.mubr.bf16.gmra.mrb[0].mxu0 %v8365
      %v8547 = vpop.f32.mrb[0].mxu0
      %v8548 = vadd.f32 %v8317, %v8547
      %v8549 = vpop.f32.mrb[0].mxu0
      %v8550 = vpop.f32.mrb[0].mxu0
      %v8551 = vadd.f32 %v8317, %v8550
      %v8552 = vpop.f32.mrb[0].mxu0
      %8553 = vmatprep.mubr.bf16.mxu0 0
      %8554 = vmatmul.mubr.bf16.gmra.mrb[0].mxu0 %v8368
      %v8555 = vpop.f32.mrb[0].mxu0
      %v8556 = vadd.f32 %v8317, %v8555
      %v8557 = vpop.f32.mrb[0].mxu0
      %v8558 = vpop.f32.mrb[0].mxu0
      %v8559 = vadd.f32 %v8317, %v8558
      %v8560 = vpop.f32.mrb[0].mxu0
      %8561 = vmatprep.mubr.bf16.mxu0 0
      %8562 = vmatmul.mubr.bf16.gmra.mrb[0].mxu0 %v8371
      %v8563 = vpop.f32.mrb[0].mxu0
      %v8564 = vadd.f32 %v8317, %v8563
      %v8565 = vpop.f32.mrb[0].mxu0
      %v8566 = vpop.f32.mrb[0].mxu0
      %v8567 = vadd.f32 %v8317, %v8566
      %v8568 = vpop.f32.mrb[0].mxu0
      %8569 = vmatprep.mubr.bf16.mxu0 0
      %8570 = vmatmul.mubr.bf16.gmra.mrb[0].mxu0 %v8374
      %v8571 = vpop.f32.mrb[0].mxu0
      %v8572 = vadd.f32 %v8317, %v8571
      %v8573 = vpop.f32.mrb[0].mxu0
      %v8574 = vpop.f32.mrb[0].mxu0
      %v8575 = vadd.f32 %v8317, %v8574
      %v8576 = vpop.f32.mrb[0].mxu0
      %8577 = vmatprep.mubr.bf16.mxu0 0
      %8578 = vmatmul.mubr.bf16.gmra.mrb[0].mxu0 %v8377
      %v8579 = vpop.f32.mrb[0].mxu0
      %v8580 = vadd.f32 %v8317, %v8579
      %v8581 = vpop.f32.mrb[0].mxu0
      %v8582 = vpop.f32.mrb[0].mxu0
      %v8583 = vadd.f32 %v8317, %v8582
      %v8584 = vpop.f32.mrb[0].mxu0
      %8585 = vmatprep.mubr.bf16.mxu0 0
      %8586 = vmatmul.mubr.bf16.gmra.mrb[0].mxu0 %v8380
      %v8587 = vpop.f32.mrb[0].mxu0
      %v8588 = vadd.f32 %v8317, %v8587
      %v8589 = vpop.f32.mrb[0].mxu0
      %v8590 = vpop.f32.mrb[0].mxu0
      %v8591 = vadd.f32 %v8317, %v8590
      %v8592 = vpop.f32.mrb[0].mxu0
      %8593 = vmatprep.mubr.bf16.mxu0 0
      %8594 = vmatmul.mubr.bf16.gmra.mrb[0].mxu0 %v8383
      %v8595 = vpop.f32.mrb[0].mxu0
      %v8596 = vadd.f32 %v8317, %v8595
      %v8597 = vpop.f32.mrb[0].mxu0
      %v8598 = vpop.f32.mrb[0].mxu0
      %v8599 = vadd.f32 %v8317, %v8598
      %v8600 = vpop.f32.mrb[0].mxu0
      %8601 = vmatprep.mubr.bf16.mxu0 0
      %8602 = vmatmul.mubr.bf16.gmra.mrb[0].mxu0 %v8386
      %v8603 = vpop.f32.mrb[0].mxu0
      %v8604 = vadd.f32 %v8317, %v8603
      %v8605 = vpop.f32.mrb[0].mxu0
      %v8606 = vpop.f32.mrb[0].mxu0
      %v8607 = vadd.f32 %v8317, %v8606
      %v8608 = vpop.f32.mrb[0].mxu0
      %8609 = vmatprep.mubr.bf16.mxu0 0
      %8610 = vmatmul.mubr.bf16.gmra.mrb[0].mxu0 %v8389
      %v8611 = vpop.f32.mrb[0].mxu0
      %v8612 = vadd.f32 %v8317, %v8611
      %v8613 = vpop.f32.mrb[0].mxu0
      %v8614 = vpop.f32.mrb[0].mxu0
      %v8615 = vadd.f32 %v8317, %v8614
      %v8616 = vpop.f32.mrb[0].mxu0
      %8617 = vmatprep.mubr.bf16.mxu0 0
      %8618 = vmatmul.mubr.bf16.gmra.mrb[0].mxu0 %v8392
      %v8619 = vpop.f32.mrb[0].mxu0
      %v8620 = vadd.f32 %v8317, %v8619
      %v8621 = vpop.f32.mrb[0].mxu0
      %v8622 = vpop.f32.mrb[0].mxu0
      %v8623 = vadd.f32 %v8317, %v8622
      %v8624 = vpop.f32.mrb[0].mxu0
      %8625 = vmatprep.mubr.bf16.mxu0 0
      %8626 = vmatmul.mubr.bf16.gmra.mrb[0].mxu0 %v8395
      %v8627 = vpop.f32.mrb[0].mxu0
      %v8628 = vadd.f32 %v8317, %v8627
      %v8629 = vpop.f32.mrb[0].mxu0
      %v8630 = vpop.f32.mrb[0].mxu0
      %v8631 = vadd.f32 %v8317, %v8630
      %v8632 = vpop.f32.mrb[0].mxu0
      %8633 = vmatprep.mubr.bf16.mxu0 0
      %8634 = vmatmul.mubr.bf16.gmra.mrb[0].mxu0 %v8398
      %v8635 = vpop.f32.mrb[0].mxu0
      %v8636 = vadd.f32 %v8317, %v8635
      %v8637 = vpop.f32.mrb[0].mxu0
      %v8638 = vpop.f32.mrb[0].mxu0
      %v8639 = vadd.f32 %v8317, %v8638
      %v8640 = vpop.f32.mrb[0].mxu0
      %8641 = vmatprep.mubr.bf16.mxu0 0
      %8642 = vmatmul.mubr.bf16.gmra.mrb[0].mxu0 %v8401
      %v8643 = vpop.f32.mrb[0].mxu0
      %v8644 = vadd.f32 %v8317, %v8643
      %v8645 = vpop.f32.mrb[0].mxu0
      %v8646 = vpop.f32.mrb[0].mxu0
      %v8647 = vadd.f32 %v8317, %v8646
      %v8648 = vpop.f32.mrb[0].mxu0
      %8649 = vmatprep.mubr.bf16.mxu0 0
      %8650 = vmatmul.mubr.bf16.gmra.mrb[0].mxu0 %v8404
      %v8651 = vpop.f32.mrb[0].mxu0
      %v8652 = vadd.f32 %v8317, %v8651
      %v8653 = vpop.f32.mrb[0].mxu0
      %v8654 = vpop.f32.mrb[0].mxu0
      %v8655 = vadd.f32 %v8317, %v8654
      %v8656 = vpop.f32.mrb[0].mxu0
      %8657 = vmatprep.mubr.bf16.mxu0 0
      %8658 = vmatmul.mubr.bf16.gmra.mrb[0].mxu0 %v8407
      %v8659 = vpop.f32.mrb[0].mxu0
      %v8660 = vadd.f32 %v8317, %v8659
      %v8661 = vpop.f32.mrb[0].mxu0
      %v8662 = vpop.f32.mrb[0].mxu0
      %v8663 = vadd.f32 %v8317, %v8662
      %v8664 = vpop.f32.mrb[0].mxu0
      %8665 = vmatprep.mubr.bf16.mxu0 0
      %8666 = vmatmul.mubr.bf16.gmra.mrb[0].mxu0 %v8410
      %v8667 = vpop.f32.mrb[0].mxu0
      %v8668 = vadd.f32 %v8317, %v8667
      %v8669 = vpop.f32.mrb[0].mxu0
      %v8670 = vpop.f32.mrb[0].mxu0
      %v8671 = vadd.f32 %v8317, %v8670
      %v8672 = vpop.f32.mrb[0].mxu0
      %8673 = vmatprep.mubr.bf16.mxu0 0
      %8674 = vmatmul.mubr.bf16.gmra.mrb[0].mxu0 %v8413
      %v8675 = vpop.f32.mrb[0].mxu0
      %v8676 = vadd.f32 %v8317, %v8675
      %v8677 = vpop.f32.mrb[0].mxu0
      %v8678 = vpop.f32.mrb[0].mxu0
      %v8679 = vadd.f32 %v8317, %v8678
      %v8680 = vpop.f32.mrb[0].mxu0
      %8681 = vmatprep.mubr.bf16.mxu0 0
      %8682 = vmatmul.mubr.bf16.gmra.mrb[0].mxu0 %v8416
      %v8683 = vpop.f32.mrb[0].mxu0
      %v8684 = vadd.f32 %v8317, %v8683
      %v8685 = vpop.f32.mrb[0].mxu0
      %v8686 = vpop.f32.mrb[0].mxu0
      %v8687 = vadd.f32 %v8317, %v8686
      %v8688 = vpop.f32.mrb[0].mxu0
      %8689 = vmatprep.mubr.bf16.mxu0 0
      %8690 = vmatmul.mubr.bf16.gmra.mrb[0].mxu0 %v8419
      %v8691 = vpop.f32.mrb[0].mxu0
      %v8692 = vadd.f32 %v8317, %v8691
      %v8693 = vpop.f32.mrb[0].mxu0
      %v8694 = vpop.f32.mrb[0].mxu0
      %v8695 = vadd.f32 %v8317, %v8694
      %v8696 = vpop.f32.mrb[0].mxu0
      %8697 = vmatprep.mubr.bf16.mxu0 0
      %8698 = vmatmul.mubr.bf16.gmra.mrb[0].mxu0 %v8422
      %v8699 = vpop.f32.mrb[0].mxu0
      %v8700 = vadd.f32 %v8317, %v8699
      %v8701 = vpop.f32.mrb[0].mxu0
      %v8702 = vpop.f32.mrb[0].mxu0
      %v8703 = vadd.f32 %v8317, %v8702
      %v8704 = vpop.f32.mrb[0].mxu0
      %8705 = vmatprep.mubr.bf16.mxu0 0
      %8706 = vmatmul.mubr.bf16.gmra.mrb[0].mxu0 %v8425
      %v8707 = vpop.f32.mrb[0].mxu0
      %v8708 = vadd.f32 %v8317, %v8707
      %v8709 = vpop.f32.mrb[0].mxu0
      %v8710 = vpop.f32.mrb[0].mxu0
      %v8711 = vadd.f32 %v8317, %v8710
      %v8712 = vpop.f32.mrb[0].mxu0
      %8713 = vmatprep.mubr.bf16.mxu0 0
      %8714 = vmatmul.mubr.bf16.gmra.mrb[0].mxu0 %v8428
      %v8715 = vpop.f32.mrb[0].mxu0
      %v8716 = vadd.f32 %v8317, %v8715
      %v8717 = vpop.f32.mrb[0].mxu0
      %v8718 = vpop.f32.mrb[0].mxu0
      %v8719 = vadd.f32 %v8317, %v8718
      %v8720 = vpop.f32.mrb[0].mxu0
      %8721 = vdwg.mxu0
      %v8722 = vmax.f32 %v8468, 0.0
      %v8723 = vmax.f32 %v8471, 0.0
      %v8724 = vmax.f32 %v8476, 0.0
      %v8725 = vmax.f32 %v8479, 0.0
      %v8726 = vmax.f32 %v8484, 0.0
      %v8727 = vmax.f32 %v8487, 0.0
      %v8728 = vmax.f32 %v8492, 0.0
      %v8729 = vmax.f32 %v8495, 0.0
      %v8730 = vmax.f32 %v8500, 0.0
      %v8731 = vmax.f32 %v8503, 0.0
      %v8732 = vmax.f32 %v8508, 0.0
      %v8733 = vmax.f32 %v8511, 0.0
      %v8734 = vmax.f32 %v8516, 0.0
      %v8735 = vmax.f32 %v8519, 0.0
      %v8736 = vmax.f32 %v8524, 0.0
      %v8737 = vmax.f32 %v8527, 0.0
      %v8738 = vmax.f32 %v8532, 0.0
      %v8739 = vmax.f32 %v8535, 0.0
      %v8740 = vmax.f32 %v8540, 0.0
      %v8741 = vmax.f32 %v8543, 0.0
      %v8742 = vmax.f32 %v8548, 0.0
      %v8743 = vmax.f32 %v8551, 0.0
      %v8744 = vmax.f32 %v8556, 0.0
      %v8745 = vmax.f32 %v8559, 0.0
      %v8746 = vmax.f32 %v8564, 0.0
      %v8747 = vmax.f32 %v8567, 0.0
      %v8748 = vmax.f32 %v8572, 0.0
      %v8749 = vmax.f32 %v8575, 0.0
      %v8750 = vmax.f32 %v8580, 0.0
      %v8751 = vmax.f32 %v8583, 0.0
      %v8752 = vmax.f32 %v8588, 0.0
      %v8753 = vmax.f32 %v8591, 0.0
      %v8754 = vmax.f32 %v8596, 0.0
      %v8755 = vmax.f32 %v8599, 0.0
      %v8756 = vmax.f32 %v8604, 0.0
      %v8757 = vmax.f32 %v8607, 0.0
      %v8758 = vmax.f32 %v8612, 0.0
      %v8759 = vmax.f32 %v8615, 0.0
      %v8760 = vmax.f32 %v8620, 0.0
      %v8761 = vmax.f32 %v8623, 0.0
      %v8762 = vmax.f32 %v8628, 0.0
      %v8763 = vmax.f32 %v8631, 0.0
      %v8764 = vmax.f32 %v8636, 0.0
      %v8765 = vmax.f32 %v8639, 0.0
      %v8766 = vmax.f32 %v8644, 0.0
      %v8767 = vmax.f32 %v8647, 0.0
      %v8768 = vmax.f32 %v8652, 0.0
      %v8769 = vmax.f32 %v8655, 0.0
      %v8770 = vmax.f32 %v8660, 0.0
      %v8771 = vmax.f32 %v8663, 0.0
      %v8772 = vmax.f32 %v8668, 0.0
      %v8773 = vmax.f32 %v8671, 0.0
      %v8774 = vmax.f32 %v8676, 0.0
      %v8775 = vmax.f32 %v8679, 0.0
      %v8776 = vmax.f32 %v8684, 0.0
      %v8777 = vmax.f32 %v8687, 0.0
      %v8778 = vmax.f32 %v8692, 0.0
      %v8779 = vmax.f32 %v8695, 0.0
      %v8780 = vmax.f32 %v8700, 0.0
      %v8781 = vmax.f32 %v8703, 0.0
      %v8782 = vmax.f32 %v8708, 0.0
      %v8783 = vmax.f32 %v8711, 0.0
      %v8784 = vmax.f32 %v8716, 0.0
      %v8785 = vmax.f32 %v8719, 0.0
      %v8786 = vld [vmem:[%s5] sm:$0xff]
      %v8787 = vld [vmem:[%s5 + $0x8] sm:$0xff]
      %v8788 = vld [vmem:[%s5 + $0x10] sm:$0xff]
      %v8789 = vld [vmem:[%s5 + $0x18] sm:$0xff]
      %v8790 = vld [vmem:[%s5 + $0x20] sm:$0xff]
      %v8791 = vld [vmem:[%s5 + $0x28] sm:$0xff]
      %v8792 = vld [vmem:[%s5 + $0x30] sm:$0xff]
      %v8793 = vld [vmem:[%s5 + $0x38] sm:$0xff]
      %v8794 = vld [vmem:[%s5 + $0x40] sm:$0xff]
      %v8795 = vld [vmem:[%s5 + $0x48] sm:$0xff]
      %v8796 = vld [vmem:[%s5 + $0x50] sm:$0xff]
      %v8797 = vld [vmem:[%s5 + $0x58] sm:$0xff]
      %v8798 = vld [vmem:[%s5 + $0x60] sm:$0xff]
      %v8799 = vld [vmem:[%s5 + $0x68] sm:$0xff]
      %v8800 = vld [vmem:[%s5 + $0x70] sm:$0xff]
      %v8801 = vld [vmem:[%s5 + $0x78] sm:$0xff]
      %v8802 = vld [vmem:[%s5 + $0x80] sm:$0xff]
      %v8803 = vld [vmem:[%s5 + $0x88] sm:$0xff]
      %v8804 = vld [vmem:[%s5 + $0x90] sm:$0xff]
      %v8805 = vld [vmem:[%s5 + $0x98] sm:$0xff]
      %v8806 = vld [vmem:[%s5 + $0xa0] sm:$0xff]
      %v8807 = vld [vmem:[%s5 + $0xa8] sm:$0xff]
      %v8808 = vld [vmem:[%s5 + $0xb0] sm:$0xff]
      %v8809 = vld [vmem:[%s5 + $0xb8] sm:$0xff]
      %v8810 = vld [vmem:[%s5 + $0xc0] sm:$0xff]
      %v8811 = vld [vmem:[%s5 + $0xc8] sm:$0xff]
      %v8812 = vld [vmem:[%s5 + $0xd0] sm:$0xff]
      %v8813 = vld [vmem:[%s5 + $0xd8] sm:$0xff]
      %v8814 = vld [vmem:[%s5 + $0xe0] sm:$0xff]
      %v8815 = vld [vmem:[%s5 + $0xe8] sm:$0xff]
      %v8816 = vld [vmem:[%s5 + $0xf0] sm:$0xff]
      %v8817 = vld [vmem:[%s5 + $0xf8] sm:$0xff]
      %v8818 = vld [vmem:[%s5 + $0x100] sm:$0xff]
      %v8819 = vld [vmem:[%s5 + $0x108] sm:$0xff]
      %v8820 = vld [vmem:[%s5 + $0x110] sm:$0xff]
      %v8821 = vld [vmem:[%s5 + $0x118] sm:$0xff]
      %v8822 = vld [vmem:[%s5 + $0x120] sm:$0xff]
      %v8823 = vld [vmem:[%s5 + $0x128] sm:$0xff]
      %v8824 = vld [vmem:[%s5 + $0x130] sm:$0xff]
      %v8825 = vld [vmem:[%s5 + $0x138] sm:$0xff]
      %v8826 = vld [vmem:[%s5 + $0x140] sm:$0xff]
      %v8827 = vld [vmem:[%s5 + $0x148] sm:$0xff]
      %v8828 = vld [vmem:[%s5 + $0x150] sm:$0xff]
      %v8829 = vld [vmem:[%s5 + $0x158] sm:$0xff]
      %v8830 = vld [vmem:[%s5 + $0x160] sm:$0xff]
      %v8831 = vld [vmem:[%s5 + $0x168] sm:$0xff]
      %v8832 = vld [vmem:[%s5 + $0x170] sm:$0xff]
      %v8833 = vld [vmem:[%s5 + $0x178] sm:$0xff]
      %v8834 = vld [vmem:[%s5 + $0x180] sm:$0xff]
      %v8835 = vld [vmem:[%s5 + $0x188] sm:$0xff]
      %v8836 = vld [vmem:[%s5 + $0x190] sm:$0xff]
      %v8837 = vld [vmem:[%s5 + $0x198] sm:$0xff]
      %v8838 = vld [vmem:[%s5 + $0x1a0] sm:$0xff]
      %v8839 = vld [vmem:[%s5 + $0x1a8] sm:$0xff]
      %v8840 = vld [vmem:[%s5 + $0x1b0] sm:$0xff]
      %v8841 = vld [vmem:[%s5 + $0x1b8] sm:$0xff]
      %v8842 = vld [vmem:[%s5 + $0x1c0] sm:$0xff]
      %v8843 = vld [vmem:[%s5 + $0x1c8] sm:$0xff]
      %v8844 = vld [vmem:[%s5 + $0x1d0] sm:$0xff]
      %v8845 = vld [vmem:[%s5 + $0x1d8] sm:$0xff]
      %v8846 = vld [vmem:[%s5 + $0x1e0] sm:$0xff]
      %v8847 = vld [vmem:[%s5 + $0x1e8] sm:$0xff]
      %v8848 = vld [vmem:[%s5 + $0x1f0] sm:$0xff]
      %v8849 = vld [vmem:[%s5 + $0x1f8] sm:$0xff]
      %v8853 = vrot.slane %v8783, 7
      %v8854 = vrot.slane %v8784, 7
      %v8855 = vsel %vm610, %v8853, %v8854
      %v8856 = vrot.slane %v8785, 7
      %v8857 = vsel %vm610, %v8854, %v8856
      %v8922 = vrot.slane %v8722, 7
      %v8923 = vrot.slane %v8723, 7
      %v8924 = vsel %vm610, %v8922, %v8923
      %v8925 = vrot.slane %v8724, 7
      %v8926 = vsel %vm610, %v8923, %v8925
      %v8927 = vrot.slane %v8725, 7
      %v8928 = vsel %vm610, %v8925, %v8927
      %v8929 = vrot.slane %v8726, 7
      %v8930 = vsel %vm610, %v8927, %v8929
      %v8931 = vrot.slane %v8727, 7
      %v8932 = vsel %vm610, %v8929, %v8931
      %v8933 = vrot.slane %v8728, 7
      %v8934 = vsel %vm610, %v8931, %v8933
      %v8935 = vrot.slane %v8729, 7
      %v8936 = vsel %vm610, %v8933, %v8935
      %v8937 = vrot.slane %v8730, 7
      %v8938 = vsel %vm610, %v8935, %v8937
      %v8939 = vrot.slane %v8731, 7
      %v8940 = vsel %vm610, %v8937, %v8939
      %v8941 = vrot.slane %v8732, 7
      %v8942 = vsel %vm610, %v8939, %v8941
      %v8943 = vrot.slane %v8733, 7
      %v8944 = vsel %vm610, %v8941, %v8943
      %v8945 = vrot.slane %v8734, 7
      %v8946 = vsel %vm610, %v8943, %v8945
      %v8947 = vrot.slane %v8735, 7
      %v8948 = vsel %vm610, %v8945, %v8947
      %v8949 = vrot.slane %v8736, 7
      %v8950 = vsel %vm610, %v8947, %v8949
      %v8951 = vrot.slane %v8737, 7
      %v8952 = vsel %vm610, %v8949, %v8951
      %v8953 = vrot.slane %v8738, 7
      %v8954 = vsel %vm610, %v8951, %v8953
      %v8955 = vrot.slane %v8739, 7
      %v8956 = vsel %vm610, %v8953, %v8955
      %v8957 = vrot.slane %v8740, 7
      %v8958 = vsel %vm610, %v8955, %v8957
      %v8959 = vrot.slane %v8741, 7
      %v8960 = vsel %vm610, %v8957, %v8959
      %v8961 = vrot.slane %v8742, 7
      %v8962 = vsel %vm610, %v8959, %v8961
      %v8963 = vrot.slane %v8743, 7
      %v8964 = vsel %vm610, %v8961, %v8963
      %v8965 = vrot.slane %v8744, 7
      %v8966 = vsel %vm610, %v8963, %v8965
      %v8967 = vrot.slane %v8745, 7
      %v8968 = vsel %vm610, %v8965, %v8967
      %v8969 = vrot.slane %v8746, 7
      %v8970 = vsel %vm610, %v8967, %v8969
      %v8971 = vrot.slane %v8747, 7
      %v8972 = vsel %vm610, %v8969, %v8971
      %v8973 = vrot.slane %v8748, 7
      %v8974 = vsel %vm610, %v8971, %v8973
      %v8975 = vrot.slane %v8749, 7
      %v8976 = vsel %vm610, %v8973, %v8975
      %v8977 = vrot.slane %v8750, 7
      %v8978 = vsel %vm610, %v8975, %v8977
      %v8979 = vrot.slane %v8751, 7
      %v8980 = vsel %vm610, %v8977, %v8979
      %v8981 = vrot.slane %v8752, 7
      %v8982 = vsel %vm610, %v8979, %v8981
      %v8983 = vrot.slane %v8753, 7
      %v8984 = vsel %vm610, %v8981, %v8983
      %v8985 = vrot.slane %v8754, 7
      %v8986 = vsel %vm610, %v8983, %v8985
      %v8987 = vrot.slane %v8755, 7
      %v8988 = vsel %vm610, %v8985, %v8987
      %v8989 = vrot.slane %v8756, 7
      %v8990 = vsel %vm610, %v8987, %v8989
      %v8991 = vrot.slane %v8757, 7
      %v8992 = vsel %vm610, %v8989, %v8991
      %v8993 = vrot.slane %v8758, 7
      %v8994 = vsel %vm610, %v8991, %v8993
      %v8995 = vrot.slane %v8759, 7
      %v8996 = vsel %vm610, %v8993, %v8995
      %v8997 = vrot.slane %v8760, 7
      %v8998 = vsel %vm610, %v8995, %v8997
      %v8999 = vrot.slane %v8761, 7
      %v9000 = vsel %vm610, %v8997, %v8999
      %v9001 = vrot.slane %v8762, 7
      %v9002 = vsel %vm610, %v8999, %v9001
      %v9003 = vrot.slane %v8763, 7
      %v9004 = vsel %vm610, %v9001, %v9003
      %v9005 = vrot.slane %v8764, 7
      %v9006 = vsel %vm610, %v9003, %v9005
      %v9007 = vrot.slane %v8765, 7
      %v9008 = vsel %vm610, %v9005, %v9007
      %v9009 = vrot.slane %v8766, 7
      %v9010 = vsel %vm610, %v9007, %v9009
      %v9011 = vrot.slane %v8767, 7
      %v9012 = vsel %vm610, %v9009, %v9011
      %v9013 = vrot.slane %v8768, 7
      %v9014 = vsel %vm610, %v9011, %v9013
      %v9015 = vrot.slane %v8769, 7
      %v9016 = vsel %vm610, %v9013, %v9015
      %v9017 = vrot.slane %v8770, 7
      %v9018 = vsel %vm610, %v9015, %v9017
      %v9019 = vrot.slane %v8771, 7
      %v9020 = vsel %vm610, %v9017, %v9019
      %v9021 = vrot.slane %v8772, 7
      %v9022 = vsel %vm610, %v9019, %v9021
      %v9023 = vrot.slane %v8773, 7
      %v9024 = vsel %vm610, %v9021, %v9023
      %v9025 = vrot.slane %v8774, 7
      %v9026 = vsel %vm610, %v9023, %v9025
      %v9027 = vrot.slane %v8775, 7
      %v9028 = vsel %vm610, %v9025, %v9027
      %v9029 = vrot.slane %v8776, 7
      %v9030 = vsel %vm610, %v9027, %v9029
      %v9031 = vrot.slane %v8777, 7
      %v9032 = vsel %vm610, %v9029, %v9031
      %v9033 = vrot.slane %v8778, 7
      %v9034 = vsel %vm610, %v9031, %v9033
      %v9035 = vrot.slane %v8779, 7
      %v9036 = vsel %vm610, %v9033, %v9035
      %v9037 = vrot.slane %v8780, 7
      %v9038 = vsel %vm610, %v9035, %v9037
      %v9039 = vrot.slane %v8781, 7
      %v9040 = vsel %vm610, %v9037, %v9039
      %v9041 = vrot.slane %v8782, 7
      %v9042 = vsel %vm610, %v9039, %v9041
      %v9043 = vsel %vm610, %v9041, %v8853
      %v9106 = vsel %vm610, %v8856, %v8922
      %v9107 = vrot.slane %v8784, 1
      %v9108 = vrot.slane %v8785, 1
      %v9109 = vsel %vm737, %v9107, %v9108
      %v9111 = vrot.slane %v8722, 1
      %v9112 = vrot.slane %v8723, 1
      %v9113 = vsel %vm737, %v9111, %v9112
      %v9114 = vrot.slane %v8724, 1
      %v9115 = vsel %vm737, %v9112, %v9114
      %v9116 = vrot.slane %v8725, 1
      %v9117 = vsel %vm737, %v9114, %v9116
      %v9118 = vrot.slane %v8726, 1
      %v9119 = vsel %vm737, %v9116, %v9118
      %v9120 = vrot.slane %v8727, 1
      %v9121 = vsel %vm737, %v9118, %v9120
      %v9122 = vrot.slane %v8728, 1
      %v9123 = vsel %vm737, %v9120, %v9122
      %v9124 = vrot.slane %v8729, 1
      %v9125 = vsel %vm737, %v9122, %v9124
      %v9126 = vrot.slane %v8730, 1
      %v9127 = vsel %vm737, %v9124, %v9126
      %v9128 = vrot.slane %v8731, 1
      %v9129 = vsel %vm737, %v9126, %v9128
      %v9130 = vrot.slane %v8732, 1
      %v9131 = vsel %vm737, %v9128, %v9130
      %v9132 = vrot.slane %v8733, 1
      %v9133 = vsel %vm737, %v9130, %v9132
      %v9134 = vrot.slane %v8734, 1
      %v9135 = vsel %vm737, %v9132, %v9134
      %v9136 = vrot.slane %v8735, 1
      %v9137 = vsel %vm737, %v9134, %v9136
      %v9138 = vrot.slane %v8736, 1
      %v9139 = vsel %vm737, %v9136, %v9138
      %v9140 = vrot.slane %v8737, 1
      %v9141 = vsel %vm737, %v9138, %v9140
      %v9142 = vrot.slane %v8738, 1
      %v9143 = vsel %vm737, %v9140, %v9142
      %v9144 = vrot.slane %v8739, 1
      %v9145 = vsel %vm737, %v9142, %v9144
      %v9146 = vrot.slane %v8740, 1
      %v9147 = vsel %vm737, %v9144, %v9146
      %v9148 = vrot.slane %v8741, 1
      %v9149 = vsel %vm737, %v9146, %v9148
      %v9150 = vrot.slane %v8742, 1
      %v9151 = vsel %vm737, %v9148, %v9150
      %v9152 = vrot.slane %v8743, 1
      %v9153 = vsel %vm737, %v9150, %v9152
      %v9154 = vrot.slane %v8744, 1
      %v9155 = vsel %vm737, %v9152, %v9154
      %v9156 = vrot.slane %v8745, 1
      %v9157 = vsel %vm737, %v9154, %v9156
      %v9158 = vrot.slane %v8746, 1
      %v9159 = vsel %vm737, %v9156, %v9158
      %v9160 = vrot.slane %v8747, 1
      %v9161 = vsel %vm737, %v9158, %v9160
      %v9162 = vrot.slane %v8748, 1
      %v9163 = vsel %vm737, %v9160, %v9162
      %v9164 = vrot.slane %v8749, 1
      %v9165 = vsel %vm737, %v9162, %v9164
      %v9166 = vrot.slane %v8750, 1
      %v9167 = vsel %vm737, %v9164, %v9166
      %v9168 = vrot.slane %v8751, 1
      %v9169 = vsel %vm737, %v9166, %v9168
      %v9170 = vrot.slane %v8752, 1
      %v9171 = vsel %vm737, %v9168, %v9170
      %v9172 = vrot.slane %v8753, 1
      %v9173 = vsel %vm737, %v9170, %v9172
      %v9174 = vrot.slane %v8754, 1
      %v9175 = vsel %vm737, %v9172, %v9174
      %v9176 = vrot.slane %v8755, 1
      %v9177 = vsel %vm737, %v9174, %v9176
      %v9178 = vrot.slane %v8756, 1
      %v9179 = vsel %vm737, %v9176, %v9178
      %v9180 = vrot.slane %v8757, 1
      %v9181 = vsel %vm737, %v9178, %v9180
      %v9182 = vrot.slane %v8758, 1
      %v9183 = vsel %vm737, %v9180, %v9182
      %v9184 = vrot.slane %v8759, 1
      %v9185 = vsel %vm737, %v9182, %v9184
      %v9186 = vrot.slane %v8760, 1
      %v9187 = vsel %vm737, %v9184, %v9186
      %v9188 = vrot.slane %v8761, 1
      %v9189 = vsel %vm737, %v9186, %v9188
      %v9190 = vrot.slane %v8762, 1
      %v9191 = vsel %vm737, %v9188, %v9190
      %v9192 = vrot.slane %v8763, 1
      %v9193 = vsel %vm737, %v9190, %v9192
      %v9194 = vrot.slane %v8764, 1
      %v9195 = vsel %vm737, %v9192, %v9194
      %v9196 = vrot.slane %v8765, 1
      %v9197 = vsel %vm737, %v9194, %v9196
      %v9198 = vrot.slane %v8766, 1
      %v9199 = vsel %vm737, %v9196, %v9198
      %v9200 = vrot.slane %v8767, 1
      %v9201 = vsel %vm737, %v9198, %v9200
      %v9202 = vrot.slane %v8768, 1
      %v9203 = vsel %vm737, %v9200, %v9202
      %v9204 = vrot.slane %v8769, 1
      %v9205 = vsel %vm737, %v9202, %v9204
      %v9206 = vrot.slane %v8770, 1
      %v9207 = vsel %vm737, %v9204, %v9206
      %v9208 = vrot.slane %v8771, 1
      %v9209 = vsel %vm737, %v9206, %v9208
      %v9210 = vrot.slane %v8772, 1
      %v9211 = vsel %vm737, %v9208, %v9210
      %v9212 = vrot.slane %v8773, 1
      %v9213 = vsel %vm737, %v9210, %v9212
      %v9214 = vrot.slane %v8774, 1
      %v9215 = vsel %vm737, %v9212, %v9214
      %v9216 = vrot.slane %v8775, 1
      %v9217 = vsel %vm737, %v9214, %v9216
      %v9218 = vrot.slane %v8776, 1
      %v9219 = vsel %vm737, %v9216, %v9218
      %v9220 = vrot.slane %v8777, 1
      %v9221 = vsel %vm737, %v9218, %v9220
      %v9222 = vrot.slane %v8778, 1
      %v9223 = vsel %vm737, %v9220, %v9222
      %v9224 = vrot.slane %v8779, 1
      %v9225 = vsel %vm737, %v9222, %v9224
      %v9226 = vrot.slane %v8780, 1
      %v9227 = vsel %vm737, %v9224, %v9226
      %v9228 = vrot.slane %v8781, 1
      %v9229 = vsel %vm737, %v9226, %v9228
      %v9230 = vrot.slane %v8782, 1
      %v9231 = vsel %vm737, %v9228, %v9230
      %v9232 = vrot.slane %v8783, 1
      %v9233 = vsel %vm737, %v9230, %v9232
      %v9234 = vsel %vm737, %v9232, %v9107
      %v9236 = vsel %vm737, %v9108, %v9111
      %9237 = vrot.lane.b32.xlu0 %v8784, 8
      %v9238 = vpop.permute.xlu0 %9237
      %9239 = vrot.lane.b32.xlu0 %v8785, 8
      %v9240 = vpop.permute.xlu0 %9239
      %9241 = vrot.lane.b32.xlu0 %v8722, 8
      %v9242 = vpop.permute.xlu0 %9241
      %9243 = vrot.lane.b32.xlu0 %v8723, 8
      %v9244 = vpop.permute.xlu0 %9243
      %9245 = vrot.lane.b32.xlu0 %v8724, 8
      %v9246 = vpop.permute.xlu0 %9245
      %9247 = vrot.lane.b32.xlu0 %v8725, 8
      %v9248 = vpop.permute.xlu0 %9247
      %9249 = vrot.lane.b32.xlu0 %v8726, 8
      %v9250 = vpop.permute.xlu0 %9249
      %9251 = vrot.lane.b32.xlu0 %v8727, 8
      %v9252 = vpop.permute.xlu0 %9251
      %9253 = vrot.lane.b32.xlu0 %v8728, 8
      %v9254 = vpop.permute.xlu0 %9253
      %9255 = vrot.lane.b32.xlu0 %v8729, 8
      %v9256 = vpop.permute.xlu0 %9255
      %9257 = vrot.lane.b32.xlu0 %v8730, 8
      %v9258 = vpop.permute.xlu0 %9257
      %9259 = vrot.lane.b32.xlu0 %v8731, 8
      %v9260 = vpop.permute.xlu0 %9259
      %9261 = vrot.lane.b32.xlu0 %v8732, 8
      %v9262 = vpop.permute.xlu0 %9261
      %9263 = vrot.lane.b32.xlu0 %v8733, 8
      %v9264 = vpop.permute.xlu0 %9263
      %9265 = vrot.lane.b32.xlu0 %v8734, 8
      %v9266 = vpop.permute.xlu0 %9265
      %9267 = vrot.lane.b32.xlu0 %v8735, 8
      %v9268 = vpop.permute.xlu0 %9267
      %9269 = vrot.lane.b32.xlu0 %v8736, 8
      %v9270 = vpop.permute.xlu0 %9269
      %9271 = vrot.lane.b32.xlu0 %v8737, 8
      %v9272 = vpop.permute.xlu0 %9271
      %9273 = vrot.lane.b32.xlu0 %v8738, 8
      %v9274 = vpop.permute.xlu0 %9273
      %9275 = vrot.lane.b32.xlu0 %v8739, 8
      %v9276 = vpop.permute.xlu0 %9275
      %9277 = vrot.lane.b32.xlu0 %v8740, 8
      %v9278 = vpop.permute.xlu0 %9277
      %9279 = vrot.lane.b32.xlu0 %v8741, 8
      %v9280 = vpop.permute.xlu0 %9279
      %9281 = vrot.lane.b32.xlu0 %v8742, 8
      %v9282 = vpop.permute.xlu0 %9281
      %9283 = vrot.lane.b32.xlu0 %v8743, 8
      %v9284 = vpop.permute.xlu0 %9283
      %9285 = vrot.lane.b32.xlu0 %v8744, 8
      %v9286 = vpop.permute.xlu0 %9285
      %9287 = vrot.lane.b32.xlu0 %v8745, 8
      %v9288 = vpop.permute.xlu0 %9287
      %9289 = vrot.lane.b32.xlu0 %v8746, 8
      %v9290 = vpop.permute.xlu0 %9289
      %9291 = vrot.lane.b32.xlu0 %v8747, 8
      %v9292 = vpop.permute.xlu0 %9291
      %9293 = vrot.lane.b32.xlu0 %v8748, 8
      %v9294 = vpop.permute.xlu0 %9293
      %9295 = vrot.lane.b32.xlu0 %v8749, 8
      %v9296 = vpop.permute.xlu0 %9295
      %9297 = vrot.lane.b32.xlu0 %v8750, 8
      %v9298 = vpop.permute.xlu0 %9297
      %9299 = vrot.lane.b32.xlu0 %v8751, 8
      %v9300 = vpop.permute.xlu0 %9299
      %9301 = vrot.lane.b32.xlu0 %v8752, 8
      %v9302 = vpop.permute.xlu0 %9301
      %9303 = vrot.lane.b32.xlu0 %v8753, 8
      %v9304 = vpop.permute.xlu0 %9303
      %9305 = vrot.lane.b32.xlu0 %v8754, 8
      %v9306 = vpop.permute.xlu0 %9305
      %9307 = vrot.lane.b32.xlu0 %v8755, 8
      %v9308 = vpop.permute.xlu0 %9307
      %9309 = vrot.lane.b32.xlu0 %v8756, 8
      %v9310 = vpop.permute.xlu0 %9309
      %9311 = vrot.lane.b32.xlu0 %v8757, 8
      %v9312 = vpop.permute.xlu0 %9311
      %9313 = vrot.lane.b32.xlu0 %v8758, 8
      %v9314 = vpop.permute.xlu0 %9313
      %9315 = vrot.lane.b32.xlu0 %v8759, 8
      %v9316 = vpop.permute.xlu0 %9315
      %9317 = vrot.lane.b32.xlu0 %v8760, 8
      %v9318 = vpop.permute.xlu0 %9317
      %9319 = vrot.lane.b32.xlu0 %v8761, 8
      %v9320 = vpop.permute.xlu0 %9319
      %9321 = vrot.lane.b32.xlu0 %v8762, 8
      %v9322 = vpop.permute.xlu0 %9321
      %9323 = vrot.lane.b32.xlu0 %v8763, 8
      %v9324 = vpop.permute.xlu0 %9323
      %9325 = vrot.lane.b32.xlu0 %v8764, 8
      %v9326 = vpop.permute.xlu0 %9325
      %9327 = vrot.lane.b32.xlu0 %v8765, 8
      %v9328 = vpop.permute.xlu0 %9327
      %9329 = vrot.lane.b32.xlu0 %v8766, 8
      %v9330 = vpop.permute.xlu0 %9329
      %9331 = vrot.lane.b32.xlu0 %v8767, 8
      %v9332 = vpop.permute.xlu0 %9331
      %9333 = vrot.lane.b32.xlu0 %v8768, 8
      %v9334 = vpop.permute.xlu0 %9333
      %9335 = vrot.lane.b32.xlu0 %v8769, 8
      %v9336 = vpop.permute.xlu0 %9335
      %9337 = vrot.lane.b32.xlu0 %v8770, 8
      %v9338 = vpop.permute.xlu0 %9337
      %9339 = vrot.lane.b32.xlu0 %v8771, 8
      %v9340 = vpop.permute.xlu0 %9339
      %9341 = vrot.lane.b32.xlu0 %v8772, 8
      %v9342 = vpop.permute.xlu0 %9341
      %9343 = vrot.lane.b32.xlu0 %v8773, 8
      %v9344 = vpop.permute.xlu0 %9343
      %9345 = vrot.lane.b32.xlu0 %v8774, 8
      %v9346 = vpop.permute.xlu0 %9345
      %9347 = vrot.lane.b32.xlu0 %v8775, 8
      %v9348 = vpop.permute.xlu0 %9347
      %9349 = vrot.lane.b32.xlu0 %v8776, 8
      %v9350 = vpop.permute.xlu0 %9349
      %9351 = vrot.lane.b32.xlu0 %v8777, 8
      %v9352 = vpop.permute.xlu0 %9351
      %9353 = vrot.lane.b32.xlu0 %v8778, 8
      %v9354 = vpop.permute.xlu0 %9353
      %9355 = vrot.lane.b32.xlu0 %v8779, 8
      %v9356 = vpop.permute.xlu0 %9355
      %9357 = vrot.lane.b32.xlu0 %v8780, 8
      %v9358 = vpop.permute.xlu0 %9357
      %9359 = vrot.lane.b32.xlu0 %v8781, 8
      %v9360 = vpop.permute.xlu0 %9359
      %9361 = vrot.lane.b32.xlu0 %v8782, 8
      %v9362 = vpop.permute.xlu0 %9361
      %9363 = vrot.lane.b32.xlu0 %v8783, 8
      %v9364 = vpop.permute.xlu0 %9363
      %9430 = vrot.lane.b32.xlu0 %v9109, 16
      %v9431 = vpop.permute.xlu0 %9430
      %9432 = vrot.lane.b32.xlu0 %v9236, 16
      %v9433 = vpop.permute.xlu0 %9432
      %9434 = vrot.lane.b32.xlu0 %v9113, 16
      %v9435 = vpop.permute.xlu0 %9434
      %9436 = vrot.lane.b32.xlu0 %v9115, 16
      %v9437 = vpop.permute.xlu0 %9436
      %9438 = vrot.lane.b32.xlu0 %v9117, 16
      %v9439 = vpop.permute.xlu0 %9438
      %9440 = vrot.lane.b32.xlu0 %v9119, 16
      %v9441 = vpop.permute.xlu0 %9440
      %9442 = vrot.lane.b32.xlu0 %v9121, 16
      %v9443 = vpop.permute.xlu0 %9442
      %9444 = vrot.lane.b32.xlu0 %v9123, 16
      %v9445 = vpop.permute.xlu0 %9444
      %9446 = vrot.lane.b32.xlu0 %v9125, 16
      %v9447 = vpop.permute.xlu0 %9446
      %9448 = vrot.lane.b32.xlu0 %v9127, 16
      %v9449 = vpop.permute.xlu0 %9448
      %9450 = vrot.lane.b32.xlu0 %v9129, 16
      %v9451 = vpop.permute.xlu0 %9450
      %9452 = vrot.lane.b32.xlu0 %v9131, 16
      %v9453 = vpop.permute.xlu0 %9452
      %9454 = vrot.lane.b32.xlu0 %v9133, 16
      %v9455 = vpop.permute.xlu0 %9454
      %9456 = vrot.lane.b32.xlu0 %v9135, 16
      %v9457 = vpop.permute.xlu0 %9456
      %9458 = vrot.lane.b32.xlu0 %v9137, 16
      %v9459 = vpop.permute.xlu0 %9458
      %9460 = vrot.lane.b32.xlu0 %v9139, 16
      %v9461 = vpop.permute.xlu0 %9460
      %9462 = vrot.lane.b32.xlu0 %v9141, 16
      %v9463 = vpop.permute.xlu0 %9462
      %9464 = vrot.lane.b32.xlu0 %v9143, 16
      %v9465 = vpop.permute.xlu0 %9464
      %9466 = vrot.lane.b32.xlu0 %v9145, 16
      %v9467 = vpop.permute.xlu0 %9466
      %9468 = vrot.lane.b32.xlu0 %v9147, 16
      %v9469 = vpop.permute.xlu0 %9468
      %9470 = vrot.lane.b32.xlu0 %v9149, 16
      %v9471 = vpop.permute.xlu0 %9470
      %9472 = vrot.lane.b32.xlu0 %v9151, 16
      %v9473 = vpop.permute.xlu0 %9472
      %9474 = vrot.lane.b32.xlu0 %v9153, 16
      %v9475 = vpop.permute.xlu0 %9474
      %9476 = vrot.lane.b32.xlu0 %v9155, 16
      %v9477 = vpop.permute.xlu0 %9476
      %9478 = vrot.lane.b32.xlu0 %v9157, 16
      %v9479 = vpop.permute.xlu0 %9478
      %9480 = vrot.lane.b32.xlu0 %v9159, 16
      %v9481 = vpop.permute.xlu0 %9480
      %9482 = vrot.lane.b32.xlu0 %v9161, 16
      %v9483 = vpop.permute.xlu0 %9482
      %9484 = vrot.lane.b32.xlu0 %v9163, 16
      %v9485 = vpop.permute.xlu0 %9484
      %9486 = vrot.lane.b32.xlu0 %v9165, 16
      %v9487 = vpop.permute.xlu0 %9486
      %9488 = vrot.lane.b32.xlu0 %v9167, 16
      %v9489 = vpop.permute.xlu0 %9488
      %9490 = vrot.lane.b32.xlu0 %v9169, 16
      %v9491 = vpop.permute.xlu0 %9490
      %9492 = vrot.lane.b32.xlu0 %v9171, 16
      %v9493 = vpop.permute.xlu0 %9492
      %9494 = vrot.lane.b32.xlu0 %v9173, 16
      %v9495 = vpop.permute.xlu0 %9494
      %9496 = vrot.lane.b32.xlu0 %v9175, 16
      %v9497 = vpop.permute.xlu0 %9496
      %9498 = vrot.lane.b32.xlu0 %v9177, 16
      %v9499 = vpop.permute.xlu0 %9498
      %9500 = vrot.lane.b32.xlu0 %v9179, 16
      %v9501 = vpop.permute.xlu0 %9500
      %9502 = vrot.lane.b32.xlu0 %v9181, 16
      %v9503 = vpop.permute.xlu0 %9502
      %9504 = vrot.lane.b32.xlu0 %v9183, 16
      %v9505 = vpop.permute.xlu0 %9504
      %9506 = vrot.lane.b32.xlu0 %v9185, 16
      %v9507 = vpop.permute.xlu0 %9506
      %9508 = vrot.lane.b32.xlu0 %v9187, 16
      %v9509 = vpop.permute.xlu0 %9508
      %9510 = vrot.lane.b32.xlu0 %v9189, 16
      %v9511 = vpop.permute.xlu0 %9510
      %9512 = vrot.lane.b32.xlu0 %v9191, 16
      %v9513 = vpop.permute.xlu0 %9512
      %9514 = vrot.lane.b32.xlu0 %v9193, 16
      %v9515 = vpop.permute.xlu0 %9514
      %9516 = vrot.lane.b32.xlu0 %v9195, 16
      %v9517 = vpop.permute.xlu0 %9516
      %9518 = vrot.lane.b32.xlu0 %v9197, 16
      %v9519 = vpop.permute.xlu0 %9518
      %9520 = vrot.lane.b32.xlu0 %v9199, 16
      %v9521 = vpop.permute.xlu0 %9520
      %9522 = vrot.lane.b32.xlu0 %v9201, 16
      %v9523 = vpop.permute.xlu0 %9522
      %9524 = vrot.lane.b32.xlu0 %v9203, 16
      %v9525 = vpop.permute.xlu0 %9524
      %9526 = vrot.lane.b32.xlu0 %v9205, 16
      %v9527 = vpop.permute.xlu0 %9526
      %9528 = vrot.lane.b32.xlu0 %v9207, 16
      %v9529 = vpop.permute.xlu0 %9528
      %9530 = vrot.lane.b32.xlu0 %v9209, 16
      %v9531 = vpop.permute.xlu0 %9530
      %9532 = vrot.lane.b32.xlu0 %v9211, 16
      %v9533 = vpop.permute.xlu0 %9532
      %9534 = vrot.lane.b32.xlu0 %v9213, 16
      %v9535 = vpop.permute.xlu0 %9534
      %9536 = vrot.lane.b32.xlu0 %v9215, 16
      %v9537 = vpop.permute.xlu0 %9536
      %9538 = vrot.lane.b32.xlu0 %v9217, 16
      %v9539 = vpop.permute.xlu0 %9538
      %9540 = vrot.lane.b32.xlu0 %v9219, 16
      %v9541 = vpop.permute.xlu0 %9540
      %9542 = vrot.lane.b32.xlu0 %v9221, 16
      %v9543 = vpop.permute.xlu0 %9542
      %9544 = vrot.lane.b32.xlu0 %v9223, 16
      %v9545 = vpop.permute.xlu0 %9544
      %9546 = vrot.lane.b32.xlu0 %v9225, 16
      %v9547 = vpop.permute.xlu0 %9546
      %9548 = vrot.lane.b32.xlu0 %v9227, 16
      %v9549 = vpop.permute.xlu0 %9548
      %9550 = vrot.lane.b32.xlu0 %v9229, 16
      %v9551 = vpop.permute.xlu0 %9550
      %9552 = vrot.lane.b32.xlu0 %v9231, 16
      %v9553 = vpop.permute.xlu0 %9552
      %9554 = vrot.lane.b32.xlu0 %v9233, 16
      %v9555 = vpop.permute.xlu0 %9554
      %9556 = vrot.lane.b32.xlu0 %v9234, 16
      %v9557 = vpop.permute.xlu0 %9556
      %9623 = vrot.lane.b32.xlu0 %v9106, 24
      %v9624 = vpop.permute.xlu0 %9623
      %9625 = vrot.lane.b32.xlu0 %v8924, 24
      %v9626 = vpop.permute.xlu0 %9625
      %9627 = vrot.lane.b32.xlu0 %v8926, 24
      %v9628 = vpop.permute.xlu0 %9627
      %9629 = vrot.lane.b32.xlu0 %v8928, 24
      %v9630 = vpop.permute.xlu0 %9629
      %9631 = vrot.lane.b32.xlu0 %v8930, 24
      %v9632 = vpop.permute.xlu0 %9631
      %9633 = vrot.lane.b32.xlu0 %v8932, 24
      %v9634 = vpop.permute.xlu0 %9633
      %9635 = vrot.lane.b32.xlu0 %v8934, 24
      %v9636 = vpop.permute.xlu0 %9635
      %9637 = vrot.lane.b32.xlu0 %v8936, 24
      %v9638 = vpop.permute.xlu0 %9637
      %9639 = vrot.lane.b32.xlu0 %v8938, 24
      %v9640 = vpop.permute.xlu0 %9639
      %9641 = vrot.lane.b32.xlu0 %v8940, 24
      %v9642 = vpop.permute.xlu0 %9641
      %9643 = vrot.lane.b32.xlu0 %v8942, 24
      %v9644 = vpop.permute.xlu0 %9643
      %9645 = vrot.lane.b32.xlu0 %v8944, 24
      %v9646 = vpop.permute.xlu0 %9645
      %9647 = vrot.lane.b32.xlu0 %v8946, 24
      %v9648 = vpop.permute.xlu0 %9647
      %9649 = vrot.lane.b32.xlu0 %v8948, 24
      %v9650 = vpop.permute.xlu0 %9649
      %9651 = vrot.lane.b32.xlu0 %v8950, 24
      %v9652 = vpop.permute.xlu0 %9651
      %9653 = vrot.lane.b32.xlu0 %v8952, 24
      %v9654 = vpop.permute.xlu0 %9653
      %9655 = vrot.lane.b32.xlu0 %v8954, 24
      %v9656 = vpop.permute.xlu0 %9655
      %9657 = vrot.lane.b32.xlu0 %v8956, 24
      %v9658 = vpop.permute.xlu0 %9657
      %9659 = vrot.lane.b32.xlu0 %v8958, 24
      %v9660 = vpop.permute.xlu0 %9659
      %9661 = vrot.lane.b32.xlu0 %v8960, 24
      %v9662 = vpop.permute.xlu0 %9661
      %9663 = vrot.lane.b32.xlu0 %v8962, 24
      %v9664 = vpop.permute.xlu0 %9663
      %9665 = vrot.lane.b32.xlu0 %v8964, 24
      %v9666 = vpop.permute.xlu0 %9665
      %9667 = vrot.lane.b32.xlu0 %v8966, 24
      %v9668 = vpop.permute.xlu0 %9667
      %9669 = vrot.lane.b32.xlu0 %v8968, 24
      %v9670 = vpop.permute.xlu0 %9669
      %9671 = vrot.lane.b32.xlu0 %v8970, 24
      %v9672 = vpop.permute.xlu0 %9671
      %9673 = vrot.lane.b32.xlu0 %v8972, 24
      %v9674 = vpop.permute.xlu0 %9673
      %9675 = vrot.lane.b32.xlu0 %v8974, 24
      %v9676 = vpop.permute.xlu0 %9675
      %9677 = vrot.lane.b32.xlu0 %v8976, 24
      %v9678 = vpop.permute.xlu0 %9677
      %9679 = vrot.lane.b32.xlu0 %v8978, 24
      %v9680 = vpop.permute.xlu0 %9679
      %9681 = vrot.lane.b32.xlu0 %v8980, 24
      %v9682 = vpop.permute.xlu0 %9681
      %9683 = vrot.lane.b32.xlu0 %v8982, 24
      %v9684 = vpop.permute.xlu0 %9683
      %9685 = vrot.lane.b32.xlu0 %v8984, 24
      %v9686 = vpop.permute.xlu0 %9685
      %9687 = vrot.lane.b32.xlu0 %v8986, 24
      %v9688 = vpop.permute.xlu0 %9687
      %9689 = vrot.lane.b32.xlu0 %v8988, 24
      %v9690 = vpop.permute.xlu0 %9689
      %9691 = vrot.lane.b32.xlu0 %v8990, 24
      %v9692 = vpop.permute.xlu0 %9691
      %9693 = vrot.lane.b32.xlu0 %v8992, 24
      %v9694 = vpop.permute.xlu0 %9693
      %9695 = vrot.lane.b32.xlu0 %v8994, 24
      %v9696 = vpop.permute.xlu0 %9695
      %9697 = vrot.lane.b32.xlu0 %v8996, 24
      %v9698 = vpop.permute.xlu0 %9697
      %9699 = vrot.lane.b32.xlu0 %v8998, 24
      %v9700 = vpop.permute.xlu0 %9699
      %9701 = vrot.lane.b32.xlu0 %v9000, 24
      %v9702 = vpop.permute.xlu0 %9701
      %9703 = vrot.lane.b32.xlu0 %v9002, 24
      %v9704 = vpop.permute.xlu0 %9703
      %9705 = vrot.lane.b32.xlu0 %v9004, 24
      %v9706 = vpop.permute.xlu0 %9705
      %9707 = vrot.lane.b32.xlu0 %v9006, 24
      %v9708 = vpop.permute.xlu0 %9707
      %9709 = vrot.lane.b32.xlu0 %v9008, 24
      %v9710 = vpop.permute.xlu0 %9709
      %9711 = vrot.lane.b32.xlu0 %v9010, 24
      %v9712 = vpop.permute.xlu0 %9711
      %9713 = vrot.lane.b32.xlu0 %v9012, 24
      %v9714 = vpop.permute.xlu0 %9713
      %9715 = vrot.lane.b32.xlu0 %v9014, 24
      %v9716 = vpop.permute.xlu0 %9715
      %9717 = vrot.lane.b32.xlu0 %v9016, 24
      %v9718 = vpop.permute.xlu0 %9717
      %9719 = vrot.lane.b32.xlu0 %v9018, 24
      %v9720 = vpop.permute.xlu0 %9719
      %9721 = vrot.lane.b32.xlu0 %v9020, 24
      %v9722 = vpop.permute.xlu0 %9721
      %9723 = vrot.lane.b32.xlu0 %v9022, 24
      %v9724 = vpop.permute.xlu0 %9723
      %9725 = vrot.lane.b32.xlu0 %v9024, 24
      %v9726 = vpop.permute.xlu0 %9725
      %9727 = vrot.lane.b32.xlu0 %v9026, 24
      %v9728 = vpop.permute.xlu0 %9727
      %9729 = vrot.lane.b32.xlu0 %v9028, 24
      %v9730 = vpop.permute.xlu0 %9729
      %9731 = vrot.lane.b32.xlu0 %v9030, 24
      %v9732 = vpop.permute.xlu0 %9731
      %9733 = vrot.lane.b32.xlu0 %v9032, 24
      %v9734 = vpop.permute.xlu0 %9733
      %9735 = vrot.lane.b32.xlu0 %v9034, 24
      %v9736 = vpop.permute.xlu0 %9735
      %9737 = vrot.lane.b32.xlu0 %v9036, 24
      %v9738 = vpop.permute.xlu0 %9737
      %9739 = vrot.lane.b32.xlu0 %v9038, 24
      %v9740 = vpop.permute.xlu0 %9739
      %9741 = vrot.lane.b32.xlu0 %v9040, 24
      %v9742 = vpop.permute.xlu0 %9741
      %9743 = vrot.lane.b32.xlu0 %v9042, 24
      %v9744 = vpop.permute.xlu0 %9743
      %9745 = vrot.lane.b32.xlu0 %v9043, 24
      %v9746 = vpop.permute.xlu0 %9745
      %9747 = vrot.lane.b32.xlu0 %v8855, 24
      %v9748 = vpop.permute.xlu0 %9747
      %9749 = vrot.lane.b32.xlu0 %v8857, 24
      %v9750 = vpop.permute.xlu0 %9749
      %9815 = vrot.lane.b32.xlu0 %v8722, 32
      %v9816 = vpop.permute.xlu0 %9815
      %9817 = vrot.lane.b32.xlu0 %v8723, 32
      %v9818 = vpop.permute.xlu0 %9817
      %9819 = vrot.lane.b32.xlu0 %v8724, 32
      %v9820 = vpop.permute.xlu0 %9819
      %9821 = vrot.lane.b32.xlu0 %v8725, 32
      %v9822 = vpop.permute.xlu0 %9821
      %9823 = vrot.lane.b32.xlu0 %v8726, 32
      %v9824 = vpop.permute.xlu0 %9823
      %9825 = vrot.lane.b32.xlu0 %v8727, 32
      %v9826 = vpop.permute.xlu0 %9825
      %9827 = vrot.lane.b32.xlu0 %v8728, 32
      %v9828 = vpop.permute.xlu0 %9827
      %9829 = vrot.lane.b32.xlu0 %v8729, 32
      %v9830 = vpop.permute.xlu0 %9829
      %9831 = vrot.lane.b32.xlu0 %v8730, 32
      %v9832 = vpop.permute.xlu0 %9831
      %9833 = vrot.lane.b32.xlu0 %v8731, 32
      %v9834 = vpop.permute.xlu0 %9833
      %9835 = vrot.lane.b32.xlu0 %v8732, 32
      %v9836 = vpop.permute.xlu0 %9835
      %9837 = vrot.lane.b32.xlu0 %v8733, 32
      %v9838 = vpop.permute.xlu0 %9837
      %9839 = vrot.lane.b32.xlu0 %v8734, 32
      %v9840 = vpop.permute.xlu0 %9839
      %9841 = vrot.lane.b32.xlu0 %v8735, 32
      %v9842 = vpop.permute.xlu0 %9841
      %9843 = vrot.lane.b32.xlu0 %v8736, 32
      %v9844 = vpop.permute.xlu0 %9843
      %9845 = vrot.lane.b32.xlu0 %v8737, 32
      %v9846 = vpop.permute.xlu0 %9845
      %9847 = vrot.lane.b32.xlu0 %v8738, 32
      %v9848 = vpop.permute.xlu0 %9847
      %9849 = vrot.lane.b32.xlu0 %v8739, 32
      %v9850 = vpop.permute.xlu0 %9849
      %9851 = vrot.lane.b32.xlu0 %v8740, 32
      %v9852 = vpop.permute.xlu0 %9851
      %9853 = vrot.lane.b32.xlu0 %v8741, 32
      %v9854 = vpop.permute.xlu0 %9853
      %9855 = vrot.lane.b32.xlu0 %v8742, 32
      %v9856 = vpop.permute.xlu0 %9855
      %9857 = vrot.lane.b32.xlu0 %v8743, 32
      %v9858 = vpop.permute.xlu0 %9857
      %9859 = vrot.lane.b32.xlu0 %v8744, 32
      %v9860 = vpop.permute.xlu0 %9859
      %9861 = vrot.lane.b32.xlu0 %v8745, 32
      %v9862 = vpop.permute.xlu0 %9861
      %9863 = vrot.lane.b32.xlu0 %v8746, 32
      %v9864 = vpop.permute.xlu0 %9863
      %9865 = vrot.lane.b32.xlu0 %v8747, 32
      %v9866 = vpop.permute.xlu0 %9865
      %9867 = vrot.lane.b32.xlu0 %v8748, 32
      %v9868 = vpop.permute.xlu0 %9867
      %9869 = vrot.lane.b32.xlu0 %v8749, 32
      %v9870 = vpop.permute.xlu0 %9869
      %9871 = vrot.lane.b32.xlu0 %v8750, 32
      %v9872 = vpop.permute.xlu0 %9871
      %9873 = vrot.lane.b32.xlu0 %v8751, 32
      %v9874 = vpop.permute.xlu0 %9873
      %9875 = vrot.lane.b32.xlu0 %v8752, 32
      %v9876 = vpop.permute.xlu0 %9875
      %9877 = vrot.lane.b32.xlu0 %v8753, 32
      %v9878 = vpop.permute.xlu0 %9877
      %9879 = vrot.lane.b32.xlu0 %v8754, 32
      %v9880 = vpop.permute.xlu0 %9879
      %9881 = vrot.lane.b32.xlu0 %v8755, 32
      %v9882 = vpop.permute.xlu0 %9881
      %9883 = vrot.lane.b32.xlu0 %v8756, 32
      %v9884 = vpop.permute.xlu0 %9883
      %9885 = vrot.lane.b32.xlu0 %v8757, 32
      %v9886 = vpop.permute.xlu0 %9885
      %9887 = vrot.lane.b32.xlu0 %v8758, 32
      %v9888 = vpop.permute.xlu0 %9887
      %9889 = vrot.lane.b32.xlu0 %v8759, 32
      %v9890 = vpop.permute.xlu0 %9889
      %9891 = vrot.lane.b32.xlu0 %v8760, 32
      %v9892 = vpop.permute.xlu0 %9891
      %9893 = vrot.lane.b32.xlu0 %v8761, 32
      %v9894 = vpop.permute.xlu0 %9893
      %9895 = vrot.lane.b32.xlu0 %v8762, 32
      %v9896 = vpop.permute.xlu0 %9895
      %9897 = vrot.lane.b32.xlu0 %v8763, 32
      %v9898 = vpop.permute.xlu0 %9897
      %9899 = vrot.lane.b32.xlu0 %v8764, 32
      %v9900 = vpop.permute.xlu0 %9899
      %9901 = vrot.lane.b32.xlu0 %v8765, 32
      %v9902 = vpop.permute.xlu0 %9901
      %9903 = vrot.lane.b32.xlu0 %v8766, 32
      %v9904 = vpop.permute.xlu0 %9903
      %9905 = vrot.lane.b32.xlu0 %v8767, 32
      %v9906 = vpop.permute.xlu0 %9905
      %9907 = vrot.lane.b32.xlu0 %v8768, 32
      %v9908 = vpop.permute.xlu0 %9907
      %9909 = vrot.lane.b32.xlu0 %v8769, 32
      %v9910 = vpop.permute.xlu0 %9909
      %9911 = vrot.lane.b32.xlu0 %v8770, 32
      %v9912 = vpop.permute.xlu0 %9911
      %9913 = vrot.lane.b32.xlu0 %v8771, 32
      %v9914 = vpop.permute.xlu0 %9913
      %9915 = vrot.lane.b32.xlu0 %v8772, 32
      %v9916 = vpop.permute.xlu0 %9915
      %9917 = vrot.lane.b32.xlu0 %v8773, 32
      %v9918 = vpop.permute.xlu0 %9917
      %9919 = vrot.lane.b32.xlu0 %v8774, 32
      %v9920 = vpop.permute.xlu0 %9919
      %9921 = vrot.lane.b32.xlu0 %v8775, 32
      %v9922 = vpop.permute.xlu0 %9921
      %9923 = vrot.lane.b32.xlu0 %v8776, 32
      %v9924 = vpop.permute.xlu0 %9923
      %9925 = vrot.lane.b32.xlu0 %v8777, 32
      %v9926 = vpop.permute.xlu0 %9925
      %9927 = vrot.lane.b32.xlu0 %v8778, 32
      %v9928 = vpop.permute.xlu0 %9927
      %9929 = vrot.lane.b32.xlu0 %v8779, 32
      %v9930 = vpop.permute.xlu0 %9929
      %9931 = vrot.lane.b32.xlu0 %v8780, 32
      %v9932 = vpop.permute.xlu0 %9931
      %9933 = vrot.lane.b32.xlu0 %v8781, 32
      %v9934 = vpop.permute.xlu0 %9933
      %9935 = vrot.lane.b32.xlu0 %v8782, 32
      %v9936 = vpop.permute.xlu0 %9935
      %9937 = vrot.lane.b32.xlu0 %v8783, 32
      %v9938 = vpop.permute.xlu0 %9937
      %9939 = vrot.lane.b32.xlu0 %v8784, 32
      %v9940 = vpop.permute.xlu0 %9939
      %9941 = vrot.lane.b32.xlu0 %v8785, 32
      %v9942 = vpop.permute.xlu0 %9941
      %10007 = vrot.lane.b32.xlu0 %v9113, 40
      %v10008 = vpop.permute.xlu0 %10007
      %10009 = vrot.lane.b32.xlu0 %v9115, 40
      %v10010 = vpop.permute.xlu0 %10009
      %10011 = vrot.lane.b32.xlu0 %v9117, 40
      %v10012 = vpop.permute.xlu0 %10011
      %10013 = vrot.lane.b32.xlu0 %v9119, 40
      %v10014 = vpop.permute.xlu0 %10013
      %10015 = vrot.lane.b32.xlu0 %v9121, 40
      %v10016 = vpop.permute.xlu0 %10015
      %10017 = vrot.lane.b32.xlu0 %v9123, 40
      %v10018 = vpop.permute.xlu0 %10017
      %10019 = vrot.lane.b32.xlu0 %v9125, 40
      %v10020 = vpop.permute.xlu0 %10019
      %10021 = vrot.lane.b32.xlu0 %v9127, 40
      %v10022 = vpop.permute.xlu0 %10021
      %10023 = vrot.lane.b32.xlu0 %v9129, 40
      %v10024 = vpop.permute.xlu0 %10023
      %10025 = vrot.lane.b32.xlu0 %v9131, 40
      %v10026 = vpop.permute.xlu0 %10025
      %10027 = vrot.lane.b32.xlu0 %v9133, 40
      %v10028 = vpop.permute.xlu0 %10027
      %10029 = vrot.lane.b32.xlu0 %v9135, 40
      %v10030 = vpop.permute.xlu0 %10029
      %10031 = vrot.lane.b32.xlu0 %v9137, 40
      %v10032 = vpop.permute.xlu0 %10031
      %10033 = vrot.lane.b32.xlu0 %v9139, 40
      %v10034 = vpop.permute.xlu0 %10033
      %10035 = vrot.lane.b32.xlu0 %v9141, 40
      %v10036 = vpop.permute.xlu0 %10035
      %10037 = vrot.lane.b32.xlu0 %v9143, 40
      %v10038 = vpop.permute.xlu0 %10037
      %10039 = vrot.lane.b32.xlu0 %v9145, 40
      %v10040 = vpop.permute.xlu0 %10039
      %10041 = vrot.lane.b32.xlu0 %v9147, 40
      %v10042 = vpop.permute.xlu0 %10041
      %10043 = vrot.lane.b32.xlu0 %v9149, 40
      %v10044 = vpop.permute.xlu0 %10043
      %10045 = vrot.lane.b32.xlu0 %v9151, 40
      %v10046 = vpop.permute.xlu0 %10045
      %10047 = vrot.lane.b32.xlu0 %v9153, 40
      %v10048 = vpop.permute.xlu0 %10047
      %10049 = vrot.lane.b32.xlu0 %v9155, 40
      %v10050 = vpop.permute.xlu0 %10049
      %10051 = vrot.lane.b32.xlu0 %v9157, 40
      %v10052 = vpop.permute.xlu0 %10051
      %10053 = vrot.lane.b32.xlu0 %v9159, 40
      %v10054 = vpop.permute.xlu0 %10053
      %10055 = vrot.lane.b32.xlu0 %v9161, 40
      %v10056 = vpop.permute.xlu0 %10055
      %10057 = vrot.lane.b32.xlu0 %v9163, 40
      %v10058 = vpop.permute.xlu0 %10057
      %10059 = vrot.lane.b32.xlu0 %v9165, 40
      %v10060 = vpop.permute.xlu0 %10059
      %10061 = vrot.lane.b32.xlu0 %v9167, 40
      %v10062 = vpop.permute.xlu0 %10061
      %10063 = vrot.lane.b32.xlu0 %v9169, 40
      %v10064 = vpop.permute.xlu0 %10063
      %10065 = vrot.lane.b32.xlu0 %v9171, 40
      %v10066 = vpop.permute.xlu0 %10065
      %10067 = vrot.lane.b32.xlu0 %v9173, 40
      %v10068 = vpop.permute.xlu0 %10067
      %10069 = vrot.lane.b32.xlu0 %v9175, 40
      %v10070 = vpop.permute.xlu0 %10069
      %10071 = vrot.lane.b32.xlu0 %v9177, 40
      %v10072 = vpop.permute.xlu0 %10071
      %10073 = vrot.lane.b32.xlu0 %v9179, 40
      %v10074 = vpop.permute.xlu0 %10073
      %10075 = vrot.lane.b32.xlu0 %v9181, 40
      %v10076 = vpop.permute.xlu0 %10075
      %10077 = vrot.lane.b32.xlu0 %v9183, 40
      %v10078 = vpop.permute.xlu0 %10077
      %10079 = vrot.lane.b32.xlu0 %v9185, 40
      %v10080 = vpop.permute.xlu0 %10079
      %10081 = vrot.lane.b32.xlu0 %v9187, 40
      %v10082 = vpop.permute.xlu0 %10081
      %10083 = vrot.lane.b32.xlu0 %v9189, 40
      %v10084 = vpop.permute.xlu0 %10083
      %10085 = vrot.lane.b32.xlu0 %v9191, 40
      %v10086 = vpop.permute.xlu0 %10085
      %10087 = vrot.lane.b32.xlu0 %v9193, 40
      %v10088 = vpop.permute.xlu0 %10087
      %10089 = vrot.lane.b32.xlu0 %v9195, 40
      %v10090 = vpop.permute.xlu0 %10089
      %10091 = vrot.lane.b32.xlu0 %v9197, 40
      %v10092 = vpop.permute.xlu0 %10091
      %10093 = vrot.lane.b32.xlu0 %v9199, 40
      %v10094 = vpop.permute.xlu0 %10093
      %10095 = vrot.lane.b32.xlu0 %v9201, 40
      %v10096 = vpop.permute.xlu0 %10095
      %10097 = vrot.lane.b32.xlu0 %v9203, 40
      %v10098 = vpop.permute.xlu0 %10097
      %10099 = vrot.lane.b32.xlu0 %v9205, 40
      %v10100 = vpop.permute.xlu0 %10099
      %10101 = vrot.lane.b32.xlu0 %v9207, 40
      %v10102 = vpop.permute.xlu0 %10101
      %10103 = vrot.lane.b32.xlu0 %v9209, 40
      %v10104 = vpop.permute.xlu0 %10103
      %10105 = vrot.lane.b32.xlu0 %v9211, 40
      %v10106 = vpop.permute.xlu0 %10105
      %10107 = vrot.lane.b32.xlu0 %v9213, 40
      %v10108 = vpop.permute.xlu0 %10107
      %10109 = vrot.lane.b32.xlu0 %v9215, 40
      %v10110 = vpop.permute.xlu0 %10109
      %10111 = vrot.lane.b32.xlu0 %v9217, 40
      %v10112 = vpop.permute.xlu0 %10111
      %10113 = vrot.lane.b32.xlu0 %v9219, 40
      %v10114 = vpop.permute.xlu0 %10113
      %10115 = vrot.lane.b32.xlu0 %v9221, 40
      %v10116 = vpop.permute.xlu0 %10115
      %10117 = vrot.lane.b32.xlu0 %v9223, 40
      %v10118 = vpop.permute.xlu0 %10117
      %10119 = vrot.lane.b32.xlu0 %v9225, 40
      %v10120 = vpop.permute.xlu0 %10119
      %10121 = vrot.lane.b32.xlu0 %v9227, 40
      %v10122 = vpop.permute.xlu0 %10121
      %10123 = vrot.lane.b32.xlu0 %v9229, 40
      %v10124 = vpop.permute.xlu0 %10123
      %10125 = vrot.lane.b32.xlu0 %v9231, 40
      %v10126 = vpop.permute.xlu0 %10125
      %10127 = vrot.lane.b32.xlu0 %v9233, 40
      %v10128 = vpop.permute.xlu0 %10127
      %10129 = vrot.lane.b32.xlu0 %v9234, 40
      %v10130 = vpop.permute.xlu0 %10129
      %10131 = vrot.lane.b32.xlu0 %v9109, 40
      %v10132 = vpop.permute.xlu0 %10131
      %10133 = vrot.lane.b32.xlu0 %v9236, 40
      %v10134 = vpop.permute.xlu0 %10133
      %10199 = vrot.lane.b32.xlu0 %v8926, 48
      %v10200 = vpop.permute.xlu0 %10199
      %10201 = vrot.lane.b32.xlu0 %v8928, 48
      %v10202 = vpop.permute.xlu0 %10201
      %10203 = vrot.lane.b32.xlu0 %v8930, 48
      %v10204 = vpop.permute.xlu0 %10203
      %10205 = vrot.lane.b32.xlu0 %v8932, 48
      %v10206 = vpop.permute.xlu0 %10205
      %10207 = vrot.lane.b32.xlu0 %v8934, 48
      %v10208 = vpop.permute.xlu0 %10207
      %10209 = vrot.lane.b32.xlu0 %v8936, 48
      %v10210 = vpop.permute.xlu0 %10209
      %10211 = vrot.lane.b32.xlu0 %v8938, 48
      %v10212 = vpop.permute.xlu0 %10211
      %10213 = vrot.lane.b32.xlu0 %v8940, 48
      %v10214 = vpop.permute.xlu0 %10213
      %10215 = vrot.lane.b32.xlu0 %v8942, 48
      %v10216 = vpop.permute.xlu0 %10215
      %10217 = vrot.lane.b32.xlu0 %v8944, 48
      %v10218 = vpop.permute.xlu0 %10217
      %10219 = vrot.lane.b32.xlu0 %v8946, 48
      %v10220 = vpop.permute.xlu0 %10219
      %10221 = vrot.lane.b32.xlu0 %v8948, 48
      %v10222 = vpop.permute.xlu0 %10221
      %10223 = vrot.lane.b32.xlu0 %v8950, 48
      %v10224 = vpop.permute.xlu0 %10223
      %10225 = vrot.lane.b32.xlu0 %v8952, 48
      %v10226 = vpop.permute.xlu0 %10225
      %10227 = vrot.lane.b32.xlu0 %v8954, 48
      %v10228 = vpop.permute.xlu0 %10227
      %10229 = vrot.lane.b32.xlu0 %v8956, 48
      %v10230 = vpop.permute.xlu0 %10229
      %10231 = vrot.lane.b32.xlu0 %v8958, 48
      %v10232 = vpop.permute.xlu0 %10231
      %10233 = vrot.lane.b32.xlu0 %v8960, 48
      %v10234 = vpop.permute.xlu0 %10233
      %10235 = vrot.lane.b32.xlu0 %v8962, 48
      %v10236 = vpop.permute.xlu0 %10235
      %10237 = vrot.lane.b32.xlu0 %v8964, 48
      %v10238 = vpop.permute.xlu0 %10237
      %10239 = vrot.lane.b32.xlu0 %v8966, 48
      %v10240 = vpop.permute.xlu0 %10239
      %10241 = vrot.lane.b32.xlu0 %v8968, 48
      %v10242 = vpop.permute.xlu0 %10241
      %10243 = vrot.lane.b32.xlu0 %v8970, 48
      %v10244 = vpop.permute.xlu0 %10243
      %10245 = vrot.lane.b32.xlu0 %v8972, 48
      %v10246 = vpop.permute.xlu0 %10245
      %10247 = vrot.lane.b32.xlu0 %v8974, 48
      %v10248 = vpop.permute.xlu0 %10247
      %10249 = vrot.lane.b32.xlu0 %v8976, 48
      %v10250 = vpop.permute.xlu0 %10249
      %10251 = vrot.lane.b32.xlu0 %v8978, 48
      %v10252 = vpop.permute.xlu0 %10251
      %10253 = vrot.lane.b32.xlu0 %v8980, 48
      %v10254 = vpop.permute.xlu0 %10253
      %10255 = vrot.lane.b32.xlu0 %v8982, 48
      %v10256 = vpop.permute.xlu0 %10255
      %10257 = vrot.lane.b32.xlu0 %v8984, 48
      %v10258 = vpop.permute.xlu0 %10257
      %10259 = vrot.lane.b32.xlu0 %v8986, 48
      %v10260 = vpop.permute.xlu0 %10259
      %10261 = vrot.lane.b32.xlu0 %v8988, 48
      %v10262 = vpop.permute.xlu0 %10261
      %10263 = vrot.lane.b32.xlu0 %v8990, 48
      %v10264 = vpop.permute.xlu0 %10263
      %10265 = vrot.lane.b32.xlu0 %v8992, 48
      %v10266 = vpop.permute.xlu0 %10265
      %10267 = vrot.lane.b32.xlu0 %v8994, 48
      %v10268 = vpop.permute.xlu0 %10267
      %10269 = vrot.lane.b32.xlu0 %v8996, 48
      %v10270 = vpop.permute.xlu0 %10269
      %10271 = vrot.lane.b32.xlu0 %v8998, 48
      %v10272 = vpop.permute.xlu0 %10271
      %10273 = vrot.lane.b32.xlu0 %v9000, 48
      %v10274 = vpop.permute.xlu0 %10273
      %10275 = vrot.lane.b32.xlu0 %v9002, 48
      %v10276 = vpop.permute.xlu0 %10275
      %10277 = vrot.lane.b32.xlu0 %v9004, 48
      %v10278 = vpop.permute.xlu0 %10277
      %10279 = vrot.lane.b32.xlu0 %v9006, 48
      %v10280 = vpop.permute.xlu0 %10279
      %10281 = vrot.lane.b32.xlu0 %v9008, 48
      %v10282 = vpop.permute.xlu0 %10281
      %10283 = vrot.lane.b32.xlu0 %v9010, 48
      %v10284 = vpop.permute.xlu0 %10283
      %10285 = vrot.lane.b32.xlu0 %v9012, 48
      %v10286 = vpop.permute.xlu0 %10285
      %10287 = vrot.lane.b32.xlu0 %v9014, 48
      %v10288 = vpop.permute.xlu0 %10287
      %10289 = vrot.lane.b32.xlu0 %v9016, 48
      %v10290 = vpop.permute.xlu0 %10289
      %10291 = vrot.lane.b32.xlu0 %v9018, 48
      %v10292 = vpop.permute.xlu0 %10291
      %10293 = vrot.lane.b32.xlu0 %v9020, 48
      %v10294 = vpop.permute.xlu0 %10293
      %10295 = vrot.lane.b32.xlu0 %v9022, 48
      %v10296 = vpop.permute.xlu0 %10295
      %10297 = vrot.lane.b32.xlu0 %v9024, 48
      %v10298 = vpop.permute.xlu0 %10297
      %10299 = vrot.lane.b32.xlu0 %v9026, 48
      %v10300 = vpop.permute.xlu0 %10299
      %10301 = vrot.lane.b32.xlu0 %v9028, 48
      %v10302 = vpop.permute.xlu0 %10301
      %10303 = vrot.lane.b32.xlu0 %v9030, 48
      %v10304 = vpop.permute.xlu0 %10303
      %10305 = vrot.lane.b32.xlu0 %v9032, 48
      %v10306 = vpop.permute.xlu0 %10305
      %10307 = vrot.lane.b32.xlu0 %v9034, 48
      %v10308 = vpop.permute.xlu0 %10307
      %10309 = vrot.lane.b32.xlu0 %v9036, 48
      %v10310 = vpop.permute.xlu0 %10309
      %10311 = vrot.lane.b32.xlu0 %v9038, 48
      %v10312 = vpop.permute.xlu0 %10311
      %10313 = vrot.lane.b32.xlu0 %v9040, 48
      %v10314 = vpop.permute.xlu0 %10313
      %10315 = vrot.lane.b32.xlu0 %v9042, 48
      %v10316 = vpop.permute.xlu0 %10315
      %10317 = vrot.lane.b32.xlu0 %v9043, 48
      %v10318 = vpop.permute.xlu0 %10317
      %10319 = vrot.lane.b32.xlu0 %v8855, 48
      %v10320 = vpop.permute.xlu0 %10319
      %10321 = vrot.lane.b32.xlu0 %v8857, 48
      %v10322 = vpop.permute.xlu0 %10321
      %10323 = vrot.lane.b32.xlu0 %v9106, 48
      %v10324 = vpop.permute.xlu0 %10323
      %10325 = vrot.lane.b32.xlu0 %v8924, 48
      %v10326 = vpop.permute.xlu0 %10325
      %10391 = vrot.lane.b32.xlu0 %v8724, 56
      %v10392 = vpop.permute.xlu0 %10391
      %10393 = vrot.lane.b32.xlu0 %v8725, 56
      %v10394 = vpop.permute.xlu0 %10393
      %10395 = vrot.lane.b32.xlu0 %v8726, 56
      %v10396 = vpop.permute.xlu0 %10395
      %10397 = vrot.lane.b32.xlu0 %v8727, 56
      %v10398 = vpop.permute.xlu0 %10397
      %10399 = vrot.lane.b32.xlu0 %v8728, 56
      %v10400 = vpop.permute.xlu0 %10399
      %10401 = vrot.lane.b32.xlu0 %v8729, 56
      %v10402 = vpop.permute.xlu0 %10401
      %10403 = vrot.lane.b32.xlu0 %v8730, 56
      %v10404 = vpop.permute.xlu0 %10403
      %10405 = vrot.lane.b32.xlu0 %v8731, 56
      %v10406 = vpop.permute.xlu0 %10405
      %10407 = vrot.lane.b32.xlu0 %v8732, 56
      %v10408 = vpop.permute.xlu0 %10407
      %10409 = vrot.lane.b32.xlu0 %v8733, 56
      %v10410 = vpop.permute.xlu0 %10409
      %10411 = vrot.lane.b32.xlu0 %v8734, 56
      %v10412 = vpop.permute.xlu0 %10411
      %10413 = vrot.lane.b32.xlu0 %v8735, 56
      %v10414 = vpop.permute.xlu0 %10413
      %10415 = vrot.lane.b32.xlu0 %v8736, 56
      %v10416 = vpop.permute.xlu0 %10415
      %10417 = vrot.lane.b32.xlu0 %v8737, 56
      %v10418 = vpop.permute.xlu0 %10417
      %10419 = vrot.lane.b32.xlu0 %v8738, 56
      %v10420 = vpop.permute.xlu0 %10419
      %10421 = vrot.lane.b32.xlu0 %v8739, 56
      %v10422 = vpop.permute.xlu0 %10421
      %10423 = vrot.lane.b32.xlu0 %v8740, 56
      %v10424 = vpop.permute.xlu0 %10423
      %10425 = vrot.lane.b32.xlu0 %v8741, 56
      %v10426 = vpop.permute.xlu0 %10425
      %10427 = vrot.lane.b32.xlu0 %v8742, 56
      %v10428 = vpop.permute.xlu0 %10427
      %10429 = vrot.lane.b32.xlu0 %v8743, 56
      %v10430 = vpop.permute.xlu0 %10429
      %10431 = vrot.lane.b32.xlu0 %v8744, 56
      %v10432 = vpop.permute.xlu0 %10431
      %10433 = vrot.lane.b32.xlu0 %v8745, 56
      %v10434 = vpop.permute.xlu0 %10433
      %10435 = vrot.lane.b32.xlu0 %v8746, 56
      %v10436 = vpop.permute.xlu0 %10435
      %10437 = vrot.lane.b32.xlu0 %v8747, 56
      %v10438 = vpop.permute.xlu0 %10437
      %10439 = vrot.lane.b32.xlu0 %v8748, 56
      %v10440 = vpop.permute.xlu0 %10439
      %10441 = vrot.lane.b32.xlu0 %v8749, 56
      %v10442 = vpop.permute.xlu0 %10441
      %10443 = vrot.lane.b32.xlu0 %v8750, 56
      %v10444 = vpop.permute.xlu0 %10443
      %10445 = vrot.lane.b32.xlu0 %v8751, 56
      %v10446 = vpop.permute.xlu0 %10445
      %10447 = vrot.lane.b32.xlu0 %v8752, 56
      %v10448 = vpop.permute.xlu0 %10447
      %10449 = vrot.lane.b32.xlu0 %v8753, 56
      %v10450 = vpop.permute.xlu0 %10449
      %10451 = vrot.lane.b32.xlu0 %v8754, 56
      %v10452 = vpop.permute.xlu0 %10451
      %10453 = vrot.lane.b32.xlu0 %v8755, 56
      %v10454 = vpop.permute.xlu0 %10453
      %10455 = vrot.lane.b32.xlu0 %v8756, 56
      %v10456 = vpop.permute.xlu0 %10455
      %10457 = vrot.lane.b32.xlu0 %v8757, 56
      %v10458 = vpop.permute.xlu0 %10457
      %10459 = vrot.lane.b32.xlu0 %v8758, 56
      %v10460 = vpop.permute.xlu0 %10459
      %10461 = vrot.lane.b32.xlu0 %v8759, 56
      %v10462 = vpop.permute.xlu0 %10461
      %10463 = vrot.lane.b32.xlu0 %v8760, 56
      %v10464 = vpop.permute.xlu0 %10463
      %10465 = vrot.lane.b32.xlu0 %v8761, 56
      %v10466 = vpop.permute.xlu0 %10465
      %10467 = vrot.lane.b32.xlu0 %v8762, 56
      %v10468 = vpop.permute.xlu0 %10467
      %10469 = vrot.lane.b32.xlu0 %v8763, 56
      %v10470 = vpop.permute.xlu0 %10469
      %10471 = vrot.lane.b32.xlu0 %v8764, 56
      %v10472 = vpop.permute.xlu0 %10471
      %10473 = vrot.lane.b32.xlu0 %v8765, 56
      %v10474 = vpop.permute.xlu0 %10473
      %10475 = vrot.lane.b32.xlu0 %v8766, 56
      %v10476 = vpop.permute.xlu0 %10475
      %10477 = vrot.lane.b32.xlu0 %v8767, 56
      %v10478 = vpop.permute.xlu0 %10477
      %10479 = vrot.lane.b32.xlu0 %v8768, 56
      %v10480 = vpop.permute.xlu0 %10479
      %10481 = vrot.lane.b32.xlu0 %v8769, 56
      %v10482 = vpop.permute.xlu0 %10481
      %10483 = vrot.lane.b32.xlu0 %v8770, 56
      %v10484 = vpop.permute.xlu0 %10483
      %10485 = vrot.lane.b32.xlu0 %v8771, 56
      %v10486 = vpop.permute.xlu0 %10485
      %10487 = vrot.lane.b32.xlu0 %v8772, 56
      %v10488 = vpop.permute.xlu0 %10487
      %10489 = vrot.lane.b32.xlu0 %v8773, 56
      %v10490 = vpop.permute.xlu0 %10489
      %10491 = vrot.lane.b32.xlu0 %v8774, 56
      %v10492 = vpop.permute.xlu0 %10491
      %10493 = vrot.lane.b32.xlu0 %v8775, 56
      %v10494 = vpop.permute.xlu0 %10493
      %10495 = vrot.lane.b32.xlu0 %v8776, 56
      %v10496 = vpop.permute.xlu0 %10495
      %10497 = vrot.lane.b32.xlu0 %v8777, 56
      %v10498 = vpop.permute.xlu0 %10497
      %10499 = vrot.lane.b32.xlu0 %v8778, 56
      %v10500 = vpop.permute.xlu0 %10499
      %10501 = vrot.lane.b32.xlu0 %v8779, 56
      %v10502 = vpop.permute.xlu0 %10501
      %10503 = vrot.lane.b32.xlu0 %v8780, 56
      %v10504 = vpop.permute.xlu0 %10503
      %10505 = vrot.lane.b32.xlu0 %v8781, 56
      %v10506 = vpop.permute.xlu0 %10505
      %10507 = vrot.lane.b32.xlu0 %v8782, 56
      %v10508 = vpop.permute.xlu0 %10507
      %10509 = vrot.lane.b32.xlu0 %v8783, 56
      %v10510 = vpop.permute.xlu0 %10509
      %10511 = vrot.lane.b32.xlu0 %v8784, 56
      %v10512 = vpop.permute.xlu0 %10511
      %10513 = vrot.lane.b32.xlu0 %v8785, 56
      %v10514 = vpop.permute.xlu0 %10513
      %10515 = vrot.lane.b32.xlu0 %v8722, 56
      %v10516 = vpop.permute.xlu0 %10515
      %10517 = vrot.lane.b32.xlu0 %v8723, 56
      %v10518 = vpop.permute.xlu0 %10517
      %10583 = vrot.lane.b32.xlu0 %v9117, 64
      %v10584 = vpop.permute.xlu0 %10583
      %10585 = vrot.lane.b32.xlu0 %v9119, 64
      %v10586 = vpop.permute.xlu0 %10585
      %10587 = vrot.lane.b32.xlu0 %v9121, 64
      %v10588 = vpop.permute.xlu0 %10587
      %10589 = vrot.lane.b32.xlu0 %v9123, 64
      %v10590 = vpop.permute.xlu0 %10589
      %10591 = vrot.lane.b32.xlu0 %v9125, 64
      %v10592 = vpop.permute.xlu0 %10591
      %10593 = vrot.lane.b32.xlu0 %v9127, 64
      %v10594 = vpop.permute.xlu0 %10593
      %10595 = vrot.lane.b32.xlu0 %v9129, 64
      %v10596 = vpop.permute.xlu0 %10595
      %10597 = vrot.lane.b32.xlu0 %v9131, 64
      %v10598 = vpop.permute.xlu0 %10597
      %10599 = vrot.lane.b32.xlu0 %v9133, 64
      %v10600 = vpop.permute.xlu0 %10599
      %10601 = vrot.lane.b32.xlu0 %v9135, 64
      %v10602 = vpop.permute.xlu0 %10601
      %10603 = vrot.lane.b32.xlu0 %v9137, 64
      %v10604 = vpop.permute.xlu0 %10603
      %10605 = vrot.lane.b32.xlu0 %v9139, 64
      %v10606 = vpop.permute.xlu0 %10605
      %10607 = vrot.lane.b32.xlu0 %v9141, 64
      %v10608 = vpop.permute.xlu0 %10607
      %10609 = vrot.lane.b32.xlu0 %v9143, 64
      %v10610 = vpop.permute.xlu0 %10609
      %10611 = vrot.lane.b32.xlu0 %v9145, 64
      %v10612 = vpop.permute.xlu0 %10611
      %10613 = vrot.lane.b32.xlu0 %v9147, 64
      %v10614 = vpop.permute.xlu0 %10613
      %10615 = vrot.lane.b32.xlu0 %v9149, 64
      %v10616 = vpop.permute.xlu0 %10615
      %10617 = vrot.lane.b32.xlu0 %v9151, 64
      %v10618 = vpop.permute.xlu0 %10617
      %10619 = vrot.lane.b32.xlu0 %v9153, 64
      %v10620 = vpop.permute.xlu0 %10619
      %10621 = vrot.lane.b32.xlu0 %v9155, 64
      %v10622 = vpop.permute.xlu0 %10621
      %10623 = vrot.lane.b32.xlu0 %v9157, 64
      %v10624 = vpop.permute.xlu0 %10623
      %10625 = vrot.lane.b32.xlu0 %v9159, 64
      %v10626 = vpop.permute.xlu0 %10625
      %10627 = vrot.lane.b32.xlu0 %v9161, 64
      %v10628 = vpop.permute.xlu0 %10627
      %10629 = vrot.lane.b32.xlu0 %v9163, 64
      %v10630 = vpop.permute.xlu0 %10629
      %10631 = vrot.lane.b32.xlu0 %v9165, 64
      %v10632 = vpop.permute.xlu0 %10631
      %10633 = vrot.lane.b32.xlu0 %v9167, 64
      %v10634 = vpop.permute.xlu0 %10633
      %10635 = vrot.lane.b32.xlu0 %v9169, 64
      %v10636 = vpop.permute.xlu0 %10635
      %10637 = vrot.lane.b32.xlu0 %v9171, 64
      %v10638 = vpop.permute.xlu0 %10637
      %10639 = vrot.lane.b32.xlu0 %v9173, 64
      %v10640 = vpop.permute.xlu0 %10639
      %10641 = vrot.lane.b32.xlu0 %v9175, 64
      %v10642 = vpop.permute.xlu0 %10641
      %10643 = vrot.lane.b32.xlu0 %v9177, 64
      %v10644 = vpop.permute.xlu0 %10643
      %10645 = vrot.lane.b32.xlu0 %v9179, 64
      %v10646 = vpop.permute.xlu0 %10645
      %10647 = vrot.lane.b32.xlu0 %v9181, 64
      %v10648 = vpop.permute.xlu0 %10647
      %10649 = vrot.lane.b32.xlu0 %v9183, 64
      %v10650 = vpop.permute.xlu0 %10649
      %10651 = vrot.lane.b32.xlu0 %v9185, 64
      %v10652 = vpop.permute.xlu0 %10651
      %10653 = vrot.lane.b32.xlu0 %v9187, 64
      %v10654 = vpop.permute.xlu0 %10653
      %10655 = vrot.lane.b32.xlu0 %v9189, 64
      %v10656 = vpop.permute.xlu0 %10655
      %10657 = vrot.lane.b32.xlu0 %v9191, 64
      %v10658 = vpop.permute.xlu0 %10657
      %10659 = vrot.lane.b32.xlu0 %v9193, 64
      %v10660 = vpop.permute.xlu0 %10659
      %10661 = vrot.lane.b32.xlu0 %v9195, 64
      %v10662 = vpop.permute.xlu0 %10661
      %10663 = vrot.lane.b32.xlu0 %v9197, 64
      %v10664 = vpop.permute.xlu0 %10663
      %10665 = vrot.lane.b32.xlu0 %v9199, 64
      %v10666 = vpop.permute.xlu0 %10665
      %10667 = vrot.lane.b32.xlu0 %v9201, 64
      %v10668 = vpop.permute.xlu0 %10667
      %10669 = vrot.lane.b32.xlu0 %v9203, 64
      %v10670 = vpop.permute.xlu0 %10669
      %10671 = vrot.lane.b32.xlu0 %v9205, 64
      %v10672 = vpop.permute.xlu0 %10671
      %10673 = vrot.lane.b32.xlu0 %v9207, 64
      %v10674 = vpop.permute.xlu0 %10673
      %10675 = vrot.lane.b32.xlu0 %v9209, 64
      %v10676 = vpop.permute.xlu0 %10675
      %10677 = vrot.lane.b32.xlu0 %v9211, 64
      %v10678 = vpop.permute.xlu0 %10677
      %10679 = vrot.lane.b32.xlu0 %v9213, 64
      %v10680 = vpop.permute.xlu0 %10679
      %10681 = vrot.lane.b32.xlu0 %v9215, 64
      %v10682 = vpop.permute.xlu0 %10681
      %10683 = vrot.lane.b32.xlu0 %v9217, 64
      %v10684 = vpop.permute.xlu0 %10683
      %10685 = vrot.lane.b32.xlu0 %v9219, 64
      %v10686 = vpop.permute.xlu0 %10685
      %10687 = vrot.lane.b32.xlu0 %v9221, 64
      %v10688 = vpop.permute.xlu0 %10687
      %10689 = vrot.lane.b32.xlu0 %v9223, 64
      %v10690 = vpop.permute.xlu0 %10689
      %10691 = vrot.lane.b32.xlu0 %v9225, 64
      %v10692 = vpop.permute.xlu0 %10691
      %10693 = vrot.lane.b32.xlu0 %v9227, 64
      %v10694 = vpop.permute.xlu0 %10693
      %10695 = vrot.lane.b32.xlu0 %v9229, 64
      %v10696 = vpop.permute.xlu0 %10695
      %10697 = vrot.lane.b32.xlu0 %v9231, 64
      %v10698 = vpop.permute.xlu0 %10697
      %10699 = vrot.lane.b32.xlu0 %v9233, 64
      %v10700 = vpop.permute.xlu0 %10699
      %10701 = vrot.lane.b32.xlu0 %v9234, 64
      %v10702 = vpop.permute.xlu0 %10701
      %10703 = vrot.lane.b32.xlu0 %v9109, 64
      %v10704 = vpop.permute.xlu0 %10703
      %10705 = vrot.lane.b32.xlu0 %v9236, 64
      %v10706 = vpop.permute.xlu0 %10705
      %10707 = vrot.lane.b32.xlu0 %v9113, 64
      %v10708 = vpop.permute.xlu0 %10707
      %10709 = vrot.lane.b32.xlu0 %v9115, 64
      %v10710 = vpop.permute.xlu0 %10709
      %v10775 = vsel %vm1607, %v8855, %v9238
      %v10776 = vsel %vm1607, %v8857, %v9240
      %v10777 = vsel %vm1607, %v9106, %v9242
      %v10778 = vsel %vm1607, %v8924, %v9244
      %v10779 = vsel %vm1607, %v8926, %v9246
      %v10780 = vsel %vm1607, %v8928, %v9248
      %v10781 = vsel %vm1607, %v8930, %v9250
      %v10782 = vsel %vm1607, %v8932, %v9252
      %v10783 = vsel %vm1607, %v8934, %v9254
      %v10784 = vsel %vm1607, %v8936, %v9256
      %v10785 = vsel %vm1607, %v8938, %v9258
      %v10786 = vsel %vm1607, %v8940, %v9260
      %v10787 = vsel %vm1607, %v8942, %v9262
      %v10788 = vsel %vm1607, %v8944, %v9264
      %v10789 = vsel %vm1607, %v8946, %v9266
      %v10790 = vsel %vm1607, %v8948, %v9268
      %v10791 = vsel %vm1607, %v8950, %v9270
      %v10792 = vsel %vm1607, %v8952, %v9272
      %v10793 = vsel %vm1607, %v8954, %v9274
      %v10794 = vsel %vm1607, %v8956, %v9276
      %v10795 = vsel %vm1607, %v8958, %v9278
      %v10796 = vsel %vm1607, %v8960, %v9280
      %v10797 = vsel %vm1607, %v8962, %v9282
      %v10798 = vsel %vm1607, %v8964, %v9284
      %v10799 = vsel %vm1607, %v8966, %v9286
      %v10800 = vsel %vm1607, %v8968, %v9288
      %v10801 = vsel %vm1607, %v8970, %v9290
      %v10802 = vsel %vm1607, %v8972, %v9292
      %v10803 = vsel %vm1607, %v8974, %v9294
      %v10804 = vsel %vm1607, %v8976, %v9296
      %v10805 = vsel %vm1607, %v8978, %v9298
      %v10806 = vsel %vm1607, %v8980, %v9300
      %v10807 = vsel %vm1607, %v8982, %v9302
      %v10808 = vsel %vm1607, %v8984, %v9304
      %v10809 = vsel %vm1607, %v8986, %v9306
      %v10810 = vsel %vm1607, %v8988, %v9308
      %v10811 = vsel %vm1607, %v8990, %v9310
      %v10812 = vsel %vm1607, %v8992, %v9312
      %v10813 = vsel %vm1607, %v8994, %v9314
      %v10814 = vsel %vm1607, %v8996, %v9316
      %v10815 = vsel %vm1607, %v8998, %v9318
      %v10816 = vsel %vm1607, %v9000, %v9320
      %v10817 = vsel %vm1607, %v9002, %v9322
      %v10818 = vsel %vm1607, %v9004, %v9324
      %v10819 = vsel %vm1607, %v9006, %v9326
      %v10820 = vsel %vm1607, %v9008, %v9328
      %v10821 = vsel %vm1607, %v9010, %v9330
      %v10822 = vsel %vm1607, %v9012, %v9332
      %v10823 = vsel %vm1607, %v9014, %v9334
      %v10824 = vsel %vm1607, %v9016, %v9336
      %v10825 = vsel %vm1607, %v9018, %v9338
      %v10826 = vsel %vm1607, %v9020, %v9340
      %v10827 = vsel %vm1607, %v9022, %v9342
      %v10828 = vsel %vm1607, %v9024, %v9344
      %v10829 = vsel %vm1607, %v9026, %v9346
      %v10830 = vsel %vm1607, %v9028, %v9348
      %v10831 = vsel %vm1607, %v9030, %v9350
      %v10832 = vsel %vm1607, %v9032, %v9352
      %v10833 = vsel %vm1607, %v9034, %v9354
      %v10834 = vsel %vm1607, %v9036, %v9356
      %v10835 = vsel %vm1607, %v9038, %v9358
      %v10836 = vsel %vm1607, %v9040, %v9360
      %v10837 = vsel %vm1607, %v9042, %v9362
      %v10838 = vsel %vm1607, %v9043, %v9364
      %v10839 = vsel %vm1673, %v10775, %v9431
      %v10840 = vsel %vm1673, %v10776, %v9433
      %v10841 = vsel %vm1673, %v10777, %v9435
      %v10842 = vsel %vm1673, %v10778, %v9437
      %v10843 = vsel %vm1673, %v10779, %v9439
      %v10844 = vsel %vm1673, %v10780, %v9441
      %v10845 = vsel %vm1673, %v10781, %v9443
      %v10846 = vsel %vm1673, %v10782, %v9445
      %v10847 = vsel %vm1673, %v10783, %v9447
      %v10848 = vsel %vm1673, %v10784, %v9449
      %v10849 = vsel %vm1673, %v10785, %v9451
      %v10850 = vsel %vm1673, %v10786, %v9453
      %v10851 = vsel %vm1673, %v10787, %v9455
      %v10852 = vsel %vm1673, %v10788, %v9457
      %v10853 = vsel %vm1673, %v10789, %v9459
      %v10854 = vsel %vm1673, %v10790, %v9461
      %v10855 = vsel %vm1673, %v10791, %v9463
      %v10856 = vsel %vm1673, %v10792, %v9465
      %v10857 = vsel %vm1673, %v10793, %v9467
      %v10858 = vsel %vm1673, %v10794, %v9469
      %v10859 = vsel %vm1673, %v10795, %v9471
      %v10860 = vsel %vm1673, %v10796, %v9473
      %v10861 = vsel %vm1673, %v10797, %v9475
      %v10862 = vsel %vm1673, %v10798, %v9477
      %v10863 = vsel %vm1673, %v10799, %v9479
      %v10864 = vsel %vm1673, %v10800, %v9481
      %v10865 = vsel %vm1673, %v10801, %v9483
      %v10866 = vsel %vm1673, %v10802, %v9485
      %v10867 = vsel %vm1673, %v10803, %v9487
      %v10868 = vsel %vm1673, %v10804, %v9489
      %v10869 = vsel %vm1673, %v10805, %v9491
      %v10870 = vsel %vm1673, %v10806, %v9493
      %v10871 = vsel %vm1673, %v10807, %v9495
      %v10872 = vsel %vm1673, %v10808, %v9497
      %v10873 = vsel %vm1673, %v10809, %v9499
      %v10874 = vsel %vm1673, %v10810, %v9501
      %v10875 = vsel %vm1673, %v10811, %v9503
      %v10876 = vsel %vm1673, %v10812, %v9505
      %v10877 = vsel %vm1673, %v10813, %v9507
      %v10878 = vsel %vm1673, %v10814, %v9509
      %v10879 = vsel %vm1673, %v10815, %v9511
      %v10880 = vsel %vm1673, %v10816, %v9513
      %v10881 = vsel %vm1673, %v10817, %v9515
      %v10882 = vsel %vm1673, %v10818, %v9517
      %v10883 = vsel %vm1673, %v10819, %v9519
      %v10884 = vsel %vm1673, %v10820, %v9521
      %v10885 = vsel %vm1673, %v10821, %v9523
      %v10886 = vsel %vm1673, %v10822, %v9525
      %v10887 = vsel %vm1673, %v10823, %v9527
      %v10888 = vsel %vm1673, %v10824, %v9529
      %v10889 = vsel %vm1673, %v10825, %v9531
      %v10890 = vsel %vm1673, %v10826, %v9533
      %v10891 = vsel %vm1673, %v10827, %v9535
      %v10892 = vsel %vm1673, %v10828, %v9537
      %v10893 = vsel %vm1673, %v10829, %v9539
      %v10894 = vsel %vm1673, %v10830, %v9541
      %v10895 = vsel %vm1673, %v10831, %v9543
      %v10896 = vsel %vm1673, %v10832, %v9545
      %v10897 = vsel %vm1673, %v10833, %v9547
      %v10898 = vsel %vm1673, %v10834, %v9549
      %v10899 = vsel %vm1673, %v10835, %v9551
      %v10900 = vsel %vm1673, %v10836, %v9553
      %v10901 = vsel %vm1673, %v10837, %v9555
      %v10902 = vsel %vm1673, %v10838, %v9557
      %v10903 = vsel %vm1739, %v10839, %v9624
      %v10904 = vsel %vm1739, %v10840, %v9626
      %v10905 = vsel %vm1739, %v10841, %v9628
      %v10906 = vsel %vm1739, %v10842, %v9630
      %v10907 = vsel %vm1739, %v10843, %v9632
      %v10908 = vsel %vm1739, %v10844, %v9634
      %v10909 = vsel %vm1739, %v10845, %v9636
      %v10910 = vsel %vm1739, %v10846, %v9638
      %v10911 = vsel %vm1739, %v10847, %v9640
      %v10912 = vsel %vm1739, %v10848, %v9642
      %v10913 = vsel %vm1739, %v10849, %v9644
      %v10914 = vsel %vm1739, %v10850, %v9646
      %v10915 = vsel %vm1739, %v10851, %v9648
      %v10916 = vsel %vm1739, %v10852, %v9650
      %v10917 = vsel %vm1739, %v10853, %v9652
      %v10918 = vsel %vm1739, %v10854, %v9654
      %v10919 = vsel %vm1739, %v10855, %v9656
      %v10920 = vsel %vm1739, %v10856, %v9658
      %v10921 = vsel %vm1739, %v10857, %v9660
      %v10922 = vsel %vm1739, %v10858, %v9662
      %v10923 = vsel %vm1739, %v10859, %v9664
      %v10924 = vsel %vm1739, %v10860, %v9666
      %v10925 = vsel %vm1739, %v10861, %v9668
      %v10926 = vsel %vm1739, %v10862, %v9670
      %v10927 = vsel %vm1739, %v10863, %v9672
      %v10928 = vsel %vm1739, %v10864, %v9674
      %v10929 = vsel %vm1739, %v10865, %v9676
      %v10930 = vsel %vm1739, %v10866, %v9678
      %v10931 = vsel %vm1739, %v10867, %v9680
      %v10932 = vsel %vm1739, %v10868, %v9682
      %v10933 = vsel %vm1739, %v10869, %v9684
      %v10934 = vsel %vm1739, %v10870, %v9686
      %v10935 = vsel %vm1739, %v10871, %v9688
      %v10936 = vsel %vm1739, %v10872, %v9690
      %v10937 = vsel %vm1739, %v10873, %v9692
      %v10938 = vsel %vm1739, %v10874, %v9694
      %v10939 = vsel %vm1739, %v10875, %v9696
      %v10940 = vsel %vm1739, %v10876, %v9698
      %v10941 = vsel %vm1739, %v10877, %v9700
      %v10942 = vsel %vm1739, %v10878, %v9702
      %v10943 = vsel %vm1739, %v10879, %v9704
      %v10944 = vsel %vm1739, %v10880, %v9706
      %v10945 = vsel %vm1739, %v10881, %v9708
      %v10946 = vsel %vm1739, %v10882, %v9710
      %v10947 = vsel %vm1739, %v10883, %v9712
      %v10948 = vsel %vm1739, %v10884, %v9714
      %v10949 = vsel %vm1739, %v10885, %v9716
      %v10950 = vsel %vm1739, %v10886, %v9718
      %v10951 = vsel %vm1739, %v10887, %v9720
      %v10952 = vsel %vm1739, %v10888, %v9722
      %v10953 = vsel %vm1739, %v10889, %v9724
      %v10954 = vsel %vm1739, %v10890, %v9726
      %v10955 = vsel %vm1739, %v10891, %v9728
      %v10956 = vsel %vm1739, %v10892, %v9730
      %v10957 = vsel %vm1739, %v10893, %v9732
      %v10958 = vsel %vm1739, %v10894, %v9734
      %v10959 = vsel %vm1739, %v10895, %v9736
      %v10960 = vsel %vm1739, %v10896, %v9738
      %v10961 = vsel %vm1739, %v10897, %v9740
      %v10962 = vsel %vm1739, %v10898, %v9742
      %v10963 = vsel %vm1739, %v10899, %v9744
      %v10964 = vsel %vm1739, %v10900, %v9746
      %v10965 = vsel %vm1739, %v10901, %v9748
      %v10966 = vsel %vm1739, %v10902, %v9750
      %v10967 = vsel %vm1805, %v10903, %v9816
      %v10968 = vsel %vm1805, %v10904, %v9818
      %v10969 = vsel %vm1805, %v10905, %v9820
      %v10970 = vsel %vm1805, %v10906, %v9822
      %v10971 = vsel %vm1805, %v10907, %v9824
      %v10972 = vsel %vm1805, %v10908, %v9826
      %v10973 = vsel %vm1805, %v10909, %v9828
      %v10974 = vsel %vm1805, %v10910, %v9830
      %v10975 = vsel %vm1805, %v10911, %v9832
      %v10976 = vsel %vm1805, %v10912, %v9834
      %v10977 = vsel %vm1805, %v10913, %v9836
      %v10978 = vsel %vm1805, %v10914, %v9838
      %v10979 = vsel %vm1805, %v10915, %v9840
      %v10980 = vsel %vm1805, %v10916, %v9842
      %v10981 = vsel %vm1805, %v10917, %v9844
      %v10982 = vsel %vm1805, %v10918, %v9846
      %v10983 = vsel %vm1805, %v10919, %v9848
      %v10984 = vsel %vm1805, %v10920, %v9850
      %v10985 = vsel %vm1805, %v10921, %v9852
      %v10986 = vsel %vm1805, %v10922, %v9854
      %v10987 = vsel %vm1805, %v10923, %v9856
      %v10988 = vsel %vm1805, %v10924, %v9858
      %v10989 = vsel %vm1805, %v10925, %v9860
      %v10990 = vsel %vm1805, %v10926, %v9862
      %v10991 = vsel %vm1805, %v10927, %v9864
      %v10992 = vsel %vm1805, %v10928, %v9866
      %v10993 = vsel %vm1805, %v10929, %v9868
      %v10994 = vsel %vm1805, %v10930, %v9870
      %v10995 = vsel %vm1805, %v10931, %v9872
      %v10996 = vsel %vm1805, %v10932, %v9874
      %v10997 = vsel %vm1805, %v10933, %v9876
      %v10998 = vsel %vm1805, %v10934, %v9878
      %v10999 = vsel %vm1805, %v10935, %v9880
      %v11000 = vsel %vm1805, %v10936, %v9882
      %v11001 = vsel %vm1805, %v10937, %v9884
      %v11002 = vsel %vm1805, %v10938, %v9886
      %v11003 = vsel %vm1805, %v10939, %v9888
      %v11004 = vsel %vm1805, %v10940, %v9890
      %v11005 = vsel %vm1805, %v10941, %v9892
      %v11006 = vsel %vm1805, %v10942, %v9894
      %v11007 = vsel %vm1805, %v10943, %v9896
      %v11008 = vsel %vm1805, %v10944, %v9898
      %v11009 = vsel %vm1805, %v10945, %v9900
      %v11010 = vsel %vm1805, %v10946, %v9902
      %v11011 = vsel %vm1805, %v10947, %v9904
      %v11012 = vsel %vm1805, %v10948, %v9906
      %v11013 = vsel %vm1805, %v10949, %v9908
      %v11014 = vsel %vm1805, %v10950, %v9910
      %v11015 = vsel %vm1805, %v10951, %v9912
      %v11016 = vsel %vm1805, %v10952, %v9914
      %v11017 = vsel %vm1805, %v10953, %v9916
      %v11018 = vsel %vm1805, %v10954, %v9918
      %v11019 = vsel %vm1805, %v10955, %v9920
      %v11020 = vsel %vm1805, %v10956, %v9922
      %v11021 = vsel %vm1805, %v10957, %v9924
      %v11022 = vsel %vm1805, %v10958, %v9926
      %v11023 = vsel %vm1805, %v10959, %v9928
      %v11024 = vsel %vm1805, %v10960, %v9930
      %v11025 = vsel %vm1805, %v10961, %v9932
      %v11026 = vsel %vm1805, %v10962, %v9934
      %v11027 = vsel %vm1805, %v10963, %v9936
      %v11028 = vsel %vm1805, %v10964, %v9938
      %v11029 = vsel %vm1805, %v10965, %v9940
      %v11030 = vsel %vm1805, %v10966, %v9942
      %vm11031 = vcmask 326656
      %v11032 = vsel %vm11031, %v10967, %v10008
      %v11033 = vsel %vm11031, %v10968, %v10010
      %v11034 = vsel %vm11031, %v10969, %v10012
      %v11035 = vsel %vm11031, %v10970, %v10014
      %v11036 = vsel %vm11031, %v10971, %v10016
      %v11037 = vsel %vm11031, %v10972, %v10018
      %v11038 = vsel %vm11031, %v10973, %v10020
      %v11039 = vsel %vm11031, %v10974, %v10022
      %v11040 = vsel %vm11031, %v10975, %v10024
      %v11041 = vsel %vm11031, %v10976, %v10026
      %v11042 = vsel %vm11031, %v10977, %v10028
      %v11043 = vsel %vm11031, %v10978, %v10030
      %v11044 = vsel %vm11031, %v10979, %v10032
      %v11045 = vsel %vm11031, %v10980, %v10034
      %v11046 = vsel %vm11031, %v10981, %v10036
      %v11047 = vsel %vm11031, %v10982, %v10038
      %v11048 = vsel %vm11031, %v10983, %v10040
      %v11049 = vsel %vm11031, %v10984, %v10042
      %v11050 = vsel %vm11031, %v10985, %v10044
      %v11051 = vsel %vm11031, %v10986, %v10046
      %v11052 = vsel %vm11031, %v10987, %v10048
      %v11053 = vsel %vm11031, %v10988, %v10050
      %v11054 = vsel %vm11031, %v10989, %v10052
      %v11055 = vsel %vm11031, %v10990, %v10054
      %v11056 = vsel %vm11031, %v10991, %v10056
      %v11057 = vsel %vm11031, %v10992, %v10058
      %v11058 = vsel %vm11031, %v10993, %v10060
      %v11059 = vsel %vm11031, %v10994, %v10062
      %v11060 = vsel %vm11031, %v10995, %v10064
      %v11061 = vsel %vm11031, %v10996, %v10066
      %v11062 = vsel %vm11031, %v10997, %v10068
      %v11063 = vsel %vm11031, %v10998, %v10070
      %v11064 = vsel %vm11031, %v10999, %v10072
      %v11065 = vsel %vm11031, %v11000, %v10074
      %v11066 = vsel %vm11031, %v11001, %v10076
      %v11067 = vsel %vm11031, %v11002, %v10078
      %v11068 = vsel %vm11031, %v11003, %v10080
      %v11069 = vsel %vm11031, %v11004, %v10082
      %v11070 = vsel %vm11031, %v11005, %v10084
      %v11071 = vsel %vm11031, %v11006, %v10086
      %v11072 = vsel %vm11031, %v11007, %v10088
      %v11073 = vsel %vm11031, %v11008, %v10090
      %v11074 = vsel %vm11031, %v11009, %v10092
      %v11075 = vsel %vm11031, %v11010, %v10094
      %v11076 = vsel %vm11031, %v11011, %v10096
      %v11077 = vsel %vm11031, %v11012, %v10098
      %v11078 = vsel %vm11031, %v11013, %v10100
      %v11079 = vsel %vm11031, %v11014, %v10102
      %v11080 = vsel %vm11031, %v11015, %v10104
      %v11081 = vsel %vm11031, %v11016, %v10106
      %v11082 = vsel %vm11031, %v11017, %v10108
      %v11083 = vsel %vm11031, %v11018, %v10110
      %v11084 = vsel %vm11031, %v11019, %v10112
      %v11085 = vsel %vm11031, %v11020, %v10114
      %v11086 = vsel %vm11031, %v11021, %v10116
      %v11087 = vsel %vm11031, %v11022, %v10118
      %v11088 = vsel %vm11031, %v11023, %v10120
      %v11089 = vsel %vm11031, %v11024, %v10122
      %v11090 = vsel %vm11031, %v11025, %v10124
      %v11091 = vsel %vm11031, %v11026, %v10126
      %v11092 = vsel %vm11031, %v11027, %v10128
      %v11093 = vsel %vm11031, %v11028, %v10130
      %v11094 = vsel %vm11031, %v11029, %v10132
      %v11095 = vsel %vm11031, %v11030, %v10134
      %vm11096 = vcmask 392192
      %v11097 = vsel %vm11096, %v11032, %v10200
      %v11098 = vsel %vm11096, %v11033, %v10202
      %v11099 = vsel %vm11096, %v11034, %v10204
      %v11100 = vsel %vm11096, %v11035, %v10206
      %v11101 = vsel %vm11096, %v11036, %v10208
      %v11102 = vsel %vm11096, %v11037, %v10210
      %v11103 = vsel %vm11096, %v11038, %v10212
      %v11104 = vsel %vm11096, %v11039, %v10214
      %v11105 = vsel %vm11096, %v11040, %v10216
      %v11106 = vsel %vm11096, %v11041, %v10218
      %v11107 = vsel %vm11096, %v11042, %v10220
      %v11108 = vsel %vm11096, %v11043, %v10222
      %v11109 = vsel %vm11096, %v11044, %v10224
      %v11110 = vsel %vm11096, %v11045, %v10226
      %v11111 = vsel %vm11096, %v11046, %v10228
      %v11112 = vsel %vm11096, %v11047, %v10230
      %v11113 = vsel %vm11096, %v11048, %v10232
      %v11114 = vsel %vm11096, %v11049, %v10234
      %v11115 = vsel %vm11096, %v11050, %v10236
      %v11116 = vsel %vm11096, %v11051, %v10238
      %v11117 = vsel %vm11096, %v11052, %v10240
      %v11118 = vsel %vm11096, %v11053, %v10242
      %v11119 = vsel %vm11096, %v11054, %v10244
      %v11120 = vsel %vm11096, %v11055, %v10246
      %v11121 = vsel %vm11096, %v11056, %v10248
      %v11122 = vsel %vm11096, %v11057, %v10250
      %v11123 = vsel %vm11096, %v11058, %v10252
      %v11124 = vsel %vm11096, %v11059, %v10254
      %v11125 = vsel %vm11096, %v11060, %v10256
      %v11126 = vsel %vm11096, %v11061, %v10258
      %v11127 = vsel %vm11096, %v11062, %v10260
      %v11128 = vsel %vm11096, %v11063, %v10262
      %v11129 = vsel %vm11096, %v11064, %v10264
      %v11130 = vsel %vm11096, %v11065, %v10266
      %v11131 = vsel %vm11096, %v11066, %v10268
      %v11132 = vsel %vm11096, %v11067, %v10270
      %v11133 = vsel %vm11096, %v11068, %v10272
      %v11134 = vsel %vm11096, %v11069, %v10274
      %v11135 = vsel %vm11096, %v11070, %v10276
      %v11136 = vsel %vm11096, %v11071, %v10278
      %v11137 = vsel %vm11096, %v11072, %v10280
      %v11138 = vsel %vm11096, %v11073, %v10282
      %v11139 = vsel %vm11096, %v11074, %v10284
      %v11140 = vsel %vm11096, %v11075, %v10286
      %v11141 = vsel %vm11096, %v11076, %v10288
      %v11142 = vsel %vm11096, %v11077, %v10290
      %v11143 = vsel %vm11096, %v11078, %v10292
      %v11144 = vsel %vm11096, %v11079, %v10294
      %v11145 = vsel %vm11096, %v11080, %v10296
      %v11146 = vsel %vm11096, %v11081, %v10298
      %v11147 = vsel %vm11096, %v11082, %v10300
      %v11148 = vsel %vm11096, %v11083, %v10302
      %v11149 = vsel %vm11096, %v11084, %v10304
      %v11150 = vsel %vm11096, %v11085, %v10306
      %v11151 = vsel %vm11096, %v11086, %v10308
      %v11152 = vsel %vm11096, %v11087, %v10310
      %v11153 = vsel %vm11096, %v11088, %v10312
      %v11154 = vsel %vm11096, %v11089, %v10314
      %v11155 = vsel %vm11096, %v11090, %v10316
      %v11156 = vsel %vm11096, %v11091, %v10318
      %v11157 = vsel %vm11096, %v11092, %v10320
      %v11158 = vsel %vm11096, %v11093, %v10322
      %v11159 = vsel %vm11096, %v11094, %v10324
      %v11160 = vsel %vm11096, %v11095, %v10326
      %vm11161 = vcmask 457728
      %v11162 = vsel %vm11161, %v11097, %v10392
      %v11163 = vsel %vm11161, %v11098, %v10394
      %v11164 = vsel %vm11161, %v11099, %v10396
      %v11165 = vsel %vm11161, %v11100, %v10398
      %v11166 = vsel %vm11161, %v11101, %v10400
      %v11167 = vsel %vm11161, %v11102, %v10402
      %v11168 = vsel %vm11161, %v11103, %v10404
      %v11169 = vsel %vm11161, %v11104, %v10406
      %v11170 = vsel %vm11161, %v11105, %v10408
      %v11171 = vsel %vm11161, %v11106, %v10410
      %v11172 = vsel %vm11161, %v11107, %v10412
      %v11173 = vsel %vm11161, %v11108, %v10414
      %v11174 = vsel %vm11161, %v11109, %v10416
      %v11175 = vsel %vm11161, %v11110, %v10418
      %v11176 = vsel %vm11161, %v11111, %v10420
      %v11177 = vsel %vm11161, %v11112, %v10422
      %v11178 = vsel %vm11161, %v11113, %v10424
      %v11179 = vsel %vm11161, %v11114, %v10426
      %v11180 = vsel %vm11161, %v11115, %v10428
      %v11181 = vsel %vm11161, %v11116, %v10430
      %v11182 = vsel %vm11161, %v11117, %v10432
      %v11183 = vsel %vm11161, %v11118, %v10434
      %v11184 = vsel %vm11161, %v11119, %v10436
      %v11185 = vsel %vm11161, %v11120, %v10438
      %v11186 = vsel %vm11161, %v11121, %v10440
      %v11187 = vsel %vm11161, %v11122, %v10442
      %v11188 = vsel %vm11161, %v11123, %v10444
      %v11189 = vsel %vm11161, %v11124, %v10446
      %v11190 = vsel %vm11161, %v11125, %v10448
      %v11191 = vsel %vm11161, %v11126, %v10450
      %v11192 = vsel %vm11161, %v11127, %v10452
      %v11193 = vsel %vm11161, %v11128, %v10454
      %v11194 = vsel %vm11161, %v11129, %v10456
      %v11195 = vsel %vm11161, %v11130, %v10458
      %v11196 = vsel %vm11161, %v11131, %v10460
      %v11197 = vsel %vm11161, %v11132, %v10462
      %v11198 = vsel %vm11161, %v11133, %v10464
      %v11199 = vsel %vm11161, %v11134, %v10466
      %v11200 = vsel %vm11161, %v11135, %v10468
      %v11201 = vsel %vm11161, %v11136, %v10470
      %v11202 = vsel %vm11161, %v11137, %v10472
      %v11203 = vsel %vm11161, %v11138, %v10474
      %v11204 = vsel %vm11161, %v11139, %v10476
      %v11205 = vsel %vm11161, %v11140, %v10478
      %v11206 = vsel %vm11161, %v11141, %v10480
      %v11207 = vsel %vm11161, %v11142, %v10482
      %v11208 = vsel %vm11161, %v11143, %v10484
      %v11209 = vsel %vm11161, %v11144, %v10486
      %v11210 = vsel %vm11161, %v11145, %v10488
      %v11211 = vsel %vm11161, %v11146, %v10490
      %v11212 = vsel %vm11161, %v11147, %v10492
      %v11213 = vsel %vm11161, %v11148, %v10494
      %v11214 = vsel %vm11161, %v11149, %v10496
      %v11215 = vsel %vm11161, %v11150, %v10498
      %v11216 = vsel %vm11161, %v11151, %v10500
      %v11217 = vsel %vm11161, %v11152, %v10502
      %v11218 = vsel %vm11161, %v11153, %v10504
      %v11219 = vsel %vm11161, %v11154, %v10506
      %v11220 = vsel %vm11161, %v11155, %v10508
      %v11221 = vsel %vm11161, %v11156, %v10510
      %v11222 = vsel %vm11161, %v11157, %v10512
      %v11223 = vsel %vm11161, %v11158, %v10514
      %v11224 = vsel %vm11161, %v11159, %v10516
      %v11225 = vsel %vm11161, %v11160, %v10518
      %v11226 = vsel %vm3091, %v11162, %v10584
      %v11227 = vsel %vm3091, %v11163, %v10586
      %v11228 = vsel %vm3091, %v11164, %v10588
      %v11229 = vsel %vm3091, %v11165, %v10590
      %v11230 = vsel %vm3091, %v11166, %v10592
      %v11231 = vsel %vm3091, %v11167, %v10594
      %v11232 = vsel %vm3091, %v11168, %v10596
      %v11233 = vsel %vm3091, %v11169, %v10598
      %v11234 = vsel %vm3091, %v11170, %v10600
      %v11235 = vsel %vm3091, %v11171, %v10602
      %v11236 = vsel %vm3091, %v11172, %v10604
      %v11237 = vsel %vm3091, %v11173, %v10606
      %v11238 = vsel %vm3091, %v11174, %v10608
      %v11239 = vsel %vm3091, %v11175, %v10610
      %v11240 = vsel %vm3091, %v11176, %v10612
      %v11241 = vsel %vm3091, %v11177, %v10614
      %v11242 = vsel %vm3091, %v11178, %v10616
      %v11243 = vsel %vm3091, %v11179, %v10618
      %v11244 = vsel %vm3091, %v11180, %v10620
      %v11245 = vsel %vm3091, %v11181, %v10622
      %v11246 = vsel %vm3091, %v11182, %v10624
      %v11247 = vsel %vm3091, %v11183, %v10626
      %v11248 = vsel %vm3091, %v11184, %v10628
      %v11249 = vsel %vm3091, %v11185, %v10630
      %v11250 = vsel %vm3091, %v11186, %v10632
      %v11251 = vsel %vm3091, %v11187, %v10634
      %v11252 = vsel %vm3091, %v11188, %v10636
      %v11253 = vsel %vm3091, %v11189, %v10638
      %v11254 = vsel %vm3091, %v11190, %v10640
      %v11255 = vsel %vm3091, %v11191, %v10642
      %v11256 = vsel %vm3091, %v11192, %v10644
      %v11257 = vsel %vm3091, %v11193, %v10646
      %v11258 = vsel %vm3091, %v11194, %v10648
      %v11259 = vsel %vm3091, %v11195, %v10650
      %v11260 = vsel %vm3091, %v11196, %v10652
      %v11261 = vsel %vm3091, %v11197, %v10654
      %v11262 = vsel %vm3091, %v11198, %v10656
      %v11263 = vsel %vm3091, %v11199, %v10658
      %v11264 = vsel %vm3091, %v11200, %v10660
      %v11265 = vsel %vm3091, %v11201, %v10662
      %v11266 = vsel %vm3091, %v11202, %v10664
      %v11267 = vsel %vm3091, %v11203, %v10666
      %v11268 = vsel %vm3091, %v11204, %v10668
      %v11269 = vsel %vm3091, %v11205, %v10670
      %v11270 = vsel %vm3091, %v11206, %v10672
      %v11271 = vsel %vm3091, %v11207, %v10674
      %v11272 = vsel %vm3091, %v11208, %v10676
      %v11273 = vsel %vm3091, %v11209, %v10678
      %v11274 = vsel %vm3091, %v11210, %v10680
      %v11275 = vsel %vm3091, %v11211, %v10682
      %v11276 = vsel %vm3091, %v11212, %v10684
      %v11277 = vsel %vm3091, %v11213, %v10686
      %v11278 = vsel %vm3091, %v11214, %v10688
      %v11279 = vsel %vm3091, %v11215, %v10690
      %v11280 = vsel %vm3091, %v11216, %v10692
      %v11281 = vsel %vm3091, %v11217, %v10694
      %v11282 = vsel %vm3091, %v11218, %v10696
      %v11283 = vsel %vm3091, %v11219, %v10698
      %v11284 = vsel %vm3091, %v11220, %v10700
      %v11285 = vsel %vm3091, %v11221, %v10702
      %v11286 = vsel %vm3091, %v11222, %v10704
      %v11287 = vsel %vm3091, %v11223, %v10706
      %v11288 = vsel %vm3091, %v11224, %v10708
      %v11289 = vsel %vm3091, %v11225, %v10710
      %v11290 = vmul.f32 %v11226, %v8786
      %v11291 = vmul.f32 %v11227, %v8787
      %v11292 = vmul.f32 %v11228, %v8788
      %v11293 = vmul.f32 %v11229, %v8789
      %v11294 = vmul.f32 %v11230, %v8790
      %v11295 = vmul.f32 %v11231, %v8791
      %v11296 = vmul.f32 %v11232, %v8792
      %v11297 = vmul.f32 %v11233, %v8793
      %v11298 = vmul.f32 %v11234, %v8794
      %v11299 = vmul.f32 %v11235, %v8795
      %v11300 = vmul.f32 %v11236, %v8796
      %v11301 = vmul.f32 %v11237, %v8797
      %v11302 = vmul.f32 %v11238, %v8798
      %v11303 = vmul.f32 %v11239, %v8799
      %v11304 = vmul.f32 %v11240, %v8800
      %v11305 = vmul.f32 %v11241, %v8801
      %v11306 = vmul.f32 %v11242, %v8802
      %v11307 = vmul.f32 %v11243, %v8803
      %v11308 = vmul.f32 %v11244, %v8804
      %v11309 = vmul.f32 %v11245, %v8805
      %v11310 = vmul.f32 %v11246, %v8806
      %v11311 = vmul.f32 %v11247, %v8807
      %v11312 = vmul.f32 %v11248, %v8808
      %v11313 = vmul.f32 %v11249, %v8809
      %v11314 = vmul.f32 %v11250, %v8810
      %v11315 = vmul.f32 %v11251, %v8811
      %v11316 = vmul.f32 %v11252, %v8812
      %v11317 = vmul.f32 %v11253, %v8813
      %v11318 = vmul.f32 %v11254, %v8814
      %v11319 = vmul.f32 %v11255, %v8815
      %v11320 = vmul.f32 %v11256, %v8816
      %v11321 = vmul.f32 %v11257, %v8817
      %v11322 = vmul.f32 %v11258, %v8818
      %v11323 = vmul.f32 %v11259, %v8819
      %v11324 = vmul.f32 %v11260, %v8820
      %v11325 = vmul.f32 %v11261, %v8821
      %v11326 = vmul.f32 %v11262, %v8822
      %v11327 = vmul.f32 %v11263, %v8823
      %v11328 = vmul.f32 %v11264, %v8824
      %v11329 = vmul.f32 %v11265, %v8825
      %v11330 = vmul.f32 %v11266, %v8826
      %v11331 = vmul.f32 %v11267, %v8827
      %v11332 = vmul.f32 %v11268, %v8828
      %v11333 = vmul.f32 %v11269, %v8829
      %v11334 = vmul.f32 %v11270, %v8830
      %v11335 = vmul.f32 %v11271, %v8831
      %v11336 = vmul.f32 %v11272, %v8832
      %v11337 = vmul.f32 %v11273, %v8833
      %v11338 = vmul.f32 %v11274, %v8834
      %v11339 = vmul.f32 %v11275, %v8835
      %v11340 = vmul.f32 %v11276, %v8836
      %v11341 = vmul.f32 %v11277, %v8837
      %v11342 = vmul.f32 %v11278, %v8838
      %v11343 = vmul.f32 %v11279, %v8839
      %v11344 = vmul.f32 %v11280, %v8840
      %v11345 = vmul.f32 %v11281, %v8841
      %v11346 = vmul.f32 %v11282, %v8842
      %v11347 = vmul.f32 %v11283, %v8843
      %v11348 = vmul.f32 %v11284, %v8844
      %v11349 = vmul.f32 %v11285, %v8845
      %v11350 = vmul.f32 %v11286, %v8846
      %v11351 = vmul.f32 %v11287, %v8847
      %v11352 = vmul.f32 %v11288, %v8848
      %v11353 = vmul.f32 %v11289, %v8849
      %v11354 = vpack.c.bf16 %v11291, %v11290
      %v11355 = vpack.c.bf16 %v11293, %v11292
      %v11356 = vpack.c.bf16 %v11295, %v11294
      %v11357 = vpack.c.bf16 %v11297, %v11296
      %v11358 = vpack.c.bf16 %v11299, %v11298
      %v11359 = vpack.c.bf16 %v11301, %v11300
      %v11360 = vpack.c.bf16 %v11303, %v11302
      %v11361 = vpack.c.bf16 %v11305, %v11304
      %v11362 = vpack.c.bf16 %v11307, %v11306
      %v11363 = vpack.c.bf16 %v11309, %v11308
      %v11364 = vpack.c.bf16 %v11311, %v11310
      %v11365 = vpack.c.bf16 %v11313, %v11312
      %v11366 = vpack.c.bf16 %v11315, %v11314
      %v11367 = vpack.c.bf16 %v11317, %v11316
      %v11368 = vpack.c.bf16 %v11319, %v11318
      %v11369 = vpack.c.bf16 %v11321, %v11320
      %v11370 = vpack.c.bf16 %v11323, %v11322
      %v11371 = vpack.c.bf16 %v11325, %v11324
      %v11372 = vpack.c.bf16 %v11327, %v11326
      %v11373 = vpack.c.bf16 %v11329, %v11328
      %v11374 = vpack.c.bf16 %v11331, %v11330
      %v11375 = vpack.c.bf16 %v11333, %v11332
      %v11376 = vpack.c.bf16 %v11335, %v11334
      %v11377 = vpack.c.bf16 %v11337, %v11336
      %v11378 = vpack.c.bf16 %v11339, %v11338
      %v11379 = vpack.c.bf16 %v11341, %v11340
      %v11380 = vpack.c.bf16 %v11343, %v11342
      %v11381 = vpack.c.bf16 %v11345, %v11344
      %v11382 = vpack.c.bf16 %v11347, %v11346
      %v11383 = vpack.c.bf16 %v11349, %v11348
      %v11384 = vpack.c.bf16 %v11351, %v11350
      %v11385 = vpack.c.bf16 %v11353, %v11352
      %v11386 = vld [vmem:[%s14] sm:$0xf]
      %v11387 = vld [vmem:[%s14 + $0x4] sm:$0xf]
      %v11388 = vld [vmem:[%s14 + $0x8] sm:$0xf]
      %v11389 = vld [vmem:[%s14 + $0xc] sm:$0xf]
      %v11390 = vld [vmem:[%s14 + $0x10] sm:$0xf]
      %v11391 = vld [vmem:[%s14 + $0x14] sm:$0xf]
      %v11392 = vld [vmem:[%s14 + $0x18] sm:$0xf]
      %v11393 = vld [vmem:[%s14 + $0x1c] sm:$0xf]
      %v11394 = vld [vmem:[%s14 + $0x20] sm:$0xf]
      %v11395 = vld [vmem:[%s15] sm:$0x1]
      %v11397 = vlaneseq
      %v11398 = vshrl.u32 %v11397, 7
      %v11399 = vsub.s32 0, %v11398
      %v11400 = vrot.slane %v11395, %v11399
      %v11411 = vunpack.c.l.b16 %v11386
      %v11412 = vunpack.c.l.b16 %v11387
      %v11413 = vunpack.c.l.b16 %v11388
      %v11414 = vunpack.c.l.b16 %v11389
      %v11415 = vunpack.c.l.b16 %v11390
      %v11416 = vunpack.c.l.b16 %v11391
      %v11417 = vunpack.c.l.b16 %v11392
      %v11418 = vunpack.c.l.b16 %v11393
      %v11419 = vunpack.c.l.b16 %v11394
      %v11420 = vpack.c.b16 %v11412, %v11411
      %v11421 = vpack.c.b16 %v11414, %v11413
      %v11422 = vpack.c.b16 %v11416, %v11415
      %v11423 = vpack.c.b16 %v11418, %v11417
      %v11424 = vpack.c.b16 %v11419, %v11419
      %vm11429 = vcmask 588800
      %v11431 = vsel %vm11429, %v11354, 0
      %v11434 = vsel %vm11429, %v11355, 0
      %v11437 = vsel %vm11429, %v11356, 0
      %v11440 = vsel %vm11429, %v11357, 0
      %v11443 = vsel %vm11429, %v11358, 0
      %v11446 = vsel %vm11429, %v11359, 0
      %v11449 = vsel %vm11429, %v11360, 0
      %v11452 = vsel %vm11429, %v11361, 0
      %v11455 = vsel %vm11429, %v11362, 0
      %v11458 = vsel %vm11429, %v11363, 0
      %v11461 = vsel %vm11429, %v11364, 0
      %v11464 = vsel %vm11429, %v11365, 0
      %v11467 = vsel %vm11429, %v11366, 0
      %v11470 = vsel %vm11429, %v11367, 0
      %v11473 = vsel %vm11429, %v11368, 0
      %v11476 = vsel %vm11429, %v11369, 0
      %v11479 = vsel %vm11429, %v11370, 0
      %v11482 = vsel %vm11429, %v11371, 0
      %v11485 = vsel %vm11429, %v11372, 0
      %v11488 = vsel %vm11429, %v11373, 0
      %v11491 = vsel %vm11429, %v11374, 0
      %v11494 = vsel %vm11429, %v11375, 0
      %v11497 = vsel %vm11429, %v11376, 0
      %v11500 = vsel %vm11429, %v11377, 0
      %v11503 = vsel %vm11429, %v11378, 0
      %v11506 = vsel %vm11429, %v11379, 0
      %v11509 = vsel %vm11429, %v11380, 0
      %v11512 = vsel %vm11429, %v11381, 0
      %v11515 = vsel %vm11429, %v11382, 0
      %v11518 = vsel %vm11429, %v11383, 0
      %v11521 = vsel %vm11429, %v11384, 0
      %v11524 = vsel %vm11429, %v11385, 0
      %vm11526 = vcmask 1043456
      %v11528 = vsel %vm11526, %v11424, 0
      %11530 = vmatprep.subr.bf16.mxu0 0
      %11531 = vmatpush1.bf16.msra.mxu0 %v11420
      %11532 = vmatprep.subr.bf16.mxu0 0
      %11533 = vmatpush1.bf16.msra.mxu0 %v11421
      %11534 = vmatprep.subr.bf16.mxu0 0
      %11535 = vmatpush1.bf16.msra.mxu0 %v11422
      %11536 = vmatprep.subr.bf16.mxu0 0
      %11537 = vmatpush1.bf16.msra.mxu0 %v11423
      %11538 = vmatprep.subr.bf16.mxu0 0
      %11539 = vmatpush1.bf16.msra.mxu0 %v11528
      %11540 = vmatprep.subr.bf16.mxu0 0
      %11541 = vmatpush1.bf16.msra.mxu0 0
      %11542 = vmatprep.subr.bf16.mxu0 0
      %11543 = vmatpush1.bf16.msra.mxu0 0
      %11544 = vmatprep.subr.bf16.mxu0 0
      %11545 = vmatpush1.bf16.msra.mxu0 0
      %11546 = vmatprep.subr.bf16.mxu0 0
      %11547 = vmatpush1.bf16.msra.mxu0 0
      %11548 = vmatprep.subr.bf16.mxu0 0
      %11549 = vmatpush1.bf16.msra.mxu0 0
      %11550 = vmatprep.subr.bf16.mxu0 0
      %11551 = vmatpush1.bf16.msra.mxu0 0
      %11552 = vmatprep.subr.bf16.mxu0 0
      %11553 = vmatpush1.bf16.msra.mxu0 0
      %11554 = vmatprep.subr.bf16.mxu0 0
      %11555 = vmatpush1.bf16.msra.mxu0 0
      %11556 = vmatprep.subr.bf16.mxu0 0
      %11557 = vmatpush1.bf16.msra.mxu0 0
      %11558 = vmatprep.subr.bf16.mxu0 0
      %11559 = vmatpush1.bf16.msra.mxu0 0
      %11560 = vmatprep.subr.bf16.mxu0 0
      %11561 = vmatpush1.bf16.msra.mxu0 0
      %11562 = vmatprep.mubr.bf16.mxu0 0
      %11563 = vmatmul.mubr.bf16.gmra.mrb[0].mxu0 %v11431
      %v11564 = vpop.f32.mrb[0].mxu0
      %v11565 = vadd.f32 %v11400, %v11564
      %v11566 = vpop.f32.mrb[0].mxu0
      %v11567 = vpop.f32.mrb[0].mxu0
      %v11568 = vadd.f32 %v11400, %v11567
      %v11569 = vpop.f32.mrb[0].mxu0
      %11570 = vmatprep.mubr.bf16.mxu0 0
      %11571 = vmatmul.mubr.bf16.gmra.mrb[0].mxu0 %v11434
      %v11572 = vpop.f32.mrb[0].mxu0
      %v11573 = vadd.f32 %v11400, %v11572
      %v11574 = vpop.f32.mrb[0].mxu0
      %v11575 = vpop.f32.mrb[0].mxu0
      %v11576 = vadd.f32 %v11400, %v11575
      %v11577 = vpop.f32.mrb[0].mxu0
      %11578 = vmatprep.mubr.bf16.mxu0 0
      %11579 = vmatmul.mubr.bf16.gmra.mrb[0].mxu0 %v11437
      %v11580 = vpop.f32.mrb[0].mxu0
      %v11581 = vadd.f32 %v11400, %v11580
      %v11582 = vpop.f32.mrb[0].mxu0
      %v11583 = vpop.f32.mrb[0].mxu0
      %v11584 = vadd.f32 %v11400, %v11583
      %v11585 = vpop.f32.mrb[0].mxu0
      %11586 = vmatprep.mubr.bf16.mxu0 0
      %11587 = vmatmul.mubr.bf16.gmra.mrb[0].mxu0 %v11440
      %v11588 = vpop.f32.mrb[0].mxu0
      %v11589 = vadd.f32 %v11400, %v11588
      %v11590 = vpop.f32.mrb[0].mxu0
      %v11591 = vpop.f32.mrb[0].mxu0
      %v11592 = vadd.f32 %v11400, %v11591
      %v11593 = vpop.f32.mrb[0].mxu0
      %11594 = vmatprep.mubr.bf16.mxu0 0
      %11595 = vmatmul.mubr.bf16.gmra.mrb[0].mxu0 %v11443
      %v11596 = vpop.f32.mrb[0].mxu0
      %v11597 = vadd.f32 %v11400, %v11596
      %v11598 = vpop.f32.mrb[0].mxu0
      %v11599 = vpop.f32.mrb[0].mxu0
      %v11600 = vadd.f32 %v11400, %v11599
      %v11601 = vpop.f32.mrb[0].mxu0
      %11602 = vmatprep.mubr.bf16.mxu0 0
      %11603 = vmatmul.mubr.bf16.gmra.mrb[0].mxu0 %v11446
      %v11604 = vpop.f32.mrb[0].mxu0
      %v11605 = vadd.f32 %v11400, %v11604
      %v11606 = vpop.f32.mrb[0].mxu0
      %v11607 = vpop.f32.mrb[0].mxu0
      %v11608 = vadd.f32 %v11400, %v11607
      %v11609 = vpop.f32.mrb[0].mxu0
      %11610 = vmatprep.mubr.bf16.mxu0 0
      %11611 = vmatmul.mubr.bf16.gmra.mrb[0].mxu0 %v11449
      %v11612 = vpop.f32.mrb[0].mxu0
      %v11613 = vadd.f32 %v11400, %v11612
      %v11614 = vpop.f32.mrb[0].mxu0
      %v11615 = vpop.f32.mrb[0].mxu0
      %v11616 = vadd.f32 %v11400, %v11615
      %v11617 = vpop.f32.mrb[0].mxu0
      %11618 = vmatprep.mubr.bf16.mxu0 0
      %11619 = vmatmul.mubr.bf16.gmra.mrb[0].mxu0 %v11452
      %v11620 = vpop.f32.mrb[0].mxu0
      %v11621 = vadd.f32 %v11400, %v11620
      %v11622 = vpop.f32.mrb[0].mxu0
      %v11623 = vpop.f32.mrb[0].mxu0
      %v11624 = vadd.f32 %v11400, %v11623
      %v11625 = vpop.f32.mrb[0].mxu0
      %11626 = vmatprep.mubr.bf16.mxu0 0
      %11627 = vmatmul.mubr.bf16.gmra.mrb[0].mxu0 %v11455
      %v11628 = vpop.f32.mrb[0].mxu0
      %v11629 = vadd.f32 %v11400, %v11628
      %v11630 = vpop.f32.mrb[0].mxu0
      %v11631 = vpop.f32.mrb[0].mxu0
      %v11632 = vadd.f32 %v11400, %v11631
      %v11633 = vpop.f32.mrb[0].mxu0
      %11634 = vmatprep.mubr.bf16.mxu0 0
      %11635 = vmatmul.mubr.bf16.gmra.mrb[0].mxu0 %v11458
      %v11636 = vpop.f32.mrb[0].mxu0
      %v11637 = vadd.f32 %v11400, %v11636
      %v11638 = vpop.f32.mrb[0].mxu0
      %v11639 = vpop.f32.mrb[0].mxu0
      %v11640 = vadd.f32 %v11400, %v11639
      %v11641 = vpop.f32.mrb[0].mxu0
      %11642 = vmatprep.mubr.bf16.mxu0 0
      %11643 = vmatmul.mubr.bf16.gmra.mrb[0].mxu0 %v11461
      %v11644 = vpop.f32.mrb[0].mxu0
      %v11645 = vadd.f32 %v11400, %v11644
      %v11646 = vpop.f32.mrb[0].mxu0
      %v11647 = vpop.f32.mrb[0].mxu0
      %v11648 = vadd.f32 %v11400, %v11647
      %v11649 = vpop.f32.mrb[0].mxu0
      %11650 = vmatprep.mubr.bf16.mxu0 0
      %11651 = vmatmul.mubr.bf16.gmra.mrb[0].mxu0 %v11464
      %v11652 = vpop.f32.mrb[0].mxu0
      %v11653 = vadd.f32 %v11400, %v11652
      %v11654 = vpop.f32.mrb[0].mxu0
      %v11655 = vpop.f32.mrb[0].mxu0
      %v11656 = vadd.f32 %v11400, %v11655
      %v11657 = vpop.f32.mrb[0].mxu0
      %11658 = vmatprep.mubr.bf16.mxu0 0
      %11659 = vmatmul.mubr.bf16.gmra.mrb[0].mxu0 %v11467
      %v11660 = vpop.f32.mrb[0].mxu0
      %v11661 = vadd.f32 %v11400, %v11660
      %v11662 = vpop.f32.mrb[0].mxu0
      %v11663 = vpop.f32.mrb[0].mxu0
      %v11664 = vadd.f32 %v11400, %v11663
      %v11665 = vpop.f32.mrb[0].mxu0
      %11666 = vmatprep.mubr.bf16.mxu0 0
      %11667 = vmatmul.mubr.bf16.gmra.mrb[0].mxu0 %v11470
      %v11668 = vpop.f32.mrb[0].mxu0
      %v11669 = vadd.f32 %v11400, %v11668
      %v11670 = vpop.f32.mrb[0].mxu0
      %v11671 = vpop.f32.mrb[0].mxu0
      %v11672 = vadd.f32 %v11400, %v11671
      %v11673 = vpop.f32.mrb[0].mxu0
      %11674 = vmatprep.mubr.bf16.mxu0 0
      %11675 = vmatmul.mubr.bf16.gmra.mrb[0].mxu0 %v11473
      %v11676 = vpop.f32.mrb[0].mxu0
      %v11677 = vadd.f32 %v11400, %v11676
      %v11678 = vpop.f32.mrb[0].mxu0
      %v11679 = vpop.f32.mrb[0].mxu0
      %v11680 = vadd.f32 %v11400, %v11679
      %v11681 = vpop.f32.mrb[0].mxu0
      %11682 = vmatprep.mubr.bf16.mxu0 0
      %11683 = vmatmul.mubr.bf16.gmra.mrb[0].mxu0 %v11476
      %v11684 = vpop.f32.mrb[0].mxu0
      %v11685 = vadd.f32 %v11400, %v11684
      %v11686 = vpop.f32.mrb[0].mxu0
      %v11687 = vpop.f32.mrb[0].mxu0
      %v11688 = vadd.f32 %v11400, %v11687
      %v11689 = vpop.f32.mrb[0].mxu0
      %11690 = vmatprep.mubr.bf16.mxu0 0
      %11691 = vmatmul.mubr.bf16.gmra.mrb[0].mxu0 %v11479
      %v11692 = vpop.f32.mrb[0].mxu0
      %v11693 = vadd.f32 %v11400, %v11692
      %v11694 = vpop.f32.mrb[0].mxu0
      %v11695 = vpop.f32.mrb[0].mxu0
      %v11696 = vadd.f32 %v11400, %v11695
      %v11697 = vpop.f32.mrb[0].mxu0
      %11698 = vmatprep.mubr.bf16.mxu0 0
      %11699 = vmatmul.mubr.bf16.gmra.mrb[0].mxu0 %v11482
      %v11700 = vpop.f32.mrb[0].mxu0
      %v11701 = vadd.f32 %v11400, %v11700
      %v11702 = vpop.f32.mrb[0].mxu0
      %v11703 = vpop.f32.mrb[0].mxu0
      %v11704 = vadd.f32 %v11400, %v11703
      %v11705 = vpop.f32.mrb[0].mxu0
      %11706 = vmatprep.mubr.bf16.mxu0 0
      %11707 = vmatmul.mubr.bf16.gmra.mrb[0].mxu0 %v11485
      %v11708 = vpop.f32.mrb[0].mxu0
      %v11709 = vadd.f32 %v11400, %v11708
      %v11710 = vpop.f32.mrb[0].mxu0
      %v11711 = vpop.f32.mrb[0].mxu0
      %v11712 = vadd.f32 %v11400, %v11711
      %v11713 = vpop.f32.mrb[0].mxu0
      %11714 = vmatprep.mubr.bf16.mxu0 0
      %11715 = vmatmul.mubr.bf16.gmra.mrb[0].mxu0 %v11488
      %v11716 = vpop.f32.mrb[0].mxu0
      %v11717 = vadd.f32 %v11400, %v11716
      %v11718 = vpop.f32.mrb[0].mxu0
      %v11719 = vpop.f32.mrb[0].mxu0
      %v11720 = vadd.f32 %v11400, %v11719
      %v11721 = vpop.f32.mrb[0].mxu0
      %11722 = vmatprep.mubr.bf16.mxu0 0
      %11723 = vmatmul.mubr.bf16.gmra.mrb[0].mxu0 %v11491
      %v11724 = vpop.f32.mrb[0].mxu0
      %v11725 = vadd.f32 %v11400, %v11724
      %v11726 = vpop.f32.mrb[0].mxu0
      %v11727 = vpop.f32.mrb[0].mxu0
      %v11728 = vadd.f32 %v11400, %v11727
      %v11729 = vpop.f32.mrb[0].mxu0
      %11730 = vmatprep.mubr.bf16.mxu0 0
      %11731 = vmatmul.mubr.bf16.gmra.mrb[0].mxu0 %v11494
      %v11732 = vpop.f32.mrb[0].mxu0
      %v11733 = vadd.f32 %v11400, %v11732
      %v11734 = vpop.f32.mrb[0].mxu0
      %v11735 = vpop.f32.mrb[0].mxu0
      %v11736 = vadd.f32 %v11400, %v11735
      %v11737 = vpop.f32.mrb[0].mxu0
      %11738 = vmatprep.mubr.bf16.mxu0 0
      %11739 = vmatmul.mubr.bf16.gmra.mrb[0].mxu0 %v11497
      %v11740 = vpop.f32.mrb[0].mxu0
      %v11741 = vadd.f32 %v11400, %v11740
      %v11742 = vpop.f32.mrb[0].mxu0
      %v11743 = vpop.f32.mrb[0].mxu0
      %v11744 = vadd.f32 %v11400, %v11743
      %v11745 = vpop.f32.mrb[0].mxu0
      %11746 = vmatprep.mubr.bf16.mxu0 0
      %11747 = vmatmul.mubr.bf16.gmra.mrb[0].mxu0 %v11500
      %v11748 = vpop.f32.mrb[0].mxu0
      %v11749 = vadd.f32 %v11400, %v11748
      %v11750 = vpop.f32.mrb[0].mxu0
      %v11751 = vpop.f32.mrb[0].mxu0
      %v11752 = vadd.f32 %v11400, %v11751
      %v11753 = vpop.f32.mrb[0].mxu0
      %11754 = vmatprep.mubr.bf16.mxu0 0
      %11755 = vmatmul.mubr.bf16.gmra.mrb[0].mxu0 %v11503
      %v11756 = vpop.f32.mrb[0].mxu0
      %v11757 = vadd.f32 %v11400, %v11756
      %v11758 = vpop.f32.mrb[0].mxu0
      %v11759 = vpop.f32.mrb[0].mxu0
      %v11760 = vadd.f32 %v11400, %v11759
      %v11761 = vpop.f32.mrb[0].mxu0
      %11762 = vmatprep.mubr.bf16.mxu0 0
      %11763 = vmatmul.mubr.bf16.gmra.mrb[0].mxu0 %v11506
      %v11764 = vpop.f32.mrb[0].mxu0
      %v11765 = vadd.f32 %v11400, %v11764
      %v11766 = vpop.f32.mrb[0].mxu0
      %v11767 = vpop.f32.mrb[0].mxu0
      %v11768 = vadd.f32 %v11400, %v11767
      %v11769 = vpop.f32.mrb[0].mxu0
      %11770 = vmatprep.mubr.bf16.mxu0 0
      %11771 = vmatmul.mubr.bf16.gmra.mrb[0].mxu0 %v11509
      %v11772 = vpop.f32.mrb[0].mxu0
      %v11773 = vadd.f32 %v11400, %v11772
      %v11774 = vpop.f32.mrb[0].mxu0
      %v11775 = vpop.f32.mrb[0].mxu0
      %v11776 = vadd.f32 %v11400, %v11775
      %v11777 = vpop.f32.mrb[0].mxu0
      %11778 = vmatprep.mubr.bf16.mxu0 0
      %11779 = vmatmul.mubr.bf16.gmra.mrb[0].mxu0 %v11512
      %v11780 = vpop.f32.mrb[0].mxu0
      %v11781 = vadd.f32 %v11400, %v11780
      %v11782 = vpop.f32.mrb[0].mxu0
      %v11783 = vpop.f32.mrb[0].mxu0
      %v11784 = vadd.f32 %v11400, %v11783
      %v11785 = vpop.f32.mrb[0].mxu0
      %11786 = vmatprep.mubr.bf16.mxu0 0
      %11787 = vmatmul.mubr.bf16.gmra.mrb[0].mxu0 %v11515
      %v11788 = vpop.f32.mrb[0].mxu0
      %v11789 = vadd.f32 %v11400, %v11788
      %v11790 = vpop.f32.mrb[0].mxu0
      %v11791 = vpop.f32.mrb[0].mxu0
      %v11792 = vadd.f32 %v11400, %v11791
      %v11793 = vpop.f32.mrb[0].mxu0
      %11794 = vmatprep.mubr.bf16.mxu0 0
      %11795 = vmatmul.mubr.bf16.gmra.mrb[0].mxu0 %v11518
      %v11796 = vpop.f32.mrb[0].mxu0
      %v11797 = vadd.f32 %v11400, %v11796
      %v11798 = vpop.f32.mrb[0].mxu0
      %v11799 = vpop.f32.mrb[0].mxu0
      %v11800 = vadd.f32 %v11400, %v11799
      %v11801 = vpop.f32.mrb[0].mxu0
      %11802 = vmatprep.mubr.bf16.mxu0 0
      %11803 = vmatmul.mubr.bf16.gmra.mrb[0].mxu0 %v11521
      %v11804 = vpop.f32.mrb[0].mxu0
      %v11805 = vadd.f32 %v11400, %v11804
      %v11806 = vpop.f32.mrb[0].mxu0
      %v11807 = vpop.f32.mrb[0].mxu0
      %v11808 = vadd.f32 %v11400, %v11807
      %v11809 = vpop.f32.mrb[0].mxu0
      %11810 = vmatprep.mubr.bf16.mxu0 0
      %11811 = vmatmul.mubr.bf16.gmra.mrb[0].mxu0 %v11524
      %v11812 = vpop.f32.mrb[0].mxu0
      %v11813 = vadd.f32 %v11400, %v11812
      %v11814 = vpop.f32.mrb[0].mxu0
      %v11815 = vpop.f32.mrb[0].mxu0
      %v11816 = vadd.f32 %v11400, %v11815
      %v11817 = vpop.f32.mrb[0].mxu0
      %11818 = vdwg.mxu0
      %v11819 = vmax.f32 %v11565, 0.0
      %v11820 = vmax.f32 %v11568, 0.0
      %v11821 = vmax.f32 %v11573, 0.0
      %v11822 = vmax.f32 %v11576, 0.0
      %v11823 = vmax.f32 %v11581, 0.0
      %v11824 = vmax.f32 %v11584, 0.0
      %v11825 = vmax.f32 %v11589, 0.0
      %v11826 = vmax.f32 %v11592, 0.0
      %v11827 = vmax.f32 %v11597, 0.0
      %v11828 = vmax.f32 %v11600, 0.0
      %v11829 = vmax.f32 %v11605, 0.0
      %v11830 = vmax.f32 %v11608, 0.0
      %v11831 = vmax.f32 %v11613, 0.0
      %v11832 = vmax.f32 %v11616, 0.0
      %v11833 = vmax.f32 %v11621, 0.0
      %v11834 = vmax.f32 %v11624, 0.0
      %v11835 = vmax.f32 %v11629, 0.0
      %v11836 = vmax.f32 %v11632, 0.0
      %v11837 = vmax.f32 %v11637, 0.0
      %v11838 = vmax.f32 %v11640, 0.0
      %v11839 = vmax.f32 %v11645, 0.0
      %v11840 = vmax.f32 %v11648, 0.0
      %v11841 = vmax.f32 %v11653, 0.0
      %v11842 = vmax.f32 %v11656, 0.0
      %v11843 = vmax.f32 %v11661, 0.0
      %v11844 = vmax.f32 %v11664, 0.0
      %v11845 = vmax.f32 %v11669, 0.0
      %v11846 = vmax.f32 %v11672, 0.0
      %v11847 = vmax.f32 %v11677, 0.0
      %v11848 = vmax.f32 %v11680, 0.0
      %v11849 = vmax.f32 %v11685, 0.0
      %v11850 = vmax.f32 %v11688, 0.0
      %v11851 = vmax.f32 %v11693, 0.0
      %v11852 = vmax.f32 %v11696, 0.0
      %v11853 = vmax.f32 %v11701, 0.0
      %v11854 = vmax.f32 %v11704, 0.0
      %v11855 = vmax.f32 %v11709, 0.0
      %v11856 = vmax.f32 %v11712, 0.0
      %v11857 = vmax.f32 %v11717, 0.0
      %v11858 = vmax.f32 %v11720, 0.0
      %v11859 = vmax.f32 %v11725, 0.0
      %v11860 = vmax.f32 %v11728, 0.0
      %v11861 = vmax.f32 %v11733, 0.0
      %v11862 = vmax.f32 %v11736, 0.0
      %v11863 = vmax.f32 %v11741, 0.0
      %v11864 = vmax.f32 %v11744, 0.0
      %v11865 = vmax.f32 %v11749, 0.0
      %v11866 = vmax.f32 %v11752, 0.0
      %v11867 = vmax.f32 %v11757, 0.0
      %v11868 = vmax.f32 %v11760, 0.0
      %v11869 = vmax.f32 %v11765, 0.0
      %v11870 = vmax.f32 %v11768, 0.0
      %v11871 = vmax.f32 %v11773, 0.0
      %v11872 = vmax.f32 %v11776, 0.0
      %v11873 = vmax.f32 %v11781, 0.0
      %v11874 = vmax.f32 %v11784, 0.0
      %v11875 = vmax.f32 %v11789, 0.0
      %v11876 = vmax.f32 %v11792, 0.0
      %v11877 = vmax.f32 %v11797, 0.0
      %v11878 = vmax.f32 %v11800, 0.0
      %v11879 = vmax.f32 %v11805, 0.0
      %v11880 = vmax.f32 %v11808, 0.0
      %v11881 = vmax.f32 %v11813, 0.0
      %v11882 = vmax.f32 %v11816, 0.0
      %11915 = vrot.lane.b32.xlu0 %v11819, 16
      %v11916 = vpop.permute.xlu0 %11915
      %11917 = vrot.lane.b32.xlu0 %v11820, 16
      %v11918 = vpop.permute.xlu0 %11917
      %11919 = vrot.lane.b32.xlu0 %v11821, 16
      %v11920 = vpop.permute.xlu0 %11919
      %11921 = vrot.lane.b32.xlu0 %v11822, 16
      %v11922 = vpop.permute.xlu0 %11921
      %11923 = vrot.lane.b32.xlu0 %v11823, 16
      %v11924 = vpop.permute.xlu0 %11923
      %11925 = vrot.lane.b32.xlu0 %v11824, 16
      %v11926 = vpop.permute.xlu0 %11925
      %11927 = vrot.lane.b32.xlu0 %v11825, 16
      %v11928 = vpop.permute.xlu0 %11927
      %11929 = vrot.lane.b32.xlu0 %v11826, 16
      %v11930 = vpop.permute.xlu0 %11929
      %11931 = vrot.lane.b32.xlu0 %v11827, 16
      %v11932 = vpop.permute.xlu0 %11931
      %11933 = vrot.lane.b32.xlu0 %v11828, 16
      %v11934 = vpop.permute.xlu0 %11933
      %11935 = vrot.lane.b32.xlu0 %v11829, 16
      %v11936 = vpop.permute.xlu0 %11935
      %11937 = vrot.lane.b32.xlu0 %v11830, 16
      %v11938 = vpop.permute.xlu0 %11937
      %11939 = vrot.lane.b32.xlu0 %v11831, 16
      %v11940 = vpop.permute.xlu0 %11939
      %11941 = vrot.lane.b32.xlu0 %v11832, 16
      %v11942 = vpop.permute.xlu0 %11941
      %11943 = vrot.lane.b32.xlu0 %v11833, 16
      %v11944 = vpop.permute.xlu0 %11943
      %11945 = vrot.lane.b32.xlu0 %v11834, 16
      %v11946 = vpop.permute.xlu0 %11945
      %11947 = vrot.lane.b32.xlu0 %v11835, 16
      %v11948 = vpop.permute.xlu0 %11947
      %11949 = vrot.lane.b32.xlu0 %v11836, 16
      %v11950 = vpop.permute.xlu0 %11949
      %11951 = vrot.lane.b32.xlu0 %v11837, 16
      %v11952 = vpop.permute.xlu0 %11951
      %11953 = vrot.lane.b32.xlu0 %v11838, 16
      %v11954 = vpop.permute.xlu0 %11953
      %11955 = vrot.lane.b32.xlu0 %v11839, 16
      %v11956 = vpop.permute.xlu0 %11955
      %11957 = vrot.lane.b32.xlu0 %v11840, 16
      %v11958 = vpop.permute.xlu0 %11957
      %11959 = vrot.lane.b32.xlu0 %v11841, 16
      %v11960 = vpop.permute.xlu0 %11959
      %11961 = vrot.lane.b32.xlu0 %v11842, 16
      %v11962 = vpop.permute.xlu0 %11961
      %11963 = vrot.lane.b32.xlu0 %v11843, 16
      %v11964 = vpop.permute.xlu0 %11963
      %11965 = vrot.lane.b32.xlu0 %v11844, 16
      %v11966 = vpop.permute.xlu0 %11965
      %11967 = vrot.lane.b32.xlu0 %v11845, 16
      %v11968 = vpop.permute.xlu0 %11967
      %11969 = vrot.lane.b32.xlu0 %v11846, 16
      %v11970 = vpop.permute.xlu0 %11969
      %11971 = vrot.lane.b32.xlu0 %v11847, 16
      %v11972 = vpop.permute.xlu0 %11971
      %11973 = vrot.lane.b32.xlu0 %v11848, 16
      %v11974 = vpop.permute.xlu0 %11973
      %11975 = vrot.lane.b32.xlu0 %v11849, 16
      %v11976 = vpop.permute.xlu0 %11975
      %11977 = vrot.lane.b32.xlu0 %v11850, 16
      %v11978 = vpop.permute.xlu0 %11977
      %12043 = vrot.lane.b32.xlu0 %v11851, 40
      %v12044 = vpop.permute.xlu0 %12043
      %12045 = vrot.lane.b32.xlu0 %v11852, 40
      %v12046 = vpop.permute.xlu0 %12045
      %12047 = vrot.lane.b32.xlu0 %v11853, 40
      %v12048 = vpop.permute.xlu0 %12047
      %12049 = vrot.lane.b32.xlu0 %v11854, 40
      %v12050 = vpop.permute.xlu0 %12049
      %12051 = vrot.lane.b32.xlu0 %v11855, 40
      %v12052 = vpop.permute.xlu0 %12051
      %12053 = vrot.lane.b32.xlu0 %v11856, 40
      %v12054 = vpop.permute.xlu0 %12053
      %12055 = vrot.lane.b32.xlu0 %v11857, 40
      %v12056 = vpop.permute.xlu0 %12055
      %12057 = vrot.lane.b32.xlu0 %v11858, 40
      %v12058 = vpop.permute.xlu0 %12057
      %12059 = vrot.lane.b32.xlu0 %v11859, 40
      %v12060 = vpop.permute.xlu0 %12059
      %12061 = vrot.lane.b32.xlu0 %v11860, 40
      %v12062 = vpop.permute.xlu0 %12061
      %12063 = vrot.lane.b32.xlu0 %v11861, 40
      %v12064 = vpop.permute.xlu0 %12063
      %12065 = vrot.lane.b32.xlu0 %v11862, 40
      %v12066 = vpop.permute.xlu0 %12065
      %12067 = vrot.lane.b32.xlu0 %v11863, 40
      %v12068 = vpop.permute.xlu0 %12067
      %12069 = vrot.lane.b32.xlu0 %v11864, 40
      %v12070 = vpop.permute.xlu0 %12069
      %12071 = vrot.lane.b32.xlu0 %v11865, 40
      %v12072 = vpop.permute.xlu0 %12071
      %12073 = vrot.lane.b32.xlu0 %v11866, 40
      %v12074 = vpop.permute.xlu0 %12073
      %12075 = vrot.lane.b32.xlu0 %v11867, 40
      %v12076 = vpop.permute.xlu0 %12075
      %12077 = vrot.lane.b32.xlu0 %v11868, 40
      %v12078 = vpop.permute.xlu0 %12077
      %12079 = vrot.lane.b32.xlu0 %v11869, 40
      %v12080 = vpop.permute.xlu0 %12079
      %12081 = vrot.lane.b32.xlu0 %v11870, 40
      %v12082 = vpop.permute.xlu0 %12081
      %12083 = vrot.lane.b32.xlu0 %v11871, 40
      %v12084 = vpop.permute.xlu0 %12083
      %12085 = vrot.lane.b32.xlu0 %v11872, 40
      %v12086 = vpop.permute.xlu0 %12085
      %12087 = vrot.lane.b32.xlu0 %v11873, 40
      %v12088 = vpop.permute.xlu0 %12087
      %12089 = vrot.lane.b32.xlu0 %v11874, 40
      %v12090 = vpop.permute.xlu0 %12089
      %12091 = vrot.lane.b32.xlu0 %v11875, 40
      %v12092 = vpop.permute.xlu0 %12091
      %12093 = vrot.lane.b32.xlu0 %v11876, 40
      %v12094 = vpop.permute.xlu0 %12093
      %12095 = vrot.lane.b32.xlu0 %v11877, 40
      %v12096 = vpop.permute.xlu0 %12095
      %12097 = vrot.lane.b32.xlu0 %v11878, 40
      %v12098 = vpop.permute.xlu0 %12097
      %12099 = vrot.lane.b32.xlu0 %v11879, 40
      %v12100 = vpop.permute.xlu0 %12099
      %12101 = vrot.lane.b32.xlu0 %v11880, 40
      %v12102 = vpop.permute.xlu0 %12101
      %12103 = vrot.lane.b32.xlu0 %v11881, 40
      %v12104 = vpop.permute.xlu0 %12103
      %12105 = vrot.lane.b32.xlu0 %v11882, 40
      %v12106 = vpop.permute.xlu0 %12105
      %v12139 = vsel %vm1607, %v5646, %v9242
      %v12140 = vsel %vm1607, %v5647, %v9244
      %v12141 = vsel %vm1607, %v5648, %v9246
      %v12142 = vsel %vm1607, %v5649, %v9248
      %v12143 = vsel %vm1607, %v5650, %v9250
      %v12144 = vsel %vm1607, %v5651, %v9252
      %v12145 = vsel %vm1607, %v5652, %v9254
      %v12146 = vsel %vm1607, %v5653, %v9256
      %v12147 = vsel %vm1607, %v5654, %v9258
      %v12148 = vsel %vm1607, %v5655, %v9260
      %v12149 = vsel %vm1607, %v5656, %v9262
      %v12150 = vsel %vm1607, %v5657, %v9264
      %v12151 = vsel %vm1607, %v5658, %v9266
      %v12152 = vsel %vm1607, %v5659, %v9268
      %v12153 = vsel %vm1607, %v5660, %v9270
      %v12154 = vsel %vm1607, %v5661, %v9272
      %v12155 = vsel %vm1607, %v5662, %v9274
      %v12156 = vsel %vm1607, %v5663, %v9276
      %v12157 = vsel %vm1607, %v5664, %v9278
      %v12158 = vsel %vm1607, %v5665, %v9280
      %v12159 = vsel %vm1607, %v5666, %v9282
      %v12160 = vsel %vm1607, %v5667, %v9284
      %v12161 = vsel %vm1607, %v5668, %v9286
      %v12162 = vsel %vm1607, %v5669, %v9288
      %v12163 = vsel %vm1607, %v5670, %v9290
      %v12164 = vsel %vm1607, %v5671, %v9292
      %v12165 = vsel %vm1607, %v5672, %v9294
      %v12166 = vsel %vm1607, %v5673, %v9296
      %v12167 = vsel %vm1607, %v5674, %v9298
      %v12168 = vsel %vm1607, %v5675, %v9300
      %v12169 = vsel %vm1607, %v5676, %v9302
      %v12170 = vsel %vm1607, %v5677, %v9304
      %v12171 = vsel %vm1673, %v12139, %v11916
      %v12172 = vsel %vm1673, %v12140, %v11918
      %v12173 = vsel %vm1673, %v12141, %v11920
      %v12174 = vsel %vm1673, %v12142, %v11922
      %v12175 = vsel %vm1673, %v12143, %v11924
      %v12176 = vsel %vm1673, %v12144, %v11926
      %v12177 = vsel %vm1673, %v12145, %v11928
      %v12178 = vsel %vm1673, %v12146, %v11930
      %v12179 = vsel %vm1673, %v12147, %v11932
      %v12180 = vsel %vm1673, %v12148, %v11934
      %v12181 = vsel %vm1673, %v12149, %v11936
      %v12182 = vsel %vm1673, %v12150, %v11938
      %v12183 = vsel %vm1673, %v12151, %v11940
      %v12184 = vsel %vm1673, %v12152, %v11942
      %v12185 = vsel %vm1673, %v12153, %v11944
      %v12186 = vsel %vm1673, %v12154, %v11946
      %v12187 = vsel %vm1673, %v12155, %v11948
      %v12188 = vsel %vm1673, %v12156, %v11950
      %v12189 = vsel %vm1673, %v12157, %v11952
      %v12190 = vsel %vm1673, %v12158, %v11954
      %v12191 = vsel %vm1673, %v12159, %v11956
      %v12192 = vsel %vm1673, %v12160, %v11958
      %v12193 = vsel %vm1673, %v12161, %v11960
      %v12194 = vsel %vm1673, %v12162, %v11962
      %v12195 = vsel %vm1673, %v12163, %v11964
      %v12196 = vsel %vm1673, %v12164, %v11966
      %v12197 = vsel %vm1673, %v12165, %v11968
      %v12198 = vsel %vm1673, %v12166, %v11970
      %v12199 = vsel %vm1673, %v12167, %v11972
      %v12200 = vsel %vm1673, %v12168, %v11974
      %v12201 = vsel %vm1673, %v12169, %v11976
      %v12202 = vsel %vm1673, %v12170, %v11978
      %v12203 = vsel %vm1805, %v12171, %v9880
      %v12204 = vsel %vm1805, %v12172, %v9882
      %v12205 = vsel %vm1805, %v12173, %v9884
      %v12206 = vsel %vm1805, %v12174, %v9886
      %v12207 = vsel %vm1805, %v12175, %v9888
      %v12208 = vsel %vm1805, %v12176, %v9890
      %v12209 = vsel %vm1805, %v12177, %v9892
      %v12210 = vsel %vm1805, %v12178, %v9894
      %v12211 = vsel %vm1805, %v12179, %v9896
      %v12212 = vsel %vm1805, %v12180, %v9898
      %v12213 = vsel %vm1805, %v12181, %v9900
      %v12214 = vsel %vm1805, %v12182, %v9902
      %v12215 = vsel %vm1805, %v12183, %v9904
      %v12216 = vsel %vm1805, %v12184, %v9906
      %v12217 = vsel %vm1805, %v12185, %v9908
      %v12218 = vsel %vm1805, %v12186, %v9910
      %v12219 = vsel %vm1805, %v12187, %v9912
      %v12220 = vsel %vm1805, %v12188, %v9914
      %v12221 = vsel %vm1805, %v12189, %v9916
      %v12222 = vsel %vm1805, %v12190, %v9918
      %v12223 = vsel %vm1805, %v12191, %v9920
      %v12224 = vsel %vm1805, %v12192, %v9922
      %v12225 = vsel %vm1805, %v12193, %v9924
      %v12226 = vsel %vm1805, %v12194, %v9926
      %v12227 = vsel %vm1805, %v12195, %v9928
      %v12228 = vsel %vm1805, %v12196, %v9930
      %v12229 = vsel %vm1805, %v12197, %v9932
      %v12230 = vsel %vm1805, %v12198, %v9934
      %v12231 = vsel %vm1805, %v12199, %v9936
      %v12232 = vsel %vm1805, %v12200, %v9938
      %v12233 = vsel %vm1805, %v12201, %v9940
      %v12234 = vsel %vm1805, %v12202, %v9942
      %v12235 = vsel %vm11031, %v12203, %v12044
      %v12236 = vsel %vm11031, %v12204, %v12046
      %v12237 = vsel %vm11031, %v12205, %v12048
      %v12238 = vsel %vm11031, %v12206, %v12050
      %v12239 = vsel %vm11031, %v12207, %v12052
      %v12240 = vsel %vm11031, %v12208, %v12054
      %v12241 = vsel %vm11031, %v12209, %v12056
      %v12242 = vsel %vm11031, %v12210, %v12058
      %v12243 = vsel %vm11031, %v12211, %v12060
      %v12244 = vsel %vm11031, %v12212, %v12062
      %v12245 = vsel %vm11031, %v12213, %v12064
      %v12246 = vsel %vm11031, %v12214, %v12066
      %v12247 = vsel %vm11031, %v12215, %v12068
      %v12248 = vsel %vm11031, %v12216, %v12070
      %v12249 = vsel %vm11031, %v12217, %v12072
      %v12250 = vsel %vm11031, %v12218, %v12074
      %v12251 = vsel %vm11031, %v12219, %v12076
      %v12252 = vsel %vm11031, %v12220, %v12078
      %v12253 = vsel %vm11031, %v12221, %v12080
      %v12254 = vsel %vm11031, %v12222, %v12082
      %v12255 = vsel %vm11031, %v12223, %v12084
      %v12256 = vsel %vm11031, %v12224, %v12086
      %v12257 = vsel %vm11031, %v12225, %v12088
      %v12258 = vsel %vm11031, %v12226, %v12090
      %v12259 = vsel %vm11031, %v12227, %v12092
      %v12260 = vsel %vm11031, %v12228, %v12094
      %v12261 = vsel %vm11031, %v12229, %v12096
      %v12262 = vsel %vm11031, %v12230, %v12098
      %v12263 = vsel %vm11031, %v12231, %v12100
      %v12264 = vsel %vm11031, %v12232, %v12102
      %v12265 = vsel %vm11031, %v12233, %v12104
      %v12266 = vsel %vm11031, %v12234, %v12106
      %v12267 = vpack.c.bf16 %v12236, %v12235
      %v12268 = vpack.c.bf16 %v12238, %v12237
      %v12269 = vpack.c.bf16 %v12240, %v12239
      %v12270 = vpack.c.bf16 %v12242, %v12241
      %v12271 = vpack.c.bf16 %v12244, %v12243
      %v12272 = vpack.c.bf16 %v12246, %v12245
      %v12273 = vpack.c.bf16 %v12248, %v12247
      %v12274 = vpack.c.bf16 %v12250, %v12249
      %v12275 = vpack.c.bf16 %v12252, %v12251
      %v12276 = vpack.c.bf16 %v12254, %v12253
      %v12277 = vpack.c.bf16 %v12256, %v12255
      %v12278 = vpack.c.bf16 %v12258, %v12257
      %v12279 = vpack.c.bf16 %v12260, %v12259
      %v12280 = vpack.c.bf16 %v12262, %v12261
      %v12281 = vpack.c.bf16 %v12264, %v12263
      %v12282 = vpack.c.bf16 %v12266, %v12265
      %v12299 = vunpack.c.l.b16 %v12267
      %v12300 = vunpack.c.h.b16 %v12267
      %v12301 = vunpack.c.l.b16 %v12268
      %v12302 = vunpack.c.h.b16 %v12268
      %v12303 = vunpack.c.l.b16 %v12269
      %v12304 = vunpack.c.h.b16 %v12269
      %v12305 = vunpack.c.l.b16 %v12270
      %v12306 = vunpack.c.h.b16 %v12270
      %v12307 = vunpack.c.l.b16 %v12271
      %v12308 = vunpack.c.h.b16 %v12271
      %v12309 = vunpack.c.l.b16 %v12272
      %v12310 = vunpack.c.h.b16 %v12272
      %v12311 = vunpack.c.l.b16 %v12273
      %v12312 = vunpack.c.h.b16 %v12273
      %v12313 = vunpack.c.l.b16 %v12274
      %v12314 = vunpack.c.h.b16 %v12274
      %v12315 = vunpack.c.l.b16 %v12275
      %v12316 = vunpack.c.h.b16 %v12275
      %v12317 = vunpack.c.l.b16 %v12276
      %v12318 = vunpack.c.h.b16 %v12276
      %v12319 = vunpack.c.l.b16 %v12277
      %v12320 = vunpack.c.h.b16 %v12277
      %v12321 = vunpack.c.l.b16 %v12278
      %v12322 = vunpack.c.h.b16 %v12278
      %v12323 = vunpack.c.l.b16 %v12279
      %v12324 = vunpack.c.h.b16 %v12279
      %v12325 = vunpack.c.l.b16 %v12280
      %v12326 = vunpack.c.h.b16 %v12280
      %v12327 = vunpack.c.l.b16 %v12281
      %v12328 = vunpack.c.h.b16 %v12281
      %v12329 = vunpack.c.l.b16 %v12282
      %v12330 = vunpack.c.h.b16 %v12282
      %v12331 = vpack.c.b16 %v12299, %v12299
      %v12332 = vpack.c.b16 %v12300, %v12300
      %v12333 = vpack.c.b16 %v12301, %v12301
      %v12334 = vpack.c.b16 %v12302, %v12302
      %v12335 = vpack.c.b16 %v12303, %v12303
      %v12336 = vpack.c.b16 %v12304, %v12304
      %v12337 = vpack.c.b16 %v12305, %v12305
      %v12338 = vpack.c.b16 %v12306, %v12306
      %v12339 = vpack.c.b16 %v12307, %v12307
      %v12340 = vpack.c.b16 %v12308, %v12308
      %v12341 = vpack.c.b16 %v12309, %v12309
      %v12342 = vpack.c.b16 %v12310, %v12310
      %v12343 = vpack.c.b16 %v12311, %v12311
      %v12344 = vpack.c.b16 %v12312, %v12312
      %v12345 = vpack.c.b16 %v12313, %v12313
      %v12346 = vpack.c.b16 %v12314, %v12314
      %v12347 = vpack.c.b16 %v12315, %v12315
      %v12348 = vpack.c.b16 %v12316, %v12316
      %v12349 = vpack.c.b16 %v12317, %v12317
      %v12350 = vpack.c.b16 %v12318, %v12318
      %v12351 = vpack.c.b16 %v12319, %v12319
      %v12352 = vpack.c.b16 %v12320, %v12320
      %v12353 = vpack.c.b16 %v12321, %v12321
      %v12354 = vpack.c.b16 %v12322, %v12322
      %v12355 = vpack.c.b16 %v12323, %v12323
      %v12356 = vpack.c.b16 %v12324, %v12324
      %v12357 = vpack.c.b16 %v12325, %v12325
      %v12358 = vpack.c.b16 %v12326, %v12326
      %v12359 = vpack.c.b16 %v12327, %v12327
      %v12360 = vpack.c.b16 %v12328, %v12328
      %v12361 = vpack.c.b16 %v12329, %v12329
      %v12362 = vpack.c.b16 %v12330, %v12330
      %vm12395 = vcmask 453632
      %12396 = vst.msk [vmem:[%s541] sm:$0xf] %vm12395, %v12331
      %12397 = vst.msk [vmem:[%s541 + $0x4] sm:$0xf] %vm12395, %v12332
      %12398 = vst.msk [vmem:[%s541 + $0x8] sm:$0xf] %vm12395, %v12333
      %12399 = vst.msk [vmem:[%s541 + $0xc] sm:$0xf] %vm12395, %v12334
      %12400 = vst.msk [vmem:[%s541 + $0x10] sm:$0xf] %vm12395, %v12335
      %12401 = vst.msk [vmem:[%s541 + $0x14] sm:$0xf] %vm12395, %v12336
      %12402 = vst.msk [vmem:[%s541 + $0x18] sm:$0xf] %vm12395, %v12337
      %12403 = vst.msk [vmem:[%s541 + $0x1c] sm:$0xf] %vm12395, %v12338
      %12404 = vst.msk [vmem:[%s541 + $0x20] sm:$0xf] %vm12395, %v12339
      %12405 = vst.msk [vmem:[%s541 + $0x24] sm:$0xf] %vm12395, %v12340
      %12406 = vst.msk [vmem:[%s541 + $0x28] sm:$0xf] %vm12395, %v12341
      %12407 = vst.msk [vmem:[%s541 + $0x2c] sm:$0xf] %vm12395, %v12342
      %12408 = vst.msk [vmem:[%s541 + $0x30] sm:$0xf] %vm12395, %v12343
      %12409 = vst.msk [vmem:[%s541 + $0x34] sm:$0xf] %vm12395, %v12344
      %12410 = vst.msk [vmem:[%s541 + $0x38] sm:$0xf] %vm12395, %v12345
      %12411 = vst.msk [vmem:[%s541 + $0x3c] sm:$0xf] %vm12395, %v12346
      %12412 = vst.msk [vmem:[%s541 + $0x40] sm:$0xf] %vm12395, %v12347
      %12413 = vst.msk [vmem:[%s541 + $0x44] sm:$0xf] %vm12395, %v12348
      %12414 = vst.msk [vmem:[%s541 + $0x48] sm:$0xf] %vm12395, %v12349
      %12415 = vst.msk [vmem:[%s541 + $0x4c] sm:$0xf] %vm12395, %v12350
      %12416 = vst.msk [vmem:[%s541 + $0x50] sm:$0xf] %vm12395, %v12351
      %12417 = vst.msk [vmem:[%s541 + $0x54] sm:$0xf] %vm12395, %v12352
      %12418 = vst.msk [vmem:[%s541 + $0x58] sm:$0xf] %vm12395, %v12353
      %12419 = vst.msk [vmem:[%s541 + $0x5c] sm:$0xf] %vm12395, %v12354
      %12420 = vst.msk [vmem:[%s541 + $0x60] sm:$0xf] %vm12395, %v12355
      %12421 = vst.msk [vmem:[%s541 + $0x64] sm:$0xf] %vm12395, %v12356
      %12422 = vst.msk [vmem:[%s541 + $0x68] sm:$0xf] %vm12395, %v12357
      %12423 = vst.msk [vmem:[%s541 + $0x6c] sm:$0xf] %vm12395, %v12358
      %12424 = vst.msk [vmem:[%s541 + $0x70] sm:$0xf] %vm12395, %v12359
      %12425 = vst.msk [vmem:[%s541 + $0x74] sm:$0xf] %vm12395, %v12360
      %12426 = vst.msk [vmem:[%s541 + $0x78] sm:$0xf] %vm12395, %v12361
      %12427 = vst.msk [vmem:[%s541 + $0x7c] sm:$0xf] %vm12395, %v12362
      %p12428 = scmp.lt.s32.totalorder %s27, 1
      %s12429 = scalar_select %p12428, %s27, 1
      %s12430 = smul.addr %s12429, 32
      %s12431 = smul.addr %s12430, 4
      %s12432 = scalar_lea.vmem %s16, %s12431
      // Predicated region
      $region85: #{synthesis_model_forward.1} parent=83 // pred_check
        %p12433 = pneg %p391
      $region86: #{synthesis_model_forward.1} parent=83 // pred_check_branch
        %12435 = sbr.rel (%p12433) target = $region88
      $region87: #{synthesis_model_forward.1} parent=83 // pred_region
        _
      $region88: #{synthesis_model_forward.1} parent=83 // pred_fallthru
        _
    $region84: #{synthesis_model_forward.1} parent=5 // pred_fallthru
      _
    %p12436 = scmp.le.s32.totalorder 2, %s22
    // Predicated region
    $region89: #{synthesis_model_forward.1} parent=5 // pred_check
      %p12437 = pneg %p12436
    $region90: #{synthesis_model_forward.1} parent=5 // pred_check_branch
      %12439 = sbr.rel (%p12437) target = $region92
    $region91: #{synthesis_model_forward.1} parent=5 // pred_region
      %s12440 = ssub.s32 %s22, 2
      // Predicated region
      $region93: #{synthesis_model_forward.1} parent=91 // pred_check
        %p12441 = pneg %p397
      $region94: #{synthesis_model_forward.1} parent=91 // pred_check_branch
        %12443 = sbr.rel (%p12441) target = $region96
      $region95: #{synthesis_model_forward.1} parent=91 // pred_region
        %p12444 = scmp.lt.s32.totalorder %s28, 1
        %s12445 = scalar_select %p12444, %s28, 1
        %s12446 = smul.addr %s12445, 32
        %s12447 = smul.addr %s12446, 4
        %s12448 = scalar_lea.vmem %s16, %s12447
      $region96: #{synthesis_model_forward.1} parent=91 // pred_fallthru
        _
    $region92: #{synthesis_model_forward.1} parent=5 // pred_fallthru
      _
  $region6: #{synthesis_model_forward.1} parent=0 // loop_footer
    %s26 = sadd.s32 1, %s22
  $region7: #{synthesis_model_forward.1} parent=0 // loop_footer_branch
    %21 = sbr.rel target = $region3
  $region8: #{synthesis_model_forward.1} parent=0 // loop_exit
    _

</llo_original>
